<compile_context>
chip_gen: v7x
topology: tpu7x:2x2x1
jax: 0.10.0
libtpu: 0.0.40
codegen_flags: <defaults>
</compile_context>

<pallas_src>
import functools

import jax
import jax.numpy as jnp
from jax.experimental import pallas as pl
from jax.experimental.pallas import tpu as pltpu


def _rnn_wavefn_kernel(
    x0_ref, u_ref,
    wih_ref, whh_ref, bf_ref, bhn_ref,
    d1w_ref, d1b_ref, d2w_ref, d2b_ref,
    probs_ref, samples_ref, logp_ref,
    *, n_sites, n_layers, hidden, in_dim,
):
    H = hidden
    B = x0_ref.shape[0]
    f32 = jnp.float32

    # Hoisted iotas / constants (JAX does not CSE broadcast_in_dim -- keep them
    # out of the unrolled site loop).
    idx_h = jax.lax.broadcasted_iota(jnp.int32, (B, H), 1)
    if in_dim != 2:
        idx_in = jax.lax.broadcasted_iota(jnp.int32, (B, in_dim), 1)
        # Upper-triangular (incl. diagonal) ones: cdf = p @ tri is the inclusive
        # prefix-sum along lanes in one tiny MXU op.
        tri = (jax.lax.broadcasted_iota(jnp.int32, (in_dim, in_dim), 0)
               <= jax.lax.broadcasted_iota(jnp.int32, (in_dim, in_dim), 1)
               ).astype(f32)

    x = x0_ref[...]                                   # (B, H) f32, zero-padded input
    hs = [jnp.zeros((B, H), f32) for _ in range(n_layers)]
    logp = jnp.zeros((B, 1), f32)

    # Static Python loop: all weight slices / output stores use static indices.
    for site in range(n_sites):
        x_b = x.astype(jnp.bfloat16)
        for layer in range(n_layers):
            h = hs[layer]
            # gi and gh are mutually independent -> MXU pipelines them.
            gi = jnp.dot(x_b, wih_ref[site, layer],
                         preferred_element_type=f32)          # (B, 3H)
            gh = jnp.dot(h.astype(jnp.bfloat16), whh_ref[site, layer],
                         preferred_element_type=f32)          # (B, 3H)
            s = gi + bf_ref[site, layer]     # r/z cols: +(b_ir+b_hr); n col: +b_in
            rz = jax.nn.sigmoid(s[:, : 2 * H] + gh[:, : 2 * H])
            r = rz[:, :H]
            z = rz[:, H:]
            n = jnp.tanh(s[:, 2 * H:] + r * (gh[:, 2 * H:] + bhn_ref[site, layer]))
            h = (1.0 - z) * n + z * h
            hs[layer] = h
            x_b = h.astype(jnp.bfloat16)     # input to next stacked layer

        # Dense head: cos(h)+eps -> Linear -> ReLU -> Linear -> Softmax(+eps).
        s_cos = jnp.cos(hs[-1]) + 1e-10
        y1 = jnp.dot(s_cos.astype(jnp.bfloat16), d1w_ref[site],
                     preferred_element_type=f32) + d1b_ref[site]
        y1 = jnp.maximum(y1, 0.0)
        logits = jnp.dot(y1.astype(jnp.bfloat16), d2w_ref[site],
                         preferred_element_type=f32) + d2b_ref[site]
        logits = logits - jnp.max(logits, axis=1, keepdims=True)
        e = jnp.exp(logits)
        p = e / jnp.sum(e, axis=1, keepdims=True)
        p_out = p + 1e-10                                     # (B, in_dim)
        probs_ref[site] = p_out.astype(probs_ref.dtype)

        # Categorical sampling via inverse CDF (same distribution as
        # torch.multinomial; RNG stream supplied externally via uniforms).
        u = u_ref[site]                                       # (B, 1)
        total = jnp.sum(p_out, axis=1, keepdims=True)
        if in_dim == 2:
            # Binary fast path: one compare replaces the prefix-sum matmul.
            sample = (u * total >= p_out[:, 0:1]).astype(jnp.int32)   # (B, 1)
            p_sel = jnp.where(sample == 0, p_out[:, 0:1], p_out[:, 1:2])
        else:
            cdf = jnp.dot(p_out, tri, preferred_element_type=f32)
            sample = jnp.minimum(
                jnp.sum((u * total >= cdf).astype(jnp.int32), axis=1, keepdims=True),
                in_dim - 1)
            oh = (idx_in == sample).astype(f32)
            p_sel = jnp.sum(p_out * oh, axis=1, keepdims=True)
        samples_ref[site] = sample

        # Accumulate log-prob of the sampled component.
        logp = logp + jnp.log(p_sel + 1e-10)

        # One-hot(sample), zero-padded to width H, is the next site's input.
        x = (idx_h == sample).astype(f32)

    logp_ref[...] = logp


def init_params(key, N, n_layers, H, in_dim):
    """Deterministic synthetic parameters in fused/pre-transposed layout.

    PyTorch GRUCell weight_ih is (3H, in) with gate order (r|z|n); here it is
    stored transposed and gate-concatenated as (in, 3H) (layer 0 zero-padded
    from in_dim to H rows), weight_hh as (H, 3H).  b_ih+b_hh are folded for the
    r/z gates; b_hn is kept separate for the n gate.  Matmul weights are bf16;
    biases stay f32.
    """
    assert H >= in_dim, "hidden width must be >= input dim for zero-padding"
    ks = jax.random.split(key, 9)
    scale = 0.1
    wih = jnp.zeros((N, n_layers, H, 3 * H), jnp.float32)
    w0 = scale * jax.random.normal(ks[0], (N, in_dim, 3 * H), jnp.float32)
    wih = wih.at[:, 0, :in_dim, :].set(w0)                 # layer 0: in_dim -> 3H
    if n_layers > 1:
        wl = scale * jax.random.normal(ks[1], (N, n_layers - 1, H, 3 * H), jnp.float32)
        wih = wih.at[:, 1:].set(wl)                        # layers > 0: H -> 3H
    whh = scale * jax.random.normal(ks[2], (N, n_layers, H, 3 * H), jnp.float32)
    b_ih = scale * jax.random.normal(ks[3], (N, n_layers, 1, 3 * H), jnp.float32)
    b_hh = scale * jax.random.normal(ks[4], (N, n_layers, 1, 3 * H), jnp.float32)
    bias_f = jnp.concatenate(
        [b_ih[..., : 2 * H] + b_hh[..., : 2 * H], b_ih[..., 2 * H:]], axis=-1)
    bias_hn = b_hh[..., 2 * H:]
    d1w = scale * jax.random.normal(ks[5], (N, H, H), jnp.float32)
    d1b = scale * jax.random.normal(ks[6], (N, 1, H), jnp.float32)
    d2w = scale * jax.random.normal(ks[7], (N, H, in_dim), jnp.float32)
    d2b = scale * jax.random.normal(ks[8], (N, 1, in_dim), jnp.float32)
    return dict(
        wih=wih.astype(jnp.bfloat16), whh=whh.astype(jnp.bfloat16),
        bias_f=bias_f, bias_hn=bias_hn,
        d1w=d1w.astype(jnp.bfloat16), d1b=d1b,
        d2w=d2w.astype(jnp.bfloat16), d2b=d2b)


def rnn_wavefunction_forward(params, inputs, uniforms, *, n_layers, H, in_dim,
                             batch_block=None):
    """inputs: (B, in_dim) f32; uniforms: (B, N) f32 in [0,1).
    Returns probs (B, N, in_dim), samples (B, N) int32, log_probs (B,).

    batch_block: optional batch tile (grid axis is "parallel" so v7x can split a
    larger batch across both TensorCores).  Must equal B or be a multiple of 8
    that divides B.
    """
    B = inputs.shape[0]
    N = params["wih"].shape[0]
    if batch_block is None:
        batch_block = B
    assert B % batch_block == 0
    assert batch_block == B or batch_block % 8 == 0
    nb = B // batch_block
    Bb = batch_block

    x0 = jnp.zeros((B, H), jnp.float32).at[:, :in_dim].set(inputs.astype(jnp.float32))
    u = jnp.transpose(uniforms, (1, 0)).reshape(N, B, 1).astype(jnp.float32)

    kernel = functools.partial(_rnn_wavefn_kernel, n_sites=N,
                               n_layers=n_layers, hidden=H, in_dim=in_dim)

    in_specs = [
        pl.BlockSpec((Bb, H), lambda b: (b, 0)),                          # x0
        pl.BlockSpec((N, Bb, 1), lambda b: (0, b, 0)),                    # uniforms
        pl.BlockSpec((N, n_layers, H, 3 * H), lambda b: (0, 0, 0, 0)),    # W_ih fused
        pl.BlockSpec((N, n_layers, H, 3 * H), lambda b: (0, 0, 0, 0)),    # W_hh fused
        pl.BlockSpec((N, n_layers, 1, 3 * H), lambda b: (0, 0, 0, 0)),    # folded biases
        pl.BlockSpec((N, n_layers, 1, H), lambda b: (0, 0, 0, 0)),        # b_hn
        pl.BlockSpec((N, H, H), lambda b: (0, 0, 0)),                     # dense1 W^T
        pl.BlockSpec((N, 1, H), lambda b: (0, 0, 0)),                     # dense1 b
        pl.BlockSpec((N, H, in_dim), lambda b: (0, 0, 0)),                # dense2 W^T
        pl.BlockSpec((N, 1, in_dim), lambda b: (0, 0, 0)),                # dense2 b
    ]
    out_shape = (
        jax.ShapeDtypeStruct((N, B, in_dim), jnp.float32),   # probs (site-major)
        jax.ShapeDtypeStruct((N, B, 1), jnp.int32),          # samples
        jax.ShapeDtypeStruct((B, 1), jnp.float32),           # log_probs
    )
    out_specs = (
        pl.BlockSpec((N, Bb, in_dim), lambda b: (0, b, 0)),
        pl.BlockSpec((N, Bb, 1), lambda b: (0, b, 0)),
        pl.BlockSpec((Bb, 1), lambda b: (b, 0)),
    )

    probs_nbi, samples_nb1, logp = pl.pallas_call(
        kernel,
        out_shape=out_shape,
        grid_spec=pltpu.PrefetchScalarGridSpec(
            num_scalar_prefetch=0,
            grid=(nb,),
            in_specs=in_specs,
            out_specs=out_specs,
        ),
        compiler_params=pltpu.CompilerParams(
            dimension_semantics=("parallel",),
            # Raised scoped-VMEM limit so all-sites-resident weights also work
            # for much larger N (well within v7x's 64 MiB per-TC budget here).
            vmem_limit_bytes=32 * 1024 * 1024,
        ),
    )(x0, u, params["wih"], params["whh"], params["bias_f"], params["bias_hn"],
      params["d1w"], params["d1b"], params["d2w"], params["d2b"])

    probs = jnp.transpose(probs_nbi, (1, 0, 2))              # (B, N, in_dim)
    samples = jnp.transpose(samples_nb1[:, :, 0], (1, 0))    # (B, N)
    return probs, samples, logp[:, 0]


def _reference_forward(params, inputs, samples, *, n_layers, H, in_dim):
    """Pure-JAX f32 re-computation, teacher-forced with the kernel's samples."""
    B = inputs.shape[0]
    wih = params["wih"].astype(jnp.float32)
    whh = params["whh"].astype(jnp.float32)
    bf = params["bias_f"]
    bhn = params["bias_hn"]
    d1w = params["d1w"].astype(jnp.float32)
    d1b = params["d1b"]
    d2w = params["d2w"].astype(jnp.float32)
    d2b = params["d2b"]
    N = wih.shape[0]
    x = jnp.zeros((B, H), jnp.float32).at[:, :in_dim].set(inputs.astype(jnp.float32))
    hs = [jnp.zeros((B, H), jnp.float32) for _ in range(n_layers)]
    probs = []
    logp = jnp.zeros((B,), jnp.float32)
    for site in range(N):
        xin = x
        for layer in range(n_layers):
            h = hs[layer]
            gi = xin @ wih[site, layer]
            gh = h @ whh[site, layer]
            s = gi + bf[site, layer]
            rz = jax.nn.sigmoid(s[:, : 2 * H] + gh[:, : 2 * H])
            r, z = rz[:, :H], rz[:, H:]
            n = jnp.tanh(s[:, 2 * H:] + r * (gh[:, 2 * H:] + bhn[site, layer]))
            h = (1.0 - z) * n + z * h
            hs[layer] = h
            xin = h
        sc = jnp.cos(hs[-1]) + 1e-10
        y1 = jnp.maximum(sc @ d1w[site] + d1b[site], 0.0)
        logits = y1 @ d2w[site] + d2b[site]
        p = jax.nn.softmax(logits, axis=1) + 1e-10
        probs.append(p)
        samp = samples[:, site].astype(jnp.int32)
        p_sel = jnp.take_along_axis(p, samp[:, None], axis=1)[:, 0]
        logp = logp + jnp.log(p_sel + 1e-10)
        x = jax.nn.one_hot(samp, H, dtype=jnp.float32)   # padded one-hot input
    return jnp.stack(probs, axis=1), logp


if __name__ == "__main__":
    # Small shapes consistent with the module: 8 sites, 2 stacked GRU layers,
    # hidden units = 32, binary (one-hot) inputs, batch = 8.
    N, n_layers, H, in_dim, B = 8, 2, 32, 2, 8

    root = jax.random.PRNGKey(0)
    k_params, k_u = jax.random.split(root)
    params = init_params(k_params, N, n_layers, H, in_dim)

    inputs = jnp.ones((B, in_dim), jnp.float32)              # like torch.ones(batch, 2)
    uniforms = jax.random.uniform(k_u, (B, N), jnp.float32)  # drives multinomial sampling

    probs, samples, log_probs = rnn_wavefunction_forward(
        params, inputs, uniforms, n_layers=n_layers, H=H, in_dim=in_dim)
    jax.block_until_ready((probs, samples, log_probs))

    # Sanity: shapes, normalization, sample range, and log-prob consistency.
    assert probs.shape == (B, N, in_dim)
    assert samples.shape == (B, N)
    assert log_probs.shape == (B,)
    assert bool(jnp.all(jnp.abs(jnp.sum(probs, axis=-1) - 1.0) < 1e-4))
    assert bool(jnp.all((samples >= 0) & (samples < in_dim)))
    oh = jax.nn.one_hot(samples, in_dim, dtype=jnp.float32)
    lp_from_probs = jnp.sum(jnp.log(jnp.sum(probs * oh, axis=-1) + 1e-10), axis=-1)
    assert bool(jnp.all(jnp.abs(lp_from_probs - log_probs) < 1e-4))

    # Cross-check against a pure-JAX f32 reference (teacher-forced with the
    # kernel's samples); loose tolerance absorbs bf16 matmul-activation casts.
    ref_probs, ref_logp = _reference_forward(
        params, inputs, samples, n_layers=n_layers, H=H, in_dim=in_dim)
    assert float(jnp.max(jnp.abs(ref_probs - probs))) < 5e-2
    assert float(jnp.max(jnp.abs(ref_logp - log_probs))) < 2e-1

    print("KERNEL_OK")
</pallas_src>

<mosaic_0001>
module attributes {stable_mosaic.version = 11 : i64} {
  func.func @_rnn_wavefn_kernel(%arg0: i32, %arg1: memref<8x32xf32, #tpu.memory_space<vmem>>, %arg2: memref<8x8x1xf32, #tpu.memory_space<vmem>>, %arg3: memref<8x2x32x96xbf16, #tpu.memory_space<vmem>>, %arg4: memref<8x2x32x96xbf16, #tpu.memory_space<vmem>>, %arg5: memref<8x2x1x96xf32, #tpu.memory_space<vmem>>, %arg6: memref<8x2x1x32xf32, #tpu.memory_space<vmem>>, %arg7: memref<8x32x32xbf16, #tpu.memory_space<vmem>>, %arg8: memref<8x1x32xf32, #tpu.memory_space<vmem>>, %arg9: memref<8x32x2xbf16, #tpu.memory_space<vmem>>, %arg10: memref<8x1x2xf32, #tpu.memory_space<vmem>>, %arg11: memref<8x8x2xf32, #tpu.memory_space<vmem>>, %arg12: memref<8x8x1xi32, #tpu.memory_space<vmem>>, %arg13: memref<8x1xf32, #tpu.memory_space<vmem>>) attributes {dimension_semantics = [#tpu.dimension_semantics<parallel>], iteration_bounds = array<i64: 1>, scalar_prefetch = 0 : i64, scratch_operands = 0 : i64, tpu.core_type = #tpu.core_type<tc>, window_params = [{transform_indices = @transform_0, window_bounds = array<i64: 8, 32>}, {transform_indices = @transform_1, window_bounds = array<i64: 8, 8, 1>}, {pipeline_mode = #tpu.pipeline_mode<synchronous>, transform_indices = @transform_2, window_bounds = array<i64: 8, 2, 32, 96>}, {pipeline_mode = #tpu.pipeline_mode<synchronous>, transform_indices = @transform_3, window_bounds = array<i64: 8, 2, 32, 96>}, {pipeline_mode = #tpu.pipeline_mode<synchronous>, transform_indices = @transform_4, window_bounds = array<i64: 8, 2, 1, 96>}, {pipeline_mode = #tpu.pipeline_mode<synchronous>, transform_indices = @transform_5, window_bounds = array<i64: 8, 2, 1, 32>}, {pipeline_mode = #tpu.pipeline_mode<synchronous>, transform_indices = @transform_6, window_bounds = array<i64: 8, 32, 32>}, {pipeline_mode = #tpu.pipeline_mode<synchronous>, transform_indices = @transform_7, window_bounds = array<i64: 8, 1, 32>}, {pipeline_mode = #tpu.pipeline_mode<synchronous>, transform_indices = @transform_8, window_bounds = array<i64: 8, 32, 2>}, {pipeline_mode = #tpu.pipeline_mode<synchronous>, transform_indices = @transform_9, window_bounds = array<i64: 8, 1, 2>}, {transform_indices = @transform_10, window_bounds = array<i64: 8, 8, 2>}, {transform_indices = @transform_11, window_bounds = array<i64: 8, 8, 1>}, {transform_indices = @transform_12, window_bounds = array<i64: 8, 1>}]} {
    %0 = tpu.iota {dimensions = array<i32: 1>} : vector<8x32xi32>
    %c0 = arith.constant 0 : index
    %c0_0 = arith.constant 0 : index
    %1 = vector.load %arg1[%c0, %c0_0] : memref<8x32xf32, #tpu.memory_space<vmem>>, vector<8x32xf32>
    %cst = arith.constant 0.000000e+00 : f32
    %2 = vector.broadcast %cst : f32 to vector<8x32xf32>
    %cst_1 = arith.constant 0.000000e+00 : f32
    %3 = vector.broadcast %cst_1 : f32 to vector<8x32xf32>
    %cst_2 = arith.constant 0.000000e+00 : f32
    %4 = vector.broadcast %cst_2 : f32 to vector<8x1xf32>
    %5 = arith.truncf %1 : vector<8x32xf32> to vector<8x32xbf16>
    %c0_3 = arith.constant 0 : index
    %c0_4 = arith.constant 0 : index
    %c0_5 = arith.constant 0 : index
    %c0_6 = arith.constant 0 : index
    %6 = vector.load %arg3[%c0_3, %c0_4, %c0_5, %c0_6] : memref<8x2x32x96xbf16, #tpu.memory_space<vmem>>, vector<1x1x32x96xbf16>
    %7 = vector.shape_cast %6 : vector<1x1x32x96xbf16> to vector<32x96xbf16>
    %cst_7 = arith.constant dense<0.000000e+00> : vector<8x96xf32>
    %8 = tpu.matmul %5, %7, %cst_7 {dimension_numbers = #tpu.dot_dimension_numbers<[1], [0], [0], [1], [0, 0, 1, 1], [], []>} : vector<8x32xbf16>, vector<32x96xbf16>, vector<8x96xf32> -> vector<8x96xf32>
    %9 = arith.truncf %2 : vector<8x32xf32> to vector<8x32xbf16>
    %c0_8 = arith.constant 0 : index
    %c0_9 = arith.constant 0 : index
    %c0_10 = arith.constant 0 : index
    %c0_11 = arith.constant 0 : index
    %10 = vector.load %arg4[%c0_8, %c0_9, %c0_10, %c0_11] : memref<8x2x32x96xbf16, #tpu.memory_space<vmem>>, vector<1x1x32x96xbf16>
    %11 = vector.shape_cast %10 : vector<1x1x32x96xbf16> to vector<32x96xbf16>
    %cst_12 = arith.constant dense<0.000000e+00> : vector<8x96xf32>
    %12 = tpu.matmul %9, %11, %cst_12 {dimension_numbers = #tpu.dot_dimension_numbers<[1], [0], [0], [1], [0, 0, 1, 1], [], []>} : vector<8x32xbf16>, vector<32x96xbf16>, vector<8x96xf32> -> vector<8x96xf32>
    %c0_13 = arith.constant 0 : index
    %c0_14 = arith.constant 0 : index
    %c0_15 = arith.constant 0 : index
    %c0_16 = arith.constant 0 : index
    %13 = vector.load %arg5[%c0_13, %c0_14, %c0_15, %c0_16] : memref<8x2x1x96xf32, #tpu.memory_space<vmem>>, vector<1x1x1x96xf32>
    %14 = vector.shape_cast %13 : vector<1x1x1x96xf32> to vector<1x96xf32>
    %15 = vector.broadcast %14 : vector<1x96xf32> to vector<8x96xf32>
    %16 = arith.addf %8, %15 : vector<8x96xf32>
    %17 = vector.extract_strided_slice %16 {offsets = [0, 0], sizes = [8, 64], strides = [1, 1]} : vector<8x96xf32> to vector<8x64xf32>
    %18 = vector.extract_strided_slice %12 {offsets = [0, 0], sizes = [8, 64], strides = [1, 1]} : vector<8x96xf32> to vector<8x64xf32>
    %19 = arith.addf %17, %18 : vector<8x64xf32>
    %20 = arith.negf %19 : vector<8x64xf32>
    %21 = math.exp %20 : vector<8x64xf32>
    %cst_17 = arith.constant 1.000000e+00 : f32
    %22 = vector.broadcast %cst_17 : f32 to vector<8x64xf32>
    %23 = arith.addf %22, %21 : vector<8x64xf32>
    %24 = arith.divf %22, %23 : vector<8x64xf32>
    %25 = vector.extract_strided_slice %24 {offsets = [0, 0], sizes = [8, 32], strides = [1, 1]} : vector<8x64xf32> to vector<8x32xf32>
    %26 = vector.extract_strided_slice %24 {offsets = [0, 32], sizes = [8, 32], strides = [1, 1]} : vector<8x64xf32> to vector<8x32xf32>
    %27 = vector.extract_strided_slice %16 {offsets = [0, 64], sizes = [8, 32], strides = [1, 1]} : vector<8x96xf32> to vector<8x32xf32>
    %28 = vector.extract_strided_slice %12 {offsets = [0, 64], sizes = [8, 32], strides = [1, 1]} : vector<8x96xf32> to vector<8x32xf32>
    %c0_18 = arith.constant 0 : index
    %c0_19 = arith.constant 0 : index
    %c0_20 = arith.constant 0 : index
    %c0_21 = arith.constant 0 : index
    %29 = vector.load %arg6[%c0_18, %c0_19, %c0_20, %c0_21] : memref<8x2x1x32xf32, #tpu.memory_space<vmem>>, vector<1x1x1x32xf32>
    %30 = vector.shape_cast %29 : vector<1x1x1x32xf32> to vector<1x32xf32>
    %31 = vector.broadcast %30 : vector<1x32xf32> to vector<8x32xf32>
    %32 = arith.addf %28, %31 : vector<8x32xf32>
    %33 = arith.mulf %25, %32 : vector<8x32xf32>
    %34 = arith.addf %27, %33 : vector<8x32xf32>
    %35 = math.tanh %34 : vector<8x32xf32>
    %cst_22 = arith.constant 1.000000e+00 : f32
    %36 = vector.broadcast %cst_22 : f32 to vector<8x32xf32>
    %37 = arith.subf %36, %26 : vector<8x32xf32>
    %38 = arith.mulf %37, %35 : vector<8x32xf32>
    %39 = arith.mulf %26, %2 : vector<8x32xf32>
    %40 = arith.addf %38, %39 : vector<8x32xf32>
    %41 = arith.truncf %40 : vector<8x32xf32> to vector<8x32xbf16>
    %c0_23 = arith.constant 0 : index
    %c1 = arith.constant 1 : index
    %c0_24 = arith.constant 0 : index
    %c0_25 = arith.constant 0 : index
    %42 = vector.load %arg3[%c0_23, %c1, %c0_24, %c0_25] : memref<8x2x32x96xbf16, #tpu.memory_space<vmem>>, vector<1x1x32x96xbf16>
    %43 = vector.shape_cast %42 : vector<1x1x32x96xbf16> to vector<32x96xbf16>
    %cst_26 = arith.constant dense<0.000000e+00> : vector<8x96xf32>
    %44 = tpu.matmul %41, %43, %cst_26 {dimension_numbers = #tpu.dot_dimension_numbers<[1], [0], [0], [1], [0, 0, 1, 1], [], []>} : vector<8x32xbf16>, vector<32x96xbf16>, vector<8x96xf32> -> vector<8x96xf32>
    %45 = arith.truncf %3 : vector<8x32xf32> to vector<8x32xbf16>
    %c0_27 = arith.constant 0 : index
    %c1_28 = arith.constant 1 : index
    %c0_29 = arith.constant 0 : index
    %c0_30 = arith.constant 0 : index
    %46 = vector.load %arg4[%c0_27, %c1_28, %c0_29, %c0_30] : memref<8x2x32x96xbf16, #tpu.memory_space<vmem>>, vector<1x1x32x96xbf16>
    %47 = vector.shape_cast %46 : vector<1x1x32x96xbf16> to vector<32x96xbf16>
    %cst_31 = arith.constant dense<0.000000e+00> : vector<8x96xf32>
    %48 = tpu.matmul %45, %47, %cst_31 {dimension_numbers = #tpu.dot_dimension_numbers<[1], [0], [0], [1], [0, 0, 1, 1], [], []>} : vector<8x32xbf16>, vector<32x96xbf16>, vector<8x96xf32> -> vector<8x96xf32>
    %c0_32 = arith.constant 0 : index
    %c1_33 = arith.constant 1 : index
    %c0_34 = arith.constant 0 : index
    %c0_35 = arith.constant 0 : index
    %49 = vector.load %arg5[%c0_32, %c1_33, %c0_34, %c0_35] : memref<8x2x1x96xf32, #tpu.memory_space<vmem>>, vector<1x1x1x96xf32>
    %50 = vector.shape_cast %49 : vector<1x1x1x96xf32> to vector<1x96xf32>
    %51 = vector.broadcast %50 : vector<1x96xf32> to vector<8x96xf32>
    %52 = arith.addf %44, %51 : vector<8x96xf32>
    %53 = vector.extract_strided_slice %52 {offsets = [0, 0], sizes = [8, 64], strides = [1, 1]} : vector<8x96xf32> to vector<8x64xf32>
    %54 = vector.extract_strided_slice %48 {offsets = [0, 0], sizes = [8, 64], strides = [1, 1]} : vector<8x96xf32> to vector<8x64xf32>
    %55 = arith.addf %53, %54 : vector<8x64xf32>
    %56 = arith.negf %55 : vector<8x64xf32>
    %57 = math.exp %56 : vector<8x64xf32>
    %cst_36 = arith.constant 1.000000e+00 : f32
    %58 = vector.broadcast %cst_36 : f32 to vector<8x64xf32>
    %59 = arith.addf %58, %57 : vector<8x64xf32>
    %60 = arith.divf %58, %59 : vector<8x64xf32>
    %61 = vector.extract_strided_slice %60 {offsets = [0, 0], sizes = [8, 32], strides = [1, 1]} : vector<8x64xf32> to vector<8x32xf32>
    %62 = vector.extract_strided_slice %60 {offsets = [0, 32], sizes = [8, 32], strides = [1, 1]} : vector<8x64xf32> to vector<8x32xf32>
    %63 = vector.extract_strided_slice %52 {offsets = [0, 64], sizes = [8, 32], strides = [1, 1]} : vector<8x96xf32> to vector<8x32xf32>
    %64 = vector.extract_strided_slice %48 {offsets = [0, 64], sizes = [8, 32], strides = [1, 1]} : vector<8x96xf32> to vector<8x32xf32>
    %c0_37 = arith.constant 0 : index
    %c1_38 = arith.constant 1 : index
    %c0_39 = arith.constant 0 : index
    %c0_40 = arith.constant 0 : index
    %65 = vector.load %arg6[%c0_37, %c1_38, %c0_39, %c0_40] : memref<8x2x1x32xf32, #tpu.memory_space<vmem>>, vector<1x1x1x32xf32>
    %66 = vector.shape_cast %65 : vector<1x1x1x32xf32> to vector<1x32xf32>
    %67 = vector.broadcast %66 : vector<1x32xf32> to vector<8x32xf32>
    %68 = arith.addf %64, %67 : vector<8x32xf32>
    %69 = arith.mulf %61, %68 : vector<8x32xf32>
    %70 = arith.addf %63, %69 : vector<8x32xf32>
    %71 = math.tanh %70 : vector<8x32xf32>
    %cst_41 = arith.constant 1.000000e+00 : f32
    %72 = vector.broadcast %cst_41 : f32 to vector<8x32xf32>
    %73 = arith.subf %72, %62 : vector<8x32xf32>
    %74 = arith.mulf %73, %71 : vector<8x32xf32>
    %75 = arith.mulf %62, %3 : vector<8x32xf32>
    %76 = arith.addf %74, %75 : vector<8x32xf32>
    %77 = math.cos %76 : vector<8x32xf32>
    %cst_42 = arith.constant 1.000000e-10 : f32
    %78 = vector.broadcast %cst_42 : f32 to vector<8x32xf32>
    %79 = arith.addf %77, %78 : vector<8x32xf32>
    %80 = arith.truncf %79 : vector<8x32xf32> to vector<8x32xbf16>
    %c0_43 = arith.constant 0 : index
    %c0_44 = arith.constant 0 : index
    %c0_45 = arith.constant 0 : index
    %81 = vector.load %arg7[%c0_43, %c0_44, %c0_45] : memref<8x32x32xbf16, #tpu.memory_space<vmem>>, vector<1x32x32xbf16>
    %82 = vector.shape_cast %81 : vector<1x32x32xbf16> to vector<32x32xbf16>
    %cst_46 = arith.constant dense<0.000000e+00> : vector<8x32xf32>
    %83 = tpu.matmul %80, %82, %cst_46 {dimension_numbers = #tpu.dot_dimension_numbers<[1], [0], [0], [1], [0, 0, 1, 1], [], []>} : vector<8x32xbf16>, vector<32x32xbf16>, vector<8x32xf32> -> vector<8x32xf32>
    %c0_47 = arith.constant 0 : index
    %c0_48 = arith.constant 0 : index
    %c0_49 = arith.constant 0 : index
    %84 = vector.load %arg8[%c0_47, %c0_48, %c0_49] : memref<8x1x32xf32, #tpu.memory_space<vmem>>, vector<1x1x32xf32>
    %85 = vector.shape_cast %84 : vector<1x1x32xf32> to vector<1x32xf32>
    %86 = vector.broadcast %85 : vector<1x32xf32> to vector<8x32xf32>
    %87 = arith.addf %83, %86 : vector<8x32xf32>
    %cst_50 = arith.constant 0.000000e+00 : f32
    %88 = vector.broadcast %cst_50 : f32 to vector<8x32xf32>
    %89 = arith.maximumf %87, %88 : vector<8x32xf32>
    %90 = arith.truncf %89 : vector<8x32xf32> to vector<8x32xbf16>
    %c0_51 = arith.constant 0 : index
    %c0_52 = arith.constant 0 : index
    %c0_53 = arith.constant 0 : index
    %91 = vector.load %arg9[%c0_51, %c0_52, %c0_53] : memref<8x32x2xbf16, #tpu.memory_space<vmem>>, vector<1x32x2xbf16>
    %92 = vector.shape_cast %91 : vector<1x32x2xbf16> to vector<32x2xbf16>
    %cst_54 = arith.constant dense<0.000000e+00> : vector<8x2xf32>
    %93 = tpu.matmul %90, %92, %cst_54 {dimension_numbers = #tpu.dot_dimension_numbers<[1], [0], [0], [1], [0, 0, 1, 1], [], []>} : vector<8x32xbf16>, vector<32x2xbf16>, vector<8x2xf32> -> vector<8x2xf32>
    %c0_55 = arith.constant 0 : index
    %c0_56 = arith.constant 0 : index
    %c0_57 = arith.constant 0 : index
    %94 = vector.load %arg10[%c0_55, %c0_56, %c0_57] : memref<8x1x2xf32, #tpu.memory_space<vmem>>, vector<1x1x2xf32>
    %95 = vector.shape_cast %94 : vector<1x1x2xf32> to vector<1x2xf32>
    %96 = vector.broadcast %95 : vector<1x2xf32> to vector<8x2xf32>
    %97 = arith.addf %93, %96 : vector<8x2xf32>
    %cst_58 = arith.constant dense<0xFF800000> : vector<8xf32>
    %98 = vector.multi_reduction <maximumf>, %97, %cst_58 [1] : vector<8x2xf32> to vector<8xf32>
    %99 = vector.shape_cast %98 : vector<8xf32> to vector<8x1xf32>
    %100 = vector.broadcast %99 : vector<8x1xf32> to vector<8x2xf32>
    %101 = arith.subf %97, %100 : vector<8x2xf32>
    %102 = math.exp %101 : vector<8x2xf32>
    %cst_59 = arith.constant dense<0.000000e+00> : vector<8xf32>
    %103 = vector.multi_reduction <add>, %102, %cst_59 [1] : vector<8x2xf32> to vector<8xf32>
    %104 = vector.shape_cast %103 : vector<8xf32> to vector<8x1xf32>
    %105 = vector.broadcast %104 : vector<8x1xf32> to vector<8x2xf32>
    %106 = arith.divf %102, %105 : vector<8x2xf32>
    %cst_60 = arith.constant 1.000000e-10 : f32
    %107 = vector.broadcast %cst_60 : f32 to vector<8x2xf32>
    %108 = arith.addf %106, %107 : vector<8x2xf32>
    %c0_61 = arith.constant 0 : index
    %c0_62 = arith.constant 0 : index
    %c0_63 = arith.constant 0 : index
    %109 = vector.load %arg11[%c0_61, %c0_62, %c0_63] : memref<8x8x2xf32, #tpu.memory_space<vmem>>, vector<1x8x2xf32>
    %110 = vector.shape_cast %109 : vector<1x8x2xf32> to vector<8x2xf32>
    %111 = vector.shape_cast %108 : vector<8x2xf32> to vector<1x8x2xf32>
    tpu.vector_store %arg11[%c0_61, %c0_62, %c0_63], %111 {strides = array<i32>} : memref<8x8x2xf32, #tpu.memory_space<vmem>>, vector<1x8x2xf32>,
    %c0_64 = arith.constant 0 : index
    %c0_65 = arith.constant 0 : index
    %c0_66 = arith.constant 0 : index
    %112 = vector.load %arg2[%c0_64, %c0_65, %c0_66] : memref<8x8x1xf32, #tpu.memory_space<vmem>>, vector<1x8x1xf32>
    %113 = vector.shape_cast %112 : vector<1x8x1xf32> to vector<8x1xf32>
    %cst_67 = arith.constant dense<0.000000e+00> : vector<8xf32>
    %114 = vector.multi_reduction <add>, %108, %cst_67 [1] : vector<8x2xf32> to vector<8xf32>
    %115 = vector.shape_cast %114 : vector<8xf32> to vector<8x1xf32>
    %116 = arith.mulf %113, %115 : vector<8x1xf32>
    %117 = vector.extract_strided_slice %108 {offsets = [0, 0], sizes = [8, 1], strides = [1, 1]} : vector<8x2xf32> to vector<8x1xf32>
    %118 = arith.cmpf oge, %116, %117 : vector<8x1xf32>
    %119 = arith.extui %118 : vector<8x1xi1> to vector<8x1xi32>
    %c0_i32 = arith.constant 0 : i32
    %120 = vector.broadcast %c0_i32 : i32 to vector<8x1xi32>
    %121 = arith.cmpi eq, %119, %120 : vector<8x1xi32>
    %122 = vector.extract_strided_slice %108 {offsets = [0, 0], sizes = [8, 1], strides = [1, 1]} : vector<8x2xf32> to vector<8x1xf32>
    %123 = vector.extract_strided_slice %108 {offsets = [0, 1], sizes = [8, 1], strides = [1, 1]} : vector<8x2xf32> to vector<8x1xf32>
    %124 = arith.select %121, %122, %123 : vector<8x1xi1>, vector<8x1xf32>
    %c0_68 = arith.constant 0 : index
    %c0_69 = arith.constant 0 : index
    %c0_70 = arith.constant 0 : index
    %125 = vector.load %arg12[%c0_68, %c0_69, %c0_70] : memref<8x8x1xi32, #tpu.memory_space<vmem>>, vector<1x8x1xi32>
    %126 = vector.shape_cast %125 : vector<1x8x1xi32> to vector<8x1xi32>
    %127 = vector.shape_cast %119 : vector<8x1xi32> to vector<1x8x1xi32>
    tpu.vector_store %arg12[%c0_68, %c0_69, %c0_70], %127 {strides = array<i32>} : memref<8x8x1xi32, #tpu.memory_space<vmem>>, vector<1x8x1xi32>,
    %cst_71 = arith.constant 1.000000e-10 : f32
    %128 = vector.broadcast %cst_71 : f32 to vector<8x1xf32>
    %129 = arith.addf %124, %128 : vector<8x1xf32>
    %130 = math.log %129 : vector<8x1xf32>
    %131 = arith.addf %4, %130 : vector<8x1xf32>
    %132 = vector.broadcast %119 : vector<8x1xi32> to vector<8x32xi32>
    %133 = arith.cmpi eq, %0, %132 : vector<8x32xi32>
    %134 = arith.extui %133 : vector<8x32xi1> to vector<8x32xi32>
    %135 = arith.sitofp %134 : vector<8x32xi32> to vector<8x32xf32>
    %136 = arith.truncf %135 : vector<8x32xf32> to vector<8x32xbf16>
    %c1_72 = arith.constant 1 : index
    %c0_73 = arith.constant 0 : index
    %c0_74 = arith.constant 0 : index
    %c0_75 = arith.constant 0 : index
    %137 = vector.load %arg3[%c1_72, %c0_73, %c0_74, %c0_75] : memref<8x2x32x96xbf16, #tpu.memory_space<vmem>>, vector<1x1x32x96xbf16>
    %138 = vector.shape_cast %137 : vector<1x1x32x96xbf16> to vector<32x96xbf16>
    %cst_76 = arith.constant dense<0.000000e+00> : vector<8x96xf32>
    %139 = tpu.matmul %136, %138, %cst_76 {dimension_numbers = #tpu.dot_dimension_numbers<[1], [0], [0], [1], [0, 0, 1, 1], [], []>} : vector<8x32xbf16>, vector<32x96xbf16>, vector<8x96xf32> -> vector<8x96xf32>
    %140 = arith.truncf %40 : vector<8x32xf32> to vector<8x32xbf16>
    %c1_77 = arith.constant 1 : index
    %c0_78 = arith.constant 0 : index
    %c0_79 = arith.constant 0 : index
    %c0_80 = arith.constant 0 : index
    %141 = vector.load %arg4[%c1_77, %c0_78, %c0_79, %c0_80] : memref<8x2x32x96xbf16, #tpu.memory_space<vmem>>, vector<1x1x32x96xbf16>
    %142 = vector.shape_cast %141 : vector<1x1x32x96xbf16> to vector<32x96xbf16>
    %cst_81 = arith.constant dense<0.000000e+00> : vector<8x96xf32>
    %143 = tpu.matmul %140, %142, %cst_81 {dimension_numbers = #tpu.dot_dimension_numbers<[1], [0], [0], [1], [0, 0, 1, 1], [], []>} : vector<8x32xbf16>, vector<32x96xbf16>, vector<8x96xf32> -> vector<8x96xf32>
    %c1_82 = arith.constant 1 : index
    %c0_83 = arith.constant 0 : index
    %c0_84 = arith.constant 0 : index
    %c0_85 = arith.constant 0 : index
    %144 = vector.load %arg5[%c1_82, %c0_83, %c0_84, %c0_85] : memref<8x2x1x96xf32, #tpu.memory_space<vmem>>, vector<1x1x1x96xf32>
    %145 = vector.shape_cast %144 : vector<1x1x1x96xf32> to vector<1x96xf32>
    %146 = vector.broadcast %145 : vector<1x96xf32> to vector<8x96xf32>
    %147 = arith.addf %139, %146 : vector<8x96xf32>
    %148 = vector.extract_strided_slice %147 {offsets = [0, 0], sizes = [8, 64], strides = [1, 1]} : vector<8x96xf32> to vector<8x64xf32>
    %149 = vector.extract_strided_slice %143 {offsets = [0, 0], sizes = [8, 64], strides = [1, 1]} : vector<8x96xf32> to vector<8x64xf32>
    %150 = arith.addf %148, %149 : vector<8x64xf32>
    %151 = arith.negf %150 : vector<8x64xf32>
    %152 = math.exp %151 : vector<8x64xf32>
    %cst_86 = arith.constant 1.000000e+00 : f32
    %153 = vector.broadcast %cst_86 : f32 to vector<8x64xf32>
    %154 = arith.addf %153, %152 : vector<8x64xf32>
    %155 = arith.divf %153, %154 : vector<8x64xf32>
    %156 = vector.extract_strided_slice %155 {offsets = [0, 0], sizes = [8, 32], strides = [1, 1]} : vector<8x64xf32> to vector<8x32xf32>
    %157 = vector.extract_strided_slice %155 {offsets = [0, 32], sizes = [8, 32], strides = [1, 1]} : vector<8x64xf32> to vector<8x32xf32>
    %158 = vector.extract_strided_slice %147 {offsets = [0, 64], sizes = [8, 32], strides = [1, 1]} : vector<8x96xf32> to vector<8x32xf32>
    %159 = vector.extract_strided_slice %143 {offsets = [0, 64], sizes = [8, 32], strides = [1, 1]} : vector<8x96xf32> to vector<8x32xf32>
    %c1_87 = arith.constant 1 : index
    %c0_88 = arith.constant 0 : index
    %c0_89 = arith.constant 0 : index
    %c0_90 = arith.constant 0 : index
    %160 = vector.load %arg6[%c1_87, %c0_88, %c0_89, %c0_90] : memref<8x2x1x32xf32, #tpu.memory_space<vmem>>, vector<1x1x1x32xf32>
    %161 = vector.shape_cast %160 : vector<1x1x1x32xf32> to vector<1x32xf32>
    %162 = vector.broadcast %161 : vector<1x32xf32> to vector<8x32xf32>
    %163 = arith.addf %159, %162 : vector<8x32xf32>
    %164 = arith.mulf %156, %163 : vector<8x32xf32>
    %165 = arith.addf %158, %164 : vector<8x32xf32>
    %166 = math.tanh %165 : vector<8x32xf32>
    %cst_91 = arith.constant 1.000000e+00 : f32
    %167 = vector.broadcast %cst_91 : f32 to vector<8x32xf32>
    %168 = arith.subf %167, %157 : vector<8x32xf32>
    %169 = arith.mulf %168, %166 : vector<8x32xf32>
    %170 = arith.mulf %157, %40 : vector<8x32xf32>
    %171 = arith.addf %169, %170 : vector<8x32xf32>
    %172 = arith.truncf %171 : vector<8x32xf32> to vector<8x32xbf16>
    %c1_92 = arith.constant 1 : index
    %c1_93 = arith.constant 1 : index
    %c0_94 = arith.constant 0 : index
    %c0_95 = arith.constant 0 : index
    %173 = vector.load %arg3[%c1_92, %c1_93, %c0_94, %c0_95] : memref<8x2x32x96xbf16, #tpu.memory_space<vmem>>, vector<1x1x32x96xbf16>
    %174 = vector.shape_cast %173 : vector<1x1x32x96xbf16> to vector<32x96xbf16>
    %cst_96 = arith.constant dense<0.000000e+00> : vector<8x96xf32>
    %175 = tpu.matmul %172, %174, %cst_96 {dimension_numbers = #tpu.dot_dimension_numbers<[1], [0], [0], [1], [0, 0, 1, 1], [], []>} : vector<8x32xbf16>, vector<32x96xbf16>, vector<8x96xf32> -> vector<8x96xf32>
    %176 = arith.truncf %76 : vector<8x32xf32> to vector<8x32xbf16>
    %c1_97 = arith.constant 1 : index
    %c1_98 = arith.constant 1 : index
    %c0_99 = arith.constant 0 : index
    %c0_100 = arith.constant 0 : index
    %177 = vector.load %arg4[%c1_97, %c1_98, %c0_99, %c0_100] : memref<8x2x32x96xbf16, #tpu.memory_space<vmem>>, vector<1x1x32x96xbf16>
    %178 = vector.shape_cast %177 : vector<1x1x32x96xbf16> to vector<32x96xbf16>
    %cst_101 = arith.constant dense<0.000000e+00> : vector<8x96xf32>
    %179 = tpu.matmul %176, %178, %cst_101 {dimension_numbers = #tpu.dot_dimension_numbers<[1], [0], [0], [1], [0, 0, 1, 1], [], []>} : vector<8x32xbf16>, vector<32x96xbf16>, vector<8x96xf32> -> vector<8x96xf32>
    %c1_102 = arith.constant 1 : index
    %c1_103 = arith.constant 1 : index
    %c0_104 = arith.constant 0 : index
    %c0_105 = arith.constant 0 : index
    %180 = vector.load %arg5[%c1_102, %c1_103, %c0_104, %c0_105] : memref<8x2x1x96xf32, #tpu.memory_space<vmem>>, vector<1x1x1x96xf32>
    %181 = vector.shape_cast %180 : vector<1x1x1x96xf32> to vector<1x96xf32>
    %182 = vector.broadcast %181 : vector<1x96xf32> to vector<8x96xf32>
    %183 = arith.addf %175, %182 : vector<8x96xf32>
    %184 = vector.extract_strided_slice %183 {offsets = [0, 0], sizes = [8, 64], strides = [1, 1]} : vector<8x96xf32> to vector<8x64xf32>
    %185 = vector.extract_strided_slice %179 {offsets = [0, 0], sizes = [8, 64], strides = [1, 1]} : vector<8x96xf32> to vector<8x64xf32>
    %186 = arith.addf %184, %185 : vector<8x64xf32>
    %187 = arith.negf %186 : vector<8x64xf32>
    %188 = math.exp %187 : vector<8x64xf32>
    %cst_106 = arith.constant 1.000000e+00 : f32
    %189 = vector.broadcast %cst_106 : f32 to vector<8x64xf32>
    %190 = arith.addf %189, %188 : vector<8x64xf32>
    %191 = arith.divf %189, %190 : vector<8x64xf32>
    %192 = vector.extract_strided_slice %191 {offsets = [0, 0], sizes = [8, 32], strides = [1, 1]} : vector<8x64xf32> to vector<8x32xf32>
    %193 = vector.extract_strided_slice %191 {offsets = [0, 32], sizes = [8, 32], strides = [1, 1]} : vector<8x64xf32> to vector<8x32xf32>
    %194 = vector.extract_strided_slice %183 {offsets = [0, 64], sizes = [8, 32], strides = [1, 1]} : vector<8x96xf32> to vector<8x32xf32>
    %195 = vector.extract_strided_slice %179 {offsets = [0, 64], sizes = [8, 32], strides = [1, 1]} : vector<8x96xf32> to vector<8x32xf32>
    %c1_107 = arith.constant 1 : index
    %c1_108 = arith.constant 1 : index
    %c0_109 = arith.constant 0 : index
    %c0_110 = arith.constant 0 : index
    %196 = vector.load %arg6[%c1_107, %c1_108, %c0_109, %c0_110] : memref<8x2x1x32xf32, #tpu.memory_space<vmem>>, vector<1x1x1x32xf32>
    %197 = vector.shape_cast %196 : vector<1x1x1x32xf32> to vector<1x32xf32>
    %198 = vector.broadcast %197 : vector<1x32xf32> to vector<8x32xf32>
    %199 = arith.addf %195, %198 : vector<8x32xf32>
    %200 = arith.mulf %192, %199 : vector<8x32xf32>
    %201 = arith.addf %194, %200 : vector<8x32xf32>
    %202 = math.tanh %201 : vector<8x32xf32>
    %cst_111 = arith.constant 1.000000e+00 : f32
    %203 = vector.broadcast %cst_111 : f32 to vector<8x32xf32>
    %204 = arith.subf %203, %193 : vector<8x32xf32>
    %205 = arith.mulf %204, %202 : vector<8x32xf32>
    %206 = arith.mulf %193, %76 : vector<8x32xf32>
    %207 = arith.addf %205, %206 : vector<8x32xf32>
    %208 = math.cos %207 : vector<8x32xf32>
    %cst_112 = arith.constant 1.000000e-10 : f32
    %209 = vector.broadcast %cst_112 : f32 to vector<8x32xf32>
    %210 = arith.addf %208, %209 : vector<8x32xf32>
    %211 = arith.truncf %210 : vector<8x32xf32> to vector<8x32xbf16>
    %c1_113 = arith.constant 1 : index
    %c0_114 = arith.constant 0 : index
    %c0_115 = arith.constant 0 : index
    %212 = vector.load %arg7[%c1_113, %c0_114, %c0_115] : memref<8x32x32xbf16, #tpu.memory_space<vmem>>, vector<1x32x32xbf16>
    %213 = vector.shape_cast %212 : vector<1x32x32xbf16> to vector<32x32xbf16>
    %cst_116 = arith.constant dense<0.000000e+00> : vector<8x32xf32>
    %214 = tpu.matmul %211, %213, %cst_116 {dimension_numbers = #tpu.dot_dimension_numbers<[1], [0], [0], [1], [0, 0, 1, 1], [], []>} : vector<8x32xbf16>, vector<32x32xbf16>, vector<8x32xf32> -> vector<8x32xf32>
    %c1_117 = arith.constant 1 : index
    %c0_118 = arith.constant 0 : index
    %c0_119 = arith.constant 0 : index
    %215 = vector.load %arg8[%c1_117, %c0_118, %c0_119] : memref<8x1x32xf32, #tpu.memory_space<vmem>>, vector<1x1x32xf32>
    %216 = vector.shape_cast %215 : vector<1x1x32xf32> to vector<1x32xf32>
    %217 = vector.broadcast %216 : vector<1x32xf32> to vector<8x32xf32>
    %218 = arith.addf %214, %217 : vector<8x32xf32>
    %cst_120 = arith.constant 0.000000e+00 : f32
    %219 = vector.broadcast %cst_120 : f32 to vector<8x32xf32>
    %220 = arith.maximumf %218, %219 : vector<8x32xf32>
    %221 = arith.truncf %220 : vector<8x32xf32> to vector<8x32xbf16>
    %c1_121 = arith.constant 1 : index
    %c0_122 = arith.constant 0 : index
    %c0_123 = arith.constant 0 : index
    %222 = vector.load %arg9[%c1_121, %c0_122, %c0_123] : memref<8x32x2xbf16, #tpu.memory_space<vmem>>, vector<1x32x2xbf16>
    %223 = vector.shape_cast %222 : vector<1x32x2xbf16> to vector<32x2xbf16>
    %cst_124 = arith.constant dense<0.000000e+00> : vector<8x2xf32>
    %224 = tpu.matmul %221, %223, %cst_124 {dimension_numbers = #tpu.dot_dimension_numbers<[1], [0], [0], [1], [0, 0, 1, 1], [], []>} : vector<8x32xbf16>, vector<32x2xbf16>, vector<8x2xf32> -> vector<8x2xf32>
    %c1_125 = arith.constant 1 : index
    %c0_126 = arith.constant 0 : index
    %c0_127 = arith.constant 0 : index
    %225 = vector.load %arg10[%c1_125, %c0_126, %c0_127] : memref<8x1x2xf32, #tpu.memory_space<vmem>>, vector<1x1x2xf32>
    %226 = vector.shape_cast %225 : vector<1x1x2xf32> to vector<1x2xf32>
    %227 = vector.broadcast %226 : vector<1x2xf32> to vector<8x2xf32>
    %228 = arith.addf %224, %227 : vector<8x2xf32>
    %cst_128 = arith.constant dense<0xFF800000> : vector<8xf32>
    %229 = vector.multi_reduction <maximumf>, %228, %cst_128 [1] : vector<8x2xf32> to vector<8xf32>
    %230 = vector.shape_cast %229 : vector<8xf32> to vector<8x1xf32>
    %231 = vector.broadcast %230 : vector<8x1xf32> to vector<8x2xf32>
    %232 = arith.subf %228, %231 : vector<8x2xf32>
    %233 = math.exp %232 : vector<8x2xf32>
    %cst_129 = arith.constant dense<0.000000e+00> : vector<8xf32>
    %234 = vector.multi_reduction <add>, %233, %cst_129 [1] : vector<8x2xf32> to vector<8xf32>
    %235 = vector.shape_cast %234 : vector<8xf32> to vector<8x1xf32>
    %236 = vector.broadcast %235 : vector<8x1xf32> to vector<8x2xf32>
    %237 = arith.divf %233, %236 : vector<8x2xf32>
    %cst_130 = arith.constant 1.000000e-10 : f32
    %238 = vector.broadcast %cst_130 : f32 to vector<8x2xf32>
    %239 = arith.addf %237, %238 : vector<8x2xf32>
    %c1_131 = arith.constant 1 : index
    %c0_132 = arith.constant 0 : index
    %c0_133 = arith.constant 0 : index
    %240 = vector.load %arg11[%c1_131, %c0_132, %c0_133] : memref<8x8x2xf32, #tpu.memory_space<vmem>>, vector<1x8x2xf32>
    %241 = vector.shape_cast %240 : vector<1x8x2xf32> to vector<8x2xf32>
    %242 = vector.shape_cast %239 : vector<8x2xf32> to vector<1x8x2xf32>
    tpu.vector_store %arg11[%c1_131, %c0_132, %c0_133], %242 {strides = array<i32>} : memref<8x8x2xf32, #tpu.memory_space<vmem>>, vector<1x8x2xf32>,
    %c1_134 = arith.constant 1 : index
    %c0_135 = arith.constant 0 : index
    %c0_136 = arith.constant 0 : index
    %243 = vector.load %arg2[%c1_134, %c0_135, %c0_136] : memref<8x8x1xf32, #tpu.memory_space<vmem>>, vector<1x8x1xf32>
    %244 = vector.shape_cast %243 : vector<1x8x1xf32> to vector<8x1xf32>
    %cst_137 = arith.constant dense<0.000000e+00> : vector<8xf32>
    %245 = vector.multi_reduction <add>, %239, %cst_137 [1] : vector<8x2xf32> to vector<8xf32>
    %246 = vector.shape_cast %245 : vector<8xf32> to vector<8x1xf32>
    %247 = arith.mulf %244, %246 : vector<8x1xf32>
    %248 = vector.extract_strided_slice %239 {offsets = [0, 0], sizes = [8, 1], strides = [1, 1]} : vector<8x2xf32> to vector<8x1xf32>
    %249 = arith.cmpf oge, %247, %248 : vector<8x1xf32>
    %250 = arith.extui %249 : vector<8x1xi1> to vector<8x1xi32>
    %c0_i32_138 = arith.constant 0 : i32
    %251 = vector.broadcast %c0_i32_138 : i32 to vector<8x1xi32>
    %252 = arith.cmpi eq, %250, %251 : vector<8x1xi32>
    %253 = vector.extract_strided_slice %239 {offsets = [0, 0], sizes = [8, 1], strides = [1, 1]} : vector<8x2xf32> to vector<8x1xf32>
    %254 = vector.extract_strided_slice %239 {offsets = [0, 1], sizes = [8, 1], strides = [1, 1]} : vector<8x2xf32> to vector<8x1xf32>
    %255 = arith.select %252, %253, %254 : vector<8x1xi1>, vector<8x1xf32>
    %c1_139 = arith.constant 1 : index
    %c0_140 = arith.constant 0 : index
    %c0_141 = arith.constant 0 : index
    %256 = vector.load %arg12[%c1_139, %c0_140, %c0_141] : memref<8x8x1xi32, #tpu.memory_space<vmem>>, vector<1x8x1xi32>
    %257 = vector.shape_cast %256 : vector<1x8x1xi32> to vector<8x1xi32>
    %258 = vector.shape_cast %250 : vector<8x1xi32> to vector<1x8x1xi32>
    tpu.vector_store %arg12[%c1_139, %c0_140, %c0_141], %258 {strides = array<i32>} : memref<8x8x1xi32, #tpu.memory_space<vmem>>, vector<1x8x1xi32>,
    %cst_142 = arith.constant 1.000000e-10 : f32
    %259 = vector.broadcast %cst_142 : f32 to vector<8x1xf32>
    %260 = arith.addf %255, %259 : vector<8x1xf32>
    %261 = math.log %260 : vector<8x1xf32>
    %262 = arith.addf %131, %261 : vector<8x1xf32>
    %263 = vector.broadcast %250 : vector<8x1xi32> to vector<8x32xi32>
    %264 = arith.cmpi eq, %0, %263 : vector<8x32xi32>
    %265 = arith.extui %264 : vector<8x32xi1> to vector<8x32xi32>
    %266 = arith.sitofp %265 : vector<8x32xi32> to vector<8x32xf32>
    %267 = arith.truncf %266 : vector<8x32xf32> to vector<8x32xbf16>
    %c2 = arith.constant 2 : index
    %c0_143 = arith.constant 0 : index
    %c0_144 = arith.constant 0 : index
    %c0_145 = arith.constant 0 : index
    %268 = vector.load %arg3[%c2, %c0_143, %c0_144, %c0_145] : memref<8x2x32x96xbf16, #tpu.memory_space<vmem>>, vector<1x1x32x96xbf16>
    %269 = vector.shape_cast %268 : vector<1x1x32x96xbf16> to vector<32x96xbf16>
    %cst_146 = arith.constant dense<0.000000e+00> : vector<8x96xf32>
    %270 = tpu.matmul %267, %269, %cst_146 {dimension_numbers = #tpu.dot_dimension_numbers<[1], [0], [0], [1], [0, 0, 1, 1], [], []>} : vector<8x32xbf16>, vector<32x96xbf16>, vector<8x96xf32> -> vector<8x96xf32>
    %271 = arith.truncf %171 : vector<8x32xf32> to vector<8x32xbf16>
    %c2_147 = arith.constant 2 : index
    %c0_148 = arith.constant 0 : index
    %c0_149 = arith.constant 0 : index
    %c0_150 = arith.constant 0 : index
    %272 = vector.load %arg4[%c2_147, %c0_148, %c0_149, %c0_150] : memref<8x2x32x96xbf16, #tpu.memory_space<vmem>>, vector<1x1x32x96xbf16>
    %273 = vector.shape_cast %272 : vector<1x1x32x96xbf16> to vector<32x96xbf16>
    %cst_151 = arith.constant dense<0.000000e+00> : vector<8x96xf32>
    %274 = tpu.matmul %271, %273, %cst_151 {dimension_numbers = #tpu.dot_dimension_numbers<[1], [0], [0], [1], [0, 0, 1, 1], [], []>} : vector<8x32xbf16>, vector<32x96xbf16>, vector<8x96xf32> -> vector<8x96xf32>
    %c2_152 = arith.constant 2 : index
    %c0_153 = arith.constant 0 : index
    %c0_154 = arith.constant 0 : index
    %c0_155 = arith.constant 0 : index
    %275 = vector.load %arg5[%c2_152, %c0_153, %c0_154, %c0_155] : memref<8x2x1x96xf32, #tpu.memory_space<vmem>>, vector<1x1x1x96xf32>
    %276 = vector.shape_cast %275 : vector<1x1x1x96xf32> to vector<1x96xf32>
    %277 = vector.broadcast %276 : vector<1x96xf32> to vector<8x96xf32>
    %278 = arith.addf %270, %277 : vector<8x96xf32>
    %279 = vector.extract_strided_slice %278 {offsets = [0, 0], sizes = [8, 64], strides = [1, 1]} : vector<8x96xf32> to vector<8x64xf32>
    %280 = vector.extract_strided_slice %274 {offsets = [0, 0], sizes = [8, 64], strides = [1, 1]} : vector<8x96xf32> to vector<8x64xf32>
    %281 = arith.addf %279, %280 : vector<8x64xf32>
    %282 = arith.negf %281 : vector<8x64xf32>
    %283 = math.exp %282 : vector<8x64xf32>
    %cst_156 = arith.constant 1.000000e+00 : f32
    %284 = vector.broadcast %cst_156 : f32 to vector<8x64xf32>
    %285 = arith.addf %284, %283 : vector<8x64xf32>
    %286 = arith.divf %284, %285 : vector<8x64xf32>
    %287 = vector.extract_strided_slice %286 {offsets = [0, 0], sizes = [8, 32], strides = [1, 1]} : vector<8x64xf32> to vector<8x32xf32>
    %288 = vector.extract_strided_slice %286 {offsets = [0, 32], sizes = [8, 32], strides = [1, 1]} : vector<8x64xf32> to vector<8x32xf32>
    %289 = vector.extract_strided_slice %278 {offsets = [0, 64], sizes = [8, 32], strides = [1, 1]} : vector<8x96xf32> to vector<8x32xf32>
    %290 = vector.extract_strided_slice %274 {offsets = [0, 64], sizes = [8, 32], strides = [1, 1]} : vector<8x96xf32> to vector<8x32xf32>
    %c2_157 = arith.constant 2 : index
    %c0_158 = arith.constant 0 : index
    %c0_159 = arith.constant 0 : index
    %c0_160 = arith.constant 0 : index
    %291 = vector.load %arg6[%c2_157, %c0_158, %c0_159, %c0_160] : memref<8x2x1x32xf32, #tpu.memory_space<vmem>>, vector<1x1x1x32xf32>
    %292 = vector.shape_cast %291 : vector<1x1x1x32xf32> to vector<1x32xf32>
    %293 = vector.broadcast %292 : vector<1x32xf32> to vector<8x32xf32>
    %294 = arith.addf %290, %293 : vector<8x32xf32>
    %295 = arith.mulf %287, %294 : vector<8x32xf32>
    %296 = arith.addf %289, %295 : vector<8x32xf32>
    %297 = math.tanh %296 : vector<8x32xf32>
    %cst_161 = arith.constant 1.000000e+00 : f32
    %298 = vector.broadcast %cst_161 : f32 to vector<8x32xf32>
    %299 = arith.subf %298, %288 : vector<8x32xf32>
    %300 = arith.mulf %299, %297 : vector<8x32xf32>
    %301 = arith.mulf %288, %171 : vector<8x32xf32>
    %302 = arith.addf %300, %301 : vector<8x32xf32>
    %303 = arith.truncf %302 : vector<8x32xf32> to vector<8x32xbf16>
    %c2_162 = arith.constant 2 : index
    %c1_163 = arith.constant 1 : index
    %c0_164 = arith.constant 0 : index
    %c0_165 = arith.constant 0 : index
    %304 = vector.load %arg3[%c2_162, %c1_163, %c0_164, %c0_165] : memref<8x2x32x96xbf16, #tpu.memory_space<vmem>>, vector<1x1x32x96xbf16>
    %305 = vector.shape_cast %304 : vector<1x1x32x96xbf16> to vector<32x96xbf16>
    %cst_166 = arith.constant dense<0.000000e+00> : vector<8x96xf32>
    %306 = tpu.matmul %303, %305, %cst_166 {dimension_numbers = #tpu.dot_dimension_numbers<[1], [0], [0], [1], [0, 0, 1, 1], [], []>} : vector<8x32xbf16>, vector<32x96xbf16>, vector<8x96xf32> -> vector<8x96xf32>
    %307 = arith.truncf %207 : vector<8x32xf32> to vector<8x32xbf16>
    %c2_167 = arith.constant 2 : index
    %c1_168 = arith.constant 1 : index
    %c0_169 = arith.constant 0 : index
    %c0_170 = arith.constant 0 : index
    %308 = vector.load %arg4[%c2_167, %c1_168, %c0_169, %c0_170] : memref<8x2x32x96xbf16, #tpu.memory_space<vmem>>, vector<1x1x32x96xbf16>
    %309 = vector.shape_cast %308 : vector<1x1x32x96xbf16> to vector<32x96xbf16>
    %cst_171 = arith.constant dense<0.000000e+00> : vector<8x96xf32>
    %310 = tpu.matmul %307, %309, %cst_171 {dimension_numbers = #tpu.dot_dimension_numbers<[1], [0], [0], [1], [0, 0, 1, 1], [], []>} : vector<8x32xbf16>, vector<32x96xbf16>, vector<8x96xf32> -> vector<8x96xf32>
    %c2_172 = arith.constant 2 : index
    %c1_173 = arith.constant 1 : index
    %c0_174 = arith.constant 0 : index
    %c0_175 = arith.constant 0 : index
    %311 = vector.load %arg5[%c2_172, %c1_173, %c0_174, %c0_175] : memref<8x2x1x96xf32, #tpu.memory_space<vmem>>, vector<1x1x1x96xf32>
    %312 = vector.shape_cast %311 : vector<1x1x1x96xf32> to vector<1x96xf32>
    %313 = vector.broadcast %312 : vector<1x96xf32> to vector<8x96xf32>
    %314 = arith.addf %306, %313 : vector<8x96xf32>
    %315 = vector.extract_strided_slice %314 {offsets = [0, 0], sizes = [8, 64], strides = [1, 1]} : vector<8x96xf32> to vector<8x64xf32>
    %316 = vector.extract_strided_slice %310 {offsets = [0, 0], sizes = [8, 64], strides = [1, 1]} : vector<8x96xf32> to vector<8x64xf32>
    %317 = arith.addf %315, %316 : vector<8x64xf32>
    %318 = arith.negf %317 : vector<8x64xf32>
    %319 = math.exp %318 : vector<8x64xf32>
    %cst_176 = arith.constant 1.000000e+00 : f32
    %320 = vector.broadcast %cst_176 : f32 to vector<8x64xf32>
    %321 = arith.addf %320, %319 : vector<8x64xf32>
    %322 = arith.divf %320, %321 : vector<8x64xf32>
    %323 = vector.extract_strided_slice %322 {offsets = [0, 0], sizes = [8, 32], strides = [1, 1]} : vector<8x64xf32> to vector<8x32xf32>
    %324 = vector.extract_strided_slice %322 {offsets = [0, 32], sizes = [8, 32], strides = [1, 1]} : vector<8x64xf32> to vector<8x32xf32>
    %325 = vector.extract_strided_slice %314 {offsets = [0, 64], sizes = [8, 32], strides = [1, 1]} : vector<8x96xf32> to vector<8x32xf32>
    %326 = vector.extract_strided_slice %310 {offsets = [0, 64], sizes = [8, 32], strides = [1, 1]} : vector<8x96xf32> to vector<8x32xf32>
    %c2_177 = arith.constant 2 : index
    %c1_178 = arith.constant 1 : index
    %c0_179 = arith.constant 0 : index
    %c0_180 = arith.constant 0 : index
    %327 = vector.load %arg6[%c2_177, %c1_178, %c0_179, %c0_180] : memref<8x2x1x32xf32, #tpu.memory_space<vmem>>, vector<1x1x1x32xf32>
    %328 = vector.shape_cast %327 : vector<1x1x1x32xf32> to vector<1x32xf32>
    %329 = vector.broadcast %328 : vector<1x32xf32> to vector<8x32xf32>
    %330 = arith.addf %326, %329 : vector<8x32xf32>
    %331 = arith.mulf %323, %330 : vector<8x32xf32>
    %332 = arith.addf %325, %331 : vector<8x32xf32>
    %333 = math.tanh %332 : vector<8x32xf32>
    %cst_181 = arith.constant 1.000000e+00 : f32
    %334 = vector.broadcast %cst_181 : f32 to vector<8x32xf32>
    %335 = arith.subf %334, %324 : vector<8x32xf32>
    %336 = arith.mulf %335, %333 : vector<8x32xf32>
    %337 = arith.mulf %324, %207 : vector<8x32xf32>
    %338 = arith.addf %336, %337 : vector<8x32xf32>
    %339 = math.cos %338 : vector<8x32xf32>
    %cst_182 = arith.constant 1.000000e-10 : f32
    %340 = vector.broadcast %cst_182 : f32 to vector<8x32xf32>
    %341 = arith.addf %339, %340 : vector<8x32xf32>
    %342 = arith.truncf %341 : vector<8x32xf32> to vector<8x32xbf16>
    %c2_183 = arith.constant 2 : index
    %c0_184 = arith.constant 0 : index
    %c0_185 = arith.constant 0 : index
    %343 = vector.load %arg7[%c2_183, %c0_184, %c0_185] : memref<8x32x32xbf16, #tpu.memory_space<vmem>>, vector<1x32x32xbf16>
    %344 = vector.shape_cast %343 : vector<1x32x32xbf16> to vector<32x32xbf16>
    %cst_186 = arith.constant dense<0.000000e+00> : vector<8x32xf32>
    %345 = tpu.matmul %342, %344, %cst_186 {dimension_numbers = #tpu.dot_dimension_numbers<[1], [0], [0], [1], [0, 0, 1, 1], [], []>} : vector<8x32xbf16>, vector<32x32xbf16>, vector<8x32xf32> -> vector<8x32xf32>
    %c2_187 = arith.constant 2 : index
    %c0_188 = arith.constant 0 : index
    %c0_189 = arith.constant 0 : index
    %346 = vector.load %arg8[%c2_187, %c0_188, %c0_189] : memref<8x1x32xf32, #tpu.memory_space<vmem>>, vector<1x1x32xf32>
    %347 = vector.shape_cast %346 : vector<1x1x32xf32> to vector<1x32xf32>
    %348 = vector.broadcast %347 : vector<1x32xf32> to vector<8x32xf32>
    %349 = arith.addf %345, %348 : vector<8x32xf32>
    %cst_190 = arith.constant 0.000000e+00 : f32
    %350 = vector.broadcast %cst_190 : f32 to vector<8x32xf32>
    %351 = arith.maximumf %349, %350 : vector<8x32xf32>
    %352 = arith.truncf %351 : vector<8x32xf32> to vector<8x32xbf16>
    %c2_191 = arith.constant 2 : index
    %c0_192 = arith.constant 0 : index
    %c0_193 = arith.constant 0 : index
    %353 = vector.load %arg9[%c2_191, %c0_192, %c0_193] : memref<8x32x2xbf16, #tpu.memory_space<vmem>>, vector<1x32x2xbf16>
    %354 = vector.shape_cast %353 : vector<1x32x2xbf16> to vector<32x2xbf16>
    %cst_194 = arith.constant dense<0.000000e+00> : vector<8x2xf32>
    %355 = tpu.matmul %352, %354, %cst_194 {dimension_numbers = #tpu.dot_dimension_numbers<[1], [0], [0], [1], [0, 0, 1, 1], [], []>} : vector<8x32xbf16>, vector<32x2xbf16>, vector<8x2xf32> -> vector<8x2xf32>
    %c2_195 = arith.constant 2 : index
    %c0_196 = arith.constant 0 : index
    %c0_197 = arith.constant 0 : index
    %356 = vector.load %arg10[%c2_195, %c0_196, %c0_197] : memref<8x1x2xf32, #tpu.memory_space<vmem>>, vector<1x1x2xf32>
    %357 = vector.shape_cast %356 : vector<1x1x2xf32> to vector<1x2xf32>
    %358 = vector.broadcast %357 : vector<1x2xf32> to vector<8x2xf32>
    %359 = arith.addf %355, %358 : vector<8x2xf32>
    %cst_198 = arith.constant dense<0xFF800000> : vector<8xf32>
    %360 = vector.multi_reduction <maximumf>, %359, %cst_198 [1] : vector<8x2xf32> to vector<8xf32>
    %361 = vector.shape_cast %360 : vector<8xf32> to vector<8x1xf32>
    %362 = vector.broadcast %361 : vector<8x1xf32> to vector<8x2xf32>
    %363 = arith.subf %359, %362 : vector<8x2xf32>
    %364 = math.exp %363 : vector<8x2xf32>
    %cst_199 = arith.constant dense<0.000000e+00> : vector<8xf32>
    %365 = vector.multi_reduction <add>, %364, %cst_199 [1] : vector<8x2xf32> to vector<8xf32>
    %366 = vector.shape_cast %365 : vector<8xf32> to vector<8x1xf32>
    %367 = vector.broadcast %366 : vector<8x1xf32> to vector<8x2xf32>
    %368 = arith.divf %364, %367 : vector<8x2xf32>
    %cst_200 = arith.constant 1.000000e-10 : f32
    %369 = vector.broadcast %cst_200 : f32 to vector<8x2xf32>
    %370 = arith.addf %368, %369 : vector<8x2xf32>
    %c2_201 = arith.constant 2 : index
    %c0_202 = arith.constant 0 : index
    %c0_203 = arith.constant 0 : index
    %371 = vector.load %arg11[%c2_201, %c0_202, %c0_203] : memref<8x8x2xf32, #tpu.memory_space<vmem>>, vector<1x8x2xf32>
    %372 = vector.shape_cast %371 : vector<1x8x2xf32> to vector<8x2xf32>
    %373 = vector.shape_cast %370 : vector<8x2xf32> to vector<1x8x2xf32>
    tpu.vector_store %arg11[%c2_201, %c0_202, %c0_203], %373 {strides = array<i32>} : memref<8x8x2xf32, #tpu.memory_space<vmem>>, vector<1x8x2xf32>,
    %c2_204 = arith.constant 2 : index
    %c0_205 = arith.constant 0 : index
    %c0_206 = arith.constant 0 : index
    %374 = vector.load %arg2[%c2_204, %c0_205, %c0_206] : memref<8x8x1xf32, #tpu.memory_space<vmem>>, vector<1x8x1xf32>
    %375 = vector.shape_cast %374 : vector<1x8x1xf32> to vector<8x1xf32>
    %cst_207 = arith.constant dense<0.000000e+00> : vector<8xf32>
    %376 = vector.multi_reduction <add>, %370, %cst_207 [1] : vector<8x2xf32> to vector<8xf32>
    %377 = vector.shape_cast %376 : vector<8xf32> to vector<8x1xf32>
    %378 = arith.mulf %375, %377 : vector<8x1xf32>
    %379 = vector.extract_strided_slice %370 {offsets = [0, 0], sizes = [8, 1], strides = [1, 1]} : vector<8x2xf32> to vector<8x1xf32>
    %380 = arith.cmpf oge, %378, %379 : vector<8x1xf32>
    %381 = arith.extui %380 : vector<8x1xi1> to vector<8x1xi32>
    %c0_i32_208 = arith.constant 0 : i32
    %382 = vector.broadcast %c0_i32_208 : i32 to vector<8x1xi32>
    %383 = arith.cmpi eq, %381, %382 : vector<8x1xi32>
    %384 = vector.extract_strided_slice %370 {offsets = [0, 0], sizes = [8, 1], strides = [1, 1]} : vector<8x2xf32> to vector<8x1xf32>
    %385 = vector.extract_strided_slice %370 {offsets = [0, 1], sizes = [8, 1], strides = [1, 1]} : vector<8x2xf32> to vector<8x1xf32>
    %386 = arith.select %383, %384, %385 : vector<8x1xi1>, vector<8x1xf32>
    %c2_209 = arith.constant 2 : index
    %c0_210 = arith.constant 0 : index
    %c0_211 = arith.constant 0 : index
    %387 = vector.load %arg12[%c2_209, %c0_210, %c0_211] : memref<8x8x1xi32, #tpu.memory_space<vmem>>, vector<1x8x1xi32>
    %388 = vector.shape_cast %387 : vector<1x8x1xi32> to vector<8x1xi32>
    %389 = vector.shape_cast %381 : vector<8x1xi32> to vector<1x8x1xi32>
    tpu.vector_store %arg12[%c2_209, %c0_210, %c0_211], %389 {strides = array<i32>} : memref<8x8x1xi32, #tpu.memory_space<vmem>>, vector<1x8x1xi32>,
    %cst_212 = arith.constant 1.000000e-10 : f32
    %390 = vector.broadcast %cst_212 : f32 to vector<8x1xf32>
    %391 = arith.addf %386, %390 : vector<8x1xf32>
    %392 = math.log %391 : vector<8x1xf32>
    %393 = arith.addf %262, %392 : vector<8x1xf32>
    %394 = vector.broadcast %381 : vector<8x1xi32> to vector<8x32xi32>
    %395 = arith.cmpi eq, %0, %394 : vector<8x32xi32>
    %396 = arith.extui %395 : vector<8x32xi1> to vector<8x32xi32>
    %397 = arith.sitofp %396 : vector<8x32xi32> to vector<8x32xf32>
    %398 = arith.truncf %397 : vector<8x32xf32> to vector<8x32xbf16>
    %c3 = arith.constant 3 : index
    %c0_213 = arith.constant 0 : index
    %c0_214 = arith.constant 0 : index
    %c0_215 = arith.constant 0 : index
    %399 = vector.load %arg3[%c3, %c0_213, %c0_214, %c0_215] : memref<8x2x32x96xbf16, #tpu.memory_space<vmem>>, vector<1x1x32x96xbf16>
    %400 = vector.shape_cast %399 : vector<1x1x32x96xbf16> to vector<32x96xbf16>
    %cst_216 = arith.constant dense<0.000000e+00> : vector<8x96xf32>
    %401 = tpu.matmul %398, %400, %cst_216 {dimension_numbers = #tpu.dot_dimension_numbers<[1], [0], [0], [1], [0, 0, 1, 1], [], []>} : vector<8x32xbf16>, vector<32x96xbf16>, vector<8x96xf32> -> vector<8x96xf32>
    %402 = arith.truncf %302 : vector<8x32xf32> to vector<8x32xbf16>
    %c3_217 = arith.constant 3 : index
    %c0_218 = arith.constant 0 : index
    %c0_219 = arith.constant 0 : index
    %c0_220 = arith.constant 0 : index
    %403 = vector.load %arg4[%c3_217, %c0_218, %c0_219, %c0_220] : memref<8x2x32x96xbf16, #tpu.memory_space<vmem>>, vector<1x1x32x96xbf16>
    %404 = vector.shape_cast %403 : vector<1x1x32x96xbf16> to vector<32x96xbf16>
    %cst_221 = arith.constant dense<0.000000e+00> : vector<8x96xf32>
    %405 = tpu.matmul %402, %404, %cst_221 {dimension_numbers = #tpu.dot_dimension_numbers<[1], [0], [0], [1], [0, 0, 1, 1], [], []>} : vector<8x32xbf16>, vector<32x96xbf16>, vector<8x96xf32> -> vector<8x96xf32>
    %c3_222 = arith.constant 3 : index
    %c0_223 = arith.constant 0 : index
    %c0_224 = arith.constant 0 : index
    %c0_225 = arith.constant 0 : index
    %406 = vector.load %arg5[%c3_222, %c0_223, %c0_224, %c0_225] : memref<8x2x1x96xf32, #tpu.memory_space<vmem>>, vector<1x1x1x96xf32>
    %407 = vector.shape_cast %406 : vector<1x1x1x96xf32> to vector<1x96xf32>
    %408 = vector.broadcast %407 : vector<1x96xf32> to vector<8x96xf32>
    %409 = arith.addf %401, %408 : vector<8x96xf32>
    %410 = vector.extract_strided_slice %409 {offsets = [0, 0], sizes = [8, 64], strides = [1, 1]} : vector<8x96xf32> to vector<8x64xf32>
    %411 = vector.extract_strided_slice %405 {offsets = [0, 0], sizes = [8, 64], strides = [1, 1]} : vector<8x96xf32> to vector<8x64xf32>
    %412 = arith.addf %410, %411 : vector<8x64xf32>
    %413 = arith.negf %412 : vector<8x64xf32>
    %414 = math.exp %413 : vector<8x64xf32>
    %cst_226 = arith.constant 1.000000e+00 : f32
    %415 = vector.broadcast %cst_226 : f32 to vector<8x64xf32>
    %416 = arith.addf %415, %414 : vector<8x64xf32>
    %417 = arith.divf %415, %416 : vector<8x64xf32>
    %418 = vector.extract_strided_slice %417 {offsets = [0, 0], sizes = [8, 32], strides = [1, 1]} : vector<8x64xf32> to vector<8x32xf32>
    %419 = vector.extract_strided_slice %417 {offsets = [0, 32], sizes = [8, 32], strides = [1, 1]} : vector<8x64xf32> to vector<8x32xf32>
    %420 = vector.extract_strided_slice %409 {offsets = [0, 64], sizes = [8, 32], strides = [1, 1]} : vector<8x96xf32> to vector<8x32xf32>
    %421 = vector.extract_strided_slice %405 {offsets = [0, 64], sizes = [8, 32], strides = [1, 1]} : vector<8x96xf32> to vector<8x32xf32>
    %c3_227 = arith.constant 3 : index
    %c0_228 = arith.constant 0 : index
    %c0_229 = arith.constant 0 : index
    %c0_230 = arith.constant 0 : index
    %422 = vector.load %arg6[%c3_227, %c0_228, %c0_229, %c0_230] : memref<8x2x1x32xf32, #tpu.memory_space<vmem>>, vector<1x1x1x32xf32>
    %423 = vector.shape_cast %422 : vector<1x1x1x32xf32> to vector<1x32xf32>
    %424 = vector.broadcast %423 : vector<1x32xf32> to vector<8x32xf32>
    %425 = arith.addf %421, %424 : vector<8x32xf32>
    %426 = arith.mulf %418, %425 : vector<8x32xf32>
    %427 = arith.addf %420, %426 : vector<8x32xf32>
    %428 = math.tanh %427 : vector<8x32xf32>
    %cst_231 = arith.constant 1.000000e+00 : f32
    %429 = vector.broadcast %cst_231 : f32 to vector<8x32xf32>
    %430 = arith.subf %429, %419 : vector<8x32xf32>
    %431 = arith.mulf %430, %428 : vector<8x32xf32>
    %432 = arith.mulf %419, %302 : vector<8x32xf32>
    %433 = arith.addf %431, %432 : vector<8x32xf32>
    %434 = arith.truncf %433 : vector<8x32xf32> to vector<8x32xbf16>
    %c3_232 = arith.constant 3 : index
    %c1_233 = arith.constant 1 : index
    %c0_234 = arith.constant 0 : index
    %c0_235 = arith.constant 0 : index
    %435 = vector.load %arg3[%c3_232, %c1_233, %c0_234, %c0_235] : memref<8x2x32x96xbf16, #tpu.memory_space<vmem>>, vector<1x1x32x96xbf16>
    %436 = vector.shape_cast %435 : vector<1x1x32x96xbf16> to vector<32x96xbf16>
    %cst_236 = arith.constant dense<0.000000e+00> : vector<8x96xf32>
    %437 = tpu.matmul %434, %436, %cst_236 {dimension_numbers = #tpu.dot_dimension_numbers<[1], [0], [0], [1], [0, 0, 1, 1], [], []>} : vector<8x32xbf16>, vector<32x96xbf16>, vector<8x96xf32> -> vector<8x96xf32>
    %438 = arith.truncf %338 : vector<8x32xf32> to vector<8x32xbf16>
    %c3_237 = arith.constant 3 : index
    %c1_238 = arith.constant 1 : index
    %c0_239 = arith.constant 0 : index
    %c0_240 = arith.constant 0 : index
    %439 = vector.load %arg4[%c3_237, %c1_238, %c0_239, %c0_240] : memref<8x2x32x96xbf16, #tpu.memory_space<vmem>>, vector<1x1x32x96xbf16>
    %440 = vector.shape_cast %439 : vector<1x1x32x96xbf16> to vector<32x96xbf16>
    %cst_241 = arith.constant dense<0.000000e+00> : vector<8x96xf32>
    %441 = tpu.matmul %438, %440, %cst_241 {dimension_numbers = #tpu.dot_dimension_numbers<[1], [0], [0], [1], [0, 0, 1, 1], [], []>} : vector<8x32xbf16>, vector<32x96xbf16>, vector<8x96xf32> -> vector<8x96xf32>
    %c3_242 = arith.constant 3 : index
    %c1_243 = arith.constant 1 : index
    %c0_244 = arith.constant 0 : index
    %c0_245 = arith.constant 0 : index
    %442 = vector.load %arg5[%c3_242, %c1_243, %c0_244, %c0_245] : memref<8x2x1x96xf32, #tpu.memory_space<vmem>>, vector<1x1x1x96xf32>
    %443 = vector.shape_cast %442 : vector<1x1x1x96xf32> to vector<1x96xf32>
    %444 = vector.broadcast %443 : vector<1x96xf32> to vector<8x96xf32>
    %445 = arith.addf %437, %444 : vector<8x96xf32>
    %446 = vector.extract_strided_slice %445 {offsets = [0, 0], sizes = [8, 64], strides = [1, 1]} : vector<8x96xf32> to vector<8x64xf32>
    %447 = vector.extract_strided_slice %441 {offsets = [0, 0], sizes = [8, 64], strides = [1, 1]} : vector<8x96xf32> to vector<8x64xf32>
    %448 = arith.addf %446, %447 : vector<8x64xf32>
    %449 = arith.negf %448 : vector<8x64xf32>
    %450 = math.exp %449 : vector<8x64xf32>
    %cst_246 = arith.constant 1.000000e+00 : f32
    %451 = vector.broadcast %cst_246 : f32 to vector<8x64xf32>
    %452 = arith.addf %451, %450 : vector<8x64xf32>
    %453 = arith.divf %451, %452 : vector<8x64xf32>
    %454 = vector.extract_strided_slice %453 {offsets = [0, 0], sizes = [8, 32], strides = [1, 1]} : vector<8x64xf32> to vector<8x32xf32>
    %455 = vector.extract_strided_slice %453 {offsets = [0, 32], sizes = [8, 32], strides = [1, 1]} : vector<8x64xf32> to vector<8x32xf32>
    %456 = vector.extract_strided_slice %445 {offsets = [0, 64], sizes = [8, 32], strides = [1, 1]} : vector<8x96xf32> to vector<8x32xf32>
    %457 = vector.extract_strided_slice %441 {offsets = [0, 64], sizes = [8, 32], strides = [1, 1]} : vector<8x96xf32> to vector<8x32xf32>
    %c3_247 = arith.constant 3 : index
    %c1_248 = arith.constant 1 : index
    %c0_249 = arith.constant 0 : index
    %c0_250 = arith.constant 0 : index
    %458 = vector.load %arg6[%c3_247, %c1_248, %c0_249, %c0_250] : memref<8x2x1x32xf32, #tpu.memory_space<vmem>>, vector<1x1x1x32xf32>
    %459 = vector.shape_cast %458 : vector<1x1x1x32xf32> to vector<1x32xf32>
    %460 = vector.broadcast %459 : vector<1x32xf32> to vector<8x32xf32>
    %461 = arith.addf %457, %460 : vector<8x32xf32>
    %462 = arith.mulf %454, %461 : vector<8x32xf32>
    %463 = arith.addf %456, %462 : vector<8x32xf32>
    %464 = math.tanh %463 : vector<8x32xf32>
    %cst_251 = arith.constant 1.000000e+00 : f32
    %465 = vector.broadcast %cst_251 : f32 to vector<8x32xf32>
    %466 = arith.subf %465, %455 : vector<8x32xf32>
    %467 = arith.mulf %466, %464 : vector<8x32xf32>
    %468 = arith.mulf %455, %338 : vector<8x32xf32>
    %469 = arith.addf %467, %468 : vector<8x32xf32>
    %470 = math.cos %469 : vector<8x32xf32>
    %cst_252 = arith.constant 1.000000e-10 : f32
    %471 = vector.broadcast %cst_252 : f32 to vector<8x32xf32>
    %472 = arith.addf %470, %471 : vector<8x32xf32>
    %473 = arith.truncf %472 : vector<8x32xf32> to vector<8x32xbf16>
    %c3_253 = arith.constant 3 : index
    %c0_254 = arith.constant 0 : index
    %c0_255 = arith.constant 0 : index
    %474 = vector.load %arg7[%c3_253, %c0_254, %c0_255] : memref<8x32x32xbf16, #tpu.memory_space<vmem>>, vector<1x32x32xbf16>
    %475 = vector.shape_cast %474 : vector<1x32x32xbf16> to vector<32x32xbf16>
    %cst_256 = arith.constant dense<0.000000e+00> : vector<8x32xf32>
    %476 = tpu.matmul %473, %475, %cst_256 {dimension_numbers = #tpu.dot_dimension_numbers<[1], [0], [0], [1], [0, 0, 1, 1], [], []>} : vector<8x32xbf16>, vector<32x32xbf16>, vector<8x32xf32> -> vector<8x32xf32>
    %c3_257 = arith.constant 3 : index
    %c0_258 = arith.constant 0 : index
    %c0_259 = arith.constant 0 : index
    %477 = vector.load %arg8[%c3_257, %c0_258, %c0_259] : memref<8x1x32xf32, #tpu.memory_space<vmem>>, vector<1x1x32xf32>
    %478 = vector.shape_cast %477 : vector<1x1x32xf32> to vector<1x32xf32>
    %479 = vector.broadcast %478 : vector<1x32xf32> to vector<8x32xf32>
    %480 = arith.addf %476, %479 : vector<8x32xf32>
    %cst_260 = arith.constant 0.000000e+00 : f32
    %481 = vector.broadcast %cst_260 : f32 to vector<8x32xf32>
    %482 = arith.maximumf %480, %481 : vector<8x32xf32>
    %483 = arith.truncf %482 : vector<8x32xf32> to vector<8x32xbf16>
    %c3_261 = arith.constant 3 : index
    %c0_262 = arith.constant 0 : index
    %c0_263 = arith.constant 0 : index
    %484 = vector.load %arg9[%c3_261, %c0_262, %c0_263] : memref<8x32x2xbf16, #tpu.memory_space<vmem>>, vector<1x32x2xbf16>
    %485 = vector.shape_cast %484 : vector<1x32x2xbf16> to vector<32x2xbf16>
    %cst_264 = arith.constant dense<0.000000e+00> : vector<8x2xf32>
    %486 = tpu.matmul %483, %485, %cst_264 {dimension_numbers = #tpu.dot_dimension_numbers<[1], [0], [0], [1], [0, 0, 1, 1], [], []>} : vector<8x32xbf16>, vector<32x2xbf16>, vector<8x2xf32> -> vector<8x2xf32>
    %c3_265 = arith.constant 3 : index
    %c0_266 = arith.constant 0 : index
    %c0_267 = arith.constant 0 : index
    %487 = vector.load %arg10[%c3_265, %c0_266, %c0_267] : memref<8x1x2xf32, #tpu.memory_space<vmem>>, vector<1x1x2xf32>
    %488 = vector.shape_cast %487 : vector<1x1x2xf32> to vector<1x2xf32>
    %489 = vector.broadcast %488 : vector<1x2xf32> to vector<8x2xf32>
    %490 = arith.addf %486, %489 : vector<8x2xf32>
    %cst_268 = arith.constant dense<0xFF800000> : vector<8xf32>
    %491 = vector.multi_reduction <maximumf>, %490, %cst_268 [1] : vector<8x2xf32> to vector<8xf32>
    %492 = vector.shape_cast %491 : vector<8xf32> to vector<8x1xf32>
    %493 = vector.broadcast %492 : vector<8x1xf32> to vector<8x2xf32>
    %494 = arith.subf %490, %493 : vector<8x2xf32>
    %495 = math.exp %494 : vector<8x2xf32>
    %cst_269 = arith.constant dense<0.000000e+00> : vector<8xf32>
    %496 = vector.multi_reduction <add>, %495, %cst_269 [1] : vector<8x2xf32> to vector<8xf32>
    %497 = vector.shape_cast %496 : vector<8xf32> to vector<8x1xf32>
    %498 = vector.broadcast %497 : vector<8x1xf32> to vector<8x2xf32>
    %499 = arith.divf %495, %498 : vector<8x2xf32>
    %cst_270 = arith.constant 1.000000e-10 : f32
    %500 = vector.broadcast %cst_270 : f32 to vector<8x2xf32>
    %501 = arith.addf %499, %500 : vector<8x2xf32>
    %c3_271 = arith.constant 3 : index
    %c0_272 = arith.constant 0 : index
    %c0_273 = arith.constant 0 : index
    %502 = vector.load %arg11[%c3_271, %c0_272, %c0_273] : memref<8x8x2xf32, #tpu.memory_space<vmem>>, vector<1x8x2xf32>
    %503 = vector.shape_cast %502 : vector<1x8x2xf32> to vector<8x2xf32>
    %504 = vector.shape_cast %501 : vector<8x2xf32> to vector<1x8x2xf32>
    tpu.vector_store %arg11[%c3_271, %c0_272, %c0_273], %504 {strides = array<i32>} : memref<8x8x2xf32, #tpu.memory_space<vmem>>, vector<1x8x2xf32>,
    %c3_274 = arith.constant 3 : index
    %c0_275 = arith.constant 0 : index
    %c0_276 = arith.constant 0 : index
    %505 = vector.load %arg2[%c3_274, %c0_275, %c0_276] : memref<8x8x1xf32, #tpu.memory_space<vmem>>, vector<1x8x1xf32>
    %506 = vector.shape_cast %505 : vector<1x8x1xf32> to vector<8x1xf32>
    %cst_277 = arith.constant dense<0.000000e+00> : vector<8xf32>
    %507 = vector.multi_reduction <add>, %501, %cst_277 [1] : vector<8x2xf32> to vector<8xf32>
    %508 = vector.shape_cast %507 : vector<8xf32> to vector<8x1xf32>
    %509 = arith.mulf %506, %508 : vector<8x1xf32>
    %510 = vector.extract_strided_slice %501 {offsets = [0, 0], sizes = [8, 1], strides = [1, 1]} : vector<8x2xf32> to vector<8x1xf32>
    %511 = arith.cmpf oge, %509, %510 : vector<8x1xf32>
    %512 = arith.extui %511 : vector<8x1xi1> to vector<8x1xi32>
    %c0_i32_278 = arith.constant 0 : i32
    %513 = vector.broadcast %c0_i32_278 : i32 to vector<8x1xi32>
    %514 = arith.cmpi eq, %512, %513 : vector<8x1xi32>
    %515 = vector.extract_strided_slice %501 {offsets = [0, 0], sizes = [8, 1], strides = [1, 1]} : vector<8x2xf32> to vector<8x1xf32>
    %516 = vector.extract_strided_slice %501 {offsets = [0, 1], sizes = [8, 1], strides = [1, 1]} : vector<8x2xf32> to vector<8x1xf32>
    %517 = arith.select %514, %515, %516 : vector<8x1xi1>, vector<8x1xf32>
    %c3_279 = arith.constant 3 : index
    %c0_280 = arith.constant 0 : index
    %c0_281 = arith.constant 0 : index
    %518 = vector.load %arg12[%c3_279, %c0_280, %c0_281] : memref<8x8x1xi32, #tpu.memory_space<vmem>>, vector<1x8x1xi32>
    %519 = vector.shape_cast %518 : vector<1x8x1xi32> to vector<8x1xi32>
    %520 = vector.shape_cast %512 : vector<8x1xi32> to vector<1x8x1xi32>
    tpu.vector_store %arg12[%c3_279, %c0_280, %c0_281], %520 {strides = array<i32>} : memref<8x8x1xi32, #tpu.memory_space<vmem>>, vector<1x8x1xi32>,
    %cst_282 = arith.constant 1.000000e-10 : f32
    %521 = vector.broadcast %cst_282 : f32 to vector<8x1xf32>
    %522 = arith.addf %517, %521 : vector<8x1xf32>
    %523 = math.log %522 : vector<8x1xf32>
    %524 = arith.addf %393, %523 : vector<8x1xf32>
    %525 = vector.broadcast %512 : vector<8x1xi32> to vector<8x32xi32>
    %526 = arith.cmpi eq, %0, %525 : vector<8x32xi32>
    %527 = arith.extui %526 : vector<8x32xi1> to vector<8x32xi32>
    %528 = arith.sitofp %527 : vector<8x32xi32> to vector<8x32xf32>
    %529 = arith.truncf %528 : vector<8x32xf32> to vector<8x32xbf16>
    %c4 = arith.constant 4 : index
    %c0_283 = arith.constant 0 : index
    %c0_284 = arith.constant 0 : index
    %c0_285 = arith.constant 0 : index
    %530 = vector.load %arg3[%c4, %c0_283, %c0_284, %c0_285] : memref<8x2x32x96xbf16, #tpu.memory_space<vmem>>, vector<1x1x32x96xbf16>
    %531 = vector.shape_cast %530 : vector<1x1x32x96xbf16> to vector<32x96xbf16>
    %cst_286 = arith.constant dense<0.000000e+00> : vector<8x96xf32>
    %532 = tpu.matmul %529, %531, %cst_286 {dimension_numbers = #tpu.dot_dimension_numbers<[1], [0], [0], [1], [0, 0, 1, 1], [], []>} : vector<8x32xbf16>, vector<32x96xbf16>, vector<8x96xf32> -> vector<8x96xf32>
    %533 = arith.truncf %433 : vector<8x32xf32> to vector<8x32xbf16>
    %c4_287 = arith.constant 4 : index
    %c0_288 = arith.constant 0 : index
    %c0_289 = arith.constant 0 : index
    %c0_290 = arith.constant 0 : index
    %534 = vector.load %arg4[%c4_287, %c0_288, %c0_289, %c0_290] : memref<8x2x32x96xbf16, #tpu.memory_space<vmem>>, vector<1x1x32x96xbf16>
    %535 = vector.shape_cast %534 : vector<1x1x32x96xbf16> to vector<32x96xbf16>
    %cst_291 = arith.constant dense<0.000000e+00> : vector<8x96xf32>
    %536 = tpu.matmul %533, %535, %cst_291 {dimension_numbers = #tpu.dot_dimension_numbers<[1], [0], [0], [1], [0, 0, 1, 1], [], []>} : vector<8x32xbf16>, vector<32x96xbf16>, vector<8x96xf32> -> vector<8x96xf32>
    %c4_292 = arith.constant 4 : index
    %c0_293 = arith.constant 0 : index
    %c0_294 = arith.constant 0 : index
    %c0_295 = arith.constant 0 : index
    %537 = vector.load %arg5[%c4_292, %c0_293, %c0_294, %c0_295] : memref<8x2x1x96xf32, #tpu.memory_space<vmem>>, vector<1x1x1x96xf32>
    %538 = vector.shape_cast %537 : vector<1x1x1x96xf32> to vector<1x96xf32>
    %539 = vector.broadcast %538 : vector<1x96xf32> to vector<8x96xf32>
    %540 = arith.addf %532, %539 : vector<8x96xf32>
    %541 = vector.extract_strided_slice %540 {offsets = [0, 0], sizes = [8, 64], strides = [1, 1]} : vector<8x96xf32> to vector<8x64xf32>
    %542 = vector.extract_strided_slice %536 {offsets = [0, 0], sizes = [8, 64], strides = [1, 1]} : vector<8x96xf32> to vector<8x64xf32>
    %543 = arith.addf %541, %542 : vector<8x64xf32>
    %544 = arith.negf %543 : vector<8x64xf32>
    %545 = math.exp %544 : vector<8x64xf32>
    %cst_296 = arith.constant 1.000000e+00 : f32
    %546 = vector.broadcast %cst_296 : f32 to vector<8x64xf32>
    %547 = arith.addf %546, %545 : vector<8x64xf32>
    %548 = arith.divf %546, %547 : vector<8x64xf32>
    %549 = vector.extract_strided_slice %548 {offsets = [0, 0], sizes = [8, 32], strides = [1, 1]} : vector<8x64xf32> to vector<8x32xf32>
    %550 = vector.extract_strided_slice %548 {offsets = [0, 32], sizes = [8, 32], strides = [1, 1]} : vector<8x64xf32> to vector<8x32xf32>
    %551 = vector.extract_strided_slice %540 {offsets = [0, 64], sizes = [8, 32], strides = [1, 1]} : vector<8x96xf32> to vector<8x32xf32>
    %552 = vector.extract_strided_slice %536 {offsets = [0, 64], sizes = [8, 32], strides = [1, 1]} : vector<8x96xf32> to vector<8x32xf32>
    %c4_297 = arith.constant 4 : index
    %c0_298 = arith.constant 0 : index
    %c0_299 = arith.constant 0 : index
    %c0_300 = arith.constant 0 : index
    %553 = vector.load %arg6[%c4_297, %c0_298, %c0_299, %c0_300] : memref<8x2x1x32xf32, #tpu.memory_space<vmem>>, vector<1x1x1x32xf32>
    %554 = vector.shape_cast %553 : vector<1x1x1x32xf32> to vector<1x32xf32>
    %555 = vector.broadcast %554 : vector<1x32xf32> to vector<8x32xf32>
    %556 = arith.addf %552, %555 : vector<8x32xf32>
    %557 = arith.mulf %549, %556 : vector<8x32xf32>
    %558 = arith.addf %551, %557 : vector<8x32xf32>
    %559 = math.tanh %558 : vector<8x32xf32>
    %cst_301 = arith.constant 1.000000e+00 : f32
    %560 = vector.broadcast %cst_301 : f32 to vector<8x32xf32>
    %561 = arith.subf %560, %550 : vector<8x32xf32>
    %562 = arith.mulf %561, %559 : vector<8x32xf32>
    %563 = arith.mulf %550, %433 : vector<8x32xf32>
    %564 = arith.addf %562, %563 : vector<8x32xf32>
    %565 = arith.truncf %564 : vector<8x32xf32> to vector<8x32xbf16>
    %c4_302 = arith.constant 4 : index
    %c1_303 = arith.constant 1 : index
    %c0_304 = arith.constant 0 : index
    %c0_305 = arith.constant 0 : index
    %566 = vector.load %arg3[%c4_302, %c1_303, %c0_304, %c0_305] : memref<8x2x32x96xbf16, #tpu.memory_space<vmem>>, vector<1x1x32x96xbf16>
    %567 = vector.shape_cast %566 : vector<1x1x32x96xbf16> to vector<32x96xbf16>
    %cst_306 = arith.constant dense<0.000000e+00> : vector<8x96xf32>
    %568 = tpu.matmul %565, %567, %cst_306 {dimension_numbers = #tpu.dot_dimension_numbers<[1], [0], [0], [1], [0, 0, 1, 1], [], []>} : vector<8x32xbf16>, vector<32x96xbf16>, vector<8x96xf32> -> vector<8x96xf32>
    %569 = arith.truncf %469 : vector<8x32xf32> to vector<8x32xbf16>
    %c4_307 = arith.constant 4 : index
    %c1_308 = arith.constant 1 : index
    %c0_309 = arith.constant 0 : index
    %c0_310 = arith.constant 0 : index
    %570 = vector.load %arg4[%c4_307, %c1_308, %c0_309, %c0_310] : memref<8x2x32x96xbf16, #tpu.memory_space<vmem>>, vector<1x1x32x96xbf16>
    %571 = vector.shape_cast %570 : vector<1x1x32x96xbf16> to vector<32x96xbf16>
    %cst_311 = arith.constant dense<0.000000e+00> : vector<8x96xf32>
    %572 = tpu.matmul %569, %571, %cst_311 {dimension_numbers = #tpu.dot_dimension_numbers<[1], [0], [0], [1], [0, 0, 1, 1], [], []>} : vector<8x32xbf16>, vector<32x96xbf16>, vector<8x96xf32> -> vector<8x96xf32>
    %c4_312 = arith.constant 4 : index
    %c1_313 = arith.constant 1 : index
    %c0_314 = arith.constant 0 : index
    %c0_315 = arith.constant 0 : index
    %573 = vector.load %arg5[%c4_312, %c1_313, %c0_314, %c0_315] : memref<8x2x1x96xf32, #tpu.memory_space<vmem>>, vector<1x1x1x96xf32>
    %574 = vector.shape_cast %573 : vector<1x1x1x96xf32> to vector<1x96xf32>
    %575 = vector.broadcast %574 : vector<1x96xf32> to vector<8x96xf32>
    %576 = arith.addf %568, %575 : vector<8x96xf32>
    %577 = vector.extract_strided_slice %576 {offsets = [0, 0], sizes = [8, 64], strides = [1, 1]} : vector<8x96xf32> to vector<8x64xf32>
    %578 = vector.extract_strided_slice %572 {offsets = [0, 0], sizes = [8, 64], strides = [1, 1]} : vector<8x96xf32> to vector<8x64xf32>
    %579 = arith.addf %577, %578 : vector<8x64xf32>
    %580 = arith.negf %579 : vector<8x64xf32>
    %581 = math.exp %580 : vector<8x64xf32>
    %cst_316 = arith.constant 1.000000e+00 : f32
    %582 = vector.broadcast %cst_316 : f32 to vector<8x64xf32>
    %583 = arith.addf %582, %581 : vector<8x64xf32>
    %584 = arith.divf %582, %583 : vector<8x64xf32>
    %585 = vector.extract_strided_slice %584 {offsets = [0, 0], sizes = [8, 32], strides = [1, 1]} : vector<8x64xf32> to vector<8x32xf32>
    %586 = vector.extract_strided_slice %584 {offsets = [0, 32], sizes = [8, 32], strides = [1, 1]} : vector<8x64xf32> to vector<8x32xf32>
    %587 = vector.extract_strided_slice %576 {offsets = [0, 64], sizes = [8, 32], strides = [1, 1]} : vector<8x96xf32> to vector<8x32xf32>
    %588 = vector.extract_strided_slice %572 {offsets = [0, 64], sizes = [8, 32], strides = [1, 1]} : vector<8x96xf32> to vector<8x32xf32>
    %c4_317 = arith.constant 4 : index
    %c1_318 = arith.constant 1 : index
    %c0_319 = arith.constant 0 : index
    %c0_320 = arith.constant 0 : index
    %589 = vector.load %arg6[%c4_317, %c1_318, %c0_319, %c0_320] : memref<8x2x1x32xf32, #tpu.memory_space<vmem>>, vector<1x1x1x32xf32>
    %590 = vector.shape_cast %589 : vector<1x1x1x32xf32> to vector<1x32xf32>
    %591 = vector.broadcast %590 : vector<1x32xf32> to vector<8x32xf32>
    %592 = arith.addf %588, %591 : vector<8x32xf32>
    %593 = arith.mulf %585, %592 : vector<8x32xf32>
    %594 = arith.addf %587, %593 : vector<8x32xf32>
    %595 = math.tanh %594 : vector<8x32xf32>
    %cst_321 = arith.constant 1.000000e+00 : f32
    %596 = vector.broadcast %cst_321 : f32 to vector<8x32xf32>
    %597 = arith.subf %596, %586 : vector<8x32xf32>
    %598 = arith.mulf %597, %595 : vector<8x32xf32>
    %599 = arith.mulf %586, %469 : vector<8x32xf32>
    %600 = arith.addf %598, %599 : vector<8x32xf32>
    %601 = math.cos %600 : vector<8x32xf32>
    %cst_322 = arith.constant 1.000000e-10 : f32
    %602 = vector.broadcast %cst_322 : f32 to vector<8x32xf32>
    %603 = arith.addf %601, %602 : vector<8x32xf32>
    %604 = arith.truncf %603 : vector<8x32xf32> to vector<8x32xbf16>
    %c4_323 = arith.constant 4 : index
    %c0_324 = arith.constant 0 : index
    %c0_325 = arith.constant 0 : index
    %605 = vector.load %arg7[%c4_323, %c0_324, %c0_325] : memref<8x32x32xbf16, #tpu.memory_space<vmem>>, vector<1x32x32xbf16>
    %606 = vector.shape_cast %605 : vector<1x32x32xbf16> to vector<32x32xbf16>
    %cst_326 = arith.constant dense<0.000000e+00> : vector<8x32xf32>
    %607 = tpu.matmul %604, %606, %cst_326 {dimension_numbers = #tpu.dot_dimension_numbers<[1], [0], [0], [1], [0, 0, 1, 1], [], []>} : vector<8x32xbf16>, vector<32x32xbf16>, vector<8x32xf32> -> vector<8x32xf32>
    %c4_327 = arith.constant 4 : index
    %c0_328 = arith.constant 0 : index
    %c0_329 = arith.constant 0 : index
    %608 = vector.load %arg8[%c4_327, %c0_328, %c0_329] : memref<8x1x32xf32, #tpu.memory_space<vmem>>, vector<1x1x32xf32>
    %609 = vector.shape_cast %608 : vector<1x1x32xf32> to vector<1x32xf32>
    %610 = vector.broadcast %609 : vector<1x32xf32> to vector<8x32xf32>
    %611 = arith.addf %607, %610 : vector<8x32xf32>
    %cst_330 = arith.constant 0.000000e+00 : f32
    %612 = vector.broadcast %cst_330 : f32 to vector<8x32xf32>
    %613 = arith.maximumf %611, %612 : vector<8x32xf32>
    %614 = arith.truncf %613 : vector<8x32xf32> to vector<8x32xbf16>
    %c4_331 = arith.constant 4 : index
    %c0_332 = arith.constant 0 : index
    %c0_333 = arith.constant 0 : index
    %615 = vector.load %arg9[%c4_331, %c0_332, %c0_333] : memref<8x32x2xbf16, #tpu.memory_space<vmem>>, vector<1x32x2xbf16>
    %616 = vector.shape_cast %615 : vector<1x32x2xbf16> to vector<32x2xbf16>
    %cst_334 = arith.constant dense<0.000000e+00> : vector<8x2xf32>
    %617 = tpu.matmul %614, %616, %cst_334 {dimension_numbers = #tpu.dot_dimension_numbers<[1], [0], [0], [1], [0, 0, 1, 1], [], []>} : vector<8x32xbf16>, vector<32x2xbf16>, vector<8x2xf32> -> vector<8x2xf32>
    %c4_335 = arith.constant 4 : index
    %c0_336 = arith.constant 0 : index
    %c0_337 = arith.constant 0 : index
    %618 = vector.load %arg10[%c4_335, %c0_336, %c0_337] : memref<8x1x2xf32, #tpu.memory_space<vmem>>, vector<1x1x2xf32>
    %619 = vector.shape_cast %618 : vector<1x1x2xf32> to vector<1x2xf32>
    %620 = vector.broadcast %619 : vector<1x2xf32> to vector<8x2xf32>
    %621 = arith.addf %617, %620 : vector<8x2xf32>
    %cst_338 = arith.constant dense<0xFF800000> : vector<8xf32>
    %622 = vector.multi_reduction <maximumf>, %621, %cst_338 [1] : vector<8x2xf32> to vector<8xf32>
    %623 = vector.shape_cast %622 : vector<8xf32> to vector<8x1xf32>
    %624 = vector.broadcast %623 : vector<8x1xf32> to vector<8x2xf32>
    %625 = arith.subf %621, %624 : vector<8x2xf32>
    %626 = math.exp %625 : vector<8x2xf32>
    %cst_339 = arith.constant dense<0.000000e+00> : vector<8xf32>
    %627 = vector.multi_reduction <add>, %626, %cst_339 [1] : vector<8x2xf32> to vector<8xf32>
    %628 = vector.shape_cast %627 : vector<8xf32> to vector<8x1xf32>
    %629 = vector.broadcast %628 : vector<8x1xf32> to vector<8x2xf32>
    %630 = arith.divf %626, %629 : vector<8x2xf32>
    %cst_340 = arith.constant 1.000000e-10 : f32
    %631 = vector.broadcast %cst_340 : f32 to vector<8x2xf32>
    %632 = arith.addf %630, %631 : vector<8x2xf32>
    %c4_341 = arith.constant 4 : index
    %c0_342 = arith.constant 0 : index
    %c0_343 = arith.constant 0 : index
    %633 = vector.load %arg11[%c4_341, %c0_342, %c0_343] : memref<8x8x2xf32, #tpu.memory_space<vmem>>, vector<1x8x2xf32>
    %634 = vector.shape_cast %633 : vector<1x8x2xf32> to vector<8x2xf32>
    %635 = vector.shape_cast %632 : vector<8x2xf32> to vector<1x8x2xf32>
    tpu.vector_store %arg11[%c4_341, %c0_342, %c0_343], %635 {strides = array<i32>} : memref<8x8x2xf32, #tpu.memory_space<vmem>>, vector<1x8x2xf32>,
    %c4_344 = arith.constant 4 : index
    %c0_345 = arith.constant 0 : index
    %c0_346 = arith.constant 0 : index
    %636 = vector.load %arg2[%c4_344, %c0_345, %c0_346] : memref<8x8x1xf32, #tpu.memory_space<vmem>>, vector<1x8x1xf32>
    %637 = vector.shape_cast %636 : vector<1x8x1xf32> to vector<8x1xf32>
    %cst_347 = arith.constant dense<0.000000e+00> : vector<8xf32>
    %638 = vector.multi_reduction <add>, %632, %cst_347 [1] : vector<8x2xf32> to vector<8xf32>
    %639 = vector.shape_cast %638 : vector<8xf32> to vector<8x1xf32>
    %640 = arith.mulf %637, %639 : vector<8x1xf32>
    %641 = vector.extract_strided_slice %632 {offsets = [0, 0], sizes = [8, 1], strides = [1, 1]} : vector<8x2xf32> to vector<8x1xf32>
    %642 = arith.cmpf oge, %640, %641 : vector<8x1xf32>
    %643 = arith.extui %642 : vector<8x1xi1> to vector<8x1xi32>
    %c0_i32_348 = arith.constant 0 : i32
    %644 = vector.broadcast %c0_i32_348 : i32 to vector<8x1xi32>
    %645 = arith.cmpi eq, %643, %644 : vector<8x1xi32>
    %646 = vector.extract_strided_slice %632 {offsets = [0, 0], sizes = [8, 1], strides = [1, 1]} : vector<8x2xf32> to vector<8x1xf32>
    %647 = vector.extract_strided_slice %632 {offsets = [0, 1], sizes = [8, 1], strides = [1, 1]} : vector<8x2xf32> to vector<8x1xf32>
    %648 = arith.select %645, %646, %647 : vector<8x1xi1>, vector<8x1xf32>
    %c4_349 = arith.constant 4 : index
    %c0_350 = arith.constant 0 : index
    %c0_351 = arith.constant 0 : index
    %649 = vector.load %arg12[%c4_349, %c0_350, %c0_351] : memref<8x8x1xi32, #tpu.memory_space<vmem>>, vector<1x8x1xi32>
    %650 = vector.shape_cast %649 : vector<1x8x1xi32> to vector<8x1xi32>
    %651 = vector.shape_cast %643 : vector<8x1xi32> to vector<1x8x1xi32>
    tpu.vector_store %arg12[%c4_349, %c0_350, %c0_351], %651 {strides = array<i32>} : memref<8x8x1xi32, #tpu.memory_space<vmem>>, vector<1x8x1xi32>,
    %cst_352 = arith.constant 1.000000e-10 : f32
    %652 = vector.broadcast %cst_352 : f32 to vector<8x1xf32>
    %653 = arith.addf %648, %652 : vector<8x1xf32>
    %654 = math.log %653 : vector<8x1xf32>
    %655 = arith.addf %524, %654 : vector<8x1xf32>
    %656 = vector.broadcast %643 : vector<8x1xi32> to vector<8x32xi32>
    %657 = arith.cmpi eq, %0, %656 : vector<8x32xi32>
    %658 = arith.extui %657 : vector<8x32xi1> to vector<8x32xi32>
    %659 = arith.sitofp %658 : vector<8x32xi32> to vector<8x32xf32>
    %660 = arith.truncf %659 : vector<8x32xf32> to vector<8x32xbf16>
    %c5 = arith.constant 5 : index
    %c0_353 = arith.constant 0 : index
    %c0_354 = arith.constant 0 : index
    %c0_355 = arith.constant 0 : index
    %661 = vector.load %arg3[%c5, %c0_353, %c0_354, %c0_355] : memref<8x2x32x96xbf16, #tpu.memory_space<vmem>>, vector<1x1x32x96xbf16>
    %662 = vector.shape_cast %661 : vector<1x1x32x96xbf16> to vector<32x96xbf16>
    %cst_356 = arith.constant dense<0.000000e+00> : vector<8x96xf32>
    %663 = tpu.matmul %660, %662, %cst_356 {dimension_numbers = #tpu.dot_dimension_numbers<[1], [0], [0], [1], [0, 0, 1, 1], [], []>} : vector<8x32xbf16>, vector<32x96xbf16>, vector<8x96xf32> -> vector<8x96xf32>
    %664 = arith.truncf %564 : vector<8x32xf32> to vector<8x32xbf16>
    %c5_357 = arith.constant 5 : index
    %c0_358 = arith.constant 0 : index
    %c0_359 = arith.constant 0 : index
    %c0_360 = arith.constant 0 : index
    %665 = vector.load %arg4[%c5_357, %c0_358, %c0_359, %c0_360] : memref<8x2x32x96xbf16, #tpu.memory_space<vmem>>, vector<1x1x32x96xbf16>
    %666 = vector.shape_cast %665 : vector<1x1x32x96xbf16> to vector<32x96xbf16>
    %cst_361 = arith.constant dense<0.000000e+00> : vector<8x96xf32>
    %667 = tpu.matmul %664, %666, %cst_361 {dimension_numbers = #tpu.dot_dimension_numbers<[1], [0], [0], [1], [0, 0, 1, 1], [], []>} : vector<8x32xbf16>, vector<32x96xbf16>, vector<8x96xf32> -> vector<8x96xf32>
    %c5_362 = arith.constant 5 : index
    %c0_363 = arith.constant 0 : index
    %c0_364 = arith.constant 0 : index
    %c0_365 = arith.constant 0 : index
    %668 = vector.load %arg5[%c5_362, %c0_363, %c0_364, %c0_365] : memref<8x2x1x96xf32, #tpu.memory_space<vmem>>, vector<1x1x1x96xf32>
    %669 = vector.shape_cast %668 : vector<1x1x1x96xf32> to vector<1x96xf32>
    %670 = vector.broadcast %669 : vector<1x96xf32> to vector<8x96xf32>
    %671 = arith.addf %663, %670 : vector<8x96xf32>
    %672 = vector.extract_strided_slice %671 {offsets = [0, 0], sizes = [8, 64], strides = [1, 1]} : vector<8x96xf32> to vector<8x64xf32>
    %673 = vector.extract_strided_slice %667 {offsets = [0, 0], sizes = [8, 64], strides = [1, 1]} : vector<8x96xf32> to vector<8x64xf32>
    %674 = arith.addf %672, %673 : vector<8x64xf32>
    %675 = arith.negf %674 : vector<8x64xf32>
    %676 = math.exp %675 : vector<8x64xf32>
    %cst_366 = arith.constant 1.000000e+00 : f32
    %677 = vector.broadcast %cst_366 : f32 to vector<8x64xf32>
    %678 = arith.addf %677, %676 : vector<8x64xf32>
    %679 = arith.divf %677, %678 : vector<8x64xf32>
    %680 = vector.extract_strided_slice %679 {offsets = [0, 0], sizes = [8, 32], strides = [1, 1]} : vector<8x64xf32> to vector<8x32xf32>
    %681 = vector.extract_strided_slice %679 {offsets = [0, 32], sizes = [8, 32], strides = [1, 1]} : vector<8x64xf32> to vector<8x32xf32>
    %682 = vector.extract_strided_slice %671 {offsets = [0, 64], sizes = [8, 32], strides = [1, 1]} : vector<8x96xf32> to vector<8x32xf32>
    %683 = vector.extract_strided_slice %667 {offsets = [0, 64], sizes = [8, 32], strides = [1, 1]} : vector<8x96xf32> to vector<8x32xf32>
    %c5_367 = arith.constant 5 : index
    %c0_368 = arith.constant 0 : index
    %c0_369 = arith.constant 0 : index
    %c0_370 = arith.constant 0 : index
    %684 = vector.load %arg6[%c5_367, %c0_368, %c0_369, %c0_370] : memref<8x2x1x32xf32, #tpu.memory_space<vmem>>, vector<1x1x1x32xf32>
    %685 = vector.shape_cast %684 : vector<1x1x1x32xf32> to vector<1x32xf32>
    %686 = vector.broadcast %685 : vector<1x32xf32> to vector<8x32xf32>
    %687 = arith.addf %683, %686 : vector<8x32xf32>
    %688 = arith.mulf %680, %687 : vector<8x32xf32>
    %689 = arith.addf %682, %688 : vector<8x32xf32>
    %690 = math.tanh %689 : vector<8x32xf32>
    %cst_371 = arith.constant 1.000000e+00 : f32
    %691 = vector.broadcast %cst_371 : f32 to vector<8x32xf32>
    %692 = arith.subf %691, %681 : vector<8x32xf32>
    %693 = arith.mulf %692, %690 : vector<8x32xf32>
    %694 = arith.mulf %681, %564 : vector<8x32xf32>
    %695 = arith.addf %693, %694 : vector<8x32xf32>
    %696 = arith.truncf %695 : vector<8x32xf32> to vector<8x32xbf16>
    %c5_372 = arith.constant 5 : index
    %c1_373 = arith.constant 1 : index
    %c0_374 = arith.constant 0 : index
    %c0_375 = arith.constant 0 : index
    %697 = vector.load %arg3[%c5_372, %c1_373, %c0_374, %c0_375] : memref<8x2x32x96xbf16, #tpu.memory_space<vmem>>, vector<1x1x32x96xbf16>
    %698 = vector.shape_cast %697 : vector<1x1x32x96xbf16> to vector<32x96xbf16>
    %cst_376 = arith.constant dense<0.000000e+00> : vector<8x96xf32>
    %699 = tpu.matmul %696, %698, %cst_376 {dimension_numbers = #tpu.dot_dimension_numbers<[1], [0], [0], [1], [0, 0, 1, 1], [], []>} : vector<8x32xbf16>, vector<32x96xbf16>, vector<8x96xf32> -> vector<8x96xf32>
    %700 = arith.truncf %600 : vector<8x32xf32> to vector<8x32xbf16>
    %c5_377 = arith.constant 5 : index
    %c1_378 = arith.constant 1 : index
    %c0_379 = arith.constant 0 : index
    %c0_380 = arith.constant 0 : index
    %701 = vector.load %arg4[%c5_377, %c1_378, %c0_379, %c0_380] : memref<8x2x32x96xbf16, #tpu.memory_space<vmem>>, vector<1x1x32x96xbf16>
    %702 = vector.shape_cast %701 : vector<1x1x32x96xbf16> to vector<32x96xbf16>
    %cst_381 = arith.constant dense<0.000000e+00> : vector<8x96xf32>
    %703 = tpu.matmul %700, %702, %cst_381 {dimension_numbers = #tpu.dot_dimension_numbers<[1], [0], [0], [1], [0, 0, 1, 1], [], []>} : vector<8x32xbf16>, vector<32x96xbf16>, vector<8x96xf32> -> vector<8x96xf32>
    %c5_382 = arith.constant 5 : index
    %c1_383 = arith.constant 1 : index
    %c0_384 = arith.constant 0 : index
    %c0_385 = arith.constant 0 : index
    %704 = vector.load %arg5[%c5_382, %c1_383, %c0_384, %c0_385] : memref<8x2x1x96xf32, #tpu.memory_space<vmem>>, vector<1x1x1x96xf32>
    %705 = vector.shape_cast %704 : vector<1x1x1x96xf32> to vector<1x96xf32>
    %706 = vector.broadcast %705 : vector<1x96xf32> to vector<8x96xf32>
    %707 = arith.addf %699, %706 : vector<8x96xf32>
    %708 = vector.extract_strided_slice %707 {offsets = [0, 0], sizes = [8, 64], strides = [1, 1]} : vector<8x96xf32> to vector<8x64xf32>
    %709 = vector.extract_strided_slice %703 {offsets = [0, 0], sizes = [8, 64], strides = [1, 1]} : vector<8x96xf32> to vector<8x64xf32>
    %710 = arith.addf %708, %709 : vector<8x64xf32>
    %711 = arith.negf %710 : vector<8x64xf32>
    %712 = math.exp %711 : vector<8x64xf32>
    %cst_386 = arith.constant 1.000000e+00 : f32
    %713 = vector.broadcast %cst_386 : f32 to vector<8x64xf32>
    %714 = arith.addf %713, %712 : vector<8x64xf32>
    %715 = arith.divf %713, %714 : vector<8x64xf32>
    %716 = vector.extract_strided_slice %715 {offsets = [0, 0], sizes = [8, 32], strides = [1, 1]} : vector<8x64xf32> to vector<8x32xf32>
    %717 = vector.extract_strided_slice %715 {offsets = [0, 32], sizes = [8, 32], strides = [1, 1]} : vector<8x64xf32> to vector<8x32xf32>
    %718 = vector.extract_strided_slice %707 {offsets = [0, 64], sizes = [8, 32], strides = [1, 1]} : vector<8x96xf32> to vector<8x32xf32>
    %719 = vector.extract_strided_slice %703 {offsets = [0, 64], sizes = [8, 32], strides = [1, 1]} : vector<8x96xf32> to vector<8x32xf32>
    %c5_387 = arith.constant 5 : index
    %c1_388 = arith.constant 1 : index
    %c0_389 = arith.constant 0 : index
    %c0_390 = arith.constant 0 : index
    %720 = vector.load %arg6[%c5_387, %c1_388, %c0_389, %c0_390] : memref<8x2x1x32xf32, #tpu.memory_space<vmem>>, vector<1x1x1x32xf32>
    %721 = vector.shape_cast %720 : vector<1x1x1x32xf32> to vector<1x32xf32>
    %722 = vector.broadcast %721 : vector<1x32xf32> to vector<8x32xf32>
    %723 = arith.addf %719, %722 : vector<8x32xf32>
    %724 = arith.mulf %716, %723 : vector<8x32xf32>
    %725 = arith.addf %718, %724 : vector<8x32xf32>
    %726 = math.tanh %725 : vector<8x32xf32>
    %cst_391 = arith.constant 1.000000e+00 : f32
    %727 = vector.broadcast %cst_391 : f32 to vector<8x32xf32>
    %728 = arith.subf %727, %717 : vector<8x32xf32>
    %729 = arith.mulf %728, %726 : vector<8x32xf32>
    %730 = arith.mulf %717, %600 : vector<8x32xf32>
    %731 = arith.addf %729, %730 : vector<8x32xf32>
    %732 = math.cos %731 : vector<8x32xf32>
    %cst_392 = arith.constant 1.000000e-10 : f32
    %733 = vector.broadcast %cst_392 : f32 to vector<8x32xf32>
    %734 = arith.addf %732, %733 : vector<8x32xf32>
    %735 = arith.truncf %734 : vector<8x32xf32> to vector<8x32xbf16>
    %c5_393 = arith.constant 5 : index
    %c0_394 = arith.constant 0 : index
    %c0_395 = arith.constant 0 : index
    %736 = vector.load %arg7[%c5_393, %c0_394, %c0_395] : memref<8x32x32xbf16, #tpu.memory_space<vmem>>, vector<1x32x32xbf16>
    %737 = vector.shape_cast %736 : vector<1x32x32xbf16> to vector<32x32xbf16>
    %cst_396 = arith.constant dense<0.000000e+00> : vector<8x32xf32>
    %738 = tpu.matmul %735, %737, %cst_396 {dimension_numbers = #tpu.dot_dimension_numbers<[1], [0], [0], [1], [0, 0, 1, 1], [], []>} : vector<8x32xbf16>, vector<32x32xbf16>, vector<8x32xf32> -> vector<8x32xf32>
    %c5_397 = arith.constant 5 : index
    %c0_398 = arith.constant 0 : index
    %c0_399 = arith.constant 0 : index
    %739 = vector.load %arg8[%c5_397, %c0_398, %c0_399] : memref<8x1x32xf32, #tpu.memory_space<vmem>>, vector<1x1x32xf32>
    %740 = vector.shape_cast %739 : vector<1x1x32xf32> to vector<1x32xf32>
    %741 = vector.broadcast %740 : vector<1x32xf32> to vector<8x32xf32>
    %742 = arith.addf %738, %741 : vector<8x32xf32>
    %cst_400 = arith.constant 0.000000e+00 : f32
    %743 = vector.broadcast %cst_400 : f32 to vector<8x32xf32>
    %744 = arith.maximumf %742, %743 : vector<8x32xf32>
    %745 = arith.truncf %744 : vector<8x32xf32> to vector<8x32xbf16>
    %c5_401 = arith.constant 5 : index
    %c0_402 = arith.constant 0 : index
    %c0_403 = arith.constant 0 : index
    %746 = vector.load %arg9[%c5_401, %c0_402, %c0_403] : memref<8x32x2xbf16, #tpu.memory_space<vmem>>, vector<1x32x2xbf16>
    %747 = vector.shape_cast %746 : vector<1x32x2xbf16> to vector<32x2xbf16>
    %cst_404 = arith.constant dense<0.000000e+00> : vector<8x2xf32>
    %748 = tpu.matmul %745, %747, %cst_404 {dimension_numbers = #tpu.dot_dimension_numbers<[1], [0], [0], [1], [0, 0, 1, 1], [], []>} : vector<8x32xbf16>, vector<32x2xbf16>, vector<8x2xf32> -> vector<8x2xf32>
    %c5_405 = arith.constant 5 : index
    %c0_406 = arith.constant 0 : index
    %c0_407 = arith.constant 0 : index
    %749 = vector.load %arg10[%c5_405, %c0_406, %c0_407] : memref<8x1x2xf32, #tpu.memory_space<vmem>>, vector<1x1x2xf32>
    %750 = vector.shape_cast %749 : vector<1x1x2xf32> to vector<1x2xf32>
    %751 = vector.broadcast %750 : vector<1x2xf32> to vector<8x2xf32>
    %752 = arith.addf %748, %751 : vector<8x2xf32>
    %cst_408 = arith.constant dense<0xFF800000> : vector<8xf32>
    %753 = vector.multi_reduction <maximumf>, %752, %cst_408 [1] : vector<8x2xf32> to vector<8xf32>
    %754 = vector.shape_cast %753 : vector<8xf32> to vector<8x1xf32>
    %755 = vector.broadcast %754 : vector<8x1xf32> to vector<8x2xf32>
    %756 = arith.subf %752, %755 : vector<8x2xf32>
    %757 = math.exp %756 : vector<8x2xf32>
    %cst_409 = arith.constant dense<0.000000e+00> : vector<8xf32>
    %758 = vector.multi_reduction <add>, %757, %cst_409 [1] : vector<8x2xf32> to vector<8xf32>
    %759 = vector.shape_cast %758 : vector<8xf32> to vector<8x1xf32>
    %760 = vector.broadcast %759 : vector<8x1xf32> to vector<8x2xf32>
    %761 = arith.divf %757, %760 : vector<8x2xf32>
    %cst_410 = arith.constant 1.000000e-10 : f32
    %762 = vector.broadcast %cst_410 : f32 to vector<8x2xf32>
    %763 = arith.addf %761, %762 : vector<8x2xf32>
    %c5_411 = arith.constant 5 : index
    %c0_412 = arith.constant 0 : index
    %c0_413 = arith.constant 0 : index
    %764 = vector.load %arg11[%c5_411, %c0_412, %c0_413] : memref<8x8x2xf32, #tpu.memory_space<vmem>>, vector<1x8x2xf32>
    %765 = vector.shape_cast %764 : vector<1x8x2xf32> to vector<8x2xf32>
    %766 = vector.shape_cast %763 : vector<8x2xf32> to vector<1x8x2xf32>
    tpu.vector_store %arg11[%c5_411, %c0_412, %c0_413], %766 {strides = array<i32>} : memref<8x8x2xf32, #tpu.memory_space<vmem>>, vector<1x8x2xf32>,
    %c5_414 = arith.constant 5 : index
    %c0_415 = arith.constant 0 : index
    %c0_416 = arith.constant 0 : index
    %767 = vector.load %arg2[%c5_414, %c0_415, %c0_416] : memref<8x8x1xf32, #tpu.memory_space<vmem>>, vector<1x8x1xf32>
    %768 = vector.shape_cast %767 : vector<1x8x1xf32> to vector<8x1xf32>
    %cst_417 = arith.constant dense<0.000000e+00> : vector<8xf32>
    %769 = vector.multi_reduction <add>, %763, %cst_417 [1] : vector<8x2xf32> to vector<8xf32>
    %770 = vector.shape_cast %769 : vector<8xf32> to vector<8x1xf32>
    %771 = arith.mulf %768, %770 : vector<8x1xf32>
    %772 = vector.extract_strided_slice %763 {offsets = [0, 0], sizes = [8, 1], strides = [1, 1]} : vector<8x2xf32> to vector<8x1xf32>
    %773 = arith.cmpf oge, %771, %772 : vector<8x1xf32>
    %774 = arith.extui %773 : vector<8x1xi1> to vector<8x1xi32>
    %c0_i32_418 = arith.constant 0 : i32
    %775 = vector.broadcast %c0_i32_418 : i32 to vector<8x1xi32>
    %776 = arith.cmpi eq, %774, %775 : vector<8x1xi32>
    %777 = vector.extract_strided_slice %763 {offsets = [0, 0], sizes = [8, 1], strides = [1, 1]} : vector<8x2xf32> to vector<8x1xf32>
    %778 = vector.extract_strided_slice %763 {offsets = [0, 1], sizes = [8, 1], strides = [1, 1]} : vector<8x2xf32> to vector<8x1xf32>
    %779 = arith.select %776, %777, %778 : vector<8x1xi1>, vector<8x1xf32>
    %c5_419 = arith.constant 5 : index
    %c0_420 = arith.constant 0 : index
    %c0_421 = arith.constant 0 : index
    %780 = vector.load %arg12[%c5_419, %c0_420, %c0_421] : memref<8x8x1xi32, #tpu.memory_space<vmem>>, vector<1x8x1xi32>
    %781 = vector.shape_cast %780 : vector<1x8x1xi32> to vector<8x1xi32>
    %782 = vector.shape_cast %774 : vector<8x1xi32> to vector<1x8x1xi32>
    tpu.vector_store %arg12[%c5_419, %c0_420, %c0_421], %782 {strides = array<i32>} : memref<8x8x1xi32, #tpu.memory_space<vmem>>, vector<1x8x1xi32>,
    %cst_422 = arith.constant 1.000000e-10 : f32
    %783 = vector.broadcast %cst_422 : f32 to vector<8x1xf32>
    %784 = arith.addf %779, %783 : vector<8x1xf32>
    %785 = math.log %784 : vector<8x1xf32>
    %786 = arith.addf %655, %785 : vector<8x1xf32>
    %787 = vector.broadcast %774 : vector<8x1xi32> to vector<8x32xi32>
    %788 = arith.cmpi eq, %0, %787 : vector<8x32xi32>
    %789 = arith.extui %788 : vector<8x32xi1> to vector<8x32xi32>
    %790 = arith.sitofp %789 : vector<8x32xi32> to vector<8x32xf32>
    %791 = arith.truncf %790 : vector<8x32xf32> to vector<8x32xbf16>
    %c6 = arith.constant 6 : index
    %c0_423 = arith.constant 0 : index
    %c0_424 = arith.constant 0 : index
    %c0_425 = arith.constant 0 : index
    %792 = vector.load %arg3[%c6, %c0_423, %c0_424, %c0_425] : memref<8x2x32x96xbf16, #tpu.memory_space<vmem>>, vector<1x1x32x96xbf16>
    %793 = vector.shape_cast %792 : vector<1x1x32x96xbf16> to vector<32x96xbf16>
    %cst_426 = arith.constant dense<0.000000e+00> : vector<8x96xf32>
    %794 = tpu.matmul %791, %793, %cst_426 {dimension_numbers = #tpu.dot_dimension_numbers<[1], [0], [0], [1], [0, 0, 1, 1], [], []>} : vector<8x32xbf16>, vector<32x96xbf16>, vector<8x96xf32> -> vector<8x96xf32>
    %795 = arith.truncf %695 : vector<8x32xf32> to vector<8x32xbf16>
    %c6_427 = arith.constant 6 : index
    %c0_428 = arith.constant 0 : index
    %c0_429 = arith.constant 0 : index
    %c0_430 = arith.constant 0 : index
    %796 = vector.load %arg4[%c6_427, %c0_428, %c0_429, %c0_430] : memref<8x2x32x96xbf16, #tpu.memory_space<vmem>>, vector<1x1x32x96xbf16>
    %797 = vector.shape_cast %796 : vector<1x1x32x96xbf16> to vector<32x96xbf16>
    %cst_431 = arith.constant dense<0.000000e+00> : vector<8x96xf32>
    %798 = tpu.matmul %795, %797, %cst_431 {dimension_numbers = #tpu.dot_dimension_numbers<[1], [0], [0], [1], [0, 0, 1, 1], [], []>} : vector<8x32xbf16>, vector<32x96xbf16>, vector<8x96xf32> -> vector<8x96xf32>
    %c6_432 = arith.constant 6 : index
    %c0_433 = arith.constant 0 : index
    %c0_434 = arith.constant 0 : index
    %c0_435 = arith.constant 0 : index
    %799 = vector.load %arg5[%c6_432, %c0_433, %c0_434, %c0_435] : memref<8x2x1x96xf32, #tpu.memory_space<vmem>>, vector<1x1x1x96xf32>
    %800 = vector.shape_cast %799 : vector<1x1x1x96xf32> to vector<1x96xf32>
    %801 = vector.broadcast %800 : vector<1x96xf32> to vector<8x96xf32>
    %802 = arith.addf %794, %801 : vector<8x96xf32>
    %803 = vector.extract_strided_slice %802 {offsets = [0, 0], sizes = [8, 64], strides = [1, 1]} : vector<8x96xf32> to vector<8x64xf32>
    %804 = vector.extract_strided_slice %798 {offsets = [0, 0], sizes = [8, 64], strides = [1, 1]} : vector<8x96xf32> to vector<8x64xf32>
    %805 = arith.addf %803, %804 : vector<8x64xf32>
    %806 = arith.negf %805 : vector<8x64xf32>
    %807 = math.exp %806 : vector<8x64xf32>
    %cst_436 = arith.constant 1.000000e+00 : f32
    %808 = vector.broadcast %cst_436 : f32 to vector<8x64xf32>
    %809 = arith.addf %808, %807 : vector<8x64xf32>
    %810 = arith.divf %808, %809 : vector<8x64xf32>
    %811 = vector.extract_strided_slice %810 {offsets = [0, 0], sizes = [8, 32], strides = [1, 1]} : vector<8x64xf32> to vector<8x32xf32>
    %812 = vector.extract_strided_slice %810 {offsets = [0, 32], sizes = [8, 32], strides = [1, 1]} : vector<8x64xf32> to vector<8x32xf32>
    %813 = vector.extract_strided_slice %802 {offsets = [0, 64], sizes = [8, 32], strides = [1, 1]} : vector<8x96xf32> to vector<8x32xf32>
    %814 = vector.extract_strided_slice %798 {offsets = [0, 64], sizes = [8, 32], strides = [1, 1]} : vector<8x96xf32> to vector<8x32xf32>
    %c6_437 = arith.constant 6 : index
    %c0_438 = arith.constant 0 : index
    %c0_439 = arith.constant 0 : index
    %c0_440 = arith.constant 0 : index
    %815 = vector.load %arg6[%c6_437, %c0_438, %c0_439, %c0_440] : memref<8x2x1x32xf32, #tpu.memory_space<vmem>>, vector<1x1x1x32xf32>
    %816 = vector.shape_cast %815 : vector<1x1x1x32xf32> to vector<1x32xf32>
    %817 = vector.broadcast %816 : vector<1x32xf32> to vector<8x32xf32>
    %818 = arith.addf %814, %817 : vector<8x32xf32>
    %819 = arith.mulf %811, %818 : vector<8x32xf32>
    %820 = arith.addf %813, %819 : vector<8x32xf32>
    %821 = math.tanh %820 : vector<8x32xf32>
    %cst_441 = arith.constant 1.000000e+00 : f32
    %822 = vector.broadcast %cst_441 : f32 to vector<8x32xf32>
    %823 = arith.subf %822, %812 : vector<8x32xf32>
    %824 = arith.mulf %823, %821 : vector<8x32xf32>
    %825 = arith.mulf %812, %695 : vector<8x32xf32>
    %826 = arith.addf %824, %825 : vector<8x32xf32>
    %827 = arith.truncf %826 : vector<8x32xf32> to vector<8x32xbf16>
    %c6_442 = arith.constant 6 : index
    %c1_443 = arith.constant 1 : index
    %c0_444 = arith.constant 0 : index
    %c0_445 = arith.constant 0 : index
    %828 = vector.load %arg3[%c6_442, %c1_443, %c0_444, %c0_445] : memref<8x2x32x96xbf16, #tpu.memory_space<vmem>>, vector<1x1x32x96xbf16>
    %829 = vector.shape_cast %828 : vector<1x1x32x96xbf16> to vector<32x96xbf16>
    %cst_446 = arith.constant dense<0.000000e+00> : vector<8x96xf32>
    %830 = tpu.matmul %827, %829, %cst_446 {dimension_numbers = #tpu.dot_dimension_numbers<[1], [0], [0], [1], [0, 0, 1, 1], [], []>} : vector<8x32xbf16>, vector<32x96xbf16>, vector<8x96xf32> -> vector<8x96xf32>
    %831 = arith.truncf %731 : vector<8x32xf32> to vector<8x32xbf16>
    %c6_447 = arith.constant 6 : index
    %c1_448 = arith.constant 1 : index
    %c0_449 = arith.constant 0 : index
    %c0_450 = arith.constant 0 : index
    %832 = vector.load %arg4[%c6_447, %c1_448, %c0_449, %c0_450] : memref<8x2x32x96xbf16, #tpu.memory_space<vmem>>, vector<1x1x32x96xbf16>
    %833 = vector.shape_cast %832 : vector<1x1x32x96xbf16> to vector<32x96xbf16>
    %cst_451 = arith.constant dense<0.000000e+00> : vector<8x96xf32>
    %834 = tpu.matmul %831, %833, %cst_451 {dimension_numbers = #tpu.dot_dimension_numbers<[1], [0], [0], [1], [0, 0, 1, 1], [], []>} : vector<8x32xbf16>, vector<32x96xbf16>, vector<8x96xf32> -> vector<8x96xf32>
    %c6_452 = arith.constant 6 : index
    %c1_453 = arith.constant 1 : index
    %c0_454 = arith.constant 0 : index
    %c0_455 = arith.constant 0 : index
    %835 = vector.load %arg5[%c6_452, %c1_453, %c0_454, %c0_455] : memref<8x2x1x96xf32, #tpu.memory_space<vmem>>, vector<1x1x1x96xf32>
    %836 = vector.shape_cast %835 : vector<1x1x1x96xf32> to vector<1x96xf32>
    %837 = vector.broadcast %836 : vector<1x96xf32> to vector<8x96xf32>
    %838 = arith.addf %830, %837 : vector<8x96xf32>
    %839 = vector.extract_strided_slice %838 {offsets = [0, 0], sizes = [8, 64], strides = [1, 1]} : vector<8x96xf32> to vector<8x64xf32>
    %840 = vector.extract_strided_slice %834 {offsets = [0, 0], sizes = [8, 64], strides = [1, 1]} : vector<8x96xf32> to vector<8x64xf32>
    %841 = arith.addf %839, %840 : vector<8x64xf32>
    %842 = arith.negf %841 : vector<8x64xf32>
    %843 = math.exp %842 : vector<8x64xf32>
    %cst_456 = arith.constant 1.000000e+00 : f32
    %844 = vector.broadcast %cst_456 : f32 to vector<8x64xf32>
    %845 = arith.addf %844, %843 : vector<8x64xf32>
    %846 = arith.divf %844, %845 : vector<8x64xf32>
    %847 = vector.extract_strided_slice %846 {offsets = [0, 0], sizes = [8, 32], strides = [1, 1]} : vector<8x64xf32> to vector<8x32xf32>
    %848 = vector.extract_strided_slice %846 {offsets = [0, 32], sizes = [8, 32], strides = [1, 1]} : vector<8x64xf32> to vector<8x32xf32>
    %849 = vector.extract_strided_slice %838 {offsets = [0, 64], sizes = [8, 32], strides = [1, 1]} : vector<8x96xf32> to vector<8x32xf32>
    %850 = vector.extract_strided_slice %834 {offsets = [0, 64], sizes = [8, 32], strides = [1, 1]} : vector<8x96xf32> to vector<8x32xf32>
    %c6_457 = arith.constant 6 : index
    %c1_458 = arith.constant 1 : index
    %c0_459 = arith.constant 0 : index
    %c0_460 = arith.constant 0 : index
    %851 = vector.load %arg6[%c6_457, %c1_458, %c0_459, %c0_460] : memref<8x2x1x32xf32, #tpu.memory_space<vmem>>, vector<1x1x1x32xf32>
    %852 = vector.shape_cast %851 : vector<1x1x1x32xf32> to vector<1x32xf32>
    %853 = vector.broadcast %852 : vector<1x32xf32> to vector<8x32xf32>
    %854 = arith.addf %850, %853 : vector<8x32xf32>
    %855 = arith.mulf %847, %854 : vector<8x32xf32>
    %856 = arith.addf %849, %855 : vector<8x32xf32>
    %857 = math.tanh %856 : vector<8x32xf32>
    %cst_461 = arith.constant 1.000000e+00 : f32
    %858 = vector.broadcast %cst_461 : f32 to vector<8x32xf32>
    %859 = arith.subf %858, %848 : vector<8x32xf32>
    %860 = arith.mulf %859, %857 : vector<8x32xf32>
    %861 = arith.mulf %848, %731 : vector<8x32xf32>
    %862 = arith.addf %860, %861 : vector<8x32xf32>
    %863 = math.cos %862 : vector<8x32xf32>
    %cst_462 = arith.constant 1.000000e-10 : f32
    %864 = vector.broadcast %cst_462 : f32 to vector<8x32xf32>
    %865 = arith.addf %863, %864 : vector<8x32xf32>
    %866 = arith.truncf %865 : vector<8x32xf32> to vector<8x32xbf16>
    %c6_463 = arith.constant 6 : index
    %c0_464 = arith.constant 0 : index
    %c0_465 = arith.constant 0 : index
    %867 = vector.load %arg7[%c6_463, %c0_464, %c0_465] : memref<8x32x32xbf16, #tpu.memory_space<vmem>>, vector<1x32x32xbf16>
    %868 = vector.shape_cast %867 : vector<1x32x32xbf16> to vector<32x32xbf16>
    %cst_466 = arith.constant dense<0.000000e+00> : vector<8x32xf32>
    %869 = tpu.matmul %866, %868, %cst_466 {dimension_numbers = #tpu.dot_dimension_numbers<[1], [0], [0], [1], [0, 0, 1, 1], [], []>} : vector<8x32xbf16>, vector<32x32xbf16>, vector<8x32xf32> -> vector<8x32xf32>
    %c6_467 = arith.constant 6 : index
    %c0_468 = arith.constant 0 : index
    %c0_469 = arith.constant 0 : index
    %870 = vector.load %arg8[%c6_467, %c0_468, %c0_469] : memref<8x1x32xf32, #tpu.memory_space<vmem>>, vector<1x1x32xf32>
    %871 = vector.shape_cast %870 : vector<1x1x32xf32> to vector<1x32xf32>
    %872 = vector.broadcast %871 : vector<1x32xf32> to vector<8x32xf32>
    %873 = arith.addf %869, %872 : vector<8x32xf32>
    %cst_470 = arith.constant 0.000000e+00 : f32
    %874 = vector.broadcast %cst_470 : f32 to vector<8x32xf32>
    %875 = arith.maximumf %873, %874 : vector<8x32xf32>
    %876 = arith.truncf %875 : vector<8x32xf32> to vector<8x32xbf16>
    %c6_471 = arith.constant 6 : index
    %c0_472 = arith.constant 0 : index
    %c0_473 = arith.constant 0 : index
    %877 = vector.load %arg9[%c6_471, %c0_472, %c0_473] : memref<8x32x2xbf16, #tpu.memory_space<vmem>>, vector<1x32x2xbf16>
    %878 = vector.shape_cast %877 : vector<1x32x2xbf16> to vector<32x2xbf16>
    %cst_474 = arith.constant dense<0.000000e+00> : vector<8x2xf32>
    %879 = tpu.matmul %876, %878, %cst_474 {dimension_numbers = #tpu.dot_dimension_numbers<[1], [0], [0], [1], [0, 0, 1, 1], [], []>} : vector<8x32xbf16>, vector<32x2xbf16>, vector<8x2xf32> -> vector<8x2xf32>
    %c6_475 = arith.constant 6 : index
    %c0_476 = arith.constant 0 : index
    %c0_477 = arith.constant 0 : index
    %880 = vector.load %arg10[%c6_475, %c0_476, %c0_477] : memref<8x1x2xf32, #tpu.memory_space<vmem>>, vector<1x1x2xf32>
    %881 = vector.shape_cast %880 : vector<1x1x2xf32> to vector<1x2xf32>
    %882 = vector.broadcast %881 : vector<1x2xf32> to vector<8x2xf32>
    %883 = arith.addf %879, %882 : vector<8x2xf32>
    %cst_478 = arith.constant dense<0xFF800000> : vector<8xf32>
    %884 = vector.multi_reduction <maximumf>, %883, %cst_478 [1] : vector<8x2xf32> to vector<8xf32>
    %885 = vector.shape_cast %884 : vector<8xf32> to vector<8x1xf32>
    %886 = vector.broadcast %885 : vector<8x1xf32> to vector<8x2xf32>
    %887 = arith.subf %883, %886 : vector<8x2xf32>
    %888 = math.exp %887 : vector<8x2xf32>
    %cst_479 = arith.constant dense<0.000000e+00> : vector<8xf32>
    %889 = vector.multi_reduction <add>, %888, %cst_479 [1] : vector<8x2xf32> to vector<8xf32>
    %890 = vector.shape_cast %889 : vector<8xf32> to vector<8x1xf32>
    %891 = vector.broadcast %890 : vector<8x1xf32> to vector<8x2xf32>
    %892 = arith.divf %888, %891 : vector<8x2xf32>
    %cst_480 = arith.constant 1.000000e-10 : f32
    %893 = vector.broadcast %cst_480 : f32 to vector<8x2xf32>
    %894 = arith.addf %892, %893 : vector<8x2xf32>
    %c6_481 = arith.constant 6 : index
    %c0_482 = arith.constant 0 : index
    %c0_483 = arith.constant 0 : index
    %895 = vector.load %arg11[%c6_481, %c0_482, %c0_483] : memref<8x8x2xf32, #tpu.memory_space<vmem>>, vector<1x8x2xf32>
    %896 = vector.shape_cast %895 : vector<1x8x2xf32> to vector<8x2xf32>
    %897 = vector.shape_cast %894 : vector<8x2xf32> to vector<1x8x2xf32>
    tpu.vector_store %arg11[%c6_481, %c0_482, %c0_483], %897 {strides = array<i32>} : memref<8x8x2xf32, #tpu.memory_space<vmem>>, vector<1x8x2xf32>,
    %c6_484 = arith.constant 6 : index
    %c0_485 = arith.constant 0 : index
    %c0_486 = arith.constant 0 : index
    %898 = vector.load %arg2[%c6_484, %c0_485, %c0_486] : memref<8x8x1xf32, #tpu.memory_space<vmem>>, vector<1x8x1xf32>
    %899 = vector.shape_cast %898 : vector<1x8x1xf32> to vector<8x1xf32>
    %cst_487 = arith.constant dense<0.000000e+00> : vector<8xf32>
    %900 = vector.multi_reduction <add>, %894, %cst_487 [1] : vector<8x2xf32> to vector<8xf32>
    %901 = vector.shape_cast %900 : vector<8xf32> to vector<8x1xf32>
    %902 = arith.mulf %899, %901 : vector<8x1xf32>
    %903 = vector.extract_strided_slice %894 {offsets = [0, 0], sizes = [8, 1], strides = [1, 1]} : vector<8x2xf32> to vector<8x1xf32>
    %904 = arith.cmpf oge, %902, %903 : vector<8x1xf32>
    %905 = arith.extui %904 : vector<8x1xi1> to vector<8x1xi32>
    %c0_i32_488 = arith.constant 0 : i32
    %906 = vector.broadcast %c0_i32_488 : i32 to vector<8x1xi32>
    %907 = arith.cmpi eq, %905, %906 : vector<8x1xi32>
    %908 = vector.extract_strided_slice %894 {offsets = [0, 0], sizes = [8, 1], strides = [1, 1]} : vector<8x2xf32> to vector<8x1xf32>
    %909 = vector.extract_strided_slice %894 {offsets = [0, 1], sizes = [8, 1], strides = [1, 1]} : vector<8x2xf32> to vector<8x1xf32>
    %910 = arith.select %907, %908, %909 : vector<8x1xi1>, vector<8x1xf32>
    %c6_489 = arith.constant 6 : index
    %c0_490 = arith.constant 0 : index
    %c0_491 = arith.constant 0 : index
    %911 = vector.load %arg12[%c6_489, %c0_490, %c0_491] : memref<8x8x1xi32, #tpu.memory_space<vmem>>, vector<1x8x1xi32>
    %912 = vector.shape_cast %911 : vector<1x8x1xi32> to vector<8x1xi32>
    %913 = vector.shape_cast %905 : vector<8x1xi32> to vector<1x8x1xi32>
    tpu.vector_store %arg12[%c6_489, %c0_490, %c0_491], %913 {strides = array<i32>} : memref<8x8x1xi32, #tpu.memory_space<vmem>>, vector<1x8x1xi32>,
    %cst_492 = arith.constant 1.000000e-10 : f32
    %914 = vector.broadcast %cst_492 : f32 to vector<8x1xf32>
    %915 = arith.addf %910, %914 : vector<8x1xf32>
    %916 = math.log %915 : vector<8x1xf32>
    %917 = arith.addf %786, %916 : vector<8x1xf32>
    %918 = vector.broadcast %905 : vector<8x1xi32> to vector<8x32xi32>
    %919 = arith.cmpi eq, %0, %918 : vector<8x32xi32>
    %920 = arith.extui %919 : vector<8x32xi1> to vector<8x32xi32>
    %921 = arith.sitofp %920 : vector<8x32xi32> to vector<8x32xf32>
    %922 = arith.truncf %921 : vector<8x32xf32> to vector<8x32xbf16>
    %c7 = arith.constant 7 : index
    %c0_493 = arith.constant 0 : index
    %c0_494 = arith.constant 0 : index
    %c0_495 = arith.constant 0 : index
    %923 = vector.load %arg3[%c7, %c0_493, %c0_494, %c0_495] : memref<8x2x32x96xbf16, #tpu.memory_space<vmem>>, vector<1x1x32x96xbf16>
    %924 = vector.shape_cast %923 : vector<1x1x32x96xbf16> to vector<32x96xbf16>
    %cst_496 = arith.constant dense<0.000000e+00> : vector<8x96xf32>
    %925 = tpu.matmul %922, %924, %cst_496 {dimension_numbers = #tpu.dot_dimension_numbers<[1], [0], [0], [1], [0, 0, 1, 1], [], []>} : vector<8x32xbf16>, vector<32x96xbf16>, vector<8x96xf32> -> vector<8x96xf32>
    %926 = arith.truncf %826 : vector<8x32xf32> to vector<8x32xbf16>
    %c7_497 = arith.constant 7 : index
    %c0_498 = arith.constant 0 : index
    %c0_499 = arith.constant 0 : index
    %c0_500 = arith.constant 0 : index
    %927 = vector.load %arg4[%c7_497, %c0_498, %c0_499, %c0_500] : memref<8x2x32x96xbf16, #tpu.memory_space<vmem>>, vector<1x1x32x96xbf16>
    %928 = vector.shape_cast %927 : vector<1x1x32x96xbf16> to vector<32x96xbf16>
    %cst_501 = arith.constant dense<0.000000e+00> : vector<8x96xf32>
    %929 = tpu.matmul %926, %928, %cst_501 {dimension_numbers = #tpu.dot_dimension_numbers<[1], [0], [0], [1], [0, 0, 1, 1], [], []>} : vector<8x32xbf16>, vector<32x96xbf16>, vector<8x96xf32> -> vector<8x96xf32>
    %c7_502 = arith.constant 7 : index
    %c0_503 = arith.constant 0 : index
    %c0_504 = arith.constant 0 : index
    %c0_505 = arith.constant 0 : index
    %930 = vector.load %arg5[%c7_502, %c0_503, %c0_504, %c0_505] : memref<8x2x1x96xf32, #tpu.memory_space<vmem>>, vector<1x1x1x96xf32>
    %931 = vector.shape_cast %930 : vector<1x1x1x96xf32> to vector<1x96xf32>
    %932 = vector.broadcast %931 : vector<1x96xf32> to vector<8x96xf32>
    %933 = arith.addf %925, %932 : vector<8x96xf32>
    %934 = vector.extract_strided_slice %933 {offsets = [0, 0], sizes = [8, 64], strides = [1, 1]} : vector<8x96xf32> to vector<8x64xf32>
    %935 = vector.extract_strided_slice %929 {offsets = [0, 0], sizes = [8, 64], strides = [1, 1]} : vector<8x96xf32> to vector<8x64xf32>
    %936 = arith.addf %934, %935 : vector<8x64xf32>
    %937 = arith.negf %936 : vector<8x64xf32>
    %938 = math.exp %937 : vector<8x64xf32>
    %cst_506 = arith.constant 1.000000e+00 : f32
    %939 = vector.broadcast %cst_506 : f32 to vector<8x64xf32>
    %940 = arith.addf %939, %938 : vector<8x64xf32>
    %941 = arith.divf %939, %940 : vector<8x64xf32>
    %942 = vector.extract_strided_slice %941 {offsets = [0, 0], sizes = [8, 32], strides = [1, 1]} : vector<8x64xf32> to vector<8x32xf32>
    %943 = vector.extract_strided_slice %941 {offsets = [0, 32], sizes = [8, 32], strides = [1, 1]} : vector<8x64xf32> to vector<8x32xf32>
    %944 = vector.extract_strided_slice %933 {offsets = [0, 64], sizes = [8, 32], strides = [1, 1]} : vector<8x96xf32> to vector<8x32xf32>
    %945 = vector.extract_strided_slice %929 {offsets = [0, 64], sizes = [8, 32], strides = [1, 1]} : vector<8x96xf32> to vector<8x32xf32>
    %c7_507 = arith.constant 7 : index
    %c0_508 = arith.constant 0 : index
    %c0_509 = arith.constant 0 : index
    %c0_510 = arith.constant 0 : index
    %946 = vector.load %arg6[%c7_507, %c0_508, %c0_509, %c0_510] : memref<8x2x1x32xf32, #tpu.memory_space<vmem>>, vector<1x1x1x32xf32>
    %947 = vector.shape_cast %946 : vector<1x1x1x32xf32> to vector<1x32xf32>
    %948 = vector.broadcast %947 : vector<1x32xf32> to vector<8x32xf32>
    %949 = arith.addf %945, %948 : vector<8x32xf32>
    %950 = arith.mulf %942, %949 : vector<8x32xf32>
    %951 = arith.addf %944, %950 : vector<8x32xf32>
    %952 = math.tanh %951 : vector<8x32xf32>
    %cst_511 = arith.constant 1.000000e+00 : f32
    %953 = vector.broadcast %cst_511 : f32 to vector<8x32xf32>
    %954 = arith.subf %953, %943 : vector<8x32xf32>
    %955 = arith.mulf %954, %952 : vector<8x32xf32>
    %956 = arith.mulf %943, %826 : vector<8x32xf32>
    %957 = arith.addf %955, %956 : vector<8x32xf32>
    %958 = arith.truncf %957 : vector<8x32xf32> to vector<8x32xbf16>
    %c7_512 = arith.constant 7 : index
    %c1_513 = arith.constant 1 : index
    %c0_514 = arith.constant 0 : index
    %c0_515 = arith.constant 0 : index
    %959 = vector.load %arg3[%c7_512, %c1_513, %c0_514, %c0_515] : memref<8x2x32x96xbf16, #tpu.memory_space<vmem>>, vector<1x1x32x96xbf16>
    %960 = vector.shape_cast %959 : vector<1x1x32x96xbf16> to vector<32x96xbf16>
    %cst_516 = arith.constant dense<0.000000e+00> : vector<8x96xf32>
    %961 = tpu.matmul %958, %960, %cst_516 {dimension_numbers = #tpu.dot_dimension_numbers<[1], [0], [0], [1], [0, 0, 1, 1], [], []>} : vector<8x32xbf16>, vector<32x96xbf16>, vector<8x96xf32> -> vector<8x96xf32>
    %962 = arith.truncf %862 : vector<8x32xf32> to vector<8x32xbf16>
    %c7_517 = arith.constant 7 : index
    %c1_518 = arith.constant 1 : index
    %c0_519 = arith.constant 0 : index
    %c0_520 = arith.constant 0 : index
    %963 = vector.load %arg4[%c7_517, %c1_518, %c0_519, %c0_520] : memref<8x2x32x96xbf16, #tpu.memory_space<vmem>>, vector<1x1x32x96xbf16>
    %964 = vector.shape_cast %963 : vector<1x1x32x96xbf16> to vector<32x96xbf16>
    %cst_521 = arith.constant dense<0.000000e+00> : vector<8x96xf32>
    %965 = tpu.matmul %962, %964, %cst_521 {dimension_numbers = #tpu.dot_dimension_numbers<[1], [0], [0], [1], [0, 0, 1, 1], [], []>} : vector<8x32xbf16>, vector<32x96xbf16>, vector<8x96xf32> -> vector<8x96xf32>
    %c7_522 = arith.constant 7 : index
    %c1_523 = arith.constant 1 : index
    %c0_524 = arith.constant 0 : index
    %c0_525 = arith.constant 0 : index
    %966 = vector.load %arg5[%c7_522, %c1_523, %c0_524, %c0_525] : memref<8x2x1x96xf32, #tpu.memory_space<vmem>>, vector<1x1x1x96xf32>
    %967 = vector.shape_cast %966 : vector<1x1x1x96xf32> to vector<1x96xf32>
    %968 = vector.broadcast %967 : vector<1x96xf32> to vector<8x96xf32>
    %969 = arith.addf %961, %968 : vector<8x96xf32>
    %970 = vector.extract_strided_slice %969 {offsets = [0, 0], sizes = [8, 64], strides = [1, 1]} : vector<8x96xf32> to vector<8x64xf32>
    %971 = vector.extract_strided_slice %965 {offsets = [0, 0], sizes = [8, 64], strides = [1, 1]} : vector<8x96xf32> to vector<8x64xf32>
    %972 = arith.addf %970, %971 : vector<8x64xf32>
    %973 = arith.negf %972 : vector<8x64xf32>
    %974 = math.exp %973 : vector<8x64xf32>
    %cst_526 = arith.constant 1.000000e+00 : f32
    %975 = vector.broadcast %cst_526 : f32 to vector<8x64xf32>
    %976 = arith.addf %975, %974 : vector<8x64xf32>
    %977 = arith.divf %975, %976 : vector<8x64xf32>
    %978 = vector.extract_strided_slice %977 {offsets = [0, 0], sizes = [8, 32], strides = [1, 1]} : vector<8x64xf32> to vector<8x32xf32>
    %979 = vector.extract_strided_slice %977 {offsets = [0, 32], sizes = [8, 32], strides = [1, 1]} : vector<8x64xf32> to vector<8x32xf32>
    %980 = vector.extract_strided_slice %969 {offsets = [0, 64], sizes = [8, 32], strides = [1, 1]} : vector<8x96xf32> to vector<8x32xf32>
    %981 = vector.extract_strided_slice %965 {offsets = [0, 64], sizes = [8, 32], strides = [1, 1]} : vector<8x96xf32> to vector<8x32xf32>
    %c7_527 = arith.constant 7 : index
    %c1_528 = arith.constant 1 : index
    %c0_529 = arith.constant 0 : index
    %c0_530 = arith.constant 0 : index
    %982 = vector.load %arg6[%c7_527, %c1_528, %c0_529, %c0_530] : memref<8x2x1x32xf32, #tpu.memory_space<vmem>>, vector<1x1x1x32xf32>
    %983 = vector.shape_cast %982 : vector<1x1x1x32xf32> to vector<1x32xf32>
    %984 = vector.broadcast %983 : vector<1x32xf32> to vector<8x32xf32>
    %985 = arith.addf %981, %984 : vector<8x32xf32>
    %986 = arith.mulf %978, %985 : vector<8x32xf32>
    %987 = arith.addf %980, %986 : vector<8x32xf32>
    %988 = math.tanh %987 : vector<8x32xf32>
    %cst_531 = arith.constant 1.000000e+00 : f32
    %989 = vector.broadcast %cst_531 : f32 to vector<8x32xf32>
    %990 = arith.subf %989, %979 : vector<8x32xf32>
    %991 = arith.mulf %990, %988 : vector<8x32xf32>
    %992 = arith.mulf %979, %862 : vector<8x32xf32>
    %993 = arith.addf %991, %992 : vector<8x32xf32>
    %994 = math.cos %993 : vector<8x32xf32>
    %cst_532 = arith.constant 1.000000e-10 : f32
    %995 = vector.broadcast %cst_532 : f32 to vector<8x32xf32>
    %996 = arith.addf %994, %995 : vector<8x32xf32>
    %997 = arith.truncf %996 : vector<8x32xf32> to vector<8x32xbf16>
    %c7_533 = arith.constant 7 : index
    %c0_534 = arith.constant 0 : index
    %c0_535 = arith.constant 0 : index
    %998 = vector.load %arg7[%c7_533, %c0_534, %c0_535] : memref<8x32x32xbf16, #tpu.memory_space<vmem>>, vector<1x32x32xbf16>
    %999 = vector.shape_cast %998 : vector<1x32x32xbf16> to vector<32x32xbf16>
    %cst_536 = arith.constant dense<0.000000e+00> : vector<8x32xf32>
    %1000 = tpu.matmul %997, %999, %cst_536 {dimension_numbers = #tpu.dot_dimension_numbers<[1], [0], [0], [1], [0, 0, 1, 1], [], []>} : vector<8x32xbf16>, vector<32x32xbf16>, vector<8x32xf32> -> vector<8x32xf32>
    %c7_537 = arith.constant 7 : index
    %c0_538 = arith.constant 0 : index
    %c0_539 = arith.constant 0 : index
    %1001 = vector.load %arg8[%c7_537, %c0_538, %c0_539] : memref<8x1x32xf32, #tpu.memory_space<vmem>>, vector<1x1x32xf32>
    %1002 = vector.shape_cast %1001 : vector<1x1x32xf32> to vector<1x32xf32>
    %1003 = vector.broadcast %1002 : vector<1x32xf32> to vector<8x32xf32>
    %1004 = arith.addf %1000, %1003 : vector<8x32xf32>
    %cst_540 = arith.constant 0.000000e+00 : f32
    %1005 = vector.broadcast %cst_540 : f32 to vector<8x32xf32>
    %1006 = arith.maximumf %1004, %1005 : vector<8x32xf32>
    %1007 = arith.truncf %1006 : vector<8x32xf32> to vector<8x32xbf16>
    %c7_541 = arith.constant 7 : index
    %c0_542 = arith.constant 0 : index
    %c0_543 = arith.constant 0 : index
    %1008 = vector.load %arg9[%c7_541, %c0_542, %c0_543] : memref<8x32x2xbf16, #tpu.memory_space<vmem>>, vector<1x32x2xbf16>
    %1009 = vector.shape_cast %1008 : vector<1x32x2xbf16> to vector<32x2xbf16>
    %cst_544 = arith.constant dense<0.000000e+00> : vector<8x2xf32>
    %1010 = tpu.matmul %1007, %1009, %cst_544 {dimension_numbers = #tpu.dot_dimension_numbers<[1], [0], [0], [1], [0, 0, 1, 1], [], []>} : vector<8x32xbf16>, vector<32x2xbf16>, vector<8x2xf32> -> vector<8x2xf32>
    %c7_545 = arith.constant 7 : index
    %c0_546 = arith.constant 0 : index
    %c0_547 = arith.constant 0 : index
    %1011 = vector.load %arg10[%c7_545, %c0_546, %c0_547] : memref<8x1x2xf32, #tpu.memory_space<vmem>>, vector<1x1x2xf32>
    %1012 = vector.shape_cast %1011 : vector<1x1x2xf32> to vector<1x2xf32>
    %1013 = vector.broadcast %1012 : vector<1x2xf32> to vector<8x2xf32>
    %1014 = arith.addf %1010, %1013 : vector<8x2xf32>
    %cst_548 = arith.constant dense<0xFF800000> : vector<8xf32>
    %1015 = vector.multi_reduction <maximumf>, %1014, %cst_548 [1] : vector<8x2xf32> to vector<8xf32>
    %1016 = vector.shape_cast %1015 : vector<8xf32> to vector<8x1xf32>
    %1017 = vector.broadcast %1016 : vector<8x1xf32> to vector<8x2xf32>
    %1018 = arith.subf %1014, %1017 : vector<8x2xf32>
    %1019 = math.exp %1018 : vector<8x2xf32>
    %cst_549 = arith.constant dense<0.000000e+00> : vector<8xf32>
    %1020 = vector.multi_reduction <add>, %1019, %cst_549 [1] : vector<8x2xf32> to vector<8xf32>
    %1021 = vector.shape_cast %1020 : vector<8xf32> to vector<8x1xf32>
    %1022 = vector.broadcast %1021 : vector<8x1xf32> to vector<8x2xf32>
    %1023 = arith.divf %1019, %1022 : vector<8x2xf32>
    %cst_550 = arith.constant 1.000000e-10 : f32
    %1024 = vector.broadcast %cst_550 : f32 to vector<8x2xf32>
    %1025 = arith.addf %1023, %1024 : vector<8x2xf32>
    %c7_551 = arith.constant 7 : index
    %c0_552 = arith.constant 0 : index
    %c0_553 = arith.constant 0 : index
    %1026 = vector.load %arg11[%c7_551, %c0_552, %c0_553] : memref<8x8x2xf32, #tpu.memory_space<vmem>>, vector<1x8x2xf32>
    %1027 = vector.shape_cast %1026 : vector<1x8x2xf32> to vector<8x2xf32>
    %1028 = vector.shape_cast %1025 : vector<8x2xf32> to vector<1x8x2xf32>
    tpu.vector_store %arg11[%c7_551, %c0_552, %c0_553], %1028 {strides = array<i32>} : memref<8x8x2xf32, #tpu.memory_space<vmem>>, vector<1x8x2xf32>,
    %c7_554 = arith.constant 7 : index
    %c0_555 = arith.constant 0 : index
    %c0_556 = arith.constant 0 : index
    %1029 = vector.load %arg2[%c7_554, %c0_555, %c0_556] : memref<8x8x1xf32, #tpu.memory_space<vmem>>, vector<1x8x1xf32>
    %1030 = vector.shape_cast %1029 : vector<1x8x1xf32> to vector<8x1xf32>
    %cst_557 = arith.constant dense<0.000000e+00> : vector<8xf32>
    %1031 = vector.multi_reduction <add>, %1025, %cst_557 [1] : vector<8x2xf32> to vector<8xf32>
    %1032 = vector.shape_cast %1031 : vector<8xf32> to vector<8x1xf32>
    %1033 = arith.mulf %1030, %1032 : vector<8x1xf32>
    %1034 = vector.extract_strided_slice %1025 {offsets = [0, 0], sizes = [8, 1], strides = [1, 1]} : vector<8x2xf32> to vector<8x1xf32>
    %1035 = arith.cmpf oge, %1033, %1034 : vector<8x1xf32>
    %1036 = arith.extui %1035 : vector<8x1xi1> to vector<8x1xi32>
    %c0_i32_558 = arith.constant 0 : i32
    %1037 = vector.broadcast %c0_i32_558 : i32 to vector<8x1xi32>
    %1038 = arith.cmpi eq, %1036, %1037 : vector<8x1xi32>
    %1039 = vector.extract_strided_slice %1025 {offsets = [0, 0], sizes = [8, 1], strides = [1, 1]} : vector<8x2xf32> to vector<8x1xf32>
    %1040 = vector.extract_strided_slice %1025 {offsets = [0, 1], sizes = [8, 1], strides = [1, 1]} : vector<8x2xf32> to vector<8x1xf32>
    %1041 = arith.select %1038, %1039, %1040 : vector<8x1xi1>, vector<8x1xf32>
    %c7_559 = arith.constant 7 : index
    %c0_560 = arith.constant 0 : index
    %c0_561 = arith.constant 0 : index
    %1042 = vector.load %arg12[%c7_559, %c0_560, %c0_561] : memref<8x8x1xi32, #tpu.memory_space<vmem>>, vector<1x8x1xi32>
    %1043 = vector.shape_cast %1042 : vector<1x8x1xi32> to vector<8x1xi32>
    %1044 = vector.shape_cast %1036 : vector<8x1xi32> to vector<1x8x1xi32>
    tpu.vector_store %arg12[%c7_559, %c0_560, %c0_561], %1044 {strides = array<i32>} : memref<8x8x1xi32, #tpu.memory_space<vmem>>, vector<1x8x1xi32>,
    %cst_562 = arith.constant 1.000000e-10 : f32
    %1045 = vector.broadcast %cst_562 : f32 to vector<8x1xf32>
    %1046 = arith.addf %1041, %1045 : vector<8x1xf32>
    %1047 = math.log %1046 : vector<8x1xf32>
    %1048 = arith.addf %917, %1047 : vector<8x1xf32>
    %c0_563 = arith.constant 0 : index
    %c0_564 = arith.constant 0 : index
    %1049 = vector.load %arg13[%c0_563, %c0_564] : memref<8x1xf32, #tpu.memory_space<vmem>>, vector<8x1xf32>
    tpu.vector_store %arg13[%c0_563, %c0_564], %1048 {strides = array<i32>} : memref<8x1xf32, #tpu.memory_space<vmem>>, vector<8x1xf32>,
    return
  }
  func.func @transform_0(%arg0: i32) -> (i32, i32) {
    %c0_i32 = arith.constant 0 : i32
    %c0_i32_0 = arith.constant 0 : i32
    return %arg0, %c0_i32 : i32, i32
  }
  func.func @transform_1(%arg0: i32) -> (i32, i32, i32) {
    %c0_i32 = arith.constant 0 : i32
    %c0_i32_0 = arith.constant 0 : i32
    %c0_i32_1 = arith.constant 0 : i32
    return %c0_i32, %arg0, %c0_i32_0 : i32, i32, i32
  }
  func.func @transform_2(%arg0: i32) -> (i32, i32, i32, i32) {
    %c0_i32 = arith.constant 0 : i32
    %c0_i32_0 = arith.constant 0 : i32
    %c0_i32_1 = arith.constant 0 : i32
    %c0_i32_2 = arith.constant 0 : i32
    %c0_i32_3 = arith.constant 0 : i32
    return %c0_i32, %c0_i32_0, %c0_i32_1, %c0_i32_2 : i32, i32, i32, i32
  }
  func.func @transform_3(%arg0: i32) -> (i32, i32, i32, i32) {
    %c0_i32 = arith.constant 0 : i32
    %c0_i32_0 = arith.constant 0 : i32
    %c0_i32_1 = arith.constant 0 : i32
    %c0_i32_2 = arith.constant 0 : i32
    %c0_i32_3 = arith.constant 0 : i32
    return %c0_i32, %c0_i32_0, %c0_i32_1, %c0_i32_2 : i32, i32, i32, i32
  }
  func.func @transform_4(%arg0: i32) -> (i32, i32, i32, i32) {
    %c0_i32 = arith.constant 0 : i32
    %c0_i32_0 = arith.constant 0 : i32
    %c0_i32_1 = arith.constant 0 : i32
    %c0_i32_2 = arith.constant 0 : i32
    %c0_i32_3 = arith.constant 0 : i32
    return %c0_i32, %c0_i32_0, %c0_i32_1, %c0_i32_2 : i32, i32, i32, i32
  }
  func.func @transform_5(%arg0: i32) -> (i32, i32, i32, i32) {
    %c0_i32 = arith.constant 0 : i32
    %c0_i32_0 = arith.constant 0 : i32
    %c0_i32_1 = arith.constant 0 : i32
    %c0_i32_2 = arith.constant 0 : i32
    %c0_i32_3 = arith.constant 0 : i32
    return %c0_i32, %c0_i32_0, %c0_i32_1, %c0_i32_2 : i32, i32, i32, i32
  }
  func.func @transform_6(%arg0: i32) -> (i32, i32, i32) {
    %c0_i32 = arith.constant 0 : i32
    %c0_i32_0 = arith.constant 0 : i32
    %c0_i32_1 = arith.constant 0 : i32
    %c0_i32_2 = arith.constant 0 : i32
    return %c0_i32, %c0_i32_0, %c0_i32_1 : i32, i32, i32
  }
  func.func @transform_7(%arg0: i32) -> (i32, i32, i32) {
    %c0_i32 = arith.constant 0 : i32
    %c0_i32_0 = arith.constant 0 : i32
    %c0_i32_1 = arith.constant 0 : i32
    %c0_i32_2 = arith.constant 0 : i32
    return %c0_i32, %c0_i32_0, %c0_i32_1 : i32, i32, i32
  }
  func.func @transform_8(%arg0: i32) -> (i32, i32, i32) {
    %c0_i32 = arith.constant 0 : i32
    %c0_i32_0 = arith.constant 0 : i32
    %c0_i32_1 = arith.constant 0 : i32
    %c0_i32_2 = arith.constant 0 : i32
    return %c0_i32, %c0_i32_0, %c0_i32_1 : i32, i32, i32
  }
  func.func @transform_9(%arg0: i32) -> (i32, i32, i32) {
    %c0_i32 = arith.constant 0 : i32
    %c0_i32_0 = arith.constant 0 : i32
    %c0_i32_1 = arith.constant 0 : i32
    %c0_i32_2 = arith.constant 0 : i32
    return %c0_i32, %c0_i32_0, %c0_i32_1 : i32, i32, i32
  }
  func.func @transform_10(%arg0: i32) -> (i32, i32, i32) {
    %c0_i32 = arith.constant 0 : i32
    %c0_i32_0 = arith.constant 0 : i32
    %c0_i32_1 = arith.constant 0 : i32
    return %c0_i32, %arg0, %c0_i32_0 : i32, i32, i32
  }
  func.func @transform_11(%arg0: i32) -> (i32, i32, i32) {
    %c0_i32 = arith.constant 0 : i32
    %c0_i32_0 = arith.constant 0 : i32
    %c0_i32_1 = arith.constant 0 : i32
    return %c0_i32, %arg0, %c0_i32_0 : i32, i32, i32
  }
  func.func @transform_12(%arg0: i32) -> (i32, i32) {
    %c0_i32 = arith.constant 0 : i32
    %c0_i32_0 = arith.constant 0 : i32
    return %arg0, %c0_i32 : i32, i32
  }
}

</mosaic_0001>

<llo_original>
// kernel: tpu_custom_call.1
$region0: #{tpu_custom_call.1}
  #allocation0 [shape = 'u32[]', space=smem, size = 0x4, offset = 0x4, fixed_abs, tag = 'smem constant byte address 0x4 - core index']
  #allocation1 [shape = 'u32[144,128]{1,0:T(1,128)}', space=vmem, size = 0x12000, scoped, tag = 'internal scratch']
  %s0 = inlined_call_operand.vmem [shape: f32[8,32], index: 0, kind: input, shape index: {}]
  %s1 = inlined_call_operand.vmem [shape: f32[8,8,1], index: 1, kind: input, shape index: {}]
  %s2 = inlined_call_operand.hbm [shape: bf16[8,2,32,96], index: 2, kind: input, shape index: {}]
  %s3 = inlined_call_operand.hbm [shape: bf16[8,2,32,96], index: 3, kind: input, shape index: {}]
  %s4 = inlined_call_operand.vmem [shape: f32[8,2,1,96], index: 4, kind: input, shape index: {}]
  %s5 = inlined_call_operand.vmem [shape: f32[8,2,1,32], index: 5, kind: input, shape index: {}]
  %s6 = inlined_call_operand.vmem [shape: bf16[8,32,32], index: 6, kind: input, shape index: {}]
  %s7 = inlined_call_operand.vmem [shape: f32[8,1,32], index: 7, kind: input, shape index: {}]
  %s8 = inlined_call_operand.vmem [shape: bf16[8,32,2], index: 8, kind: input, shape index: {}]
  %s9 = inlined_call_operand.vmem [shape: f32[8,1,2], index: 9, kind: input, shape index: {}]
  %s10 = inlined_call_operand.vmem [shape: f32[8,8,2], index: 10, kind: output, shape index: {0}]
  %s11 = inlined_call_operand.vmem [shape: s32[8,8,1], index: 11, kind: output, shape index: {1}]
  %s12 = inlined_call_operand.vmem [shape: f32[8,1], index: 12, kind: output, shape index: {2}]
  %13 = xla_tuple %s10, %s11, %s12
  %s14 = sld [smem:[#allocation0]]
  $region74: #{tpu_custom_call.1} parent=0
    _
  %s16 = ssub.s32 1, %s14
  %s17 = scalar_select 0, %s16, %s14
  $region1: #{tpu_custom_call.1} parent=0
    #allocation2 [shape = 'u8[131072]{0}', space=vmem, size = 0x20000, scoped, tag = 'input window, operand 2, single buffered']
    #allocation3 [shape = 's32[1]{0}', space=sflag, size = 0x4, scoped, tag = 'scoped memory for tpu_custom_call.1']
    #allocation4 [shape = 'u8[131072]{0}', space=vmem, size = 0x20000, scoped, tag = 'input window, operand 3, single buffered']
    #allocation5 [shape = 's32[1]{0}', space=sflag, size = 0x4, scoped, tag = 'scoped memory for tpu_custom_call.1']
    %18 = vsyncpa [#allocation3], 0
    %19 = vsyncpa [#allocation5], 0
    // Predicated region
    $region2: #{tpu_custom_call.1} parent=1 // pred_check
      _
    $region3: #{tpu_custom_call.1} parent=1 // pred_check_branch
      %21 = sbr.rel (0) target = $region5
    $region4: #{tpu_custom_call.1} parent=1 // pred_region
      _
    $region5: #{tpu_custom_call.1} parent=1 // pred_fallthru
      _
    // Predicated region
    $region6: #{tpu_custom_call.1} parent=1 // pred_check
      _
    $region7: #{tpu_custom_call.1} parent=1 // pred_check_branch
      %23 = sbr.rel (0) target = $region9
    $region8: #{tpu_custom_call.1} parent=1 // pred_region
      _
    $region9: #{tpu_custom_call.1} parent=1 // pred_fallthru
      _
    // Predicated region
    $region10: #{tpu_custom_call.1} parent=1 // pred_check
      _
    $region11: #{tpu_custom_call.1} parent=1 // pred_check_branch
      %25 = sbr.rel (0) target = $region13
    $region12: #{tpu_custom_call.1} parent=1 // pred_region
      %s27 = ssub.s32 4096, 4096
      %28 = vsyncadd [#allocation3], %s27
      %s29 = sshll.u32 [#allocation2], 4
      %s30 = int_to_ptr.vmem [resolvable:$true] %s29
      %35 = dma.hbm_to_vmem [thread:$0]  %s2, 4096, %s30, [#allocation3], 64, 64, 4
    $region13: #{tpu_custom_call.1} parent=1 // pred_fallthru
      _
    // Predicated region
    $region14: #{tpu_custom_call.1} parent=1 // pred_check
      _
    $region15: #{tpu_custom_call.1} parent=1 // pred_check_branch
      %37 = sbr.rel (0) target = $region17
    $region16: #{tpu_custom_call.1} parent=1 // pred_region
      %s39 = ssub.s32 4096, 4096
      %40 = vsyncadd [#allocation5], %s39
      %s41 = sshll.u32 [#allocation4], 4
      %s42 = int_to_ptr.vmem [resolvable:$true] %s41
      %47 = dma.hbm_to_vmem [thread:$0]  %s3, 4096, %s42, [#allocation5], 64, 64, 4
    $region17: #{tpu_custom_call.1} parent=1 // pred_fallthru
      _
    // Predicated region
    $region18: #{tpu_custom_call.1} parent=1 // pred_check
      _
    $region19: #{tpu_custom_call.1} parent=1 // pred_check_branch
      %49 = sbr.rel (0) target = $region21
    $region20: #{tpu_custom_call.1} parent=1 // pred_region
      _
    $region21: #{tpu_custom_call.1} parent=1 // pred_fallthru
      _
    // Predicated region
    $region22: #{tpu_custom_call.1} parent=1 // pred_check
      _
    $region23: #{tpu_custom_call.1} parent=1 // pred_check_branch
      %51 = sbr.rel (0) target = $region25
    $region24: #{tpu_custom_call.1} parent=1 // pred_region
      _
    $region25: #{tpu_custom_call.1} parent=1 // pred_fallthru
      _
    // Predicated region
    $region26: #{tpu_custom_call.1} parent=1 // pred_check
      _
    $region27: #{tpu_custom_call.1} parent=1 // pred_check_branch
      %53 = sbr.rel (0) target = $region29
    $region28: #{tpu_custom_call.1} parent=1 // pred_region
      _
    $region29: #{tpu_custom_call.1} parent=1 // pred_fallthru
      _
    // Predicated region
    $region30: #{tpu_custom_call.1} parent=1 // pred_check
      _
    $region31: #{tpu_custom_call.1} parent=1 // pred_check_branch
      %55 = sbr.rel (0) target = $region33
    $region32: #{tpu_custom_call.1} parent=1 // pred_region
      _
    $region33: #{tpu_custom_call.1} parent=1 // pred_fallthru
      _
    // Predicated region
    $region34: #{tpu_custom_call.1} parent=1 // pred_check
      _
    $region35: #{tpu_custom_call.1} parent=1 // pred_check_branch
      %57 = sbr.rel (0) target = $region37
    $region36: #{tpu_custom_call.1} parent=1 // pred_region
      _
    $region37: #{tpu_custom_call.1} parent=1 // pred_fallthru
      _
    // Predicated region
    $region38: #{tpu_custom_call.1} parent=1 // pred_check
      _
    $region39: #{tpu_custom_call.1} parent=1 // pred_check_branch
      %59 = sbr.rel (0) target = $region41
    $region40: #{tpu_custom_call.1} parent=1 // pred_region
      _
    $region41: #{tpu_custom_call.1} parent=1 // pred_fallthru
      _
    // Predicated region
    $region42: #{tpu_custom_call.1} parent=1 // pred_check
      _
    $region43: #{tpu_custom_call.1} parent=1 // pred_check_branch
      %61 = sbr.rel (0) target = $region45
    $region44: #{tpu_custom_call.1} parent=1 // pred_region
      %62 = dma.done [#allocation3], 4096
    $region45: #{tpu_custom_call.1} parent=1 // pred_fallthru
      _
    // Predicated region
    $region46: #{tpu_custom_call.1} parent=1 // pred_check
      _
    $region47: #{tpu_custom_call.1} parent=1 // pred_check_branch
      %64 = sbr.rel (0) target = $region49
    $region48: #{tpu_custom_call.1} parent=1 // pred_region
      %65 = dma.done [#allocation5], 4096
    $region49: #{tpu_custom_call.1} parent=1 // pred_fallthru
      _
    %v67 = vlaneseq
    %v68 = vand.u32 %v67, 127
    %v69 = vld [vmem:[%s0] sm:$0xff]
    %v70 = vpack.c.bf16 %v69, %v69
    %v71 = vld [vmem:[#allocation2] sm:$0xf]
    %v72 = vld [vmem:[#allocation2 + $0x4] sm:$0xf]
    %v73 = vld [vmem:[#allocation2 + $0x8] sm:$0xf]
    %v74 = vld [vmem:[#allocation2 + $0xc] sm:$0xf]
    %v75 = vld [vmem:[#allocation4] sm:$0xf]
    %v76 = vld [vmem:[#allocation4 + $0x4] sm:$0xf]
    %v77 = vld [vmem:[#allocation4 + $0x8] sm:$0xf]
    %v78 = vld [vmem:[#allocation4 + $0xc] sm:$0xf]
    %v83 = vunpack.c.l.b16 %v75
    %v84 = vunpack.c.l.b16 %v76
    %v85 = vunpack.c.l.b16 %v77
    %v86 = vunpack.c.l.b16 %v78
    %v87 = vpack.c.b16 %v84, %v83
    %v88 = vpack.c.b16 %v86, %v85
    %vm91 = vcmask 261120
    %v93 = vsel %vm91, 0, 0
    %95 = vmatprep.subr.bf16.mxu0 0
    %96 = vmatpush1.bf16.msra.mxu0 %v87
    %97 = vmatprep.subr.bf16.mxu0 0
    %98 = vmatpush1.bf16.msra.mxu0 %v88
    %99 = vmatprep.subr.bf16.mxu0 0
    %100 = vmatpush1.bf16.msra.mxu0 0
    %101 = vmatprep.subr.bf16.mxu0 0
    %102 = vmatpush1.bf16.msra.mxu0 0
    %103 = vmatprep.subr.bf16.mxu0 0
    %104 = vmatpush1.bf16.msra.mxu0 0
    %105 = vmatprep.subr.bf16.mxu0 0
    %106 = vmatpush1.bf16.msra.mxu0 0
    %107 = vmatprep.subr.bf16.mxu0 0
    %108 = vmatpush1.bf16.msra.mxu0 0
    %109 = vmatprep.subr.bf16.mxu0 0
    %110 = vmatpush1.bf16.msra.mxu0 0
    %111 = vmatprep.subr.bf16.mxu0 0
    %112 = vmatpush1.bf16.msra.mxu0 0
    %113 = vmatprep.subr.bf16.mxu0 0
    %114 = vmatpush1.bf16.msra.mxu0 0
    %115 = vmatprep.subr.bf16.mxu0 0
    %116 = vmatpush1.bf16.msra.mxu0 0
    %117 = vmatprep.subr.bf16.mxu0 0
    %118 = vmatpush1.bf16.msra.mxu0 0
    %119 = vmatprep.subr.bf16.mxu0 0
    %120 = vmatpush1.bf16.msra.mxu0 0
    %121 = vmatprep.subr.bf16.mxu0 0
    %122 = vmatpush1.bf16.msra.mxu0 0
    %123 = vmatprep.subr.bf16.mxu0 0
    %124 = vmatpush1.bf16.msra.mxu0 0
    %125 = vmatprep.subr.bf16.mxu0 0
    %126 = vmatpush1.bf16.msra.mxu0 0
    %127 = vmatprep.mubr.bf16.mxu0 0
    %128 = vmatmul.mubr.bf16.gmra.mrb[0].mxu0 %v93
    %v129 = vpop.f32.mrb[0].mxu0
    %v130 = vadd.f32 0.0, %v129
    %v131 = vpop.f32.mrb[0].mxu0
    %v132 = vpop.f32.mrb[0].mxu0
    %v133 = vpop.f32.mrb[0].mxu0
    %134 = vdwg.mxu0
    %v135 = vld [vmem:[%s4] sm:$0x1]
    %v137 = vlaneseq
    %v138 = vshrl.u32 %v137, 7
    %v139 = vsub.s32 0, %v138
    %v140 = vrot.slane %v135, %v139
    %v146 = vunpack.c.l.b16 %v71
    %v147 = vunpack.c.l.b16 %v72
    %v148 = vunpack.c.l.b16 %v73
    %v149 = vunpack.c.l.b16 %v74
    %v150 = vpack.c.b16 %v147, %v146
    %v151 = vpack.c.b16 %v149, %v148
    %v155 = vsel %vm91, %v70, 0
    %157 = vmatprep.subr.bf16.mxu0 0
    %158 = vmatpush1.bf16.msra.mxu0 %v150
    %159 = vmatprep.subr.bf16.mxu0 0
    %160 = vmatpush1.bf16.msra.mxu0 %v151
    %161 = vmatprep.subr.bf16.mxu0 0
    %162 = vmatpush1.bf16.msra.mxu0 0
    %163 = vmatprep.subr.bf16.mxu0 0
    %164 = vmatpush1.bf16.msra.mxu0 0
    %165 = vmatprep.subr.bf16.mxu0 0
    %166 = vmatpush1.bf16.msra.mxu0 0
    %167 = vmatprep.subr.bf16.mxu0 0
    %168 = vmatpush1.bf16.msra.mxu0 0
    %169 = vmatprep.subr.bf16.mxu0 0
    %170 = vmatpush1.bf16.msra.mxu0 0
    %171 = vmatprep.subr.bf16.mxu0 0
    %172 = vmatpush1.bf16.msra.mxu0 0
    %173 = vmatprep.subr.bf16.mxu0 0
    %174 = vmatpush1.bf16.msra.mxu0 0
    %175 = vmatprep.subr.bf16.mxu0 0
    %176 = vmatpush1.bf16.msra.mxu0 0
    %177 = vmatprep.subr.bf16.mxu0 0
    %178 = vmatpush1.bf16.msra.mxu0 0
    %179 = vmatprep.subr.bf16.mxu0 0
    %180 = vmatpush1.bf16.msra.mxu0 0
    %181 = vmatprep.subr.bf16.mxu0 0
    %182 = vmatpush1.bf16.msra.mxu0 0
    %183 = vmatprep.subr.bf16.mxu0 0
    %184 = vmatpush1.bf16.msra.mxu0 0
    %185 = vmatprep.subr.bf16.mxu0 0
    %186 = vmatpush1.bf16.msra.mxu0 0
    %187 = vmatprep.subr.bf16.mxu0 0
    %188 = vmatpush1.bf16.msra.mxu0 0
    %189 = vmatprep.mubr.bf16.mxu0 0
    %190 = vmatmul.mubr.bf16.gmra.mrb[0].mxu0 %v155
    %v191 = vpop.f32.mrb[0].mxu0
    %v192 = vadd.f32 %v140, %v191
    %v193 = vpop.f32.mrb[0].mxu0
    %v194 = vpop.f32.mrb[0].mxu0
    %v195 = vpop.f32.mrb[0].mxu0
    %196 = vdwg.mxu0
    %v197 = vadd.f32 %v192, %v130
    %v198 = vxor.u32 %v197, 2147483648
    %v199 = vmul.f32 %v198, 1.442695
    %v200 = vpow.pop %v199
    %v201 = vadd.f32 %v200, 1.0
    %v202 = vrcp.pop %v201
    %v203 = vmul.f32 1.0, %v202
    %v204 = vld [vmem:[%s5] sm:$0x1]
    %v206 = vlaneseq
    %v207 = vshrl.u32 %v206, 7
    %v208 = vsub.s32 0, %v207
    %v209 = vrot.slane %v204, %v208
    %210 = vrot.lane.b32.xlu0 %v209, 64
    %v211 = vpop.permute.xlu0 %210
    %v213 = vadd.f32 %v130, %v211
    %215 = vrot.lane.b32.xlu0 %v213, 64
    %v216 = vpop.permute.xlu0 %215
    %v218 = vmul.f32 %v203, %v216
    %220 = vrot.lane.b32.xlu0 %v218, 64
    %v221 = vpop.permute.xlu0 %220
    %v223 = vadd.f32 %v192, %v221
    %v224 = vtanh.pop %v223
    %v225 = vsub.f32 1.0, %v203
    %227 = vrot.lane.b32.xlu0 %v224, 96
    %v228 = vpop.permute.xlu0 %227
    %v230 = vmul.f32 %v225, %v228
    %v231 = vmul.f32 %v203, 0.0
    %v232 = vadd.f32 %v230, %v231
    %v233 = vpack.c.bf16 %v232, %v232
    %s234 = scalar_lea.vmem [#allocation2], 16
    %v235 = vld [vmem:[%s234] sm:$0xf]
    %v236 = vld [vmem:[%s234 + $0x4] sm:$0xf]
    %v237 = vld [vmem:[%s234 + $0x8] sm:$0xf]
    %v238 = vld [vmem:[%s234 + $0xc] sm:$0xf]
    %s239 = scalar_lea.vmem [#allocation4], 16
    %v240 = vld [vmem:[%s239] sm:$0xf]
    %v241 = vld [vmem:[%s239 + $0x4] sm:$0xf]
    %v242 = vld [vmem:[%s239 + $0x8] sm:$0xf]
    %v243 = vld [vmem:[%s239 + $0xc] sm:$0xf]
    %v248 = vunpack.c.l.b16 %v240
    %v249 = vunpack.c.l.b16 %v241
    %v250 = vunpack.c.l.b16 %v242
    %v251 = vunpack.c.l.b16 %v243
    %v252 = vpack.c.b16 %v249, %v248
    %v253 = vpack.c.b16 %v251, %v250
    %256 = vmatprep.subr.bf16.mxu0 0
    %257 = vmatpush1.bf16.msra.mxu0 %v252
    %258 = vmatprep.subr.bf16.mxu0 0
    %259 = vmatpush1.bf16.msra.mxu0 %v253
    %260 = vmatprep.subr.bf16.mxu0 0
    %261 = vmatpush1.bf16.msra.mxu0 0
    %262 = vmatprep.subr.bf16.mxu0 0
    %263 = vmatpush1.bf16.msra.mxu0 0
    %264 = vmatprep.subr.bf16.mxu0 0
    %265 = vmatpush1.bf16.msra.mxu0 0
    %266 = vmatprep.subr.bf16.mxu0 0
    %267 = vmatpush1.bf16.msra.mxu0 0
    %268 = vmatprep.subr.bf16.mxu0 0
    %269 = vmatpush1.bf16.msra.mxu0 0
    %270 = vmatprep.subr.bf16.mxu0 0
    %271 = vmatpush1.bf16.msra.mxu0 0
    %272 = vmatprep.subr.bf16.mxu0 0
    %273 = vmatpush1.bf16.msra.mxu0 0
    %274 = vmatprep.subr.bf16.mxu0 0
    %275 = vmatpush1.bf16.msra.mxu0 0
    %276 = vmatprep.subr.bf16.mxu0 0
    %277 = vmatpush1.bf16.msra.mxu0 0
    %278 = vmatprep.subr.bf16.mxu0 0
    %279 = vmatpush1.bf16.msra.mxu0 0
    %280 = vmatprep.subr.bf16.mxu0 0
    %281 = vmatpush1.bf16.msra.mxu0 0
    %282 = vmatprep.subr.bf16.mxu0 0
    %283 = vmatpush1.bf16.msra.mxu0 0
    %284 = vmatprep.subr.bf16.mxu0 0
    %285 = vmatpush1.bf16.msra.mxu0 0
    %286 = vmatprep.subr.bf16.mxu0 0
    %287 = vmatpush1.bf16.msra.mxu0 0
    %288 = vmatprep.mubr.bf16.mxu0 0
    %289 = vmatmul.mubr.bf16.gmra.mrb[0].mxu0 %v93
    %v290 = vpop.f32.mrb[0].mxu0
    %v291 = vadd.f32 0.0, %v290
    %v292 = vpop.f32.mrb[0].mxu0
    %v293 = vpop.f32.mrb[0].mxu0
    %v294 = vpop.f32.mrb[0].mxu0
    %295 = vdwg.mxu0
    %s296 = scalar_lea.vmem %s4, 1
    %v297 = vld [vmem:[%s296] sm:$0x1]
    %v299 = vlaneseq
    %v300 = vshrl.u32 %v299, 7
    %v301 = vsub.s32 0, %v300
    %v302 = vrot.slane %v297, %v301
    %305 = vrot.lane.b32.xlu0 %v233, 96
    %v306 = vpop.permute.xlu0 %305
    %v311 = vunpack.c.l.b16 %v235
    %v312 = vunpack.c.l.b16 %v236
    %v313 = vunpack.c.l.b16 %v237
    %v314 = vunpack.c.l.b16 %v238
    %v315 = vpack.c.b16 %v312, %v311
    %v316 = vpack.c.b16 %v314, %v313
    %v320 = vsel %vm91, %v306, 0
    %322 = vmatprep.subr.bf16.mxu0 0
    %323 = vmatpush1.bf16.msra.mxu0 %v315
    %324 = vmatprep.subr.bf16.mxu0 0
    %325 = vmatpush1.bf16.msra.mxu0 %v316
    %326 = vmatprep.subr.bf16.mxu0 0
    %327 = vmatpush1.bf16.msra.mxu0 0
    %328 = vmatprep.subr.bf16.mxu0 0
    %329 = vmatpush1.bf16.msra.mxu0 0
    %330 = vmatprep.subr.bf16.mxu0 0
    %331 = vmatpush1.bf16.msra.mxu0 0
    %332 = vmatprep.subr.bf16.mxu0 0
    %333 = vmatpush1.bf16.msra.mxu0 0
    %334 = vmatprep.subr.bf16.mxu0 0
    %335 = vmatpush1.bf16.msra.mxu0 0
    %336 = vmatprep.subr.bf16.mxu0 0
    %337 = vmatpush1.bf16.msra.mxu0 0
    %338 = vmatprep.subr.bf16.mxu0 0
    %339 = vmatpush1.bf16.msra.mxu0 0
    %340 = vmatprep.subr.bf16.mxu0 0
    %341 = vmatpush1.bf16.msra.mxu0 0
    %342 = vmatprep.subr.bf16.mxu0 0
    %343 = vmatpush1.bf16.msra.mxu0 0
    %344 = vmatprep.subr.bf16.mxu0 0
    %345 = vmatpush1.bf16.msra.mxu0 0
    %346 = vmatprep.subr.bf16.mxu0 0
    %347 = vmatpush1.bf16.msra.mxu0 0
    %348 = vmatprep.subr.bf16.mxu0 0
    %349 = vmatpush1.bf16.msra.mxu0 0
    %350 = vmatprep.subr.bf16.mxu0 0
    %351 = vmatpush1.bf16.msra.mxu0 0
    %352 = vmatprep.subr.bf16.mxu0 0
    %353 = vmatpush1.bf16.msra.mxu0 0
    %354 = vmatprep.mubr.bf16.mxu0 0
    %355 = vmatmul.mubr.bf16.gmra.mrb[0].mxu0 %v320
    %v356 = vpop.f32.mrb[0].mxu0
    %v357 = vadd.f32 %v302, %v356
    %v358 = vpop.f32.mrb[0].mxu0
    %v359 = vpop.f32.mrb[0].mxu0
    %v360 = vpop.f32.mrb[0].mxu0
    %361 = vdwg.mxu0
    %v362 = vadd.f32 %v357, %v291
    %v363 = vxor.u32 %v362, 2147483648
    %v364 = vmul.f32 %v363, 1.442695
    %v365 = vpow.pop %v364
    %v366 = vadd.f32 %v365, 1.0
    %v367 = vrcp.pop %v366
    %v368 = vmul.f32 1.0, %v367
    %s369 = scalar_lea.vmem %s5, 1
    %v370 = vld [vmem:[%s369] sm:$0x1]
    %v372 = vlaneseq
    %v373 = vshrl.u32 %v372, 7
    %v374 = vsub.s32 0, %v373
    %v375 = vrot.slane %v370, %v374
    %376 = vrot.lane.b32.xlu0 %v375, 64
    %v377 = vpop.permute.xlu0 %376
    %v379 = vadd.f32 %v291, %v377
    %381 = vrot.lane.b32.xlu0 %v379, 64
    %v382 = vpop.permute.xlu0 %381
    %v384 = vmul.f32 %v368, %v382
    %386 = vrot.lane.b32.xlu0 %v384, 64
    %v387 = vpop.permute.xlu0 %386
    %v389 = vadd.f32 %v357, %v387
    %v390 = vtanh.pop %v389
    %v391 = vsub.f32 1.0, %v368
    %393 = vrot.lane.b32.xlu0 %v390, 96
    %v394 = vpop.permute.xlu0 %393
    %v396 = vmul.f32 %v391, %v394
    %v397 = vmul.f32 %v368, 0.0
    %v398 = vadd.f32 %v396, %v397
    %v399 = vand.u32 2147483647, %v398
    %vm400 = vcmp.le.f32.partialorder %v399, 0.7853982
    %vm401 = vcmp.lt.s32.totalorder %v398, 0
    %v402 = vand.u32 %v398, 2139095040
    %v403 = vshrl.u32 %v402, 23
    %v404 = vsub.s32 %v403, 127
    %v405 = vand.u32 2147483647, %v398
    %v406 = vand.u32 %v405, 8388607
    %v407 = vor.u32 %v406, 8388608
    %v408 = vsub.s32 0, %v407
    %v409 = vadd.s32 %v404, 1
    %vm410 = vcmp.gt.s32.totalorder %v409, 0
    %v411 = vsel %vm410, %v409, 0
    %v412 = vshrl.u32 %v411, 5
    %v413 = vand.u32 %v411, 31
    %v414 = vsub.s32 32, %v413
    %v415 = vshrl.u32 683565275, %v414
    %v416 = vshll.u32 683565275, %v413
    %v417 = vshrl.u32 2475754826, %v414
    %v418 = vor.u32 %v416, %v417
    %v419 = vshll.u32 2475754826, %v413
    %v420 = vshrl.u32 2131351028, %v414
    %v421 = vor.u32 %v419, %v420
    %v422 = vshll.u32 2131351028, %v413
    %v423 = vshrl.u32 2102212464, %v414
    %v424 = vor.u32 %v422, %v423
    %v425 = vshll.u32 2102212464, %v413
    %v426 = vshrl.u32 920167782, %v414
    %v427 = vor.u32 %v425, %v426
    %v428 = vshll.u32 920167782, %v413
    %v429 = vshrl.u32 1326507024, %v414
    %v430 = vor.u32 %v428, %v429
    %vm431 = vcmp.lt.s32.totalorder %v412, 1
    %vm432 = vcmp.lt.s32.totalorder %v412, 2
    %vm433 = vcmp.lt.s32.totalorder %v412, 3
    %vm434 = vcmp.lt.s32.totalorder %v412, 4
    %v435 = vsel %vm431, %v415, %v418
    %v436 = vsel %vm434, %v424, 2102212464
    %v437 = vsel %vm433, %v421, %v436
    %v438 = vsel %vm432, %v435, %v437
    %v439 = vsel %vm431, %v418, %v421
    %v440 = vsel %vm434, %v427, 920167782
    %v441 = vsel %vm433, %v424, %v440
    %v442 = vsel %vm432, %v439, %v441
    %v443 = vsel %vm431, %v421, %v424
    %v444 = vsel %vm434, %v430, 1326507024
    %v445 = vsel %vm433, %v427, %v444
    %v446 = vsel %vm432, %v443, %v445
    %v447 = vshll.u32 %v407, 8
    %v448 = vmul.u32.u64.compose %v447, %v446
    %v449 = vextract.low.u32 %v448
    %v450 = vextract.high.u32 %v448
    %v451 = vmul.u32.u64.compose %v447, %v442
    %v452 = vextract.low.u32 %v451
    %v453 = vextract.high.u32 %v451
    %v454 = vmul.u32 %v447, %v438
    %v455 = vadd.s32 %v450, %v452
    %vm456 = vc.u32 %v450, %v452
    %v457 = vadd.s32 %v453, 1
    %v458 = vsel %vm456, %v457, %v453
    %v459 = vadd.s32 %v454, %v458
    %v460 = vadd.s32 %v459, 536870912
    %v461 = vshrl.u32 %v460, 30
    %v462 = vshll.u32 %v461, 30
    %v463 = vsub.s32 %v459, %v462
    %vm464 = vcmp.lt.s32.totalorder %v463, 0
    %v465 = vsub.s32 0, %v463
    %v466 = vsel %vm464, %v465, %v463
    %v467 = vclz %v466
    %v468 = vsub.s32 %v467, 2
    %vm469 = vcmp.gt.s32.totalorder 0, %v468
    %v470 = vsel %vm469, 0, %v468
    %v471 = vsub.s32 32, %v470
    %v472 = vshll.u32 %v463, %v470
    %v473 = vshrl.u32 %v455, %v471
    %v474 = vor.u32 %v472, %v473
    %v475 = vsub.s32 4294967266, %v470
    %v476 = vadd.s32 %v475, 127
    %v477 = vshll.u32 %v476, 23
    %v478 = vor.u32 4788187, %v477
    %v479 = vand.u32 2147483647, %v478
    %v481 = vcvt.s32.f32 %v474
    %v482 = vmul.f32 %v481, %v479
    %v483 = vxor.u32 %v482, 2147483648
    %v484 = vsel %vm401, %v483, %v482
    %v485 = vsub.s32 4, %v461
    %v486 = vsel %vm401, %v485, %v461
    %v487 = vsel %vm400, %v398, %v484
    %v488 = vsel %vm400, 0, %v486
    %v489 = vcosq.f32.pop %v487
    %v490 = vsinq.f32.pop %v487
    %vm491 = vweird.f32 %v398
    %v492 = vand.u32 %v488, 3
    %vm493 = vcmp.lt.s32.totalorder %v492, 2
    %vm494 = vcmp.eq.s32.totalorder %v492, 0
    %v495 = vxor.u32 %v490, 2147483648
    %v496 = vsel %vm494, %v489, %v495
    %vm497 = vcmp.eq.s32.totalorder %v492, 2
    %v498 = vxor.u32 %v489, 2147483648
    %v499 = vsel %vm497, %v498, %v490
    %v500 = vsel %vm493, %v496, %v499
    %v501 = vsel %vm491, nan, %v500
    %v502 = vadd.f32 %v501, 1e-10
    %v503 = vpack.c.bf16 %v502, %v502
    %v504 = vld [vmem:[%s6] sm:$0xf]
    %v505 = vld [vmem:[%s6 + $0x4] sm:$0xf]
    %v506 = vld [vmem:[%s6 + $0x8] sm:$0xf]
    %v507 = vld [vmem:[%s6 + $0xc] sm:$0xf]
    %v508 = vld [vmem:[%s7] sm:$0x1]
    %v510 = vlaneseq
    %v511 = vshrl.u32 %v510, 7
    %v512 = vsub.s32 0, %v511
    %v513 = vrot.slane %v508, %v512
    %516 = vrot.lane.b32.xlu0 %v503, 96
    %v517 = vpop.permute.xlu0 %516
    %v522 = vunpack.c.l.b16 %v504
    %v523 = vunpack.c.l.b16 %v505
    %v524 = vunpack.c.l.b16 %v506
    %v525 = vunpack.c.l.b16 %v507
    %v526 = vpack.c.b16 %v523, %v522
    %v527 = vpack.c.b16 %v525, %v524
    %v531 = vsel %vm91, %v517, 0
    %533 = vmatprep.subr.bf16.mxu0 0
    %534 = vmatpush1.bf16.msra.mxu0 %v526
    %535 = vmatprep.subr.bf16.mxu0 0
    %536 = vmatpush1.bf16.msra.mxu0 %v527
    %537 = vmatprep.subr.bf16.mxu0 0
    %538 = vmatpush1.bf16.msra.mxu0 0
    %539 = vmatprep.subr.bf16.mxu0 0
    %540 = vmatpush1.bf16.msra.mxu0 0
    %541 = vmatprep.subr.bf16.mxu0 0
    %542 = vmatpush1.bf16.msra.mxu0 0
    %543 = vmatprep.subr.bf16.mxu0 0
    %544 = vmatpush1.bf16.msra.mxu0 0
    %545 = vmatprep.subr.bf16.mxu0 0
    %546 = vmatpush1.bf16.msra.mxu0 0
    %547 = vmatprep.subr.bf16.mxu0 0
    %548 = vmatpush1.bf16.msra.mxu0 0
    %549 = vmatprep.subr.bf16.mxu0 0
    %550 = vmatpush1.bf16.msra.mxu0 0
    %551 = vmatprep.subr.bf16.mxu0 0
    %552 = vmatpush1.bf16.msra.mxu0 0
    %553 = vmatprep.subr.bf16.mxu0 0
    %554 = vmatpush1.bf16.msra.mxu0 0
    %555 = vmatprep.subr.bf16.mxu0 0
    %556 = vmatpush1.bf16.msra.mxu0 0
    %557 = vmatprep.subr.bf16.mxu0 0
    %558 = vmatpush1.bf16.msra.mxu0 0
    %559 = vmatprep.subr.bf16.mxu0 0
    %560 = vmatpush1.bf16.msra.mxu0 0
    %561 = vmatprep.subr.bf16.mxu0 0
    %562 = vmatpush1.bf16.msra.mxu0 0
    %563 = vmatprep.subr.bf16.mxu0 0
    %564 = vmatpush1.bf16.msra.mxu0 0
    %565 = vmatprep.mubr.bf16.mxu0 0
    %566 = vmatmul.mubr.bf16.gmra.mrb[0].mxu0 %v531
    %v567 = vpop.f32.mrb[0].mxu0
    %v568 = vadd.f32 %v513, %v567
    %v569 = vpop.f32.mrb[0].mxu0
    %v570 = vpop.f32.mrb[0].mxu0
    %v571 = vpop.f32.mrb[0].mxu0
    %572 = vdwg.mxu0
    %v573 = vmax.f32 %v568, 0.0
    %v574 = vpack.c.bf16 %v573, %v573
    %v575 = vld [vmem:[%s8] sm:$0xf]
    %v576 = vld [vmem:[%s8 + $0x4] sm:$0xf]
    %v577 = vld [vmem:[%s8 + $0x8] sm:$0xf]
    %v578 = vld [vmem:[%s8 + $0xc] sm:$0xf]
    %v579 = vld [vmem:[%s9] sm:$0x1]
    %v581 = vlaneseq
    %v582 = vshrl.u32 %v581, 7
    %v583 = vsub.s32 0, %v582
    %v584 = vrot.slane %v579, %v583
    %v590 = vunpack.c.l.b16 %v575
    %v591 = vunpack.c.l.b16 %v576
    %v592 = vunpack.c.l.b16 %v577
    %v593 = vunpack.c.l.b16 %v578
    %v594 = vpack.c.b16 %v591, %v590
    %v595 = vpack.c.b16 %v593, %v592
    %v599 = vsel %vm91, %v574, 0
    %601 = vmatprep.subr.bf16.mxu0 0
    %602 = vmatpush1.bf16.msra.mxu0 %v594
    %603 = vmatprep.subr.bf16.mxu0 0
    %604 = vmatpush1.bf16.msra.mxu0 %v595
    %605 = vmatprep.subr.bf16.mxu0 0
    %606 = vmatpush1.bf16.msra.mxu0 0
    %607 = vmatprep.subr.bf16.mxu0 0
    %608 = vmatpush1.bf16.msra.mxu0 0
    %609 = vmatprep.subr.bf16.mxu0 0
    %610 = vmatpush1.bf16.msra.mxu0 0
    %611 = vmatprep.subr.bf16.mxu0 0
    %612 = vmatpush1.bf16.msra.mxu0 0
    %613 = vmatprep.subr.bf16.mxu0 0
    %614 = vmatpush1.bf16.msra.mxu0 0
    %615 = vmatprep.subr.bf16.mxu0 0
    %616 = vmatpush1.bf16.msra.mxu0 0
    %617 = vmatprep.subr.bf16.mxu0 0
    %618 = vmatpush1.bf16.msra.mxu0 0
    %619 = vmatprep.subr.bf16.mxu0 0
    %620 = vmatpush1.bf16.msra.mxu0 0
    %621 = vmatprep.subr.bf16.mxu0 0
    %622 = vmatpush1.bf16.msra.mxu0 0
    %623 = vmatprep.subr.bf16.mxu0 0
    %624 = vmatpush1.bf16.msra.mxu0 0
    %625 = vmatprep.subr.bf16.mxu0 0
    %626 = vmatpush1.bf16.msra.mxu0 0
    %627 = vmatprep.subr.bf16.mxu0 0
    %628 = vmatpush1.bf16.msra.mxu0 0
    %629 = vmatprep.subr.bf16.mxu0 0
    %630 = vmatpush1.bf16.msra.mxu0 0
    %631 = vmatprep.subr.bf16.mxu0 0
    %632 = vmatpush1.bf16.msra.mxu0 0
    %633 = vmatprep.mubr.bf16.mxu0 0
    %634 = vmatmul.mubr.bf16.gmra.mrb[0].mxu0 %v599
    %v635 = vpop.f32.mrb[0].mxu0
    %v636 = vadd.f32 %v584, %v635
    %v637 = vpop.f32.mrb[0].mxu0
    %v638 = vpop.f32.mrb[0].mxu0
    %v639 = vpop.f32.mrb[0].mxu0
    %640 = vdwg.mxu0
    %vm641 = vcmask 15360
    %v642 = vsel %vm641, %v636, -inf
    %643 = vmax.xlane.f32.xlu0 %v642
    %v644 = vpop.xlane.xlu0 %643
    %v645 = vsub.f32 %v636, %v644
    %v646 = vmul.f32 %v645, 1.442695
    %v647 = vpow.pop %v646
    %v648 = vsel %vm641, %v647, 0.0
    %649 = vadd.xlane.f32.xlu0 %v648
    %v650 = vpop.xlane.xlu0 %649
    %v651 = vrcp.pop %v650
    %v652 = vmul.f32 %v647, %v651
    %v653 = vadd.f32 %v652, 1e-10
    %654 = vst.msk [vmem:[%s10] sm:$0xff] %vm641, %v653
    %v655 = vld [vmem:[%s1] sm:$0xff]
    %v656 = vsel %vm641, %v653, 0.0
    %657 = vadd.xlane.f32.xlu0 %v656
    %v658 = vpop.xlane.xlu0 %657
    %v659 = vmul.f32 %v655, %v658
    %vm660 = vcmp.ge.f32.partialorder %v659, %v653
    %v661 = vsel %vm660, 1, 0
    %vm662 = vcmp.eq.s32.totalorder %v661, 0
    %664 = vrot.lane.b32.xlu0 %v653, 127
    %v665 = vpop.permute.xlu0 %664
    %v667 = vsel %vm662, %v653, %v665
    %vm668 = vcmask 7168
    %669 = vst.msk [vmem:[%s11] sm:$0xff] %vm668, %v661
    %v670 = vadd.f32 %v667, 1e-10
    %v671 = vlog2.pop %v670
    %v672 = vmul.f32 %v671, 0.6931472
    %v673 = vadd.f32 %v672, 0.0
    %674 = vset.pattern.permute.xlu0 0
    %675 = vperm.xlu0 %674, %v661
    %v676 = vpop.permute.xlu0 %675
    %vm677 = vcmp.eq.s32.totalorder %v68, %v676
    %v678 = vsel %vm677, 1, 0
    %v679 = vcvt.s32.f32 %v678
    %v680 = vpack.c.bf16 %v679, %v679
    %s681 = scalar_lea.vmem [#allocation2], 32
    %v682 = vld [vmem:[%s681] sm:$0xf]
    %v683 = vld [vmem:[%s681 + $0x4] sm:$0xf]
    %v684 = vld [vmem:[%s681 + $0x8] sm:$0xf]
    %v685 = vld [vmem:[%s681 + $0xc] sm:$0xf]
    %s686 = scalar_lea.vmem [#allocation4], 32
    %v687 = vld [vmem:[%s686] sm:$0xf]
    %v688 = vld [vmem:[%s686 + $0x4] sm:$0xf]
    %v689 = vld [vmem:[%s686 + $0x8] sm:$0xf]
    %v690 = vld [vmem:[%s686 + $0xc] sm:$0xf]
    %v695 = vunpack.c.l.b16 %v687
    %v696 = vunpack.c.l.b16 %v688
    %v697 = vunpack.c.l.b16 %v689
    %v698 = vunpack.c.l.b16 %v690
    %v699 = vpack.c.b16 %v696, %v695
    %v700 = vpack.c.b16 %v698, %v697
    %703 = vmatprep.subr.bf16.mxu0 0
    %704 = vmatpush1.bf16.msra.mxu0 %v699
    %705 = vmatprep.subr.bf16.mxu0 0
    %706 = vmatpush1.bf16.msra.mxu0 %v700
    %707 = vmatprep.subr.bf16.mxu0 0
    %708 = vmatpush1.bf16.msra.mxu0 0
    %709 = vmatprep.subr.bf16.mxu0 0
    %710 = vmatpush1.bf16.msra.mxu0 0
    %711 = vmatprep.subr.bf16.mxu0 0
    %712 = vmatpush1.bf16.msra.mxu0 0
    %713 = vmatprep.subr.bf16.mxu0 0
    %714 = vmatpush1.bf16.msra.mxu0 0
    %715 = vmatprep.subr.bf16.mxu0 0
    %716 = vmatpush1.bf16.msra.mxu0 0
    %717 = vmatprep.subr.bf16.mxu0 0
    %718 = vmatpush1.bf16.msra.mxu0 0
    %719 = vmatprep.subr.bf16.mxu0 0
    %720 = vmatpush1.bf16.msra.mxu0 0
    %721 = vmatprep.subr.bf16.mxu0 0
    %722 = vmatpush1.bf16.msra.mxu0 0
    %723 = vmatprep.subr.bf16.mxu0 0
    %724 = vmatpush1.bf16.msra.mxu0 0
    %725 = vmatprep.subr.bf16.mxu0 0
    %726 = vmatpush1.bf16.msra.mxu0 0
    %727 = vmatprep.subr.bf16.mxu0 0
    %728 = vmatpush1.bf16.msra.mxu0 0
    %729 = vmatprep.subr.bf16.mxu0 0
    %730 = vmatpush1.bf16.msra.mxu0 0
    %731 = vmatprep.subr.bf16.mxu0 0
    %732 = vmatpush1.bf16.msra.mxu0 0
    %733 = vmatprep.subr.bf16.mxu0 0
    %734 = vmatpush1.bf16.msra.mxu0 0
    %735 = vmatprep.mubr.bf16.mxu0 0
    %736 = vmatmul.mubr.bf16.gmra.mrb[0].mxu0 %v320
    %v737 = vpop.f32.mrb[0].mxu0
    %v738 = vadd.f32 0.0, %v737
    %v739 = vpop.f32.mrb[0].mxu0
    %v740 = vpop.f32.mrb[0].mxu0
    %v741 = vpop.f32.mrb[0].mxu0
    %742 = vdwg.mxu0
    %s743 = scalar_lea.vmem %s4, 2
    %v744 = vld [vmem:[%s743] sm:$0x1]
    %v746 = vlaneseq
    %v747 = vshrl.u32 %v746, 7
    %v748 = vsub.s32 0, %v747
    %v749 = vrot.slane %v744, %v748
    %v755 = vunpack.c.l.b16 %v682
    %v756 = vunpack.c.l.b16 %v683
    %v757 = vunpack.c.l.b16 %v684
    %v758 = vunpack.c.l.b16 %v685
    %v759 = vpack.c.b16 %v756, %v755
    %v760 = vpack.c.b16 %v758, %v757
    %v764 = vsel %vm91, %v680, 0
    %766 = vmatprep.subr.bf16.mxu0 0
    %767 = vmatpush1.bf16.msra.mxu0 %v759
    %768 = vmatprep.subr.bf16.mxu0 0
    %769 = vmatpush1.bf16.msra.mxu0 %v760
    %770 = vmatprep.subr.bf16.mxu0 0
    %771 = vmatpush1.bf16.msra.mxu0 0
    %772 = vmatprep.subr.bf16.mxu0 0
    %773 = vmatpush1.bf16.msra.mxu0 0
    %774 = vmatprep.subr.bf16.mxu0 0
    %775 = vmatpush1.bf16.msra.mxu0 0
    %776 = vmatprep.subr.bf16.mxu0 0
    %777 = vmatpush1.bf16.msra.mxu0 0
    %778 = vmatprep.subr.bf16.mxu0 0
    %779 = vmatpush1.bf16.msra.mxu0 0
    %780 = vmatprep.subr.bf16.mxu0 0
    %781 = vmatpush1.bf16.msra.mxu0 0
    %782 = vmatprep.subr.bf16.mxu0 0
    %783 = vmatpush1.bf16.msra.mxu0 0
    %784 = vmatprep.subr.bf16.mxu0 0
    %785 = vmatpush1.bf16.msra.mxu0 0
    %786 = vmatprep.subr.bf16.mxu0 0
    %787 = vmatpush1.bf16.msra.mxu0 0
    %788 = vmatprep.subr.bf16.mxu0 0
    %789 = vmatpush1.bf16.msra.mxu0 0
    %790 = vmatprep.subr.bf16.mxu0 0
    %791 = vmatpush1.bf16.msra.mxu0 0
    %792 = vmatprep.subr.bf16.mxu0 0
    %793 = vmatpush1.bf16.msra.mxu0 0
    %794 = vmatprep.subr.bf16.mxu0 0
    %795 = vmatpush1.bf16.msra.mxu0 0
    %796 = vmatprep.subr.bf16.mxu0 0
    %797 = vmatpush1.bf16.msra.mxu0 0
    %798 = vmatprep.mubr.bf16.mxu0 0
    %799 = vmatmul.mubr.bf16.gmra.mrb[0].mxu0 %v764
    %v800 = vpop.f32.mrb[0].mxu0
    %v801 = vadd.f32 %v749, %v800
    %v802 = vpop.f32.mrb[0].mxu0
    %v803 = vpop.f32.mrb[0].mxu0
    %v804 = vpop.f32.mrb[0].mxu0
    %805 = vdwg.mxu0
    %v806 = vadd.f32 %v801, %v738
    %v807 = vxor.u32 %v806, 2147483648
    %v808 = vmul.f32 %v807, 1.442695
    %v809 = vpow.pop %v808
    %v810 = vadd.f32 %v809, 1.0
    %v811 = vrcp.pop %v810
    %v812 = vmul.f32 1.0, %v811
    %s813 = scalar_lea.vmem %s5, 2
    %v814 = vld [vmem:[%s813] sm:$0x1]
    %v816 = vlaneseq
    %v817 = vshrl.u32 %v816, 7
    %v818 = vsub.s32 0, %v817
    %v819 = vrot.slane %v814, %v818
    %820 = vrot.lane.b32.xlu0 %v819, 64
    %v821 = vpop.permute.xlu0 %820
    %v823 = vadd.f32 %v738, %v821
    %825 = vrot.lane.b32.xlu0 %v823, 64
    %v826 = vpop.permute.xlu0 %825
    %v828 = vmul.f32 %v812, %v826
    %830 = vrot.lane.b32.xlu0 %v828, 64
    %v831 = vpop.permute.xlu0 %830
    %v833 = vadd.f32 %v801, %v831
    %v834 = vtanh.pop %v833
    %v835 = vsub.f32 1.0, %v812
    %837 = vrot.lane.b32.xlu0 %v834, 96
    %v838 = vpop.permute.xlu0 %837
    %v840 = vmul.f32 %v835, %v838
    %v841 = vmul.f32 %v812, %v232
    %v842 = vadd.f32 %v840, %v841
    %v843 = vpack.c.bf16 %v842, %v842
    %s844 = scalar_lea.vmem [#allocation2], 48
    %v845 = vld [vmem:[%s844] sm:$0xf]
    %v846 = vld [vmem:[%s844 + $0x4] sm:$0xf]
    %v847 = vld [vmem:[%s844 + $0x8] sm:$0xf]
    %v848 = vld [vmem:[%s844 + $0xc] sm:$0xf]
    %v849 = vpack.c.bf16 %v398, %v398
    %s850 = scalar_lea.vmem [#allocation4], 48
    %v851 = vld [vmem:[%s850] sm:$0xf]
    %v852 = vld [vmem:[%s850 + $0x4] sm:$0xf]
    %v853 = vld [vmem:[%s850 + $0x8] sm:$0xf]
    %v854 = vld [vmem:[%s850 + $0xc] sm:$0xf]
    %856 = vrot.lane.b32.xlu0 %v849, 96
    %v857 = vpop.permute.xlu0 %856
    %v862 = vunpack.c.l.b16 %v851
    %v863 = vunpack.c.l.b16 %v852
    %v864 = vunpack.c.l.b16 %v853
    %v865 = vunpack.c.l.b16 %v854
    %v866 = vpack.c.b16 %v863, %v862
    %v867 = vpack.c.b16 %v865, %v864
    %v871 = vsel %vm91, %v857, 0
    %873 = vmatprep.subr.bf16.mxu0 0
    %874 = vmatpush1.bf16.msra.mxu0 %v866
    %875 = vmatprep.subr.bf16.mxu0 0
    %876 = vmatpush1.bf16.msra.mxu0 %v867
    %877 = vmatprep.subr.bf16.mxu0 0
    %878 = vmatpush1.bf16.msra.mxu0 0
    %879 = vmatprep.subr.bf16.mxu0 0
    %880 = vmatpush1.bf16.msra.mxu0 0
    %881 = vmatprep.subr.bf16.mxu0 0
    %882 = vmatpush1.bf16.msra.mxu0 0
    %883 = vmatprep.subr.bf16.mxu0 0
    %884 = vmatpush1.bf16.msra.mxu0 0
    %885 = vmatprep.subr.bf16.mxu0 0
    %886 = vmatpush1.bf16.msra.mxu0 0
    %887 = vmatprep.subr.bf16.mxu0 0
    %888 = vmatpush1.bf16.msra.mxu0 0
    %889 = vmatprep.subr.bf16.mxu0 0
    %890 = vmatpush1.bf16.msra.mxu0 0
    %891 = vmatprep.subr.bf16.mxu0 0
    %892 = vmatpush1.bf16.msra.mxu0 0
    %893 = vmatprep.subr.bf16.mxu0 0
    %894 = vmatpush1.bf16.msra.mxu0 0
    %895 = vmatprep.subr.bf16.mxu0 0
    %896 = vmatpush1.bf16.msra.mxu0 0
    %897 = vmatprep.subr.bf16.mxu0 0
    %898 = vmatpush1.bf16.msra.mxu0 0
    %899 = vmatprep.subr.bf16.mxu0 0
    %900 = vmatpush1.bf16.msra.mxu0 0
    %901 = vmatprep.subr.bf16.mxu0 0
    %902 = vmatpush1.bf16.msra.mxu0 0
    %903 = vmatprep.subr.bf16.mxu0 0
    %904 = vmatpush1.bf16.msra.mxu0 0
    %905 = vmatprep.mubr.bf16.mxu0 0
    %906 = vmatmul.mubr.bf16.gmra.mrb[0].mxu0 %v871
    %v907 = vpop.f32.mrb[0].mxu0
    %v908 = vadd.f32 0.0, %v907
    %v909 = vpop.f32.mrb[0].mxu0
    %v910 = vpop.f32.mrb[0].mxu0
    %v911 = vpop.f32.mrb[0].mxu0
    %912 = vdwg.mxu0
    %s913 = scalar_lea.vmem %s4, 3
    %v914 = vld [vmem:[%s913] sm:$0x1]
    %v916 = vlaneseq
    %v917 = vshrl.u32 %v916, 7
    %v918 = vsub.s32 0, %v917
    %v919 = vrot.slane %v914, %v918
    %922 = vrot.lane.b32.xlu0 %v843, 96
    %v923 = vpop.permute.xlu0 %922
    %v928 = vunpack.c.l.b16 %v845
    %v929 = vunpack.c.l.b16 %v846
    %v930 = vunpack.c.l.b16 %v847
    %v931 = vunpack.c.l.b16 %v848
    %v932 = vpack.c.b16 %v929, %v928
    %v933 = vpack.c.b16 %v931, %v930
    %v937 = vsel %vm91, %v923, 0
    %939 = vmatprep.subr.bf16.mxu0 0
    %940 = vmatpush1.bf16.msra.mxu0 %v932
    %941 = vmatprep.subr.bf16.mxu0 0
    %942 = vmatpush1.bf16.msra.mxu0 %v933
    %943 = vmatprep.subr.bf16.mxu0 0
    %944 = vmatpush1.bf16.msra.mxu0 0
    %945 = vmatprep.subr.bf16.mxu0 0
    %946 = vmatpush1.bf16.msra.mxu0 0
    %947 = vmatprep.subr.bf16.mxu0 0
    %948 = vmatpush1.bf16.msra.mxu0 0
    %949 = vmatprep.subr.bf16.mxu0 0
    %950 = vmatpush1.bf16.msra.mxu0 0
    %951 = vmatprep.subr.bf16.mxu0 0
    %952 = vmatpush1.bf16.msra.mxu0 0
    %953 = vmatprep.subr.bf16.mxu0 0
    %954 = vmatpush1.bf16.msra.mxu0 0
    %955 = vmatprep.subr.bf16.mxu0 0
    %956 = vmatpush1.bf16.msra.mxu0 0
    %957 = vmatprep.subr.bf16.mxu0 0
    %958 = vmatpush1.bf16.msra.mxu0 0
    %959 = vmatprep.subr.bf16.mxu0 0
    %960 = vmatpush1.bf16.msra.mxu0 0
    %961 = vmatprep.subr.bf16.mxu0 0
    %962 = vmatpush1.bf16.msra.mxu0 0
    %963 = vmatprep.subr.bf16.mxu0 0
    %964 = vmatpush1.bf16.msra.mxu0 0
    %965 = vmatprep.subr.bf16.mxu0 0
    %966 = vmatpush1.bf16.msra.mxu0 0
    %967 = vmatprep.subr.bf16.mxu0 0
    %968 = vmatpush1.bf16.msra.mxu0 0
    %969 = vmatprep.subr.bf16.mxu0 0
    %970 = vmatpush1.bf16.msra.mxu0 0
    %971 = vmatprep.mubr.bf16.mxu0 0
    %972 = vmatmul.mubr.bf16.gmra.mrb[0].mxu0 %v937
    %v973 = vpop.f32.mrb[0].mxu0
    %v974 = vadd.f32 %v919, %v973
    %v975 = vpop.f32.mrb[0].mxu0
    %v976 = vpop.f32.mrb[0].mxu0
    %v977 = vpop.f32.mrb[0].mxu0
    %978 = vdwg.mxu0
    %v979 = vadd.f32 %v974, %v908
    %v980 = vxor.u32 %v979, 2147483648
    %v981 = vmul.f32 %v980, 1.442695
    %v982 = vpow.pop %v981
    %v983 = vadd.f32 %v982, 1.0
    %v984 = vrcp.pop %v983
    %v985 = vmul.f32 1.0, %v984
    %s986 = scalar_lea.vmem %s5, 3
    %v987 = vld [vmem:[%s986] sm:$0x1]
    %v989 = vlaneseq
    %v990 = vshrl.u32 %v989, 7
    %v991 = vsub.s32 0, %v990
    %v992 = vrot.slane %v987, %v991
    %993 = vrot.lane.b32.xlu0 %v992, 64
    %v994 = vpop.permute.xlu0 %993
    %v996 = vadd.f32 %v908, %v994
    %998 = vrot.lane.b32.xlu0 %v996, 64
    %v999 = vpop.permute.xlu0 %998
    %v1001 = vmul.f32 %v985, %v999
    %1003 = vrot.lane.b32.xlu0 %v1001, 64
    %v1004 = vpop.permute.xlu0 %1003
    %v1006 = vadd.f32 %v974, %v1004
    %v1007 = vtanh.pop %v1006
    %v1008 = vsub.f32 1.0, %v985
    %1010 = vrot.lane.b32.xlu0 %v1007, 96
    %v1011 = vpop.permute.xlu0 %1010
    %v1013 = vmul.f32 %v1008, %v1011
    %v1014 = vmul.f32 %v985, %v398
    %v1015 = vadd.f32 %v1013, %v1014
    %v1016 = vand.u32 2147483647, %v1015
    %vm1017 = vcmp.le.f32.partialorder %v1016, 0.7853982
    %vm1018 = vcmp.lt.s32.totalorder %v1015, 0
    %v1019 = vand.u32 %v1015, 2139095040
    %v1020 = vshrl.u32 %v1019, 23
    %v1021 = vsub.s32 %v1020, 127
    %v1022 = vand.u32 2147483647, %v1015
    %v1023 = vand.u32 %v1022, 8388607
    %v1024 = vor.u32 %v1023, 8388608
    %v1025 = vsub.s32 0, %v1024
    %v1026 = vadd.s32 %v1021, 1
    %vm1027 = vcmp.gt.s32.totalorder %v1026, 0
    %v1028 = vsel %vm1027, %v1026, 0
    %v1029 = vshrl.u32 %v1028, 5
    %v1030 = vand.u32 %v1028, 31
    %v1031 = vsub.s32 32, %v1030
    %v1032 = vshrl.u32 683565275, %v1031
    %v1033 = vshll.u32 683565275, %v1030
    %v1034 = vshrl.u32 2475754826, %v1031
    %v1035 = vor.u32 %v1033, %v1034
    %v1036 = vshll.u32 2475754826, %v1030
    %v1037 = vshrl.u32 2131351028, %v1031
    %v1038 = vor.u32 %v1036, %v1037
    %v1039 = vshll.u32 2131351028, %v1030
    %v1040 = vshrl.u32 2102212464, %v1031
    %v1041 = vor.u32 %v1039, %v1040
    %v1042 = vshll.u32 2102212464, %v1030
    %v1043 = vshrl.u32 920167782, %v1031
    %v1044 = vor.u32 %v1042, %v1043
    %v1045 = vshll.u32 920167782, %v1030
    %v1046 = vshrl.u32 1326507024, %v1031
    %v1047 = vor.u32 %v1045, %v1046
    %vm1048 = vcmp.lt.s32.totalorder %v1029, 1
    %vm1049 = vcmp.lt.s32.totalorder %v1029, 2
    %vm1050 = vcmp.lt.s32.totalorder %v1029, 3
    %vm1051 = vcmp.lt.s32.totalorder %v1029, 4
    %v1052 = vsel %vm1048, %v1032, %v1035
    %v1053 = vsel %vm1051, %v1041, 2102212464
    %v1054 = vsel %vm1050, %v1038, %v1053
    %v1055 = vsel %vm1049, %v1052, %v1054
    %v1056 = vsel %vm1048, %v1035, %v1038
    %v1057 = vsel %vm1051, %v1044, 920167782
    %v1058 = vsel %vm1050, %v1041, %v1057
    %v1059 = vsel %vm1049, %v1056, %v1058
    %v1060 = vsel %vm1048, %v1038, %v1041
    %v1061 = vsel %vm1051, %v1047, 1326507024
    %v1062 = vsel %vm1050, %v1044, %v1061
    %v1063 = vsel %vm1049, %v1060, %v1062
    %v1064 = vshll.u32 %v1024, 8
    %v1065 = vmul.u32.u64.compose %v1064, %v1063
    %v1066 = vextract.low.u32 %v1065
    %v1067 = vextract.high.u32 %v1065
    %v1068 = vmul.u32.u64.compose %v1064, %v1059
    %v1069 = vextract.low.u32 %v1068
    %v1070 = vextract.high.u32 %v1068
    %v1071 = vmul.u32 %v1064, %v1055
    %v1072 = vadd.s32 %v1067, %v1069
    %vm1073 = vc.u32 %v1067, %v1069
    %v1074 = vadd.s32 %v1070, 1
    %v1075 = vsel %vm1073, %v1074, %v1070
    %v1076 = vadd.s32 %v1071, %v1075
    %v1077 = vadd.s32 %v1076, 536870912
    %v1078 = vshrl.u32 %v1077, 30
    %v1079 = vshll.u32 %v1078, 30
    %v1080 = vsub.s32 %v1076, %v1079
    %vm1081 = vcmp.lt.s32.totalorder %v1080, 0
    %v1082 = vsub.s32 0, %v1080
    %v1083 = vsel %vm1081, %v1082, %v1080
    %v1084 = vclz %v1083
    %v1085 = vsub.s32 %v1084, 2
    %vm1086 = vcmp.gt.s32.totalorder 0, %v1085
    %v1087 = vsel %vm1086, 0, %v1085
    %v1088 = vsub.s32 32, %v1087
    %v1089 = vshll.u32 %v1080, %v1087
    %v1090 = vshrl.u32 %v1072, %v1088
    %v1091 = vor.u32 %v1089, %v1090
    %v1092 = vsub.s32 4294967266, %v1087
    %v1093 = vadd.s32 %v1092, 127
    %v1094 = vshll.u32 %v1093, 23
    %v1095 = vor.u32 4788187, %v1094
    %v1096 = vand.u32 2147483647, %v1095
    %v1098 = vcvt.s32.f32 %v1091
    %v1099 = vmul.f32 %v1098, %v1096
    %v1100 = vxor.u32 %v1099, 2147483648
    %v1101 = vsel %vm1018, %v1100, %v1099
    %v1102 = vsub.s32 4, %v1078
    %v1103 = vsel %vm1018, %v1102, %v1078
    %v1104 = vsel %vm1017, %v1015, %v1101
    %v1105 = vsel %vm1017, 0, %v1103
    %v1106 = vcosq.f32.pop %v1104
    %v1107 = vsinq.f32.pop %v1104
    %vm1108 = vweird.f32 %v1015
    %v1109 = vand.u32 %v1105, 3
    %vm1110 = vcmp.lt.s32.totalorder %v1109, 2
    %vm1111 = vcmp.eq.s32.totalorder %v1109, 0
    %v1112 = vxor.u32 %v1107, 2147483648
    %v1113 = vsel %vm1111, %v1106, %v1112
    %vm1114 = vcmp.eq.s32.totalorder %v1109, 2
    %v1115 = vxor.u32 %v1106, 2147483648
    %v1116 = vsel %vm1114, %v1115, %v1107
    %v1117 = vsel %vm1110, %v1113, %v1116
    %v1118 = vsel %vm1108, nan, %v1117
    %v1119 = vadd.f32 %v1118, 1e-10
    %v1120 = vpack.c.bf16 %v1119, %v1119
    %s1121 = scalar_lea.vmem %s6, 16
    %v1122 = vld [vmem:[%s1121] sm:$0xf]
    %v1123 = vld [vmem:[%s1121 + $0x4] sm:$0xf]
    %v1124 = vld [vmem:[%s1121 + $0x8] sm:$0xf]
    %v1125 = vld [vmem:[%s1121 + $0xc] sm:$0xf]
    %s1126 = scalar_lea.vmem %s7, 1
    %v1127 = vld [vmem:[%s1126] sm:$0x1]
    %v1129 = vlaneseq
    %v1130 = vshrl.u32 %v1129, 7
    %v1131 = vsub.s32 0, %v1130
    %v1132 = vrot.slane %v1127, %v1131
    %1135 = vrot.lane.b32.xlu0 %v1120, 96
    %v1136 = vpop.permute.xlu0 %1135
    %v1141 = vunpack.c.l.b16 %v1122
    %v1142 = vunpack.c.l.b16 %v1123
    %v1143 = vunpack.c.l.b16 %v1124
    %v1144 = vunpack.c.l.b16 %v1125
    %v1145 = vpack.c.b16 %v1142, %v1141
    %v1146 = vpack.c.b16 %v1144, %v1143
    %v1150 = vsel %vm91, %v1136, 0
    %1152 = vmatprep.subr.bf16.mxu0 0
    %1153 = vmatpush1.bf16.msra.mxu0 %v1145
    %1154 = vmatprep.subr.bf16.mxu0 0
    %1155 = vmatpush1.bf16.msra.mxu0 %v1146
    %1156 = vmatprep.subr.bf16.mxu0 0
    %1157 = vmatpush1.bf16.msra.mxu0 0
    %1158 = vmatprep.subr.bf16.mxu0 0
    %1159 = vmatpush1.bf16.msra.mxu0 0
    %1160 = vmatprep.subr.bf16.mxu0 0
    %1161 = vmatpush1.bf16.msra.mxu0 0
    %1162 = vmatprep.subr.bf16.mxu0 0
    %1163 = vmatpush1.bf16.msra.mxu0 0
    %1164 = vmatprep.subr.bf16.mxu0 0
    %1165 = vmatpush1.bf16.msra.mxu0 0
    %1166 = vmatprep.subr.bf16.mxu0 0
    %1167 = vmatpush1.bf16.msra.mxu0 0
    %1168 = vmatprep.subr.bf16.mxu0 0
    %1169 = vmatpush1.bf16.msra.mxu0 0
    %1170 = vmatprep.subr.bf16.mxu0 0
    %1171 = vmatpush1.bf16.msra.mxu0 0
    %1172 = vmatprep.subr.bf16.mxu0 0
    %1173 = vmatpush1.bf16.msra.mxu0 0
    %1174 = vmatprep.subr.bf16.mxu0 0
    %1175 = vmatpush1.bf16.msra.mxu0 0
    %1176 = vmatprep.subr.bf16.mxu0 0
    %1177 = vmatpush1.bf16.msra.mxu0 0
    %1178 = vmatprep.subr.bf16.mxu0 0
    %1179 = vmatpush1.bf16.msra.mxu0 0
    %1180 = vmatprep.subr.bf16.mxu0 0
    %1181 = vmatpush1.bf16.msra.mxu0 0
    %1182 = vmatprep.subr.bf16.mxu0 0
    %1183 = vmatpush1.bf16.msra.mxu0 0
    %1184 = vmatprep.mubr.bf16.mxu0 0
    %1185 = vmatmul.mubr.bf16.gmra.mrb[0].mxu0 %v1150
    %v1186 = vpop.f32.mrb[0].mxu0
    %v1187 = vadd.f32 %v1132, %v1186
    %v1188 = vpop.f32.mrb[0].mxu0
    %v1189 = vpop.f32.mrb[0].mxu0
    %v1190 = vpop.f32.mrb[0].mxu0
    %1191 = vdwg.mxu0
    %v1192 = vmax.f32 %v1187, 0.0
    %v1193 = vpack.c.bf16 %v1192, %v1192
    %s1194 = scalar_lea.vmem %s8, 16
    %v1195 = vld [vmem:[%s1194] sm:$0xf]
    %v1196 = vld [vmem:[%s1194 + $0x4] sm:$0xf]
    %v1197 = vld [vmem:[%s1194 + $0x8] sm:$0xf]
    %v1198 = vld [vmem:[%s1194 + $0xc] sm:$0xf]
    %s1199 = scalar_lea.vmem %s9, 1
    %v1200 = vld [vmem:[%s1199] sm:$0x1]
    %v1202 = vlaneseq
    %v1203 = vshrl.u32 %v1202, 7
    %v1204 = vsub.s32 0, %v1203
    %v1205 = vrot.slane %v1200, %v1204
    %v1211 = vunpack.c.l.b16 %v1195
    %v1212 = vunpack.c.l.b16 %v1196
    %v1213 = vunpack.c.l.b16 %v1197
    %v1214 = vunpack.c.l.b16 %v1198
    %v1215 = vpack.c.b16 %v1212, %v1211
    %v1216 = vpack.c.b16 %v1214, %v1213
    %v1220 = vsel %vm91, %v1193, 0
    %1222 = vmatprep.subr.bf16.mxu0 0
    %1223 = vmatpush1.bf16.msra.mxu0 %v1215
    %1224 = vmatprep.subr.bf16.mxu0 0
    %1225 = vmatpush1.bf16.msra.mxu0 %v1216
    %1226 = vmatprep.subr.bf16.mxu0 0
    %1227 = vmatpush1.bf16.msra.mxu0 0
    %1228 = vmatprep.subr.bf16.mxu0 0
    %1229 = vmatpush1.bf16.msra.mxu0 0
    %1230 = vmatprep.subr.bf16.mxu0 0
    %1231 = vmatpush1.bf16.msra.mxu0 0
    %1232 = vmatprep.subr.bf16.mxu0 0
    %1233 = vmatpush1.bf16.msra.mxu0 0
    %1234 = vmatprep.subr.bf16.mxu0 0
    %1235 = vmatpush1.bf16.msra.mxu0 0
    %1236 = vmatprep.subr.bf16.mxu0 0
    %1237 = vmatpush1.bf16.msra.mxu0 0
    %1238 = vmatprep.subr.bf16.mxu0 0
    %1239 = vmatpush1.bf16.msra.mxu0 0
    %1240 = vmatprep.subr.bf16.mxu0 0
    %1241 = vmatpush1.bf16.msra.mxu0 0
    %1242 = vmatprep.subr.bf16.mxu0 0
    %1243 = vmatpush1.bf16.msra.mxu0 0
    %1244 = vmatprep.subr.bf16.mxu0 0
    %1245 = vmatpush1.bf16.msra.mxu0 0
    %1246 = vmatprep.subr.bf16.mxu0 0
    %1247 = vmatpush1.bf16.msra.mxu0 0
    %1248 = vmatprep.subr.bf16.mxu0 0
    %1249 = vmatpush1.bf16.msra.mxu0 0
    %1250 = vmatprep.subr.bf16.mxu0 0
    %1251 = vmatpush1.bf16.msra.mxu0 0
    %1252 = vmatprep.subr.bf16.mxu0 0
    %1253 = vmatpush1.bf16.msra.mxu0 0
    %1254 = vmatprep.mubr.bf16.mxu0 0
    %1255 = vmatmul.mubr.bf16.gmra.mrb[0].mxu0 %v1220
    %v1256 = vpop.f32.mrb[0].mxu0
    %v1257 = vadd.f32 %v1205, %v1256
    %v1258 = vpop.f32.mrb[0].mxu0
    %v1259 = vpop.f32.mrb[0].mxu0
    %v1260 = vpop.f32.mrb[0].mxu0
    %1261 = vdwg.mxu0
    %v1262 = vsel %vm641, %v1257, -inf
    %1263 = vmax.xlane.f32.xlu0 %v1262
    %v1264 = vpop.xlane.xlu0 %1263
    %v1265 = vsub.f32 %v1257, %v1264
    %v1266 = vmul.f32 %v1265, 1.442695
    %v1267 = vpow.pop %v1266
    %v1268 = vsel %vm641, %v1267, 0.0
    %1269 = vadd.xlane.f32.xlu0 %v1268
    %v1270 = vpop.xlane.xlu0 %1269
    %v1271 = vrcp.pop %v1270
    %v1272 = vmul.f32 %v1267, %v1271
    %v1273 = vadd.f32 %v1272, 1e-10
    %s1274 = scalar_lea.vmem %s10, 8
    %1275 = vst.msk [vmem:[%s1274] sm:$0xff] %vm641, %v1273
    %s1276 = scalar_lea.vmem %s1, 8
    %v1277 = vld [vmem:[%s1276] sm:$0xff]
    %v1278 = vsel %vm641, %v1273, 0.0
    %1279 = vadd.xlane.f32.xlu0 %v1278
    %v1280 = vpop.xlane.xlu0 %1279
    %v1281 = vmul.f32 %v1277, %v1280
    %vm1282 = vcmp.ge.f32.partialorder %v1281, %v1273
    %v1283 = vsel %vm1282, 1, 0
    %vm1284 = vcmp.eq.s32.totalorder %v1283, 0
    %1286 = vrot.lane.b32.xlu0 %v1273, 127
    %v1287 = vpop.permute.xlu0 %1286
    %v1289 = vsel %vm1284, %v1273, %v1287
    %s1290 = scalar_lea.vmem %s11, 8
    %1291 = vst.msk [vmem:[%s1290] sm:$0xff] %vm668, %v1283
    %v1292 = vadd.f32 %v1289, 1e-10
    %v1293 = vlog2.pop %v1292
    %v1294 = vmul.f32 %v1293, 0.6931472
    %v1295 = vadd.f32 %v673, %v1294
    %1296 = vset.pattern.permute.xlu0 0
    %1297 = vperm.xlu0 %1296, %v1283
    %v1298 = vpop.permute.xlu0 %1297
    %vm1299 = vcmp.eq.s32.totalorder %v68, %v1298
    %v1300 = vsel %vm1299, 1, 0
    %v1301 = vcvt.s32.f32 %v1300
    %v1302 = vpack.c.bf16 %v1301, %v1301
    %s1303 = scalar_lea.vmem [#allocation2], 64
    %v1304 = vld [vmem:[%s1303] sm:$0xf]
    %v1305 = vld [vmem:[%s1303 + $0x4] sm:$0xf]
    %v1306 = vld [vmem:[%s1303 + $0x8] sm:$0xf]
    %v1307 = vld [vmem:[%s1303 + $0xc] sm:$0xf]
    %s1308 = scalar_lea.vmem [#allocation4], 64
    %v1309 = vld [vmem:[%s1308] sm:$0xf]
    %v1310 = vld [vmem:[%s1308 + $0x4] sm:$0xf]
    %v1311 = vld [vmem:[%s1308 + $0x8] sm:$0xf]
    %v1312 = vld [vmem:[%s1308 + $0xc] sm:$0xf]
    %v1317 = vunpack.c.l.b16 %v1309
    %v1318 = vunpack.c.l.b16 %v1310
    %v1319 = vunpack.c.l.b16 %v1311
    %v1320 = vunpack.c.l.b16 %v1312
    %v1321 = vpack.c.b16 %v1318, %v1317
    %v1322 = vpack.c.b16 %v1320, %v1319
    %1325 = vmatprep.subr.bf16.mxu0 0
    %1326 = vmatpush1.bf16.msra.mxu0 %v1321
    %1327 = vmatprep.subr.bf16.mxu0 0
    %1328 = vmatpush1.bf16.msra.mxu0 %v1322
    %1329 = vmatprep.subr.bf16.mxu0 0
    %1330 = vmatpush1.bf16.msra.mxu0 0
    %1331 = vmatprep.subr.bf16.mxu0 0
    %1332 = vmatpush1.bf16.msra.mxu0 0
    %1333 = vmatprep.subr.bf16.mxu0 0
    %1334 = vmatpush1.bf16.msra.mxu0 0
    %1335 = vmatprep.subr.bf16.mxu0 0
    %1336 = vmatpush1.bf16.msra.mxu0 0
    %1337 = vmatprep.subr.bf16.mxu0 0
    %1338 = vmatpush1.bf16.msra.mxu0 0
    %1339 = vmatprep.subr.bf16.mxu0 0
    %1340 = vmatpush1.bf16.msra.mxu0 0
    %1341 = vmatprep.subr.bf16.mxu0 0
    %1342 = vmatpush1.bf16.msra.mxu0 0
    %1343 = vmatprep.subr.bf16.mxu0 0
    %1344 = vmatpush1.bf16.msra.mxu0 0
    %1345 = vmatprep.subr.bf16.mxu0 0
    %1346 = vmatpush1.bf16.msra.mxu0 0
    %1347 = vmatprep.subr.bf16.mxu0 0
    %1348 = vmatpush1.bf16.msra.mxu0 0
    %1349 = vmatprep.subr.bf16.mxu0 0
    %1350 = vmatpush1.bf16.msra.mxu0 0
    %1351 = vmatprep.subr.bf16.mxu0 0
    %1352 = vmatpush1.bf16.msra.mxu0 0
    %1353 = vmatprep.subr.bf16.mxu0 0
    %1354 = vmatpush1.bf16.msra.mxu0 0
    %1355 = vmatprep.subr.bf16.mxu0 0
    %1356 = vmatpush1.bf16.msra.mxu0 0
    %1357 = vmatprep.mubr.bf16.mxu0 0
    %1358 = vmatmul.mubr.bf16.gmra.mrb[0].mxu0 %v937
    %v1359 = vpop.f32.mrb[0].mxu0
    %v1360 = vadd.f32 0.0, %v1359
    %v1361 = vpop.f32.mrb[0].mxu0
    %v1362 = vpop.f32.mrb[0].mxu0
    %v1363 = vpop.f32.mrb[0].mxu0
    %1364 = vdwg.mxu0
    %s1365 = scalar_lea.vmem %s4, 4
    %v1366 = vld [vmem:[%s1365] sm:$0x1]
    %v1368 = vlaneseq
    %v1369 = vshrl.u32 %v1368, 7
    %v1370 = vsub.s32 0, %v1369
    %v1371 = vrot.slane %v1366, %v1370
    %v1377 = vunpack.c.l.b16 %v1304
    %v1378 = vunpack.c.l.b16 %v1305
    %v1379 = vunpack.c.l.b16 %v1306
    %v1380 = vunpack.c.l.b16 %v1307
    %v1381 = vpack.c.b16 %v1378, %v1377
    %v1382 = vpack.c.b16 %v1380, %v1379
    %v1386 = vsel %vm91, %v1302, 0
    %1388 = vmatprep.subr.bf16.mxu0 0
    %1389 = vmatpush1.bf16.msra.mxu0 %v1381
    %1390 = vmatprep.subr.bf16.mxu0 0
    %1391 = vmatpush1.bf16.msra.mxu0 %v1382
    %1392 = vmatprep.subr.bf16.mxu0 0
    %1393 = vmatpush1.bf16.msra.mxu0 0
    %1394 = vmatprep.subr.bf16.mxu0 0
    %1395 = vmatpush1.bf16.msra.mxu0 0
    %1396 = vmatprep.subr.bf16.mxu0 0
    %1397 = vmatpush1.bf16.msra.mxu0 0
    %1398 = vmatprep.subr.bf16.mxu0 0
    %1399 = vmatpush1.bf16.msra.mxu0 0
    %1400 = vmatprep.subr.bf16.mxu0 0
    %1401 = vmatpush1.bf16.msra.mxu0 0
    %1402 = vmatprep.subr.bf16.mxu0 0
    %1403 = vmatpush1.bf16.msra.mxu0 0
    %1404 = vmatprep.subr.bf16.mxu0 0
    %1405 = vmatpush1.bf16.msra.mxu0 0
    %1406 = vmatprep.subr.bf16.mxu0 0
    %1407 = vmatpush1.bf16.msra.mxu0 0
    %1408 = vmatprep.subr.bf16.mxu0 0
    %1409 = vmatpush1.bf16.msra.mxu0 0
    %1410 = vmatprep.subr.bf16.mxu0 0
    %1411 = vmatpush1.bf16.msra.mxu0 0
    %1412 = vmatprep.subr.bf16.mxu0 0
    %1413 = vmatpush1.bf16.msra.mxu0 0
    %1414 = vmatprep.subr.bf16.mxu0 0
    %1415 = vmatpush1.bf16.msra.mxu0 0
    %1416 = vmatprep.subr.bf16.mxu0 0
    %1417 = vmatpush1.bf16.msra.mxu0 0
    %1418 = vmatprep.subr.bf16.mxu0 0
    %1419 = vmatpush1.bf16.msra.mxu0 0
    %1420 = vmatprep.mubr.bf16.mxu0 0
    %1421 = vmatmul.mubr.bf16.gmra.mrb[0].mxu0 %v1386
    %v1422 = vpop.f32.mrb[0].mxu0
    %v1423 = vadd.f32 %v1371, %v1422
    %v1424 = vpop.f32.mrb[0].mxu0
    %v1425 = vpop.f32.mrb[0].mxu0
    %v1426 = vpop.f32.mrb[0].mxu0
    %1427 = vdwg.mxu0
    %v1428 = vadd.f32 %v1423, %v1360
    %v1429 = vxor.u32 %v1428, 2147483648
    %v1430 = vmul.f32 %v1429, 1.442695
    %v1431 = vpow.pop %v1430
    %v1432 = vadd.f32 %v1431, 1.0
    %v1433 = vrcp.pop %v1432
    %v1434 = vmul.f32 1.0, %v1433
    %s1435 = scalar_lea.vmem %s5, 4
    %v1436 = vld [vmem:[%s1435] sm:$0x1]
    %v1438 = vlaneseq
    %v1439 = vshrl.u32 %v1438, 7
    %v1440 = vsub.s32 0, %v1439
    %v1441 = vrot.slane %v1436, %v1440
    %1442 = vrot.lane.b32.xlu0 %v1441, 64
    %v1443 = vpop.permute.xlu0 %1442
    %v1445 = vadd.f32 %v1360, %v1443
    %1447 = vrot.lane.b32.xlu0 %v1445, 64
    %v1448 = vpop.permute.xlu0 %1447
    %v1450 = vmul.f32 %v1434, %v1448
    %1452 = vrot.lane.b32.xlu0 %v1450, 64
    %v1453 = vpop.permute.xlu0 %1452
    %v1455 = vadd.f32 %v1423, %v1453
    %v1456 = vtanh.pop %v1455
    %v1457 = vsub.f32 1.0, %v1434
    %1459 = vrot.lane.b32.xlu0 %v1456, 96
    %v1460 = vpop.permute.xlu0 %1459
    %v1462 = vmul.f32 %v1457, %v1460
    %v1463 = vmul.f32 %v1434, %v842
    %v1464 = vadd.f32 %v1462, %v1463
    %v1465 = vpack.c.bf16 %v1464, %v1464
    %s1466 = scalar_lea.vmem [#allocation2], 80
    %v1467 = vld [vmem:[%s1466] sm:$0xf]
    %v1468 = vld [vmem:[%s1466 + $0x4] sm:$0xf]
    %v1469 = vld [vmem:[%s1466 + $0x8] sm:$0xf]
    %v1470 = vld [vmem:[%s1466 + $0xc] sm:$0xf]
    %v1471 = vpack.c.bf16 %v1015, %v1015
    %s1472 = scalar_lea.vmem [#allocation4], 80
    %v1473 = vld [vmem:[%s1472] sm:$0xf]
    %v1474 = vld [vmem:[%s1472 + $0x4] sm:$0xf]
    %v1475 = vld [vmem:[%s1472 + $0x8] sm:$0xf]
    %v1476 = vld [vmem:[%s1472 + $0xc] sm:$0xf]
    %1478 = vrot.lane.b32.xlu0 %v1471, 96
    %v1479 = vpop.permute.xlu0 %1478
    %v1484 = vunpack.c.l.b16 %v1473
    %v1485 = vunpack.c.l.b16 %v1474
    %v1486 = vunpack.c.l.b16 %v1475
    %v1487 = vunpack.c.l.b16 %v1476
    %v1488 = vpack.c.b16 %v1485, %v1484
    %v1489 = vpack.c.b16 %v1487, %v1486
    %v1493 = vsel %vm91, %v1479, 0
    %1495 = vmatprep.subr.bf16.mxu0 0
    %1496 = vmatpush1.bf16.msra.mxu0 %v1488
    %1497 = vmatprep.subr.bf16.mxu0 0
    %1498 = vmatpush1.bf16.msra.mxu0 %v1489
    %1499 = vmatprep.subr.bf16.mxu0 0
    %1500 = vmatpush1.bf16.msra.mxu0 0
    %1501 = vmatprep.subr.bf16.mxu0 0
    %1502 = vmatpush1.bf16.msra.mxu0 0
    %1503 = vmatprep.subr.bf16.mxu0 0
    %1504 = vmatpush1.bf16.msra.mxu0 0
    %1505 = vmatprep.subr.bf16.mxu0 0
    %1506 = vmatpush1.bf16.msra.mxu0 0
    %1507 = vmatprep.subr.bf16.mxu0 0
    %1508 = vmatpush1.bf16.msra.mxu0 0
    %1509 = vmatprep.subr.bf16.mxu0 0
    %1510 = vmatpush1.bf16.msra.mxu0 0
    %1511 = vmatprep.subr.bf16.mxu0 0
    %1512 = vmatpush1.bf16.msra.mxu0 0
    %1513 = vmatprep.subr.bf16.mxu0 0
    %1514 = vmatpush1.bf16.msra.mxu0 0
    %1515 = vmatprep.subr.bf16.mxu0 0
    %1516 = vmatpush1.bf16.msra.mxu0 0
    %1517 = vmatprep.subr.bf16.mxu0 0
    %1518 = vmatpush1.bf16.msra.mxu0 0
    %1519 = vmatprep.subr.bf16.mxu0 0
    %1520 = vmatpush1.bf16.msra.mxu0 0
    %1521 = vmatprep.subr.bf16.mxu0 0
    %1522 = vmatpush1.bf16.msra.mxu0 0
    %1523 = vmatprep.subr.bf16.mxu0 0
    %1524 = vmatpush1.bf16.msra.mxu0 0
    %1525 = vmatprep.subr.bf16.mxu0 0
    %1526 = vmatpush1.bf16.msra.mxu0 0
    %1527 = vmatprep.mubr.bf16.mxu0 0
    %1528 = vmatmul.mubr.bf16.gmra.mrb[0].mxu0 %v1493
    %v1529 = vpop.f32.mrb[0].mxu0
    %v1530 = vadd.f32 0.0, %v1529
    %v1531 = vpop.f32.mrb[0].mxu0
    %v1532 = vpop.f32.mrb[0].mxu0
    %v1533 = vpop.f32.mrb[0].mxu0
    %1534 = vdwg.mxu0
    %s1535 = scalar_lea.vmem %s4, 5
    %v1536 = vld [vmem:[%s1535] sm:$0x1]
    %v1538 = vlaneseq
    %v1539 = vshrl.u32 %v1538, 7
    %v1540 = vsub.s32 0, %v1539
    %v1541 = vrot.slane %v1536, %v1540
    %1544 = vrot.lane.b32.xlu0 %v1465, 96
    %v1545 = vpop.permute.xlu0 %1544
    %v1550 = vunpack.c.l.b16 %v1467
    %v1551 = vunpack.c.l.b16 %v1468
    %v1552 = vunpack.c.l.b16 %v1469
    %v1553 = vunpack.c.l.b16 %v1470
    %v1554 = vpack.c.b16 %v1551, %v1550
    %v1555 = vpack.c.b16 %v1553, %v1552
    %v1559 = vsel %vm91, %v1545, 0
    %1561 = vmatprep.subr.bf16.mxu0 0
    %1562 = vmatpush1.bf16.msra.mxu0 %v1554
    %1563 = vmatprep.subr.bf16.mxu0 0
    %1564 = vmatpush1.bf16.msra.mxu0 %v1555
    %1565 = vmatprep.subr.bf16.mxu0 0
    %1566 = vmatpush1.bf16.msra.mxu0 0
    %1567 = vmatprep.subr.bf16.mxu0 0
    %1568 = vmatpush1.bf16.msra.mxu0 0
    %1569 = vmatprep.subr.bf16.mxu0 0
    %1570 = vmatpush1.bf16.msra.mxu0 0
    %1571 = vmatprep.subr.bf16.mxu0 0
    %1572 = vmatpush1.bf16.msra.mxu0 0
    %1573 = vmatprep.subr.bf16.mxu0 0
    %1574 = vmatpush1.bf16.msra.mxu0 0
    %1575 = vmatprep.subr.bf16.mxu0 0
    %1576 = vmatpush1.bf16.msra.mxu0 0
    %1577 = vmatprep.subr.bf16.mxu0 0
    %1578 = vmatpush1.bf16.msra.mxu0 0
    %1579 = vmatprep.subr.bf16.mxu0 0
    %1580 = vmatpush1.bf16.msra.mxu0 0
    %1581 = vmatprep.subr.bf16.mxu0 0
    %1582 = vmatpush1.bf16.msra.mxu0 0
    %1583 = vmatprep.subr.bf16.mxu0 0
    %1584 = vmatpush1.bf16.msra.mxu0 0
    %1585 = vmatprep.subr.bf16.mxu0 0
    %1586 = vmatpush1.bf16.msra.mxu0 0
    %1587 = vmatprep.subr.bf16.mxu0 0
    %1588 = vmatpush1.bf16.msra.mxu0 0
    %1589 = vmatprep.subr.bf16.mxu0 0
    %1590 = vmatpush1.bf16.msra.mxu0 0
    %1591 = vmatprep.subr.bf16.mxu0 0
    %1592 = vmatpush1.bf16.msra.mxu0 0
    %1593 = vmatprep.mubr.bf16.mxu0 0
    %1594 = vmatmul.mubr.bf16.gmra.mrb[0].mxu0 %v1559
    %v1595 = vpop.f32.mrb[0].mxu0
    %v1596 = vadd.f32 %v1541, %v1595
    %v1597 = vpop.f32.mrb[0].mxu0
    %v1598 = vpop.f32.mrb[0].mxu0
    %v1599 = vpop.f32.mrb[0].mxu0
    %1600 = vdwg.mxu0
    %v1601 = vadd.f32 %v1596, %v1530
    %v1602 = vxor.u32 %v1601, 2147483648
    %v1603 = vmul.f32 %v1602, 1.442695
    %v1604 = vpow.pop %v1603
    %v1605 = vadd.f32 %v1604, 1.0
    %v1606 = vrcp.pop %v1605
    %v1607 = vmul.f32 1.0, %v1606
    %s1608 = scalar_lea.vmem %s5, 5
    %v1609 = vld [vmem:[%s1608] sm:$0x1]
    %v1611 = vlaneseq
    %v1612 = vshrl.u32 %v1611, 7
    %v1613 = vsub.s32 0, %v1612
    %v1614 = vrot.slane %v1609, %v1613
    %1615 = vrot.lane.b32.xlu0 %v1614, 64
    %v1616 = vpop.permute.xlu0 %1615
    %v1618 = vadd.f32 %v1530, %v1616
    %1620 = vrot.lane.b32.xlu0 %v1618, 64
    %v1621 = vpop.permute.xlu0 %1620
    %v1623 = vmul.f32 %v1607, %v1621
    %1625 = vrot.lane.b32.xlu0 %v1623, 64
    %v1626 = vpop.permute.xlu0 %1625
    %v1628 = vadd.f32 %v1596, %v1626
    %v1629 = vtanh.pop %v1628
    %v1630 = vsub.f32 1.0, %v1607
    %1632 = vrot.lane.b32.xlu0 %v1629, 96
    %v1633 = vpop.permute.xlu0 %1632
    %v1635 = vmul.f32 %v1630, %v1633
    %v1636 = vmul.f32 %v1607, %v1015
    %v1637 = vadd.f32 %v1635, %v1636
    %v1638 = vand.u32 2147483647, %v1637
    %vm1639 = vcmp.le.f32.partialorder %v1638, 0.7853982
    %vm1640 = vcmp.lt.s32.totalorder %v1637, 0
    %v1641 = vand.u32 %v1637, 2139095040
    %v1642 = vshrl.u32 %v1641, 23
    %v1643 = vsub.s32 %v1642, 127
    %v1644 = vand.u32 2147483647, %v1637
    %v1645 = vand.u32 %v1644, 8388607
    %v1646 = vor.u32 %v1645, 8388608
    %v1647 = vsub.s32 0, %v1646
    %v1648 = vadd.s32 %v1643, 1
    %vm1649 = vcmp.gt.s32.totalorder %v1648, 0
    %v1650 = vsel %vm1649, %v1648, 0
    %v1651 = vshrl.u32 %v1650, 5
    %v1652 = vand.u32 %v1650, 31
    %v1653 = vsub.s32 32, %v1652
    %v1654 = vshrl.u32 683565275, %v1653
    %v1655 = vshll.u32 683565275, %v1652
    %v1656 = vshrl.u32 2475754826, %v1653
    %v1657 = vor.u32 %v1655, %v1656
    %v1658 = vshll.u32 2475754826, %v1652
    %v1659 = vshrl.u32 2131351028, %v1653
    %v1660 = vor.u32 %v1658, %v1659
    %v1661 = vshll.u32 2131351028, %v1652
    %v1662 = vshrl.u32 2102212464, %v1653
    %v1663 = vor.u32 %v1661, %v1662
    %v1664 = vshll.u32 2102212464, %v1652
    %v1665 = vshrl.u32 920167782, %v1653
    %v1666 = vor.u32 %v1664, %v1665
    %v1667 = vshll.u32 920167782, %v1652
    %v1668 = vshrl.u32 1326507024, %v1653
    %v1669 = vor.u32 %v1667, %v1668
    %vm1670 = vcmp.lt.s32.totalorder %v1651, 1
    %vm1671 = vcmp.lt.s32.totalorder %v1651, 2
    %vm1672 = vcmp.lt.s32.totalorder %v1651, 3
    %vm1673 = vcmp.lt.s32.totalorder %v1651, 4
    %v1674 = vsel %vm1670, %v1654, %v1657
    %v1675 = vsel %vm1673, %v1663, 2102212464
    %v1676 = vsel %vm1672, %v1660, %v1675
    %v1677 = vsel %vm1671, %v1674, %v1676
    %v1678 = vsel %vm1670, %v1657, %v1660
    %v1679 = vsel %vm1673, %v1666, 920167782
    %v1680 = vsel %vm1672, %v1663, %v1679
    %v1681 = vsel %vm1671, %v1678, %v1680
    %v1682 = vsel %vm1670, %v1660, %v1663
    %v1683 = vsel %vm1673, %v1669, 1326507024
    %v1684 = vsel %vm1672, %v1666, %v1683
    %v1685 = vsel %vm1671, %v1682, %v1684
    %v1686 = vshll.u32 %v1646, 8
    %v1687 = vmul.u32.u64.compose %v1686, %v1685
    %v1688 = vextract.low.u32 %v1687
    %v1689 = vextract.high.u32 %v1687
    %v1690 = vmul.u32.u64.compose %v1686, %v1681
    %v1691 = vextract.low.u32 %v1690
    %v1692 = vextract.high.u32 %v1690
    %v1693 = vmul.u32 %v1686, %v1677
    %v1694 = vadd.s32 %v1689, %v1691
    %vm1695 = vc.u32 %v1689, %v1691
    %v1696 = vadd.s32 %v1692, 1
    %v1697 = vsel %vm1695, %v1696, %v1692
    %v1698 = vadd.s32 %v1693, %v1697
    %v1699 = vadd.s32 %v1698, 536870912
    %v1700 = vshrl.u32 %v1699, 30
    %v1701 = vshll.u32 %v1700, 30
    %v1702 = vsub.s32 %v1698, %v1701
    %vm1703 = vcmp.lt.s32.totalorder %v1702, 0
    %v1704 = vsub.s32 0, %v1702
    %v1705 = vsel %vm1703, %v1704, %v1702
    %v1706 = vclz %v1705
    %v1707 = vsub.s32 %v1706, 2
    %vm1708 = vcmp.gt.s32.totalorder 0, %v1707
    %v1709 = vsel %vm1708, 0, %v1707
    %v1710 = vsub.s32 32, %v1709
    %v1711 = vshll.u32 %v1702, %v1709
    %v1712 = vshrl.u32 %v1694, %v1710
    %v1713 = vor.u32 %v1711, %v1712
    %v1714 = vsub.s32 4294967266, %v1709
    %v1715 = vadd.s32 %v1714, 127
    %v1716 = vshll.u32 %v1715, 23
    %v1717 = vor.u32 4788187, %v1716
    %v1718 = vand.u32 2147483647, %v1717
    %v1720 = vcvt.s32.f32 %v1713
    %v1721 = vmul.f32 %v1720, %v1718
    %v1722 = vxor.u32 %v1721, 2147483648
    %v1723 = vsel %vm1640, %v1722, %v1721
    %v1724 = vsub.s32 4, %v1700
    %v1725 = vsel %vm1640, %v1724, %v1700
    %v1726 = vsel %vm1639, %v1637, %v1723
    %v1727 = vsel %vm1639, 0, %v1725
    %v1728 = vcosq.f32.pop %v1726
    %v1729 = vsinq.f32.pop %v1726
    %vm1730 = vweird.f32 %v1637
    %v1731 = vand.u32 %v1727, 3
    %vm1732 = vcmp.lt.s32.totalorder %v1731, 2
    %vm1733 = vcmp.eq.s32.totalorder %v1731, 0
    %v1734 = vxor.u32 %v1729, 2147483648
    %v1735 = vsel %vm1733, %v1728, %v1734
    %vm1736 = vcmp.eq.s32.totalorder %v1731, 2
    %v1737 = vxor.u32 %v1728, 2147483648
    %v1738 = vsel %vm1736, %v1737, %v1729
    %v1739 = vsel %vm1732, %v1735, %v1738
    %v1740 = vsel %vm1730, nan, %v1739
    %v1741 = vadd.f32 %v1740, 1e-10
    %v1742 = vpack.c.bf16 %v1741, %v1741
    %s1743 = scalar_lea.vmem %s6, 32
    %v1744 = vld [vmem:[%s1743] sm:$0xf]
    %v1745 = vld [vmem:[%s1743 + $0x4] sm:$0xf]
    %v1746 = vld [vmem:[%s1743 + $0x8] sm:$0xf]
    %v1747 = vld [vmem:[%s1743 + $0xc] sm:$0xf]
    %s1748 = scalar_lea.vmem %s7, 2
    %v1749 = vld [vmem:[%s1748] sm:$0x1]
    %v1751 = vlaneseq
    %v1752 = vshrl.u32 %v1751, 7
    %v1753 = vsub.s32 0, %v1752
    %v1754 = vrot.slane %v1749, %v1753
    %1757 = vrot.lane.b32.xlu0 %v1742, 96
    %v1758 = vpop.permute.xlu0 %1757
    %v1763 = vunpack.c.l.b16 %v1744
    %v1764 = vunpack.c.l.b16 %v1745
    %v1765 = vunpack.c.l.b16 %v1746
    %v1766 = vunpack.c.l.b16 %v1747
    %v1767 = vpack.c.b16 %v1764, %v1763
    %v1768 = vpack.c.b16 %v1766, %v1765
    %v1772 = vsel %vm91, %v1758, 0
    %1774 = vmatprep.subr.bf16.mxu0 0
    %1775 = vmatpush1.bf16.msra.mxu0 %v1767
    %1776 = vmatprep.subr.bf16.mxu0 0
    %1777 = vmatpush1.bf16.msra.mxu0 %v1768
    %1778 = vmatprep.subr.bf16.mxu0 0
    %1779 = vmatpush1.bf16.msra.mxu0 0
    %1780 = vmatprep.subr.bf16.mxu0 0
    %1781 = vmatpush1.bf16.msra.mxu0 0
    %1782 = vmatprep.subr.bf16.mxu0 0
    %1783 = vmatpush1.bf16.msra.mxu0 0
    %1784 = vmatprep.subr.bf16.mxu0 0
    %1785 = vmatpush1.bf16.msra.mxu0 0
    %1786 = vmatprep.subr.bf16.mxu0 0
    %1787 = vmatpush1.bf16.msra.mxu0 0
    %1788 = vmatprep.subr.bf16.mxu0 0
    %1789 = vmatpush1.bf16.msra.mxu0 0
    %1790 = vmatprep.subr.bf16.mxu0 0
    %1791 = vmatpush1.bf16.msra.mxu0 0
    %1792 = vmatprep.subr.bf16.mxu0 0
    %1793 = vmatpush1.bf16.msra.mxu0 0
    %1794 = vmatprep.subr.bf16.mxu0 0
    %1795 = vmatpush1.bf16.msra.mxu0 0
    %1796 = vmatprep.subr.bf16.mxu0 0
    %1797 = vmatpush1.bf16.msra.mxu0 0
    %1798 = vmatprep.subr.bf16.mxu0 0
    %1799 = vmatpush1.bf16.msra.mxu0 0
    %1800 = vmatprep.subr.bf16.mxu0 0
    %1801 = vmatpush1.bf16.msra.mxu0 0
    %1802 = vmatprep.subr.bf16.mxu0 0
    %1803 = vmatpush1.bf16.msra.mxu0 0
    %1804 = vmatprep.subr.bf16.mxu0 0
    %1805 = vmatpush1.bf16.msra.mxu0 0
    %1806 = vmatprep.mubr.bf16.mxu0 0
    %1807 = vmatmul.mubr.bf16.gmra.mrb[0].mxu0 %v1772
    %v1808 = vpop.f32.mrb[0].mxu0
    %v1809 = vadd.f32 %v1754, %v1808
    %v1810 = vpop.f32.mrb[0].mxu0
    %v1811 = vpop.f32.mrb[0].mxu0
    %v1812 = vpop.f32.mrb[0].mxu0
    %1813 = vdwg.mxu0
    %v1814 = vmax.f32 %v1809, 0.0
    %v1815 = vpack.c.bf16 %v1814, %v1814
    %s1816 = scalar_lea.vmem %s8, 32
    %v1817 = vld [vmem:[%s1816] sm:$0xf]
    %v1818 = vld [vmem:[%s1816 + $0x4] sm:$0xf]
    %v1819 = vld [vmem:[%s1816 + $0x8] sm:$0xf]
    %v1820 = vld [vmem:[%s1816 + $0xc] sm:$0xf]
    %s1821 = scalar_lea.vmem %s9, 2
    %v1822 = vld [vmem:[%s1821] sm:$0x1]
    %v1824 = vlaneseq
    %v1825 = vshrl.u32 %v1824, 7
    %v1826 = vsub.s32 0, %v1825
    %v1827 = vrot.slane %v1822, %v1826
    %v1833 = vunpack.c.l.b16 %v1817
    %v1834 = vunpack.c.l.b16 %v1818
    %v1835 = vunpack.c.l.b16 %v1819
    %v1836 = vunpack.c.l.b16 %v1820
    %v1837 = vpack.c.b16 %v1834, %v1833
    %v1838 = vpack.c.b16 %v1836, %v1835
    %v1842 = vsel %vm91, %v1815, 0
    %1844 = vmatprep.subr.bf16.mxu0 0
    %1845 = vmatpush1.bf16.msra.mxu0 %v1837
    %1846 = vmatprep.subr.bf16.mxu0 0
    %1847 = vmatpush1.bf16.msra.mxu0 %v1838
    %1848 = vmatprep.subr.bf16.mxu0 0
    %1849 = vmatpush1.bf16.msra.mxu0 0
    %1850 = vmatprep.subr.bf16.mxu0 0
    %1851 = vmatpush1.bf16.msra.mxu0 0
    %1852 = vmatprep.subr.bf16.mxu0 0
    %1853 = vmatpush1.bf16.msra.mxu0 0
    %1854 = vmatprep.subr.bf16.mxu0 0
    %1855 = vmatpush1.bf16.msra.mxu0 0
    %1856 = vmatprep.subr.bf16.mxu0 0
    %1857 = vmatpush1.bf16.msra.mxu0 0
    %1858 = vmatprep.subr.bf16.mxu0 0
    %1859 = vmatpush1.bf16.msra.mxu0 0
    %1860 = vmatprep.subr.bf16.mxu0 0
    %1861 = vmatpush1.bf16.msra.mxu0 0
    %1862 = vmatprep.subr.bf16.mxu0 0
    %1863 = vmatpush1.bf16.msra.mxu0 0
    %1864 = vmatprep.subr.bf16.mxu0 0
    %1865 = vmatpush1.bf16.msra.mxu0 0
    %1866 = vmatprep.subr.bf16.mxu0 0
    %1867 = vmatpush1.bf16.msra.mxu0 0
    %1868 = vmatprep.subr.bf16.mxu0 0
    %1869 = vmatpush1.bf16.msra.mxu0 0
    %1870 = vmatprep.subr.bf16.mxu0 0
    %1871 = vmatpush1.bf16.msra.mxu0 0
    %1872 = vmatprep.subr.bf16.mxu0 0
    %1873 = vmatpush1.bf16.msra.mxu0 0
    %1874 = vmatprep.subr.bf16.mxu0 0
    %1875 = vmatpush1.bf16.msra.mxu0 0
    %1876 = vmatprep.mubr.bf16.mxu0 0
    %1877 = vmatmul.mubr.bf16.gmra.mrb[0].mxu0 %v1842
    %v1878 = vpop.f32.mrb[0].mxu0
    %v1879 = vadd.f32 %v1827, %v1878
    %v1880 = vpop.f32.mrb[0].mxu0
    %v1881 = vpop.f32.mrb[0].mxu0
    %v1882 = vpop.f32.mrb[0].mxu0
    %1883 = vdwg.mxu0
    %v1884 = vsel %vm641, %v1879, -inf
    %1885 = vmax.xlane.f32.xlu0 %v1884
    %v1886 = vpop.xlane.xlu0 %1885
    %v1887 = vsub.f32 %v1879, %v1886
    %v1888 = vmul.f32 %v1887, 1.442695
    %v1889 = vpow.pop %v1888
    %v1890 = vsel %vm641, %v1889, 0.0
    %1891 = vadd.xlane.f32.xlu0 %v1890
    %v1892 = vpop.xlane.xlu0 %1891
    %v1893 = vrcp.pop %v1892
    %v1894 = vmul.f32 %v1889, %v1893
    %v1895 = vadd.f32 %v1894, 1e-10
    %s1896 = scalar_lea.vmem %s10, 16
    %1897 = vst.msk [vmem:[%s1896] sm:$0xff] %vm641, %v1895
    %s1898 = scalar_lea.vmem %s1, 16
    %v1899 = vld [vmem:[%s1898] sm:$0xff]
    %v1900 = vsel %vm641, %v1895, 0.0
    %1901 = vadd.xlane.f32.xlu0 %v1900
    %v1902 = vpop.xlane.xlu0 %1901
    %v1903 = vmul.f32 %v1899, %v1902
    %vm1904 = vcmp.ge.f32.partialorder %v1903, %v1895
    %v1905 = vsel %vm1904, 1, 0
    %vm1906 = vcmp.eq.s32.totalorder %v1905, 0
    %1908 = vrot.lane.b32.xlu0 %v1895, 127
    %v1909 = vpop.permute.xlu0 %1908
    %v1911 = vsel %vm1906, %v1895, %v1909
    %s1912 = scalar_lea.vmem %s11, 16
    %1913 = vst.msk [vmem:[%s1912] sm:$0xff] %vm668, %v1905
    %v1914 = vadd.f32 %v1911, 1e-10
    %v1915 = vlog2.pop %v1914
    %v1916 = vmul.f32 %v1915, 0.6931472
    %v1917 = vadd.f32 %v1295, %v1916
    %1918 = vset.pattern.permute.xlu0 0
    %1919 = vperm.xlu0 %1918, %v1905
    %v1920 = vpop.permute.xlu0 %1919
    %vm1921 = vcmp.eq.s32.totalorder %v68, %v1920
    %v1922 = vsel %vm1921, 1, 0
    %v1923 = vcvt.s32.f32 %v1922
    %v1924 = vpack.c.bf16 %v1923, %v1923
    %s1925 = scalar_lea.vmem [#allocation2], 96
    %v1926 = vld [vmem:[%s1925] sm:$0xf]
    %v1927 = vld [vmem:[%s1925 + $0x4] sm:$0xf]
    %v1928 = vld [vmem:[%s1925 + $0x8] sm:$0xf]
    %v1929 = vld [vmem:[%s1925 + $0xc] sm:$0xf]
    %s1930 = scalar_lea.vmem [#allocation4], 96
    %v1931 = vld [vmem:[%s1930] sm:$0xf]
    %v1932 = vld [vmem:[%s1930 + $0x4] sm:$0xf]
    %v1933 = vld [vmem:[%s1930 + $0x8] sm:$0xf]
    %v1934 = vld [vmem:[%s1930 + $0xc] sm:$0xf]
    %v1939 = vunpack.c.l.b16 %v1931
    %v1940 = vunpack.c.l.b16 %v1932
    %v1941 = vunpack.c.l.b16 %v1933
    %v1942 = vunpack.c.l.b16 %v1934
    %v1943 = vpack.c.b16 %v1940, %v1939
    %v1944 = vpack.c.b16 %v1942, %v1941
    %1947 = vmatprep.subr.bf16.mxu0 0
    %1948 = vmatpush1.bf16.msra.mxu0 %v1943
    %1949 = vmatprep.subr.bf16.mxu0 0
    %1950 = vmatpush1.bf16.msra.mxu0 %v1944
    %1951 = vmatprep.subr.bf16.mxu0 0
    %1952 = vmatpush1.bf16.msra.mxu0 0
    %1953 = vmatprep.subr.bf16.mxu0 0
    %1954 = vmatpush1.bf16.msra.mxu0 0
    %1955 = vmatprep.subr.bf16.mxu0 0
    %1956 = vmatpush1.bf16.msra.mxu0 0
    %1957 = vmatprep.subr.bf16.mxu0 0
    %1958 = vmatpush1.bf16.msra.mxu0 0
    %1959 = vmatprep.subr.bf16.mxu0 0
    %1960 = vmatpush1.bf16.msra.mxu0 0
    %1961 = vmatprep.subr.bf16.mxu0 0
    %1962 = vmatpush1.bf16.msra.mxu0 0
    %1963 = vmatprep.subr.bf16.mxu0 0
    %1964 = vmatpush1.bf16.msra.mxu0 0
    %1965 = vmatprep.subr.bf16.mxu0 0
    %1966 = vmatpush1.bf16.msra.mxu0 0
    %1967 = vmatprep.subr.bf16.mxu0 0
    %1968 = vmatpush1.bf16.msra.mxu0 0
    %1969 = vmatprep.subr.bf16.mxu0 0
    %1970 = vmatpush1.bf16.msra.mxu0 0
    %1971 = vmatprep.subr.bf16.mxu0 0
    %1972 = vmatpush1.bf16.msra.mxu0 0
    %1973 = vmatprep.subr.bf16.mxu0 0
    %1974 = vmatpush1.bf16.msra.mxu0 0
    %1975 = vmatprep.subr.bf16.mxu0 0
    %1976 = vmatpush1.bf16.msra.mxu0 0
    %1977 = vmatprep.subr.bf16.mxu0 0
    %1978 = vmatpush1.bf16.msra.mxu0 0
    %1979 = vmatprep.mubr.bf16.mxu0 0
    %1980 = vmatmul.mubr.bf16.gmra.mrb[0].mxu0 %v1559
    %v1981 = vpop.f32.mrb[0].mxu0
    %v1982 = vadd.f32 0.0, %v1981
    %v1983 = vpop.f32.mrb[0].mxu0
    %v1984 = vpop.f32.mrb[0].mxu0
    %v1985 = vpop.f32.mrb[0].mxu0
    %1986 = vdwg.mxu0
    %s1987 = scalar_lea.vmem %s4, 6
    %v1988 = vld [vmem:[%s1987] sm:$0x1]
    %v1990 = vlaneseq
    %v1991 = vshrl.u32 %v1990, 7
    %v1992 = vsub.s32 0, %v1991
    %v1993 = vrot.slane %v1988, %v1992
    %v1999 = vunpack.c.l.b16 %v1926
    %v2000 = vunpack.c.l.b16 %v1927
    %v2001 = vunpack.c.l.b16 %v1928
    %v2002 = vunpack.c.l.b16 %v1929
    %v2003 = vpack.c.b16 %v2000, %v1999
    %v2004 = vpack.c.b16 %v2002, %v2001
    %v2008 = vsel %vm91, %v1924, 0
    %2010 = vmatprep.subr.bf16.mxu0 0
    %2011 = vmatpush1.bf16.msra.mxu0 %v2003
    %2012 = vmatprep.subr.bf16.mxu0 0
    %2013 = vmatpush1.bf16.msra.mxu0 %v2004
    %2014 = vmatprep.subr.bf16.mxu0 0
    %2015 = vmatpush1.bf16.msra.mxu0 0
    %2016 = vmatprep.subr.bf16.mxu0 0
    %2017 = vmatpush1.bf16.msra.mxu0 0
    %2018 = vmatprep.subr.bf16.mxu0 0
    %2019 = vmatpush1.bf16.msra.mxu0 0
    %2020 = vmatprep.subr.bf16.mxu0 0
    %2021 = vmatpush1.bf16.msra.mxu0 0
    %2022 = vmatprep.subr.bf16.mxu0 0
    %2023 = vmatpush1.bf16.msra.mxu0 0
    %2024 = vmatprep.subr.bf16.mxu0 0
    %2025 = vmatpush1.bf16.msra.mxu0 0
    %2026 = vmatprep.subr.bf16.mxu0 0
    %2027 = vmatpush1.bf16.msra.mxu0 0
    %2028 = vmatprep.subr.bf16.mxu0 0
    %2029 = vmatpush1.bf16.msra.mxu0 0
    %2030 = vmatprep.subr.bf16.mxu0 0
    %2031 = vmatpush1.bf16.msra.mxu0 0
    %2032 = vmatprep.subr.bf16.mxu0 0
    %2033 = vmatpush1.bf16.msra.mxu0 0
    %2034 = vmatprep.subr.bf16.mxu0 0
    %2035 = vmatpush1.bf16.msra.mxu0 0
    %2036 = vmatprep.subr.bf16.mxu0 0
    %2037 = vmatpush1.bf16.msra.mxu0 0
    %2038 = vmatprep.subr.bf16.mxu0 0
    %2039 = vmatpush1.bf16.msra.mxu0 0
    %2040 = vmatprep.subr.bf16.mxu0 0
    %2041 = vmatpush1.bf16.msra.mxu0 0
    %2042 = vmatprep.mubr.bf16.mxu0 0
    %2043 = vmatmul.mubr.bf16.gmra.mrb[0].mxu0 %v2008
    %v2044 = vpop.f32.mrb[0].mxu0
    %v2045 = vadd.f32 %v1993, %v2044
    %v2046 = vpop.f32.mrb[0].mxu0
    %v2047 = vpop.f32.mrb[0].mxu0
    %v2048 = vpop.f32.mrb[0].mxu0
    %2049 = vdwg.mxu0
    %v2050 = vadd.f32 %v2045, %v1982
    %v2051 = vxor.u32 %v2050, 2147483648
    %v2052 = vmul.f32 %v2051, 1.442695
    %v2053 = vpow.pop %v2052
    %v2054 = vadd.f32 %v2053, 1.0
    %v2055 = vrcp.pop %v2054
    %v2056 = vmul.f32 1.0, %v2055
    %s2057 = scalar_lea.vmem %s5, 6
    %v2058 = vld [vmem:[%s2057] sm:$0x1]
    %v2060 = vlaneseq
    %v2061 = vshrl.u32 %v2060, 7
    %v2062 = vsub.s32 0, %v2061
    %v2063 = vrot.slane %v2058, %v2062
    %2064 = vrot.lane.b32.xlu0 %v2063, 64
    %v2065 = vpop.permute.xlu0 %2064
    %v2067 = vadd.f32 %v1982, %v2065
    %2069 = vrot.lane.b32.xlu0 %v2067, 64
    %v2070 = vpop.permute.xlu0 %2069
    %v2072 = vmul.f32 %v2056, %v2070
    %2074 = vrot.lane.b32.xlu0 %v2072, 64
    %v2075 = vpop.permute.xlu0 %2074
    %v2077 = vadd.f32 %v2045, %v2075
    %v2078 = vtanh.pop %v2077
    %v2079 = vsub.f32 1.0, %v2056
    %2081 = vrot.lane.b32.xlu0 %v2078, 96
    %v2082 = vpop.permute.xlu0 %2081
    %v2084 = vmul.f32 %v2079, %v2082
    %v2085 = vmul.f32 %v2056, %v1464
    %v2086 = vadd.f32 %v2084, %v2085
    %v2087 = vpack.c.bf16 %v2086, %v2086
    %s2088 = scalar_lea.vmem [#allocation2], 112
    %v2089 = vld [vmem:[%s2088] sm:$0xf]
    %v2090 = vld [vmem:[%s2088 + $0x4] sm:$0xf]
    %v2091 = vld [vmem:[%s2088 + $0x8] sm:$0xf]
    %v2092 = vld [vmem:[%s2088 + $0xc] sm:$0xf]
    %v2093 = vpack.c.bf16 %v1637, %v1637
    %s2094 = scalar_lea.vmem [#allocation4], 112
    %v2095 = vld [vmem:[%s2094] sm:$0xf]
    %v2096 = vld [vmem:[%s2094 + $0x4] sm:$0xf]
    %v2097 = vld [vmem:[%s2094 + $0x8] sm:$0xf]
    %v2098 = vld [vmem:[%s2094 + $0xc] sm:$0xf]
    %2100 = vrot.lane.b32.xlu0 %v2093, 96
    %v2101 = vpop.permute.xlu0 %2100
    %v2106 = vunpack.c.l.b16 %v2095
    %v2107 = vunpack.c.l.b16 %v2096
    %v2108 = vunpack.c.l.b16 %v2097
    %v2109 = vunpack.c.l.b16 %v2098
    %v2110 = vpack.c.b16 %v2107, %v2106
    %v2111 = vpack.c.b16 %v2109, %v2108
    %v2115 = vsel %vm91, %v2101, 0
    %2117 = vmatprep.subr.bf16.mxu0 0
    %2118 = vmatpush1.bf16.msra.mxu0 %v2110
    %2119 = vmatprep.subr.bf16.mxu0 0
    %2120 = vmatpush1.bf16.msra.mxu0 %v2111
    %2121 = vmatprep.subr.bf16.mxu0 0
    %2122 = vmatpush1.bf16.msra.mxu0 0
    %2123 = vmatprep.subr.bf16.mxu0 0
    %2124 = vmatpush1.bf16.msra.mxu0 0
    %2125 = vmatprep.subr.bf16.mxu0 0
    %2126 = vmatpush1.bf16.msra.mxu0 0
    %2127 = vmatprep.subr.bf16.mxu0 0
    %2128 = vmatpush1.bf16.msra.mxu0 0
    %2129 = vmatprep.subr.bf16.mxu0 0
    %2130 = vmatpush1.bf16.msra.mxu0 0
    %2131 = vmatprep.subr.bf16.mxu0 0
    %2132 = vmatpush1.bf16.msra.mxu0 0
    %2133 = vmatprep.subr.bf16.mxu0 0
    %2134 = vmatpush1.bf16.msra.mxu0 0
    %2135 = vmatprep.subr.bf16.mxu0 0
    %2136 = vmatpush1.bf16.msra.mxu0 0
    %2137 = vmatprep.subr.bf16.mxu0 0
    %2138 = vmatpush1.bf16.msra.mxu0 0
    %2139 = vmatprep.subr.bf16.mxu0 0
    %2140 = vmatpush1.bf16.msra.mxu0 0
    %2141 = vmatprep.subr.bf16.mxu0 0
    %2142 = vmatpush1.bf16.msra.mxu0 0
    %2143 = vmatprep.subr.bf16.mxu0 0
    %2144 = vmatpush1.bf16.msra.mxu0 0
    %2145 = vmatprep.subr.bf16.mxu0 0
    %2146 = vmatpush1.bf16.msra.mxu0 0
    %2147 = vmatprep.subr.bf16.mxu0 0
    %2148 = vmatpush1.bf16.msra.mxu0 0
    %2149 = vmatprep.mubr.bf16.mxu0 0
    %2150 = vmatmul.mubr.bf16.gmra.mrb[0].mxu0 %v2115
    %v2151 = vpop.f32.mrb[0].mxu0
    %v2152 = vadd.f32 0.0, %v2151
    %v2153 = vpop.f32.mrb[0].mxu0
    %v2154 = vpop.f32.mrb[0].mxu0
    %v2155 = vpop.f32.mrb[0].mxu0
    %2156 = vdwg.mxu0
    %s2157 = scalar_lea.vmem %s4, 7
    %v2158 = vld [vmem:[%s2157] sm:$0x1]
    %v2160 = vlaneseq
    %v2161 = vshrl.u32 %v2160, 7
    %v2162 = vsub.s32 0, %v2161
    %v2163 = vrot.slane %v2158, %v2162
    %2166 = vrot.lane.b32.xlu0 %v2087, 96
    %v2167 = vpop.permute.xlu0 %2166
    %v2172 = vunpack.c.l.b16 %v2089
    %v2173 = vunpack.c.l.b16 %v2090
    %v2174 = vunpack.c.l.b16 %v2091
    %v2175 = vunpack.c.l.b16 %v2092
    %v2176 = vpack.c.b16 %v2173, %v2172
    %v2177 = vpack.c.b16 %v2175, %v2174
    %v2181 = vsel %vm91, %v2167, 0
    %2183 = vmatprep.subr.bf16.mxu0 0
    %2184 = vmatpush1.bf16.msra.mxu0 %v2176
    %2185 = vmatprep.subr.bf16.mxu0 0
    %2186 = vmatpush1.bf16.msra.mxu0 %v2177
    %2187 = vmatprep.subr.bf16.mxu0 0
    %2188 = vmatpush1.bf16.msra.mxu0 0
    %2189 = vmatprep.subr.bf16.mxu0 0
    %2190 = vmatpush1.bf16.msra.mxu0 0
    %2191 = vmatprep.subr.bf16.mxu0 0
    %2192 = vmatpush1.bf16.msra.mxu0 0
    %2193 = vmatprep.subr.bf16.mxu0 0
    %2194 = vmatpush1.bf16.msra.mxu0 0
    %2195 = vmatprep.subr.bf16.mxu0 0
    %2196 = vmatpush1.bf16.msra.mxu0 0
    %2197 = vmatprep.subr.bf16.mxu0 0
    %2198 = vmatpush1.bf16.msra.mxu0 0
    %2199 = vmatprep.subr.bf16.mxu0 0
    %2200 = vmatpush1.bf16.msra.mxu0 0
    %2201 = vmatprep.subr.bf16.mxu0 0
    %2202 = vmatpush1.bf16.msra.mxu0 0
    %2203 = vmatprep.subr.bf16.mxu0 0
    %2204 = vmatpush1.bf16.msra.mxu0 0
    %2205 = vmatprep.subr.bf16.mxu0 0
    %2206 = vmatpush1.bf16.msra.mxu0 0
    %2207 = vmatprep.subr.bf16.mxu0 0
    %2208 = vmatpush1.bf16.msra.mxu0 0
    %2209 = vmatprep.subr.bf16.mxu0 0
    %2210 = vmatpush1.bf16.msra.mxu0 0
    %2211 = vmatprep.subr.bf16.mxu0 0
    %2212 = vmatpush1.bf16.msra.mxu0 0
    %2213 = vmatprep.subr.bf16.mxu0 0
    %2214 = vmatpush1.bf16.msra.mxu0 0
    %2215 = vmatprep.mubr.bf16.mxu0 0
    %2216 = vmatmul.mubr.bf16.gmra.mrb[0].mxu0 %v2181
    %v2217 = vpop.f32.mrb[0].mxu0
    %v2218 = vadd.f32 %v2163, %v2217
    %v2219 = vpop.f32.mrb[0].mxu0
    %v2220 = vpop.f32.mrb[0].mxu0
    %v2221 = vpop.f32.mrb[0].mxu0
    %2222 = vdwg.mxu0
    %v2223 = vadd.f32 %v2218, %v2152
    %v2224 = vxor.u32 %v2223, 2147483648
    %v2225 = vmul.f32 %v2224, 1.442695
    %v2226 = vpow.pop %v2225
    %v2227 = vadd.f32 %v2226, 1.0
    %v2228 = vrcp.pop %v2227
    %v2229 = vmul.f32 1.0, %v2228
    %s2230 = scalar_lea.vmem %s5, 7
    %v2231 = vld [vmem:[%s2230] sm:$0x1]
    %v2233 = vlaneseq
    %v2234 = vshrl.u32 %v2233, 7
    %v2235 = vsub.s32 0, %v2234
    %v2236 = vrot.slane %v2231, %v2235
    %2237 = vrot.lane.b32.xlu0 %v2236, 64
    %v2238 = vpop.permute.xlu0 %2237
    %v2240 = vadd.f32 %v2152, %v2238
    %2242 = vrot.lane.b32.xlu0 %v2240, 64
    %v2243 = vpop.permute.xlu0 %2242
    %v2245 = vmul.f32 %v2229, %v2243
    %2247 = vrot.lane.b32.xlu0 %v2245, 64
    %v2248 = vpop.permute.xlu0 %2247
    %v2250 = vadd.f32 %v2218, %v2248
    %v2251 = vtanh.pop %v2250
    %v2252 = vsub.f32 1.0, %v2229
    %2254 = vrot.lane.b32.xlu0 %v2251, 96
    %v2255 = vpop.permute.xlu0 %2254
    %v2257 = vmul.f32 %v2252, %v2255
    %v2258 = vmul.f32 %v2229, %v1637
    %v2259 = vadd.f32 %v2257, %v2258
    %v2260 = vand.u32 2147483647, %v2259
    %vm2261 = vcmp.le.f32.partialorder %v2260, 0.7853982
    %vm2262 = vcmp.lt.s32.totalorder %v2259, 0
    %v2263 = vand.u32 %v2259, 2139095040
    %v2264 = vshrl.u32 %v2263, 23
    %v2265 = vsub.s32 %v2264, 127
    %v2266 = vand.u32 2147483647, %v2259
    %v2267 = vand.u32 %v2266, 8388607
    %v2268 = vor.u32 %v2267, 8388608
    %v2269 = vsub.s32 0, %v2268
    %v2270 = vadd.s32 %v2265, 1
    %vm2271 = vcmp.gt.s32.totalorder %v2270, 0
    %v2272 = vsel %vm2271, %v2270, 0
    %v2273 = vshrl.u32 %v2272, 5
    %v2274 = vand.u32 %v2272, 31
    %v2275 = vsub.s32 32, %v2274
    %v2276 = vshrl.u32 683565275, %v2275
    %v2277 = vshll.u32 683565275, %v2274
    %v2278 = vshrl.u32 2475754826, %v2275
    %v2279 = vor.u32 %v2277, %v2278
    %v2280 = vshll.u32 2475754826, %v2274
    %v2281 = vshrl.u32 2131351028, %v2275
    %v2282 = vor.u32 %v2280, %v2281
    %v2283 = vshll.u32 2131351028, %v2274
    %v2284 = vshrl.u32 2102212464, %v2275
    %v2285 = vor.u32 %v2283, %v2284
    %v2286 = vshll.u32 2102212464, %v2274
    %v2287 = vshrl.u32 920167782, %v2275
    %v2288 = vor.u32 %v2286, %v2287
    %v2289 = vshll.u32 920167782, %v2274
    %v2290 = vshrl.u32 1326507024, %v2275
    %v2291 = vor.u32 %v2289, %v2290
    %vm2292 = vcmp.lt.s32.totalorder %v2273, 1
    %vm2293 = vcmp.lt.s32.totalorder %v2273, 2
    %vm2294 = vcmp.lt.s32.totalorder %v2273, 3
    %vm2295 = vcmp.lt.s32.totalorder %v2273, 4
    %v2296 = vsel %vm2292, %v2276, %v2279
    %v2297 = vsel %vm2295, %v2285, 2102212464
    %v2298 = vsel %vm2294, %v2282, %v2297
    %v2299 = vsel %vm2293, %v2296, %v2298
    %v2300 = vsel %vm2292, %v2279, %v2282
    %v2301 = vsel %vm2295, %v2288, 920167782
    %v2302 = vsel %vm2294, %v2285, %v2301
    %v2303 = vsel %vm2293, %v2300, %v2302
    %v2304 = vsel %vm2292, %v2282, %v2285
    %v2305 = vsel %vm2295, %v2291, 1326507024
    %v2306 = vsel %vm2294, %v2288, %v2305
    %v2307 = vsel %vm2293, %v2304, %v2306
    %v2308 = vshll.u32 %v2268, 8
    %v2309 = vmul.u32.u64.compose %v2308, %v2307
    %v2310 = vextract.low.u32 %v2309
    %v2311 = vextract.high.u32 %v2309
    %v2312 = vmul.u32.u64.compose %v2308, %v2303
    %v2313 = vextract.low.u32 %v2312
    %v2314 = vextract.high.u32 %v2312
    %v2315 = vmul.u32 %v2308, %v2299
    %v2316 = vadd.s32 %v2311, %v2313
    %vm2317 = vc.u32 %v2311, %v2313
    %v2318 = vadd.s32 %v2314, 1
    %v2319 = vsel %vm2317, %v2318, %v2314
    %v2320 = vadd.s32 %v2315, %v2319
    %v2321 = vadd.s32 %v2320, 536870912
    %v2322 = vshrl.u32 %v2321, 30
    %v2323 = vshll.u32 %v2322, 30
    %v2324 = vsub.s32 %v2320, %v2323
    %vm2325 = vcmp.lt.s32.totalorder %v2324, 0
    %v2326 = vsub.s32 0, %v2324
    %v2327 = vsel %vm2325, %v2326, %v2324
    %v2328 = vclz %v2327
    %v2329 = vsub.s32 %v2328, 2
    %vm2330 = vcmp.gt.s32.totalorder 0, %v2329
    %v2331 = vsel %vm2330, 0, %v2329
    %v2332 = vsub.s32 32, %v2331
    %v2333 = vshll.u32 %v2324, %v2331
    %v2334 = vshrl.u32 %v2316, %v2332
    %v2335 = vor.u32 %v2333, %v2334
    %v2336 = vsub.s32 4294967266, %v2331
    %v2337 = vadd.s32 %v2336, 127
    %v2338 = vshll.u32 %v2337, 23
    %v2339 = vor.u32 4788187, %v2338
    %v2340 = vand.u32 2147483647, %v2339
    %v2342 = vcvt.s32.f32 %v2335
    %v2343 = vmul.f32 %v2342, %v2340
    %v2344 = vxor.u32 %v2343, 2147483648
    %v2345 = vsel %vm2262, %v2344, %v2343
    %v2346 = vsub.s32 4, %v2322
    %v2347 = vsel %vm2262, %v2346, %v2322
    %v2348 = vsel %vm2261, %v2259, %v2345
    %v2349 = vsel %vm2261, 0, %v2347
    %v2350 = vcosq.f32.pop %v2348
    %v2351 = vsinq.f32.pop %v2348
    %vm2352 = vweird.f32 %v2259
    %v2353 = vand.u32 %v2349, 3
    %vm2354 = vcmp.lt.s32.totalorder %v2353, 2
    %vm2355 = vcmp.eq.s32.totalorder %v2353, 0
    %v2356 = vxor.u32 %v2351, 2147483648
    %v2357 = vsel %vm2355, %v2350, %v2356
    %vm2358 = vcmp.eq.s32.totalorder %v2353, 2
    %v2359 = vxor.u32 %v2350, 2147483648
    %v2360 = vsel %vm2358, %v2359, %v2351
    %v2361 = vsel %vm2354, %v2357, %v2360
    %v2362 = vsel %vm2352, nan, %v2361
    %v2363 = vadd.f32 %v2362, 1e-10
    %v2364 = vpack.c.bf16 %v2363, %v2363
    %s2365 = scalar_lea.vmem %s6, 48
    %v2366 = vld [vmem:[%s2365] sm:$0xf]
    %v2367 = vld [vmem:[%s2365 + $0x4] sm:$0xf]
    %v2368 = vld [vmem:[%s2365 + $0x8] sm:$0xf]
    %v2369 = vld [vmem:[%s2365 + $0xc] sm:$0xf]
    %s2370 = scalar_lea.vmem %s7, 3
    %v2371 = vld [vmem:[%s2370] sm:$0x1]
    %v2373 = vlaneseq
    %v2374 = vshrl.u32 %v2373, 7
    %v2375 = vsub.s32 0, %v2374
    %v2376 = vrot.slane %v2371, %v2375
    %2379 = vrot.lane.b32.xlu0 %v2364, 96
    %v2380 = vpop.permute.xlu0 %2379
    %v2385 = vunpack.c.l.b16 %v2366
    %v2386 = vunpack.c.l.b16 %v2367
    %v2387 = vunpack.c.l.b16 %v2368
    %v2388 = vunpack.c.l.b16 %v2369
    %v2389 = vpack.c.b16 %v2386, %v2385
    %v2390 = vpack.c.b16 %v2388, %v2387
    %v2394 = vsel %vm91, %v2380, 0
    %2396 = vmatprep.subr.bf16.mxu0 0
    %2397 = vmatpush1.bf16.msra.mxu0 %v2389
    %2398 = vmatprep.subr.bf16.mxu0 0
    %2399 = vmatpush1.bf16.msra.mxu0 %v2390
    %2400 = vmatprep.subr.bf16.mxu0 0
    %2401 = vmatpush1.bf16.msra.mxu0 0
    %2402 = vmatprep.subr.bf16.mxu0 0
    %2403 = vmatpush1.bf16.msra.mxu0 0
    %2404 = vmatprep.subr.bf16.mxu0 0
    %2405 = vmatpush1.bf16.msra.mxu0 0
    %2406 = vmatprep.subr.bf16.mxu0 0
    %2407 = vmatpush1.bf16.msra.mxu0 0
    %2408 = vmatprep.subr.bf16.mxu0 0
    %2409 = vmatpush1.bf16.msra.mxu0 0
    %2410 = vmatprep.subr.bf16.mxu0 0
    %2411 = vmatpush1.bf16.msra.mxu0 0
    %2412 = vmatprep.subr.bf16.mxu0 0
    %2413 = vmatpush1.bf16.msra.mxu0 0
    %2414 = vmatprep.subr.bf16.mxu0 0
    %2415 = vmatpush1.bf16.msra.mxu0 0
    %2416 = vmatprep.subr.bf16.mxu0 0
    %2417 = vmatpush1.bf16.msra.mxu0 0
    %2418 = vmatprep.subr.bf16.mxu0 0
    %2419 = vmatpush1.bf16.msra.mxu0 0
    %2420 = vmatprep.subr.bf16.mxu0 0
    %2421 = vmatpush1.bf16.msra.mxu0 0
    %2422 = vmatprep.subr.bf16.mxu0 0
    %2423 = vmatpush1.bf16.msra.mxu0 0
    %2424 = vmatprep.subr.bf16.mxu0 0
    %2425 = vmatpush1.bf16.msra.mxu0 0
    %2426 = vmatprep.subr.bf16.mxu0 0
    %2427 = vmatpush1.bf16.msra.mxu0 0
    %2428 = vmatprep.mubr.bf16.mxu0 0
    %2429 = vmatmul.mubr.bf16.gmra.mrb[0].mxu0 %v2394
    %v2430 = vpop.f32.mrb[0].mxu0
    %v2431 = vadd.f32 %v2376, %v2430
    %v2432 = vpop.f32.mrb[0].mxu0
    %v2433 = vpop.f32.mrb[0].mxu0
    %v2434 = vpop.f32.mrb[0].mxu0
    %2435 = vdwg.mxu0
    %v2436 = vmax.f32 %v2431, 0.0
    %v2437 = vpack.c.bf16 %v2436, %v2436
    %s2438 = scalar_lea.vmem %s8, 48
    %v2439 = vld [vmem:[%s2438] sm:$0xf]
    %v2440 = vld [vmem:[%s2438 + $0x4] sm:$0xf]
    %v2441 = vld [vmem:[%s2438 + $0x8] sm:$0xf]
    %v2442 = vld [vmem:[%s2438 + $0xc] sm:$0xf]
    %s2443 = scalar_lea.vmem %s9, 3
    %v2444 = vld [vmem:[%s2443] sm:$0x1]
    %v2446 = vlaneseq
    %v2447 = vshrl.u32 %v2446, 7
    %v2448 = vsub.s32 0, %v2447
    %v2449 = vrot.slane %v2444, %v2448
    %v2455 = vunpack.c.l.b16 %v2439
    %v2456 = vunpack.c.l.b16 %v2440
    %v2457 = vunpack.c.l.b16 %v2441
    %v2458 = vunpack.c.l.b16 %v2442
    %v2459 = vpack.c.b16 %v2456, %v2455
    %v2460 = vpack.c.b16 %v2458, %v2457
    %v2464 = vsel %vm91, %v2437, 0
    %2466 = vmatprep.subr.bf16.mxu0 0
    %2467 = vmatpush1.bf16.msra.mxu0 %v2459
    %2468 = vmatprep.subr.bf16.mxu0 0
    %2469 = vmatpush1.bf16.msra.mxu0 %v2460
    %2470 = vmatprep.subr.bf16.mxu0 0
    %2471 = vmatpush1.bf16.msra.mxu0 0
    %2472 = vmatprep.subr.bf16.mxu0 0
    %2473 = vmatpush1.bf16.msra.mxu0 0
    %2474 = vmatprep.subr.bf16.mxu0 0
    %2475 = vmatpush1.bf16.msra.mxu0 0
    %2476 = vmatprep.subr.bf16.mxu0 0
    %2477 = vmatpush1.bf16.msra.mxu0 0
    %2478 = vmatprep.subr.bf16.mxu0 0
    %2479 = vmatpush1.bf16.msra.mxu0 0
    %2480 = vmatprep.subr.bf16.mxu0 0
    %2481 = vmatpush1.bf16.msra.mxu0 0
    %2482 = vmatprep.subr.bf16.mxu0 0
    %2483 = vmatpush1.bf16.msra.mxu0 0
    %2484 = vmatprep.subr.bf16.mxu0 0
    %2485 = vmatpush1.bf16.msra.mxu0 0
    %2486 = vmatprep.subr.bf16.mxu0 0
    %2487 = vmatpush1.bf16.msra.mxu0 0
    %2488 = vmatprep.subr.bf16.mxu0 0
    %2489 = vmatpush1.bf16.msra.mxu0 0
    %2490 = vmatprep.subr.bf16.mxu0 0
    %2491 = vmatpush1.bf16.msra.mxu0 0
    %2492 = vmatprep.subr.bf16.mxu0 0
    %2493 = vmatpush1.bf16.msra.mxu0 0
    %2494 = vmatprep.subr.bf16.mxu0 0
    %2495 = vmatpush1.bf16.msra.mxu0 0
    %2496 = vmatprep.subr.bf16.mxu0 0
    %2497 = vmatpush1.bf16.msra.mxu0 0
    %2498 = vmatprep.mubr.bf16.mxu0 0
    %2499 = vmatmul.mubr.bf16.gmra.mrb[0].mxu0 %v2464
    %v2500 = vpop.f32.mrb[0].mxu0
    %v2501 = vadd.f32 %v2449, %v2500
    %v2502 = vpop.f32.mrb[0].mxu0
    %v2503 = vpop.f32.mrb[0].mxu0
    %v2504 = vpop.f32.mrb[0].mxu0
    %2505 = vdwg.mxu0
    %v2506 = vsel %vm641, %v2501, -inf
    %2507 = vmax.xlane.f32.xlu0 %v2506
    %v2508 = vpop.xlane.xlu0 %2507
    %v2509 = vsub.f32 %v2501, %v2508
    %v2510 = vmul.f32 %v2509, 1.442695
    %v2511 = vpow.pop %v2510
    %v2512 = vsel %vm641, %v2511, 0.0
    %2513 = vadd.xlane.f32.xlu0 %v2512
    %v2514 = vpop.xlane.xlu0 %2513
    %v2515 = vrcp.pop %v2514
    %v2516 = vmul.f32 %v2511, %v2515
    %v2517 = vadd.f32 %v2516, 1e-10
    %s2518 = scalar_lea.vmem %s10, 24
    %2519 = vst.msk [vmem:[%s2518] sm:$0xff] %vm641, %v2517
    %s2520 = scalar_lea.vmem %s1, 24
    %v2521 = vld [vmem:[%s2520] sm:$0xff]
    %v2522 = vsel %vm641, %v2517, 0.0
    %2523 = vadd.xlane.f32.xlu0 %v2522
    %v2524 = vpop.xlane.xlu0 %2523
    %v2525 = vmul.f32 %v2521, %v2524
    %vm2526 = vcmp.ge.f32.partialorder %v2525, %v2517
    %v2527 = vsel %vm2526, 1, 0
    %vm2528 = vcmp.eq.s32.totalorder %v2527, 0
    %2530 = vrot.lane.b32.xlu0 %v2517, 127
    %v2531 = vpop.permute.xlu0 %2530
    %v2533 = vsel %vm2528, %v2517, %v2531
    %s2534 = scalar_lea.vmem %s11, 24
    %2535 = vst.msk [vmem:[%s2534] sm:$0xff] %vm668, %v2527
    %v2536 = vadd.f32 %v2533, 1e-10
    %v2537 = vlog2.pop %v2536
    %v2538 = vmul.f32 %v2537, 0.6931472
    %v2539 = vadd.f32 %v1917, %v2538
    %2540 = vset.pattern.permute.xlu0 0
    %2541 = vperm.xlu0 %2540, %v2527
    %v2542 = vpop.permute.xlu0 %2541
    %vm2543 = vcmp.eq.s32.totalorder %v68, %v2542
    %v2544 = vsel %vm2543, 1, 0
    %v2545 = vcvt.s32.f32 %v2544
    %v2546 = vpack.c.bf16 %v2545, %v2545
    %s2547 = scalar_lea.vmem [#allocation2], 128
    %v2548 = vld [vmem:[%s2547] sm:$0xf]
    %v2549 = vld [vmem:[%s2547 + $0x4] sm:$0xf]
    %v2550 = vld [vmem:[%s2547 + $0x8] sm:$0xf]
    %v2551 = vld [vmem:[%s2547 + $0xc] sm:$0xf]
    %s2552 = scalar_lea.vmem [#allocation4], 128
    %v2553 = vld [vmem:[%s2552] sm:$0xf]
    %v2554 = vld [vmem:[%s2552 + $0x4] sm:$0xf]
    %v2555 = vld [vmem:[%s2552 + $0x8] sm:$0xf]
    %v2556 = vld [vmem:[%s2552 + $0xc] sm:$0xf]
    %v2561 = vunpack.c.l.b16 %v2553
    %v2562 = vunpack.c.l.b16 %v2554
    %v2563 = vunpack.c.l.b16 %v2555
    %v2564 = vunpack.c.l.b16 %v2556
    %v2565 = vpack.c.b16 %v2562, %v2561
    %v2566 = vpack.c.b16 %v2564, %v2563
    %2569 = vmatprep.subr.bf16.mxu0 0
    %2570 = vmatpush1.bf16.msra.mxu0 %v2565
    %2571 = vmatprep.subr.bf16.mxu0 0
    %2572 = vmatpush1.bf16.msra.mxu0 %v2566
    %2573 = vmatprep.subr.bf16.mxu0 0
    %2574 = vmatpush1.bf16.msra.mxu0 0
    %2575 = vmatprep.subr.bf16.mxu0 0
    %2576 = vmatpush1.bf16.msra.mxu0 0
    %2577 = vmatprep.subr.bf16.mxu0 0
    %2578 = vmatpush1.bf16.msra.mxu0 0
    %2579 = vmatprep.subr.bf16.mxu0 0
    %2580 = vmatpush1.bf16.msra.mxu0 0
    %2581 = vmatprep.subr.bf16.mxu0 0
    %2582 = vmatpush1.bf16.msra.mxu0 0
    %2583 = vmatprep.subr.bf16.mxu0 0
    %2584 = vmatpush1.bf16.msra.mxu0 0
    %2585 = vmatprep.subr.bf16.mxu0 0
    %2586 = vmatpush1.bf16.msra.mxu0 0
    %2587 = vmatprep.subr.bf16.mxu0 0
    %2588 = vmatpush1.bf16.msra.mxu0 0
    %2589 = vmatprep.subr.bf16.mxu0 0
    %2590 = vmatpush1.bf16.msra.mxu0 0
    %2591 = vmatprep.subr.bf16.mxu0 0
    %2592 = vmatpush1.bf16.msra.mxu0 0
    %2593 = vmatprep.subr.bf16.mxu0 0
    %2594 = vmatpush1.bf16.msra.mxu0 0
    %2595 = vmatprep.subr.bf16.mxu0 0
    %2596 = vmatpush1.bf16.msra.mxu0 0
    %2597 = vmatprep.subr.bf16.mxu0 0
    %2598 = vmatpush1.bf16.msra.mxu0 0
    %2599 = vmatprep.subr.bf16.mxu0 0
    %2600 = vmatpush1.bf16.msra.mxu0 0
    %2601 = vmatprep.mubr.bf16.mxu0 0
    %2602 = vmatmul.mubr.bf16.gmra.mrb[0].mxu0 %v2181
    %v2603 = vpop.f32.mrb[0].mxu0
    %v2604 = vadd.f32 0.0, %v2603
    %v2605 = vpop.f32.mrb[0].mxu0
    %v2606 = vpop.f32.mrb[0].mxu0
    %v2607 = vpop.f32.mrb[0].mxu0
    %2608 = vdwg.mxu0
    %s2609 = scalar_lea.vmem %s4, 8
    %v2610 = vld [vmem:[%s2609] sm:$0x1]
    %v2612 = vlaneseq
    %v2613 = vshrl.u32 %v2612, 7
    %v2614 = vsub.s32 0, %v2613
    %v2615 = vrot.slane %v2610, %v2614
    %v2621 = vunpack.c.l.b16 %v2548
    %v2622 = vunpack.c.l.b16 %v2549
    %v2623 = vunpack.c.l.b16 %v2550
    %v2624 = vunpack.c.l.b16 %v2551
    %v2625 = vpack.c.b16 %v2622, %v2621
    %v2626 = vpack.c.b16 %v2624, %v2623
    %v2630 = vsel %vm91, %v2546, 0
    %2632 = vmatprep.subr.bf16.mxu0 0
    %2633 = vmatpush1.bf16.msra.mxu0 %v2625
    %2634 = vmatprep.subr.bf16.mxu0 0
    %2635 = vmatpush1.bf16.msra.mxu0 %v2626
    %2636 = vmatprep.subr.bf16.mxu0 0
    %2637 = vmatpush1.bf16.msra.mxu0 0
    %2638 = vmatprep.subr.bf16.mxu0 0
    %2639 = vmatpush1.bf16.msra.mxu0 0
    %2640 = vmatprep.subr.bf16.mxu0 0
    %2641 = vmatpush1.bf16.msra.mxu0 0
    %2642 = vmatprep.subr.bf16.mxu0 0
    %2643 = vmatpush1.bf16.msra.mxu0 0
    %2644 = vmatprep.subr.bf16.mxu0 0
    %2645 = vmatpush1.bf16.msra.mxu0 0
    %2646 = vmatprep.subr.bf16.mxu0 0
    %2647 = vmatpush1.bf16.msra.mxu0 0
    %2648 = vmatprep.subr.bf16.mxu0 0
    %2649 = vmatpush1.bf16.msra.mxu0 0
    %2650 = vmatprep.subr.bf16.mxu0 0
    %2651 = vmatpush1.bf16.msra.mxu0 0
    %2652 = vmatprep.subr.bf16.mxu0 0
    %2653 = vmatpush1.bf16.msra.mxu0 0
    %2654 = vmatprep.subr.bf16.mxu0 0
    %2655 = vmatpush1.bf16.msra.mxu0 0
    %2656 = vmatprep.subr.bf16.mxu0 0
    %2657 = vmatpush1.bf16.msra.mxu0 0
    %2658 = vmatprep.subr.bf16.mxu0 0
    %2659 = vmatpush1.bf16.msra.mxu0 0
    %2660 = vmatprep.subr.bf16.mxu0 0
    %2661 = vmatpush1.bf16.msra.mxu0 0
    %2662 = vmatprep.subr.bf16.mxu0 0
    %2663 = vmatpush1.bf16.msra.mxu0 0
    %2664 = vmatprep.mubr.bf16.mxu0 0
    %2665 = vmatmul.mubr.bf16.gmra.mrb[0].mxu0 %v2630
    %v2666 = vpop.f32.mrb[0].mxu0
    %v2667 = vadd.f32 %v2615, %v2666
    %v2668 = vpop.f32.mrb[0].mxu0
    %v2669 = vpop.f32.mrb[0].mxu0
    %v2670 = vpop.f32.mrb[0].mxu0
    %2671 = vdwg.mxu0
    %v2672 = vadd.f32 %v2667, %v2604
    %v2673 = vxor.u32 %v2672, 2147483648
    %v2674 = vmul.f32 %v2673, 1.442695
    %v2675 = vpow.pop %v2674
    %v2676 = vadd.f32 %v2675, 1.0
    %v2677 = vrcp.pop %v2676
    %v2678 = vmul.f32 1.0, %v2677
    %s2679 = scalar_lea.vmem %s5, 8
    %v2680 = vld [vmem:[%s2679] sm:$0x1]
    %v2682 = vlaneseq
    %v2683 = vshrl.u32 %v2682, 7
    %v2684 = vsub.s32 0, %v2683
    %v2685 = vrot.slane %v2680, %v2684
    %2686 = vrot.lane.b32.xlu0 %v2685, 64
    %v2687 = vpop.permute.xlu0 %2686
    %v2689 = vadd.f32 %v2604, %v2687
    %2691 = vrot.lane.b32.xlu0 %v2689, 64
    %v2692 = vpop.permute.xlu0 %2691
    %v2694 = vmul.f32 %v2678, %v2692
    %2696 = vrot.lane.b32.xlu0 %v2694, 64
    %v2697 = vpop.permute.xlu0 %2696
    %v2699 = vadd.f32 %v2667, %v2697
    %v2700 = vtanh.pop %v2699
    %v2701 = vsub.f32 1.0, %v2678
    %2703 = vrot.lane.b32.xlu0 %v2700, 96
    %v2704 = vpop.permute.xlu0 %2703
    %v2706 = vmul.f32 %v2701, %v2704
    %v2707 = vmul.f32 %v2678, %v2086
    %v2708 = vadd.f32 %v2706, %v2707
    %v2709 = vpack.c.bf16 %v2708, %v2708
    %s2710 = scalar_lea.vmem [#allocation2], 144
    %v2711 = vld [vmem:[%s2710] sm:$0xf]
    %v2712 = vld [vmem:[%s2710 + $0x4] sm:$0xf]
    %v2713 = vld [vmem:[%s2710 + $0x8] sm:$0xf]
    %v2714 = vld [vmem:[%s2710 + $0xc] sm:$0xf]
    %v2715 = vpack.c.bf16 %v2259, %v2259
    %s2716 = scalar_lea.vmem [#allocation4], 144
    %v2717 = vld [vmem:[%s2716] sm:$0xf]
    %v2718 = vld [vmem:[%s2716 + $0x4] sm:$0xf]
    %v2719 = vld [vmem:[%s2716 + $0x8] sm:$0xf]
    %v2720 = vld [vmem:[%s2716 + $0xc] sm:$0xf]
    %2722 = vrot.lane.b32.xlu0 %v2715, 96
    %v2723 = vpop.permute.xlu0 %2722
    %v2728 = vunpack.c.l.b16 %v2717
    %v2729 = vunpack.c.l.b16 %v2718
    %v2730 = vunpack.c.l.b16 %v2719
    %v2731 = vunpack.c.l.b16 %v2720
    %v2732 = vpack.c.b16 %v2729, %v2728
    %v2733 = vpack.c.b16 %v2731, %v2730
    %v2737 = vsel %vm91, %v2723, 0
    %2739 = vmatprep.subr.bf16.mxu0 0
    %2740 = vmatpush1.bf16.msra.mxu0 %v2732
    %2741 = vmatprep.subr.bf16.mxu0 0
    %2742 = vmatpush1.bf16.msra.mxu0 %v2733
    %2743 = vmatprep.subr.bf16.mxu0 0
    %2744 = vmatpush1.bf16.msra.mxu0 0
    %2745 = vmatprep.subr.bf16.mxu0 0
    %2746 = vmatpush1.bf16.msra.mxu0 0
    %2747 = vmatprep.subr.bf16.mxu0 0
    %2748 = vmatpush1.bf16.msra.mxu0 0
    %2749 = vmatprep.subr.bf16.mxu0 0
    %2750 = vmatpush1.bf16.msra.mxu0 0
    %2751 = vmatprep.subr.bf16.mxu0 0
    %2752 = vmatpush1.bf16.msra.mxu0 0
    %2753 = vmatprep.subr.bf16.mxu0 0
    %2754 = vmatpush1.bf16.msra.mxu0 0
    %2755 = vmatprep.subr.bf16.mxu0 0
    %2756 = vmatpush1.bf16.msra.mxu0 0
    %2757 = vmatprep.subr.bf16.mxu0 0
    %2758 = vmatpush1.bf16.msra.mxu0 0
    %2759 = vmatprep.subr.bf16.mxu0 0
    %2760 = vmatpush1.bf16.msra.mxu0 0
    %2761 = vmatprep.subr.bf16.mxu0 0
    %2762 = vmatpush1.bf16.msra.mxu0 0
    %2763 = vmatprep.subr.bf16.mxu0 0
    %2764 = vmatpush1.bf16.msra.mxu0 0
    %2765 = vmatprep.subr.bf16.mxu0 0
    %2766 = vmatpush1.bf16.msra.mxu0 0
    %2767 = vmatprep.subr.bf16.mxu0 0
    %2768 = vmatpush1.bf16.msra.mxu0 0
    %2769 = vmatprep.subr.bf16.mxu0 0
    %2770 = vmatpush1.bf16.msra.mxu0 0
    %2771 = vmatprep.mubr.bf16.mxu0 0
    %2772 = vmatmul.mubr.bf16.gmra.mrb[0].mxu0 %v2737
    %v2773 = vpop.f32.mrb[0].mxu0
    %v2774 = vadd.f32 0.0, %v2773
    %v2775 = vpop.f32.mrb[0].mxu0
    %v2776 = vpop.f32.mrb[0].mxu0
    %v2777 = vpop.f32.mrb[0].mxu0
    %2778 = vdwg.mxu0
    %s2779 = scalar_lea.vmem %s4, 9
    %v2780 = vld [vmem:[%s2779] sm:$0x1]
    %v2782 = vlaneseq
    %v2783 = vshrl.u32 %v2782, 7
    %v2784 = vsub.s32 0, %v2783
    %v2785 = vrot.slane %v2780, %v2784
    %2788 = vrot.lane.b32.xlu0 %v2709, 96
    %v2789 = vpop.permute.xlu0 %2788
    %v2794 = vunpack.c.l.b16 %v2711
    %v2795 = vunpack.c.l.b16 %v2712
    %v2796 = vunpack.c.l.b16 %v2713
    %v2797 = vunpack.c.l.b16 %v2714
    %v2798 = vpack.c.b16 %v2795, %v2794
    %v2799 = vpack.c.b16 %v2797, %v2796
    %v2803 = vsel %vm91, %v2789, 0
    %2805 = vmatprep.subr.bf16.mxu0 0
    %2806 = vmatpush1.bf16.msra.mxu0 %v2798
    %2807 = vmatprep.subr.bf16.mxu0 0
    %2808 = vmatpush1.bf16.msra.mxu0 %v2799
    %2809 = vmatprep.subr.bf16.mxu0 0
    %2810 = vmatpush1.bf16.msra.mxu0 0
    %2811 = vmatprep.subr.bf16.mxu0 0
    %2812 = vmatpush1.bf16.msra.mxu0 0
    %2813 = vmatprep.subr.bf16.mxu0 0
    %2814 = vmatpush1.bf16.msra.mxu0 0
    %2815 = vmatprep.subr.bf16.mxu0 0
    %2816 = vmatpush1.bf16.msra.mxu0 0
    %2817 = vmatprep.subr.bf16.mxu0 0
    %2818 = vmatpush1.bf16.msra.mxu0 0
    %2819 = vmatprep.subr.bf16.mxu0 0
    %2820 = vmatpush1.bf16.msra.mxu0 0
    %2821 = vmatprep.subr.bf16.mxu0 0
    %2822 = vmatpush1.bf16.msra.mxu0 0
    %2823 = vmatprep.subr.bf16.mxu0 0
    %2824 = vmatpush1.bf16.msra.mxu0 0
    %2825 = vmatprep.subr.bf16.mxu0 0
    %2826 = vmatpush1.bf16.msra.mxu0 0
    %2827 = vmatprep.subr.bf16.mxu0 0
    %2828 = vmatpush1.bf16.msra.mxu0 0
    %2829 = vmatprep.subr.bf16.mxu0 0
    %2830 = vmatpush1.bf16.msra.mxu0 0
    %2831 = vmatprep.subr.bf16.mxu0 0
    %2832 = vmatpush1.bf16.msra.mxu0 0
    %2833 = vmatprep.subr.bf16.mxu0 0
    %2834 = vmatpush1.bf16.msra.mxu0 0
    %2835 = vmatprep.subr.bf16.mxu0 0
    %2836 = vmatpush1.bf16.msra.mxu0 0
    %2837 = vmatprep.mubr.bf16.mxu0 0
    %2838 = vmatmul.mubr.bf16.gmra.mrb[0].mxu0 %v2803
    %v2839 = vpop.f32.mrb[0].mxu0
    %v2840 = vadd.f32 %v2785, %v2839
    %v2841 = vpop.f32.mrb[0].mxu0
    %v2842 = vpop.f32.mrb[0].mxu0
    %v2843 = vpop.f32.mrb[0].mxu0
    %2844 = vdwg.mxu0
    %v2845 = vadd.f32 %v2840, %v2774
    %v2846 = vxor.u32 %v2845, 2147483648
    %v2847 = vmul.f32 %v2846, 1.442695
    %v2848 = vpow.pop %v2847
    %v2849 = vadd.f32 %v2848, 1.0
    %v2850 = vrcp.pop %v2849
    %v2851 = vmul.f32 1.0, %v2850
    %s2852 = scalar_lea.vmem %s5, 9
    %v2853 = vld [vmem:[%s2852] sm:$0x1]
    %v2855 = vlaneseq
    %v2856 = vshrl.u32 %v2855, 7
    %v2857 = vsub.s32 0, %v2856
    %v2858 = vrot.slane %v2853, %v2857
    %2859 = vrot.lane.b32.xlu0 %v2858, 64
    %v2860 = vpop.permute.xlu0 %2859
    %v2862 = vadd.f32 %v2774, %v2860
    %2864 = vrot.lane.b32.xlu0 %v2862, 64
    %v2865 = vpop.permute.xlu0 %2864
    %v2867 = vmul.f32 %v2851, %v2865
    %2869 = vrot.lane.b32.xlu0 %v2867, 64
    %v2870 = vpop.permute.xlu0 %2869
    %v2872 = vadd.f32 %v2840, %v2870
    %v2873 = vtanh.pop %v2872
    %v2874 = vsub.f32 1.0, %v2851
    %2876 = vrot.lane.b32.xlu0 %v2873, 96
    %v2877 = vpop.permute.xlu0 %2876
    %v2879 = vmul.f32 %v2874, %v2877
    %v2880 = vmul.f32 %v2851, %v2259
    %v2881 = vadd.f32 %v2879, %v2880
    %v2882 = vand.u32 2147483647, %v2881
    %vm2883 = vcmp.le.f32.partialorder %v2882, 0.7853982
    %vm2884 = vcmp.lt.s32.totalorder %v2881, 0
    %v2885 = vand.u32 %v2881, 2139095040
    %v2886 = vshrl.u32 %v2885, 23
    %v2887 = vsub.s32 %v2886, 127
    %v2888 = vand.u32 2147483647, %v2881
    %v2889 = vand.u32 %v2888, 8388607
    %v2890 = vor.u32 %v2889, 8388608
    %v2891 = vsub.s32 0, %v2890
    %v2892 = vadd.s32 %v2887, 1
    %vm2893 = vcmp.gt.s32.totalorder %v2892, 0
    %v2894 = vsel %vm2893, %v2892, 0
    %v2895 = vshrl.u32 %v2894, 5
    %v2896 = vand.u32 %v2894, 31
    %v2897 = vsub.s32 32, %v2896
    %v2898 = vshrl.u32 683565275, %v2897
    %v2899 = vshll.u32 683565275, %v2896
    %v2900 = vshrl.u32 2475754826, %v2897
    %v2901 = vor.u32 %v2899, %v2900
    %v2902 = vshll.u32 2475754826, %v2896
    %v2903 = vshrl.u32 2131351028, %v2897
    %v2904 = vor.u32 %v2902, %v2903
    %v2905 = vshll.u32 2131351028, %v2896
    %v2906 = vshrl.u32 2102212464, %v2897
    %v2907 = vor.u32 %v2905, %v2906
    %v2908 = vshll.u32 2102212464, %v2896
    %v2909 = vshrl.u32 920167782, %v2897
    %v2910 = vor.u32 %v2908, %v2909
    %v2911 = vshll.u32 920167782, %v2896
    %v2912 = vshrl.u32 1326507024, %v2897
    %v2913 = vor.u32 %v2911, %v2912
    %vm2914 = vcmp.lt.s32.totalorder %v2895, 1
    %vm2915 = vcmp.lt.s32.totalorder %v2895, 2
    %vm2916 = vcmp.lt.s32.totalorder %v2895, 3
    %vm2917 = vcmp.lt.s32.totalorder %v2895, 4
    %v2918 = vsel %vm2914, %v2898, %v2901
    %v2919 = vsel %vm2917, %v2907, 2102212464
    %v2920 = vsel %vm2916, %v2904, %v2919
    %v2921 = vsel %vm2915, %v2918, %v2920
    %v2922 = vsel %vm2914, %v2901, %v2904
    %v2923 = vsel %vm2917, %v2910, 920167782
    %v2924 = vsel %vm2916, %v2907, %v2923
    %v2925 = vsel %vm2915, %v2922, %v2924
    %v2926 = vsel %vm2914, %v2904, %v2907
    %v2927 = vsel %vm2917, %v2913, 1326507024
    %v2928 = vsel %vm2916, %v2910, %v2927
    %v2929 = vsel %vm2915, %v2926, %v2928
    %v2930 = vshll.u32 %v2890, 8
    %v2931 = vmul.u32.u64.compose %v2930, %v2929
    %v2932 = vextract.low.u32 %v2931
    %v2933 = vextract.high.u32 %v2931
    %v2934 = vmul.u32.u64.compose %v2930, %v2925
    %v2935 = vextract.low.u32 %v2934
    %v2936 = vextract.high.u32 %v2934
    %v2937 = vmul.u32 %v2930, %v2921
    %v2938 = vadd.s32 %v2933, %v2935
    %vm2939 = vc.u32 %v2933, %v2935
    %v2940 = vadd.s32 %v2936, 1
    %v2941 = vsel %vm2939, %v2940, %v2936
    %v2942 = vadd.s32 %v2937, %v2941
    %v2943 = vadd.s32 %v2942, 536870912
    %v2944 = vshrl.u32 %v2943, 30
    %v2945 = vshll.u32 %v2944, 30
    %v2946 = vsub.s32 %v2942, %v2945
    %vm2947 = vcmp.lt.s32.totalorder %v2946, 0
    %v2948 = vsub.s32 0, %v2946
    %v2949 = vsel %vm2947, %v2948, %v2946
    %v2950 = vclz %v2949
    %v2951 = vsub.s32 %v2950, 2
    %vm2952 = vcmp.gt.s32.totalorder 0, %v2951
    %v2953 = vsel %vm2952, 0, %v2951
    %v2954 = vsub.s32 32, %v2953
    %v2955 = vshll.u32 %v2946, %v2953
    %v2956 = vshrl.u32 %v2938, %v2954
    %v2957 = vor.u32 %v2955, %v2956
    %v2958 = vsub.s32 4294967266, %v2953
    %v2959 = vadd.s32 %v2958, 127
    %v2960 = vshll.u32 %v2959, 23
    %v2961 = vor.u32 4788187, %v2960
    %v2962 = vand.u32 2147483647, %v2961
    %v2964 = vcvt.s32.f32 %v2957
    %v2965 = vmul.f32 %v2964, %v2962
    %v2966 = vxor.u32 %v2965, 2147483648
    %v2967 = vsel %vm2884, %v2966, %v2965
    %v2968 = vsub.s32 4, %v2944
    %v2969 = vsel %vm2884, %v2968, %v2944
    %v2970 = vsel %vm2883, %v2881, %v2967
    %v2971 = vsel %vm2883, 0, %v2969
    %v2972 = vcosq.f32.pop %v2970
    %v2973 = vsinq.f32.pop %v2970
    %vm2974 = vweird.f32 %v2881
    %v2975 = vand.u32 %v2971, 3
    %vm2976 = vcmp.lt.s32.totalorder %v2975, 2
    %vm2977 = vcmp.eq.s32.totalorder %v2975, 0
    %v2978 = vxor.u32 %v2973, 2147483648
    %v2979 = vsel %vm2977, %v2972, %v2978
    %vm2980 = vcmp.eq.s32.totalorder %v2975, 2
    %v2981 = vxor.u32 %v2972, 2147483648
    %v2982 = vsel %vm2980, %v2981, %v2973
    %v2983 = vsel %vm2976, %v2979, %v2982
    %v2984 = vsel %vm2974, nan, %v2983
    %v2985 = vadd.f32 %v2984, 1e-10
    %v2986 = vpack.c.bf16 %v2985, %v2985
    %s2987 = scalar_lea.vmem %s6, 64
    %v2988 = vld [vmem:[%s2987] sm:$0xf]
    %v2989 = vld [vmem:[%s2987 + $0x4] sm:$0xf]
    %v2990 = vld [vmem:[%s2987 + $0x8] sm:$0xf]
    %v2991 = vld [vmem:[%s2987 + $0xc] sm:$0xf]
    %s2992 = scalar_lea.vmem %s7, 4
    %v2993 = vld [vmem:[%s2992] sm:$0x1]
    %v2995 = vlaneseq
    %v2996 = vshrl.u32 %v2995, 7
    %v2997 = vsub.s32 0, %v2996
    %v2998 = vrot.slane %v2993, %v2997
    %3001 = vrot.lane.b32.xlu0 %v2986, 96
    %v3002 = vpop.permute.xlu0 %3001
    %v3007 = vunpack.c.l.b16 %v2988
    %v3008 = vunpack.c.l.b16 %v2989
    %v3009 = vunpack.c.l.b16 %v2990
    %v3010 = vunpack.c.l.b16 %v2991
    %v3011 = vpack.c.b16 %v3008, %v3007
    %v3012 = vpack.c.b16 %v3010, %v3009
    %v3016 = vsel %vm91, %v3002, 0
    %3018 = vmatprep.subr.bf16.mxu0 0
    %3019 = vmatpush1.bf16.msra.mxu0 %v3011
    %3020 = vmatprep.subr.bf16.mxu0 0
    %3021 = vmatpush1.bf16.msra.mxu0 %v3012
    %3022 = vmatprep.subr.bf16.mxu0 0
    %3023 = vmatpush1.bf16.msra.mxu0 0
    %3024 = vmatprep.subr.bf16.mxu0 0
    %3025 = vmatpush1.bf16.msra.mxu0 0
    %3026 = vmatprep.subr.bf16.mxu0 0
    %3027 = vmatpush1.bf16.msra.mxu0 0
    %3028 = vmatprep.subr.bf16.mxu0 0
    %3029 = vmatpush1.bf16.msra.mxu0 0
    %3030 = vmatprep.subr.bf16.mxu0 0
    %3031 = vmatpush1.bf16.msra.mxu0 0
    %3032 = vmatprep.subr.bf16.mxu0 0
    %3033 = vmatpush1.bf16.msra.mxu0 0
    %3034 = vmatprep.subr.bf16.mxu0 0
    %3035 = vmatpush1.bf16.msra.mxu0 0
    %3036 = vmatprep.subr.bf16.mxu0 0
    %3037 = vmatpush1.bf16.msra.mxu0 0
    %3038 = vmatprep.subr.bf16.mxu0 0
    %3039 = vmatpush1.bf16.msra.mxu0 0
    %3040 = vmatprep.subr.bf16.mxu0 0
    %3041 = vmatpush1.bf16.msra.mxu0 0
    %3042 = vmatprep.subr.bf16.mxu0 0
    %3043 = vmatpush1.bf16.msra.mxu0 0
    %3044 = vmatprep.subr.bf16.mxu0 0
    %3045 = vmatpush1.bf16.msra.mxu0 0
    %3046 = vmatprep.subr.bf16.mxu0 0
    %3047 = vmatpush1.bf16.msra.mxu0 0
    %3048 = vmatprep.subr.bf16.mxu0 0
    %3049 = vmatpush1.bf16.msra.mxu0 0
    %3050 = vmatprep.mubr.bf16.mxu0 0
    %3051 = vmatmul.mubr.bf16.gmra.mrb[0].mxu0 %v3016
    %v3052 = vpop.f32.mrb[0].mxu0
    %v3053 = vadd.f32 %v2998, %v3052
    %v3054 = vpop.f32.mrb[0].mxu0
    %v3055 = vpop.f32.mrb[0].mxu0
    %v3056 = vpop.f32.mrb[0].mxu0
    %3057 = vdwg.mxu0
    %v3058 = vmax.f32 %v3053, 0.0
    %v3059 = vpack.c.bf16 %v3058, %v3058
    %s3060 = scalar_lea.vmem %s8, 64
    %v3061 = vld [vmem:[%s3060] sm:$0xf]
    %v3062 = vld [vmem:[%s3060 + $0x4] sm:$0xf]
    %v3063 = vld [vmem:[%s3060 + $0x8] sm:$0xf]
    %v3064 = vld [vmem:[%s3060 + $0xc] sm:$0xf]
    %s3065 = scalar_lea.vmem %s9, 4
    %v3066 = vld [vmem:[%s3065] sm:$0x1]
    %v3068 = vlaneseq
    %v3069 = vshrl.u32 %v3068, 7
    %v3070 = vsub.s32 0, %v3069
    %v3071 = vrot.slane %v3066, %v3070
    %v3077 = vunpack.c.l.b16 %v3061
    %v3078 = vunpack.c.l.b16 %v3062
    %v3079 = vunpack.c.l.b16 %v3063
    %v3080 = vunpack.c.l.b16 %v3064
    %v3081 = vpack.c.b16 %v3078, %v3077
    %v3082 = vpack.c.b16 %v3080, %v3079
    %v3086 = vsel %vm91, %v3059, 0
    %3088 = vmatprep.subr.bf16.mxu0 0
    %3089 = vmatpush1.bf16.msra.mxu0 %v3081
    %3090 = vmatprep.subr.bf16.mxu0 0
    %3091 = vmatpush1.bf16.msra.mxu0 %v3082
    %3092 = vmatprep.subr.bf16.mxu0 0
    %3093 = vmatpush1.bf16.msra.mxu0 0
    %3094 = vmatprep.subr.bf16.mxu0 0
    %3095 = vmatpush1.bf16.msra.mxu0 0
    %3096 = vmatprep.subr.bf16.mxu0 0
    %3097 = vmatpush1.bf16.msra.mxu0 0
    %3098 = vmatprep.subr.bf16.mxu0 0
    %3099 = vmatpush1.bf16.msra.mxu0 0
    %3100 = vmatprep.subr.bf16.mxu0 0
    %3101 = vmatpush1.bf16.msra.mxu0 0
    %3102 = vmatprep.subr.bf16.mxu0 0
    %3103 = vmatpush1.bf16.msra.mxu0 0
    %3104 = vmatprep.subr.bf16.mxu0 0
    %3105 = vmatpush1.bf16.msra.mxu0 0
    %3106 = vmatprep.subr.bf16.mxu0 0
    %3107 = vmatpush1.bf16.msra.mxu0 0
    %3108 = vmatprep.subr.bf16.mxu0 0
    %3109 = vmatpush1.bf16.msra.mxu0 0
    %3110 = vmatprep.subr.bf16.mxu0 0
    %3111 = vmatpush1.bf16.msra.mxu0 0
    %3112 = vmatprep.subr.bf16.mxu0 0
    %3113 = vmatpush1.bf16.msra.mxu0 0
    %3114 = vmatprep.subr.bf16.mxu0 0
    %3115 = vmatpush1.bf16.msra.mxu0 0
    %3116 = vmatprep.subr.bf16.mxu0 0
    %3117 = vmatpush1.bf16.msra.mxu0 0
    %3118 = vmatprep.subr.bf16.mxu0 0
    %3119 = vmatpush1.bf16.msra.mxu0 0
    %3120 = vmatprep.mubr.bf16.mxu0 0
    %3121 = vmatmul.mubr.bf16.gmra.mrb[0].mxu0 %v3086
    %v3122 = vpop.f32.mrb[0].mxu0
    %v3123 = vadd.f32 %v3071, %v3122
    %v3124 = vpop.f32.mrb[0].mxu0
    %v3125 = vpop.f32.mrb[0].mxu0
    %v3126 = vpop.f32.mrb[0].mxu0
    %3127 = vdwg.mxu0
    %v3128 = vsel %vm641, %v3123, -inf
    %3129 = vmax.xlane.f32.xlu0 %v3128
    %v3130 = vpop.xlane.xlu0 %3129
    %v3131 = vsub.f32 %v3123, %v3130
    %v3132 = vmul.f32 %v3131, 1.442695
    %v3133 = vpow.pop %v3132
    %v3134 = vsel %vm641, %v3133, 0.0
    %3135 = vadd.xlane.f32.xlu0 %v3134
    %v3136 = vpop.xlane.xlu0 %3135
    %v3137 = vrcp.pop %v3136
    %v3138 = vmul.f32 %v3133, %v3137
    %v3139 = vadd.f32 %v3138, 1e-10
    %s3140 = scalar_lea.vmem %s10, 32
    %3141 = vst.msk [vmem:[%s3140] sm:$0xff] %vm641, %v3139
    %s3142 = scalar_lea.vmem %s1, 32
    %v3143 = vld [vmem:[%s3142] sm:$0xff]
    %v3144 = vsel %vm641, %v3139, 0.0
    %3145 = vadd.xlane.f32.xlu0 %v3144
    %v3146 = vpop.xlane.xlu0 %3145
    %v3147 = vmul.f32 %v3143, %v3146
    %vm3148 = vcmp.ge.f32.partialorder %v3147, %v3139
    %v3149 = vsel %vm3148, 1, 0
    %vm3150 = vcmp.eq.s32.totalorder %v3149, 0
    %3152 = vrot.lane.b32.xlu0 %v3139, 127
    %v3153 = vpop.permute.xlu0 %3152
    %v3155 = vsel %vm3150, %v3139, %v3153
    %s3156 = scalar_lea.vmem %s11, 32
    %3157 = vst.msk [vmem:[%s3156] sm:$0xff] %vm668, %v3149
    %v3158 = vadd.f32 %v3155, 1e-10
    %v3159 = vlog2.pop %v3158
    %v3160 = vmul.f32 %v3159, 0.6931472
    %v3161 = vadd.f32 %v2539, %v3160
    %3162 = vset.pattern.permute.xlu0 0
    %3163 = vperm.xlu0 %3162, %v3149
    %v3164 = vpop.permute.xlu0 %3163
    %vm3165 = vcmp.eq.s32.totalorder %v68, %v3164
    %v3166 = vsel %vm3165, 1, 0
    %v3167 = vcvt.s32.f32 %v3166
    %v3168 = vpack.c.bf16 %v3167, %v3167
    %s3169 = scalar_lea.vmem [#allocation2], 160
    %v3170 = vld [vmem:[%s3169] sm:$0xf]
    %v3171 = vld [vmem:[%s3169 + $0x4] sm:$0xf]
    %v3172 = vld [vmem:[%s3169 + $0x8] sm:$0xf]
    %v3173 = vld [vmem:[%s3169 + $0xc] sm:$0xf]
    %s3174 = scalar_lea.vmem [#allocation4], 160
    %v3175 = vld [vmem:[%s3174] sm:$0xf]
    %v3176 = vld [vmem:[%s3174 + $0x4] sm:$0xf]
    %v3177 = vld [vmem:[%s3174 + $0x8] sm:$0xf]
    %v3178 = vld [vmem:[%s3174 + $0xc] sm:$0xf]
    %v3183 = vunpack.c.l.b16 %v3175
    %v3184 = vunpack.c.l.b16 %v3176
    %v3185 = vunpack.c.l.b16 %v3177
    %v3186 = vunpack.c.l.b16 %v3178
    %v3187 = vpack.c.b16 %v3184, %v3183
    %v3188 = vpack.c.b16 %v3186, %v3185
    %3191 = vmatprep.subr.bf16.mxu0 0
    %3192 = vmatpush1.bf16.msra.mxu0 %v3187
    %3193 = vmatprep.subr.bf16.mxu0 0
    %3194 = vmatpush1.bf16.msra.mxu0 %v3188
    %3195 = vmatprep.subr.bf16.mxu0 0
    %3196 = vmatpush1.bf16.msra.mxu0 0
    %3197 = vmatprep.subr.bf16.mxu0 0
    %3198 = vmatpush1.bf16.msra.mxu0 0
    %3199 = vmatprep.subr.bf16.mxu0 0
    %3200 = vmatpush1.bf16.msra.mxu0 0
    %3201 = vmatprep.subr.bf16.mxu0 0
    %3202 = vmatpush1.bf16.msra.mxu0 0
    %3203 = vmatprep.subr.bf16.mxu0 0
    %3204 = vmatpush1.bf16.msra.mxu0 0
    %3205 = vmatprep.subr.bf16.mxu0 0
    %3206 = vmatpush1.bf16.msra.mxu0 0
    %3207 = vmatprep.subr.bf16.mxu0 0
    %3208 = vmatpush1.bf16.msra.mxu0 0
    %3209 = vmatprep.subr.bf16.mxu0 0
    %3210 = vmatpush1.bf16.msra.mxu0 0
    %3211 = vmatprep.subr.bf16.mxu0 0
    %3212 = vmatpush1.bf16.msra.mxu0 0
    %3213 = vmatprep.subr.bf16.mxu0 0
    %3214 = vmatpush1.bf16.msra.mxu0 0
    %3215 = vmatprep.subr.bf16.mxu0 0
    %3216 = vmatpush1.bf16.msra.mxu0 0
    %3217 = vmatprep.subr.bf16.mxu0 0
    %3218 = vmatpush1.bf16.msra.mxu0 0
    %3219 = vmatprep.subr.bf16.mxu0 0
    %3220 = vmatpush1.bf16.msra.mxu0 0
    %3221 = vmatprep.subr.bf16.mxu0 0
    %3222 = vmatpush1.bf16.msra.mxu0 0
    %3223 = vmatprep.mubr.bf16.mxu0 0
    %3224 = vmatmul.mubr.bf16.gmra.mrb[0].mxu0 %v2803
    %v3225 = vpop.f32.mrb[0].mxu0
    %v3226 = vadd.f32 0.0, %v3225
    %v3227 = vpop.f32.mrb[0].mxu0
    %v3228 = vpop.f32.mrb[0].mxu0
    %v3229 = vpop.f32.mrb[0].mxu0
    %3230 = vdwg.mxu0
    %s3231 = scalar_lea.vmem %s4, 10
    %v3232 = vld [vmem:[%s3231] sm:$0x1]
    %v3234 = vlaneseq
    %v3235 = vshrl.u32 %v3234, 7
    %v3236 = vsub.s32 0, %v3235
    %v3237 = vrot.slane %v3232, %v3236
    %v3243 = vunpack.c.l.b16 %v3170
    %v3244 = vunpack.c.l.b16 %v3171
    %v3245 = vunpack.c.l.b16 %v3172
    %v3246 = vunpack.c.l.b16 %v3173
    %v3247 = vpack.c.b16 %v3244, %v3243
    %v3248 = vpack.c.b16 %v3246, %v3245
    %v3252 = vsel %vm91, %v3168, 0
    %3254 = vmatprep.subr.bf16.mxu0 0
    %3255 = vmatpush1.bf16.msra.mxu0 %v3247
    %3256 = vmatprep.subr.bf16.mxu0 0
    %3257 = vmatpush1.bf16.msra.mxu0 %v3248
    %3258 = vmatprep.subr.bf16.mxu0 0
    %3259 = vmatpush1.bf16.msra.mxu0 0
    %3260 = vmatprep.subr.bf16.mxu0 0
    %3261 = vmatpush1.bf16.msra.mxu0 0
    %3262 = vmatprep.subr.bf16.mxu0 0
    %3263 = vmatpush1.bf16.msra.mxu0 0
    %3264 = vmatprep.subr.bf16.mxu0 0
    %3265 = vmatpush1.bf16.msra.mxu0 0
    %3266 = vmatprep.subr.bf16.mxu0 0
    %3267 = vmatpush1.bf16.msra.mxu0 0
    %3268 = vmatprep.subr.bf16.mxu0 0
    %3269 = vmatpush1.bf16.msra.mxu0 0
    %3270 = vmatprep.subr.bf16.mxu0 0
    %3271 = vmatpush1.bf16.msra.mxu0 0
    %3272 = vmatprep.subr.bf16.mxu0 0
    %3273 = vmatpush1.bf16.msra.mxu0 0
    %3274 = vmatprep.subr.bf16.mxu0 0
    %3275 = vmatpush1.bf16.msra.mxu0 0
    %3276 = vmatprep.subr.bf16.mxu0 0
    %3277 = vmatpush1.bf16.msra.mxu0 0
    %3278 = vmatprep.subr.bf16.mxu0 0
    %3279 = vmatpush1.bf16.msra.mxu0 0
    %3280 = vmatprep.subr.bf16.mxu0 0
    %3281 = vmatpush1.bf16.msra.mxu0 0
    %3282 = vmatprep.subr.bf16.mxu0 0
    %3283 = vmatpush1.bf16.msra.mxu0 0
    %3284 = vmatprep.subr.bf16.mxu0 0
    %3285 = vmatpush1.bf16.msra.mxu0 0
    %3286 = vmatprep.mubr.bf16.mxu0 0
    %3287 = vmatmul.mubr.bf16.gmra.mrb[0].mxu0 %v3252
    %v3288 = vpop.f32.mrb[0].mxu0
    %v3289 = vadd.f32 %v3237, %v3288
    %v3290 = vpop.f32.mrb[0].mxu0
    %v3291 = vpop.f32.mrb[0].mxu0
    %v3292 = vpop.f32.mrb[0].mxu0
    %3293 = vdwg.mxu0
    %v3294 = vadd.f32 %v3289, %v3226
    %v3295 = vxor.u32 %v3294, 2147483648
    %v3296 = vmul.f32 %v3295, 1.442695
    %v3297 = vpow.pop %v3296
    %v3298 = vadd.f32 %v3297, 1.0
    %v3299 = vrcp.pop %v3298
    %v3300 = vmul.f32 1.0, %v3299
    %s3301 = scalar_lea.vmem %s5, 10
    %v3302 = vld [vmem:[%s3301] sm:$0x1]
    %v3304 = vlaneseq
    %v3305 = vshrl.u32 %v3304, 7
    %v3306 = vsub.s32 0, %v3305
    %v3307 = vrot.slane %v3302, %v3306
    %3308 = vrot.lane.b32.xlu0 %v3307, 64
    %v3309 = vpop.permute.xlu0 %3308
    %v3311 = vadd.f32 %v3226, %v3309
    %3313 = vrot.lane.b32.xlu0 %v3311, 64
    %v3314 = vpop.permute.xlu0 %3313
    %v3316 = vmul.f32 %v3300, %v3314
    %3318 = vrot.lane.b32.xlu0 %v3316, 64
    %v3319 = vpop.permute.xlu0 %3318
    %v3321 = vadd.f32 %v3289, %v3319
    %v3322 = vtanh.pop %v3321
    %v3323 = vsub.f32 1.0, %v3300
    %3325 = vrot.lane.b32.xlu0 %v3322, 96
    %v3326 = vpop.permute.xlu0 %3325
    %v3328 = vmul.f32 %v3323, %v3326
    %v3329 = vmul.f32 %v3300, %v2708
    %v3330 = vadd.f32 %v3328, %v3329
    %v3331 = vpack.c.bf16 %v3330, %v3330
    %s3332 = scalar_lea.vmem [#allocation2], 176
    %v3333 = vld [vmem:[%s3332] sm:$0xf]
    %v3334 = vld [vmem:[%s3332 + $0x4] sm:$0xf]
    %v3335 = vld [vmem:[%s3332 + $0x8] sm:$0xf]
    %v3336 = vld [vmem:[%s3332 + $0xc] sm:$0xf]
    %v3337 = vpack.c.bf16 %v2881, %v2881
    %s3338 = scalar_lea.vmem [#allocation4], 176
    %v3339 = vld [vmem:[%s3338] sm:$0xf]
    %v3340 = vld [vmem:[%s3338 + $0x4] sm:$0xf]
    %v3341 = vld [vmem:[%s3338 + $0x8] sm:$0xf]
    %v3342 = vld [vmem:[%s3338 + $0xc] sm:$0xf]
    %3344 = vrot.lane.b32.xlu0 %v3337, 96
    %v3345 = vpop.permute.xlu0 %3344
    %v3350 = vunpack.c.l.b16 %v3339
    %v3351 = vunpack.c.l.b16 %v3340
    %v3352 = vunpack.c.l.b16 %v3341
    %v3353 = vunpack.c.l.b16 %v3342
    %v3354 = vpack.c.b16 %v3351, %v3350
    %v3355 = vpack.c.b16 %v3353, %v3352
    %v3359 = vsel %vm91, %v3345, 0
    %3361 = vmatprep.subr.bf16.mxu0 0
    %3362 = vmatpush1.bf16.msra.mxu0 %v3354
    %3363 = vmatprep.subr.bf16.mxu0 0
    %3364 = vmatpush1.bf16.msra.mxu0 %v3355
    %3365 = vmatprep.subr.bf16.mxu0 0
    %3366 = vmatpush1.bf16.msra.mxu0 0
    %3367 = vmatprep.subr.bf16.mxu0 0
    %3368 = vmatpush1.bf16.msra.mxu0 0
    %3369 = vmatprep.subr.bf16.mxu0 0
    %3370 = vmatpush1.bf16.msra.mxu0 0
    %3371 = vmatprep.subr.bf16.mxu0 0
    %3372 = vmatpush1.bf16.msra.mxu0 0
    %3373 = vmatprep.subr.bf16.mxu0 0
    %3374 = vmatpush1.bf16.msra.mxu0 0
    %3375 = vmatprep.subr.bf16.mxu0 0
    %3376 = vmatpush1.bf16.msra.mxu0 0
    %3377 = vmatprep.subr.bf16.mxu0 0
    %3378 = vmatpush1.bf16.msra.mxu0 0
    %3379 = vmatprep.subr.bf16.mxu0 0
    %3380 = vmatpush1.bf16.msra.mxu0 0
    %3381 = vmatprep.subr.bf16.mxu0 0
    %3382 = vmatpush1.bf16.msra.mxu0 0
    %3383 = vmatprep.subr.bf16.mxu0 0
    %3384 = vmatpush1.bf16.msra.mxu0 0
    %3385 = vmatprep.subr.bf16.mxu0 0
    %3386 = vmatpush1.bf16.msra.mxu0 0
    %3387 = vmatprep.subr.bf16.mxu0 0
    %3388 = vmatpush1.bf16.msra.mxu0 0
    %3389 = vmatprep.subr.bf16.mxu0 0
    %3390 = vmatpush1.bf16.msra.mxu0 0
    %3391 = vmatprep.subr.bf16.mxu0 0
    %3392 = vmatpush1.bf16.msra.mxu0 0
    %3393 = vmatprep.mubr.bf16.mxu0 0
    %3394 = vmatmul.mubr.bf16.gmra.mrb[0].mxu0 %v3359
    %v3395 = vpop.f32.mrb[0].mxu0
    %v3396 = vadd.f32 0.0, %v3395
    %v3397 = vpop.f32.mrb[0].mxu0
    %v3398 = vpop.f32.mrb[0].mxu0
    %v3399 = vpop.f32.mrb[0].mxu0
    %3400 = vdwg.mxu0
    %s3401 = scalar_lea.vmem %s4, 11
    %v3402 = vld [vmem:[%s3401] sm:$0x1]
    %v3404 = vlaneseq
    %v3405 = vshrl.u32 %v3404, 7
    %v3406 = vsub.s32 0, %v3405
    %v3407 = vrot.slane %v3402, %v3406
    %3410 = vrot.lane.b32.xlu0 %v3331, 96
    %v3411 = vpop.permute.xlu0 %3410
    %v3416 = vunpack.c.l.b16 %v3333
    %v3417 = vunpack.c.l.b16 %v3334
    %v3418 = vunpack.c.l.b16 %v3335
    %v3419 = vunpack.c.l.b16 %v3336
    %v3420 = vpack.c.b16 %v3417, %v3416
    %v3421 = vpack.c.b16 %v3419, %v3418
    %v3425 = vsel %vm91, %v3411, 0
    %3427 = vmatprep.subr.bf16.mxu0 0
    %3428 = vmatpush1.bf16.msra.mxu0 %v3420
    %3429 = vmatprep.subr.bf16.mxu0 0
    %3430 = vmatpush1.bf16.msra.mxu0 %v3421
    %3431 = vmatprep.subr.bf16.mxu0 0
    %3432 = vmatpush1.bf16.msra.mxu0 0
    %3433 = vmatprep.subr.bf16.mxu0 0
    %3434 = vmatpush1.bf16.msra.mxu0 0
    %3435 = vmatprep.subr.bf16.mxu0 0
    %3436 = vmatpush1.bf16.msra.mxu0 0
    %3437 = vmatprep.subr.bf16.mxu0 0
    %3438 = vmatpush1.bf16.msra.mxu0 0
    %3439 = vmatprep.subr.bf16.mxu0 0
    %3440 = vmatpush1.bf16.msra.mxu0 0
    %3441 = vmatprep.subr.bf16.mxu0 0
    %3442 = vmatpush1.bf16.msra.mxu0 0
    %3443 = vmatprep.subr.bf16.mxu0 0
    %3444 = vmatpush1.bf16.msra.mxu0 0
    %3445 = vmatprep.subr.bf16.mxu0 0
    %3446 = vmatpush1.bf16.msra.mxu0 0
    %3447 = vmatprep.subr.bf16.mxu0 0
    %3448 = vmatpush1.bf16.msra.mxu0 0
    %3449 = vmatprep.subr.bf16.mxu0 0
    %3450 = vmatpush1.bf16.msra.mxu0 0
    %3451 = vmatprep.subr.bf16.mxu0 0
    %3452 = vmatpush1.bf16.msra.mxu0 0
    %3453 = vmatprep.subr.bf16.mxu0 0
    %3454 = vmatpush1.bf16.msra.mxu0 0
    %3455 = vmatprep.subr.bf16.mxu0 0
    %3456 = vmatpush1.bf16.msra.mxu0 0
    %3457 = vmatprep.subr.bf16.mxu0 0
    %3458 = vmatpush1.bf16.msra.mxu0 0
    %3459 = vmatprep.mubr.bf16.mxu0 0
    %3460 = vmatmul.mubr.bf16.gmra.mrb[0].mxu0 %v3425
    %v3461 = vpop.f32.mrb[0].mxu0
    %v3462 = vadd.f32 %v3407, %v3461
    %v3463 = vpop.f32.mrb[0].mxu0
    %v3464 = vpop.f32.mrb[0].mxu0
    %v3465 = vpop.f32.mrb[0].mxu0
    %3466 = vdwg.mxu0
    %v3467 = vadd.f32 %v3462, %v3396
    %v3468 = vxor.u32 %v3467, 2147483648
    %v3469 = vmul.f32 %v3468, 1.442695
    %v3470 = vpow.pop %v3469
    %v3471 = vadd.f32 %v3470, 1.0
    %v3472 = vrcp.pop %v3471
    %v3473 = vmul.f32 1.0, %v3472
    %s3474 = scalar_lea.vmem %s5, 11
    %v3475 = vld [vmem:[%s3474] sm:$0x1]
    %v3477 = vlaneseq
    %v3478 = vshrl.u32 %v3477, 7
    %v3479 = vsub.s32 0, %v3478
    %v3480 = vrot.slane %v3475, %v3479
    %3481 = vrot.lane.b32.xlu0 %v3480, 64
    %v3482 = vpop.permute.xlu0 %3481
    %v3484 = vadd.f32 %v3396, %v3482
    %3486 = vrot.lane.b32.xlu0 %v3484, 64
    %v3487 = vpop.permute.xlu0 %3486
    %v3489 = vmul.f32 %v3473, %v3487
    %3491 = vrot.lane.b32.xlu0 %v3489, 64
    %v3492 = vpop.permute.xlu0 %3491
    %v3494 = vadd.f32 %v3462, %v3492
    %v3495 = vtanh.pop %v3494
    %v3496 = vsub.f32 1.0, %v3473
    %3498 = vrot.lane.b32.xlu0 %v3495, 96
    %v3499 = vpop.permute.xlu0 %3498
    %v3501 = vmul.f32 %v3496, %v3499
    %v3502 = vmul.f32 %v3473, %v2881
    %v3503 = vadd.f32 %v3501, %v3502
    %v3504 = vand.u32 2147483647, %v3503
    %vm3505 = vcmp.le.f32.partialorder %v3504, 0.7853982
    %vm3506 = vcmp.lt.s32.totalorder %v3503, 0
    %v3507 = vand.u32 %v3503, 2139095040
    %v3508 = vshrl.u32 %v3507, 23
    %v3509 = vsub.s32 %v3508, 127
    %v3510 = vand.u32 2147483647, %v3503
    %v3511 = vand.u32 %v3510, 8388607
    %v3512 = vor.u32 %v3511, 8388608
    %v3513 = vsub.s32 0, %v3512
    %v3514 = vadd.s32 %v3509, 1
    %vm3515 = vcmp.gt.s32.totalorder %v3514, 0
    %v3516 = vsel %vm3515, %v3514, 0
    %v3517 = vshrl.u32 %v3516, 5
    %v3518 = vand.u32 %v3516, 31
    %v3519 = vsub.s32 32, %v3518
    %v3520 = vshrl.u32 683565275, %v3519
    %v3521 = vshll.u32 683565275, %v3518
    %v3522 = vshrl.u32 2475754826, %v3519
    %v3523 = vor.u32 %v3521, %v3522
    %v3524 = vshll.u32 2475754826, %v3518
    %v3525 = vshrl.u32 2131351028, %v3519
    %v3526 = vor.u32 %v3524, %v3525
    %v3527 = vshll.u32 2131351028, %v3518
    %v3528 = vshrl.u32 2102212464, %v3519
    %v3529 = vor.u32 %v3527, %v3528
    %v3530 = vshll.u32 2102212464, %v3518
    %v3531 = vshrl.u32 920167782, %v3519
    %v3532 = vor.u32 %v3530, %v3531
    %v3533 = vshll.u32 920167782, %v3518
    %v3534 = vshrl.u32 1326507024, %v3519
    %v3535 = vor.u32 %v3533, %v3534
    %vm3536 = vcmp.lt.s32.totalorder %v3517, 1
    %vm3537 = vcmp.lt.s32.totalorder %v3517, 2
    %vm3538 = vcmp.lt.s32.totalorder %v3517, 3
    %vm3539 = vcmp.lt.s32.totalorder %v3517, 4
    %v3540 = vsel %vm3536, %v3520, %v3523
    %v3541 = vsel %vm3539, %v3529, 2102212464
    %v3542 = vsel %vm3538, %v3526, %v3541
    %v3543 = vsel %vm3537, %v3540, %v3542
    %v3544 = vsel %vm3536, %v3523, %v3526
    %v3545 = vsel %vm3539, %v3532, 920167782
    %v3546 = vsel %vm3538, %v3529, %v3545
    %v3547 = vsel %vm3537, %v3544, %v3546
    %v3548 = vsel %vm3536, %v3526, %v3529
    %v3549 = vsel %vm3539, %v3535, 1326507024
    %v3550 = vsel %vm3538, %v3532, %v3549
    %v3551 = vsel %vm3537, %v3548, %v3550
    %v3552 = vshll.u32 %v3512, 8
    %v3553 = vmul.u32.u64.compose %v3552, %v3551
    %v3554 = vextract.low.u32 %v3553
    %v3555 = vextract.high.u32 %v3553
    %v3556 = vmul.u32.u64.compose %v3552, %v3547
    %v3557 = vextract.low.u32 %v3556
    %v3558 = vextract.high.u32 %v3556
    %v3559 = vmul.u32 %v3552, %v3543
    %v3560 = vadd.s32 %v3555, %v3557
    %vm3561 = vc.u32 %v3555, %v3557
    %v3562 = vadd.s32 %v3558, 1
    %v3563 = vsel %vm3561, %v3562, %v3558
    %v3564 = vadd.s32 %v3559, %v3563
    %v3565 = vadd.s32 %v3564, 536870912
    %v3566 = vshrl.u32 %v3565, 30
    %v3567 = vshll.u32 %v3566, 30
    %v3568 = vsub.s32 %v3564, %v3567
    %vm3569 = vcmp.lt.s32.totalorder %v3568, 0
    %v3570 = vsub.s32 0, %v3568
    %v3571 = vsel %vm3569, %v3570, %v3568
    %v3572 = vclz %v3571
    %v3573 = vsub.s32 %v3572, 2
    %vm3574 = vcmp.gt.s32.totalorder 0, %v3573
    %v3575 = vsel %vm3574, 0, %v3573
    %v3576 = vsub.s32 32, %v3575
    %v3577 = vshll.u32 %v3568, %v3575
    %v3578 = vshrl.u32 %v3560, %v3576
    %v3579 = vor.u32 %v3577, %v3578
    %v3580 = vsub.s32 4294967266, %v3575
    %v3581 = vadd.s32 %v3580, 127
    %v3582 = vshll.u32 %v3581, 23
    %v3583 = vor.u32 4788187, %v3582
    %v3584 = vand.u32 2147483647, %v3583
    %v3586 = vcvt.s32.f32 %v3579
    %v3587 = vmul.f32 %v3586, %v3584
    %v3588 = vxor.u32 %v3587, 2147483648
    %v3589 = vsel %vm3506, %v3588, %v3587
    %v3590 = vsub.s32 4, %v3566
    %v3591 = vsel %vm3506, %v3590, %v3566
    %v3592 = vsel %vm3505, %v3503, %v3589
    %v3593 = vsel %vm3505, 0, %v3591
    %v3594 = vcosq.f32.pop %v3592
    %v3595 = vsinq.f32.pop %v3592
    %vm3596 = vweird.f32 %v3503
    %v3597 = vand.u32 %v3593, 3
    %vm3598 = vcmp.lt.s32.totalorder %v3597, 2
    %vm3599 = vcmp.eq.s32.totalorder %v3597, 0
    %v3600 = vxor.u32 %v3595, 2147483648
    %v3601 = vsel %vm3599, %v3594, %v3600
    %vm3602 = vcmp.eq.s32.totalorder %v3597, 2
    %v3603 = vxor.u32 %v3594, 2147483648
    %v3604 = vsel %vm3602, %v3603, %v3595
    %v3605 = vsel %vm3598, %v3601, %v3604
    %v3606 = vsel %vm3596, nan, %v3605
    %v3607 = vadd.f32 %v3606, 1e-10
    %v3608 = vpack.c.bf16 %v3607, %v3607
    %s3609 = scalar_lea.vmem %s6, 80
    %v3610 = vld [vmem:[%s3609] sm:$0xf]
    %v3611 = vld [vmem:[%s3609 + $0x4] sm:$0xf]
    %v3612 = vld [vmem:[%s3609 + $0x8] sm:$0xf]
    %v3613 = vld [vmem:[%s3609 + $0xc] sm:$0xf]
    %s3614 = scalar_lea.vmem %s7, 5
    %v3615 = vld [vmem:[%s3614] sm:$0x1]
    %v3617 = vlaneseq
    %v3618 = vshrl.u32 %v3617, 7
    %v3619 = vsub.s32 0, %v3618
    %v3620 = vrot.slane %v3615, %v3619
    %3623 = vrot.lane.b32.xlu0 %v3608, 96
    %v3624 = vpop.permute.xlu0 %3623
    %v3629 = vunpack.c.l.b16 %v3610
    %v3630 = vunpack.c.l.b16 %v3611
    %v3631 = vunpack.c.l.b16 %v3612
    %v3632 = vunpack.c.l.b16 %v3613
    %v3633 = vpack.c.b16 %v3630, %v3629
    %v3634 = vpack.c.b16 %v3632, %v3631
    %v3638 = vsel %vm91, %v3624, 0
    %3640 = vmatprep.subr.bf16.mxu0 0
    %3641 = vmatpush1.bf16.msra.mxu0 %v3633
    %3642 = vmatprep.subr.bf16.mxu0 0
    %3643 = vmatpush1.bf16.msra.mxu0 %v3634
    %3644 = vmatprep.subr.bf16.mxu0 0
    %3645 = vmatpush1.bf16.msra.mxu0 0
    %3646 = vmatprep.subr.bf16.mxu0 0
    %3647 = vmatpush1.bf16.msra.mxu0 0
    %3648 = vmatprep.subr.bf16.mxu0 0
    %3649 = vmatpush1.bf16.msra.mxu0 0
    %3650 = vmatprep.subr.bf16.mxu0 0
    %3651 = vmatpush1.bf16.msra.mxu0 0
    %3652 = vmatprep.subr.bf16.mxu0 0
    %3653 = vmatpush1.bf16.msra.mxu0 0
    %3654 = vmatprep.subr.bf16.mxu0 0
    %3655 = vmatpush1.bf16.msra.mxu0 0
    %3656 = vmatprep.subr.bf16.mxu0 0
    %3657 = vmatpush1.bf16.msra.mxu0 0
    %3658 = vmatprep.subr.bf16.mxu0 0
    %3659 = vmatpush1.bf16.msra.mxu0 0
    %3660 = vmatprep.subr.bf16.mxu0 0
    %3661 = vmatpush1.bf16.msra.mxu0 0
    %3662 = vmatprep.subr.bf16.mxu0 0
    %3663 = vmatpush1.bf16.msra.mxu0 0
    %3664 = vmatprep.subr.bf16.mxu0 0
    %3665 = vmatpush1.bf16.msra.mxu0 0
    %3666 = vmatprep.subr.bf16.mxu0 0
    %3667 = vmatpush1.bf16.msra.mxu0 0
    %3668 = vmatprep.subr.bf16.mxu0 0
    %3669 = vmatpush1.bf16.msra.mxu0 0
    %3670 = vmatprep.subr.bf16.mxu0 0
    %3671 = vmatpush1.bf16.msra.mxu0 0
    %3672 = vmatprep.mubr.bf16.mxu0 0
    %3673 = vmatmul.mubr.bf16.gmra.mrb[0].mxu0 %v3638
    %v3674 = vpop.f32.mrb[0].mxu0
    %v3675 = vadd.f32 %v3620, %v3674
    %v3676 = vpop.f32.mrb[0].mxu0
    %v3677 = vpop.f32.mrb[0].mxu0
    %v3678 = vpop.f32.mrb[0].mxu0
    %3679 = vdwg.mxu0
    %v3680 = vmax.f32 %v3675, 0.0
    %v3681 = vpack.c.bf16 %v3680, %v3680
    %s3682 = scalar_lea.vmem %s8, 80
    %v3683 = vld [vmem:[%s3682] sm:$0xf]
    %v3684 = vld [vmem:[%s3682 + $0x4] sm:$0xf]
    %v3685 = vld [vmem:[%s3682 + $0x8] sm:$0xf]
    %v3686 = vld [vmem:[%s3682 + $0xc] sm:$0xf]
    %s3687 = scalar_lea.vmem %s9, 5
    %v3688 = vld [vmem:[%s3687] sm:$0x1]
    %v3690 = vlaneseq
    %v3691 = vshrl.u32 %v3690, 7
    %v3692 = vsub.s32 0, %v3691
    %v3693 = vrot.slane %v3688, %v3692
    %v3699 = vunpack.c.l.b16 %v3683
    %v3700 = vunpack.c.l.b16 %v3684
    %v3701 = vunpack.c.l.b16 %v3685
    %v3702 = vunpack.c.l.b16 %v3686
    %v3703 = vpack.c.b16 %v3700, %v3699
    %v3704 = vpack.c.b16 %v3702, %v3701
    %v3708 = vsel %vm91, %v3681, 0
    %3710 = vmatprep.subr.bf16.mxu0 0
    %3711 = vmatpush1.bf16.msra.mxu0 %v3703
    %3712 = vmatprep.subr.bf16.mxu0 0
    %3713 = vmatpush1.bf16.msra.mxu0 %v3704
    %3714 = vmatprep.subr.bf16.mxu0 0
    %3715 = vmatpush1.bf16.msra.mxu0 0
    %3716 = vmatprep.subr.bf16.mxu0 0
    %3717 = vmatpush1.bf16.msra.mxu0 0
    %3718 = vmatprep.subr.bf16.mxu0 0
    %3719 = vmatpush1.bf16.msra.mxu0 0
    %3720 = vmatprep.subr.bf16.mxu0 0
    %3721 = vmatpush1.bf16.msra.mxu0 0
    %3722 = vmatprep.subr.bf16.mxu0 0
    %3723 = vmatpush1.bf16.msra.mxu0 0
    %3724 = vmatprep.subr.bf16.mxu0 0
    %3725 = vmatpush1.bf16.msra.mxu0 0
    %3726 = vmatprep.subr.bf16.mxu0 0
    %3727 = vmatpush1.bf16.msra.mxu0 0
    %3728 = vmatprep.subr.bf16.mxu0 0
    %3729 = vmatpush1.bf16.msra.mxu0 0
    %3730 = vmatprep.subr.bf16.mxu0 0
    %3731 = vmatpush1.bf16.msra.mxu0 0
    %3732 = vmatprep.subr.bf16.mxu0 0
    %3733 = vmatpush1.bf16.msra.mxu0 0
    %3734 = vmatprep.subr.bf16.mxu0 0
    %3735 = vmatpush1.bf16.msra.mxu0 0
    %3736 = vmatprep.subr.bf16.mxu0 0
    %3737 = vmatpush1.bf16.msra.mxu0 0
    %3738 = vmatprep.subr.bf16.mxu0 0
    %3739 = vmatpush1.bf16.msra.mxu0 0
    %3740 = vmatprep.subr.bf16.mxu0 0
    %3741 = vmatpush1.bf16.msra.mxu0 0
    %3742 = vmatprep.mubr.bf16.mxu0 0
    %3743 = vmatmul.mubr.bf16.gmra.mrb[0].mxu0 %v3708
    %v3744 = vpop.f32.mrb[0].mxu0
    %v3745 = vadd.f32 %v3693, %v3744
    %v3746 = vpop.f32.mrb[0].mxu0
    %v3747 = vpop.f32.mrb[0].mxu0
    %v3748 = vpop.f32.mrb[0].mxu0
    %3749 = vdwg.mxu0
    %v3750 = vsel %vm641, %v3745, -inf
    %3751 = vmax.xlane.f32.xlu0 %v3750
    %v3752 = vpop.xlane.xlu0 %3751
    %v3753 = vsub.f32 %v3745, %v3752
    %v3754 = vmul.f32 %v3753, 1.442695
    %v3755 = vpow.pop %v3754
    %v3756 = vsel %vm641, %v3755, 0.0
    %3757 = vadd.xlane.f32.xlu0 %v3756
    %v3758 = vpop.xlane.xlu0 %3757
    %v3759 = vrcp.pop %v3758
    %v3760 = vmul.f32 %v3755, %v3759
    %v3761 = vadd.f32 %v3760, 1e-10
    %s3762 = scalar_lea.vmem %s10, 40
    %3763 = vst.msk [vmem:[%s3762] sm:$0xff] %vm641, %v3761
    %s3764 = scalar_lea.vmem %s1, 40
    %v3765 = vld [vmem:[%s3764] sm:$0xff]
    %v3766 = vsel %vm641, %v3761, 0.0
    %3767 = vadd.xlane.f32.xlu0 %v3766
    %v3768 = vpop.xlane.xlu0 %3767
    %v3769 = vmul.f32 %v3765, %v3768
    %vm3770 = vcmp.ge.f32.partialorder %v3769, %v3761
    %v3771 = vsel %vm3770, 1, 0
    %vm3772 = vcmp.eq.s32.totalorder %v3771, 0
    %3774 = vrot.lane.b32.xlu0 %v3761, 127
    %v3775 = vpop.permute.xlu0 %3774
    %v3777 = vsel %vm3772, %v3761, %v3775
    %s3778 = scalar_lea.vmem %s11, 40
    %3779 = vst.msk [vmem:[%s3778] sm:$0xff] %vm668, %v3771
    %v3780 = vadd.f32 %v3777, 1e-10
    %v3781 = vlog2.pop %v3780
    %v3782 = vmul.f32 %v3781, 0.6931472
    %v3783 = vadd.f32 %v3161, %v3782
    %3784 = vset.pattern.permute.xlu0 0
    %3785 = vperm.xlu0 %3784, %v3771
    %v3786 = vpop.permute.xlu0 %3785
    %vm3787 = vcmp.eq.s32.totalorder %v68, %v3786
    %v3788 = vsel %vm3787, 1, 0
    %v3789 = vcvt.s32.f32 %v3788
    %v3790 = vpack.c.bf16 %v3789, %v3789
    %s3791 = scalar_lea.vmem [#allocation2], 192
    %v3792 = vld [vmem:[%s3791] sm:$0xf]
    %v3793 = vld [vmem:[%s3791 + $0x4] sm:$0xf]
    %v3794 = vld [vmem:[%s3791 + $0x8] sm:$0xf]
    %v3795 = vld [vmem:[%s3791 + $0xc] sm:$0xf]
    %s3796 = scalar_lea.vmem [#allocation4], 192
    %v3797 = vld [vmem:[%s3796] sm:$0xf]
    %v3798 = vld [vmem:[%s3796 + $0x4] sm:$0xf]
    %v3799 = vld [vmem:[%s3796 + $0x8] sm:$0xf]
    %v3800 = vld [vmem:[%s3796 + $0xc] sm:$0xf]
    %v3805 = vunpack.c.l.b16 %v3797
    %v3806 = vunpack.c.l.b16 %v3798
    %v3807 = vunpack.c.l.b16 %v3799
    %v3808 = vunpack.c.l.b16 %v3800
    %v3809 = vpack.c.b16 %v3806, %v3805
    %v3810 = vpack.c.b16 %v3808, %v3807
    %3813 = vmatprep.subr.bf16.mxu0 0
    %3814 = vmatpush1.bf16.msra.mxu0 %v3809
    %3815 = vmatprep.subr.bf16.mxu0 0
    %3816 = vmatpush1.bf16.msra.mxu0 %v3810
    %3817 = vmatprep.subr.bf16.mxu0 0
    %3818 = vmatpush1.bf16.msra.mxu0 0
    %3819 = vmatprep.subr.bf16.mxu0 0
    %3820 = vmatpush1.bf16.msra.mxu0 0
    %3821 = vmatprep.subr.bf16.mxu0 0
    %3822 = vmatpush1.bf16.msra.mxu0 0
    %3823 = vmatprep.subr.bf16.mxu0 0
    %3824 = vmatpush1.bf16.msra.mxu0 0
    %3825 = vmatprep.subr.bf16.mxu0 0
    %3826 = vmatpush1.bf16.msra.mxu0 0
    %3827 = vmatprep.subr.bf16.mxu0 0
    %3828 = vmatpush1.bf16.msra.mxu0 0
    %3829 = vmatprep.subr.bf16.mxu0 0
    %3830 = vmatpush1.bf16.msra.mxu0 0
    %3831 = vmatprep.subr.bf16.mxu0 0
    %3832 = vmatpush1.bf16.msra.mxu0 0
    %3833 = vmatprep.subr.bf16.mxu0 0
    %3834 = vmatpush1.bf16.msra.mxu0 0
    %3835 = vmatprep.subr.bf16.mxu0 0
    %3836 = vmatpush1.bf16.msra.mxu0 0
    %3837 = vmatprep.subr.bf16.mxu0 0
    %3838 = vmatpush1.bf16.msra.mxu0 0
    %3839 = vmatprep.subr.bf16.mxu0 0
    %3840 = vmatpush1.bf16.msra.mxu0 0
    %3841 = vmatprep.subr.bf16.mxu0 0
    %3842 = vmatpush1.bf16.msra.mxu0 0
    %3843 = vmatprep.subr.bf16.mxu0 0
    %3844 = vmatpush1.bf16.msra.mxu0 0
    %3845 = vmatprep.mubr.bf16.mxu0 0
    %3846 = vmatmul.mubr.bf16.gmra.mrb[0].mxu0 %v3425
    %v3847 = vpop.f32.mrb[0].mxu0
    %v3848 = vadd.f32 0.0, %v3847
    %v3849 = vpop.f32.mrb[0].mxu0
    %v3850 = vpop.f32.mrb[0].mxu0
    %v3851 = vpop.f32.mrb[0].mxu0
    %3852 = vdwg.mxu0
    %s3853 = scalar_lea.vmem %s4, 12
    %v3854 = vld [vmem:[%s3853] sm:$0x1]
    %v3856 = vlaneseq
    %v3857 = vshrl.u32 %v3856, 7
    %v3858 = vsub.s32 0, %v3857
    %v3859 = vrot.slane %v3854, %v3858
    %v3865 = vunpack.c.l.b16 %v3792
    %v3866 = vunpack.c.l.b16 %v3793
    %v3867 = vunpack.c.l.b16 %v3794
    %v3868 = vunpack.c.l.b16 %v3795
    %v3869 = vpack.c.b16 %v3866, %v3865
    %v3870 = vpack.c.b16 %v3868, %v3867
    %v3874 = vsel %vm91, %v3790, 0
    %3876 = vmatprep.subr.bf16.mxu0 0
    %3877 = vmatpush1.bf16.msra.mxu0 %v3869
    %3878 = vmatprep.subr.bf16.mxu0 0
    %3879 = vmatpush1.bf16.msra.mxu0 %v3870
    %3880 = vmatprep.subr.bf16.mxu0 0
    %3881 = vmatpush1.bf16.msra.mxu0 0
    %3882 = vmatprep.subr.bf16.mxu0 0
    %3883 = vmatpush1.bf16.msra.mxu0 0
    %3884 = vmatprep.subr.bf16.mxu0 0
    %3885 = vmatpush1.bf16.msra.mxu0 0
    %3886 = vmatprep.subr.bf16.mxu0 0
    %3887 = vmatpush1.bf16.msra.mxu0 0
    %3888 = vmatprep.subr.bf16.mxu0 0
    %3889 = vmatpush1.bf16.msra.mxu0 0
    %3890 = vmatprep.subr.bf16.mxu0 0
    %3891 = vmatpush1.bf16.msra.mxu0 0
    %3892 = vmatprep.subr.bf16.mxu0 0
    %3893 = vmatpush1.bf16.msra.mxu0 0
    %3894 = vmatprep.subr.bf16.mxu0 0
    %3895 = vmatpush1.bf16.msra.mxu0 0
    %3896 = vmatprep.subr.bf16.mxu0 0
    %3897 = vmatpush1.bf16.msra.mxu0 0
    %3898 = vmatprep.subr.bf16.mxu0 0
    %3899 = vmatpush1.bf16.msra.mxu0 0
    %3900 = vmatprep.subr.bf16.mxu0 0
    %3901 = vmatpush1.bf16.msra.mxu0 0
    %3902 = vmatprep.subr.bf16.mxu0 0
    %3903 = vmatpush1.bf16.msra.mxu0 0
    %3904 = vmatprep.subr.bf16.mxu0 0
    %3905 = vmatpush1.bf16.msra.mxu0 0
    %3906 = vmatprep.subr.bf16.mxu0 0
    %3907 = vmatpush1.bf16.msra.mxu0 0
    %3908 = vmatprep.mubr.bf16.mxu0 0
    %3909 = vmatmul.mubr.bf16.gmra.mrb[0].mxu0 %v3874
    %v3910 = vpop.f32.mrb[0].mxu0
    %v3911 = vadd.f32 %v3859, %v3910
    %v3912 = vpop.f32.mrb[0].mxu0
    %v3913 = vpop.f32.mrb[0].mxu0
    %v3914 = vpop.f32.mrb[0].mxu0
    %3915 = vdwg.mxu0
    %v3916 = vadd.f32 %v3911, %v3848
    %v3917 = vxor.u32 %v3916, 2147483648
    %v3918 = vmul.f32 %v3917, 1.442695
    %v3919 = vpow.pop %v3918
    %v3920 = vadd.f32 %v3919, 1.0
    %v3921 = vrcp.pop %v3920
    %v3922 = vmul.f32 1.0, %v3921
    %s3923 = scalar_lea.vmem %s5, 12
    %v3924 = vld [vmem:[%s3923] sm:$0x1]
    %v3926 = vlaneseq
    %v3927 = vshrl.u32 %v3926, 7
    %v3928 = vsub.s32 0, %v3927
    %v3929 = vrot.slane %v3924, %v3928
    %3930 = vrot.lane.b32.xlu0 %v3929, 64
    %v3931 = vpop.permute.xlu0 %3930
    %v3933 = vadd.f32 %v3848, %v3931
    %3935 = vrot.lane.b32.xlu0 %v3933, 64
    %v3936 = vpop.permute.xlu0 %3935
    %v3938 = vmul.f32 %v3922, %v3936
    %3940 = vrot.lane.b32.xlu0 %v3938, 64
    %v3941 = vpop.permute.xlu0 %3940
    %v3943 = vadd.f32 %v3911, %v3941
    %v3944 = vtanh.pop %v3943
    %v3945 = vsub.f32 1.0, %v3922
    %3947 = vrot.lane.b32.xlu0 %v3944, 96
    %v3948 = vpop.permute.xlu0 %3947
    %v3950 = vmul.f32 %v3945, %v3948
    %v3951 = vmul.f32 %v3922, %v3330
    %v3952 = vadd.f32 %v3950, %v3951
    %v3953 = vpack.c.bf16 %v3952, %v3952
    %s3954 = scalar_lea.vmem [#allocation2], 208
    %v3955 = vld [vmem:[%s3954] sm:$0xf]
    %v3956 = vld [vmem:[%s3954 + $0x4] sm:$0xf]
    %v3957 = vld [vmem:[%s3954 + $0x8] sm:$0xf]
    %v3958 = vld [vmem:[%s3954 + $0xc] sm:$0xf]
    %v3959 = vpack.c.bf16 %v3503, %v3503
    %s3960 = scalar_lea.vmem [#allocation4], 208
    %v3961 = vld [vmem:[%s3960] sm:$0xf]
    %v3962 = vld [vmem:[%s3960 + $0x4] sm:$0xf]
    %v3963 = vld [vmem:[%s3960 + $0x8] sm:$0xf]
    %v3964 = vld [vmem:[%s3960 + $0xc] sm:$0xf]
    %3966 = vrot.lane.b32.xlu0 %v3959, 96
    %v3967 = vpop.permute.xlu0 %3966
    %v3972 = vunpack.c.l.b16 %v3961
    %v3973 = vunpack.c.l.b16 %v3962
    %v3974 = vunpack.c.l.b16 %v3963
    %v3975 = vunpack.c.l.b16 %v3964
    %v3976 = vpack.c.b16 %v3973, %v3972
    %v3977 = vpack.c.b16 %v3975, %v3974
    %v3981 = vsel %vm91, %v3967, 0
    %3983 = vmatprep.subr.bf16.mxu0 0
    %3984 = vmatpush1.bf16.msra.mxu0 %v3976
    %3985 = vmatprep.subr.bf16.mxu0 0
    %3986 = vmatpush1.bf16.msra.mxu0 %v3977
    %3987 = vmatprep.subr.bf16.mxu0 0
    %3988 = vmatpush1.bf16.msra.mxu0 0
    %3989 = vmatprep.subr.bf16.mxu0 0
    %3990 = vmatpush1.bf16.msra.mxu0 0
    %3991 = vmatprep.subr.bf16.mxu0 0
    %3992 = vmatpush1.bf16.msra.mxu0 0
    %3993 = vmatprep.subr.bf16.mxu0 0
    %3994 = vmatpush1.bf16.msra.mxu0 0
    %3995 = vmatprep.subr.bf16.mxu0 0
    %3996 = vmatpush1.bf16.msra.mxu0 0
    %3997 = vmatprep.subr.bf16.mxu0 0
    %3998 = vmatpush1.bf16.msra.mxu0 0
    %3999 = vmatprep.subr.bf16.mxu0 0
    %4000 = vmatpush1.bf16.msra.mxu0 0
    %4001 = vmatprep.subr.bf16.mxu0 0
    %4002 = vmatpush1.bf16.msra.mxu0 0
    %4003 = vmatprep.subr.bf16.mxu0 0
    %4004 = vmatpush1.bf16.msra.mxu0 0
    %4005 = vmatprep.subr.bf16.mxu0 0
    %4006 = vmatpush1.bf16.msra.mxu0 0
    %4007 = vmatprep.subr.bf16.mxu0 0
    %4008 = vmatpush1.bf16.msra.mxu0 0
    %4009 = vmatprep.subr.bf16.mxu0 0
    %4010 = vmatpush1.bf16.msra.mxu0 0
    %4011 = vmatprep.subr.bf16.mxu0 0
    %4012 = vmatpush1.bf16.msra.mxu0 0
    %4013 = vmatprep.subr.bf16.mxu0 0
    %4014 = vmatpush1.bf16.msra.mxu0 0
    %4015 = vmatprep.mubr.bf16.mxu0 0
    %4016 = vmatmul.mubr.bf16.gmra.mrb[0].mxu0 %v3981
    %v4017 = vpop.f32.mrb[0].mxu0
    %v4018 = vadd.f32 0.0, %v4017
    %v4019 = vpop.f32.mrb[0].mxu0
    %v4020 = vpop.f32.mrb[0].mxu0
    %v4021 = vpop.f32.mrb[0].mxu0
    %4022 = vdwg.mxu0
    %s4023 = scalar_lea.vmem %s4, 13
    %v4024 = vld [vmem:[%s4023] sm:$0x1]
    %v4026 = vlaneseq
    %v4027 = vshrl.u32 %v4026, 7
    %v4028 = vsub.s32 0, %v4027
    %v4029 = vrot.slane %v4024, %v4028
    %4032 = vrot.lane.b32.xlu0 %v3953, 96
    %v4033 = vpop.permute.xlu0 %4032
    %v4038 = vunpack.c.l.b16 %v3955
    %v4039 = vunpack.c.l.b16 %v3956
    %v4040 = vunpack.c.l.b16 %v3957
    %v4041 = vunpack.c.l.b16 %v3958
    %v4042 = vpack.c.b16 %v4039, %v4038
    %v4043 = vpack.c.b16 %v4041, %v4040
    %v4047 = vsel %vm91, %v4033, 0
    %4049 = vmatprep.subr.bf16.mxu0 0
    %4050 = vmatpush1.bf16.msra.mxu0 %v4042
    %4051 = vmatprep.subr.bf16.mxu0 0
    %4052 = vmatpush1.bf16.msra.mxu0 %v4043
    %4053 = vmatprep.subr.bf16.mxu0 0
    %4054 = vmatpush1.bf16.msra.mxu0 0
    %4055 = vmatprep.subr.bf16.mxu0 0
    %4056 = vmatpush1.bf16.msra.mxu0 0
    %4057 = vmatprep.subr.bf16.mxu0 0
    %4058 = vmatpush1.bf16.msra.mxu0 0
    %4059 = vmatprep.subr.bf16.mxu0 0
    %4060 = vmatpush1.bf16.msra.mxu0 0
    %4061 = vmatprep.subr.bf16.mxu0 0
    %4062 = vmatpush1.bf16.msra.mxu0 0
    %4063 = vmatprep.subr.bf16.mxu0 0
    %4064 = vmatpush1.bf16.msra.mxu0 0
    %4065 = vmatprep.subr.bf16.mxu0 0
    %4066 = vmatpush1.bf16.msra.mxu0 0
    %4067 = vmatprep.subr.bf16.mxu0 0
    %4068 = vmatpush1.bf16.msra.mxu0 0
    %4069 = vmatprep.subr.bf16.mxu0 0
    %4070 = vmatpush1.bf16.msra.mxu0 0
    %4071 = vmatprep.subr.bf16.mxu0 0
    %4072 = vmatpush1.bf16.msra.mxu0 0
    %4073 = vmatprep.subr.bf16.mxu0 0
    %4074 = vmatpush1.bf16.msra.mxu0 0
    %4075 = vmatprep.subr.bf16.mxu0 0
    %4076 = vmatpush1.bf16.msra.mxu0 0
    %4077 = vmatprep.subr.bf16.mxu0 0
    %4078 = vmatpush1.bf16.msra.mxu0 0
    %4079 = vmatprep.subr.bf16.mxu0 0
    %4080 = vmatpush1.bf16.msra.mxu0 0
    %4081 = vmatprep.mubr.bf16.mxu0 0
    %4082 = vmatmul.mubr.bf16.gmra.mrb[0].mxu0 %v4047
    %v4083 = vpop.f32.mrb[0].mxu0
    %v4084 = vadd.f32 %v4029, %v4083
    %v4085 = vpop.f32.mrb[0].mxu0
    %v4086 = vpop.f32.mrb[0].mxu0
    %v4087 = vpop.f32.mrb[0].mxu0
    %4088 = vdwg.mxu0
    %v4089 = vadd.f32 %v4084, %v4018
    %v4090 = vxor.u32 %v4089, 2147483648
    %v4091 = vmul.f32 %v4090, 1.442695
    %v4092 = vpow.pop %v4091
    %v4093 = vadd.f32 %v4092, 1.0
    %v4094 = vrcp.pop %v4093
    %v4095 = vmul.f32 1.0, %v4094
    %s4096 = scalar_lea.vmem %s5, 13
    %v4097 = vld [vmem:[%s4096] sm:$0x1]
    %v4099 = vlaneseq
    %v4100 = vshrl.u32 %v4099, 7
    %v4101 = vsub.s32 0, %v4100
    %v4102 = vrot.slane %v4097, %v4101
    %4103 = vrot.lane.b32.xlu0 %v4102, 64
    %v4104 = vpop.permute.xlu0 %4103
    %v4106 = vadd.f32 %v4018, %v4104
    %4108 = vrot.lane.b32.xlu0 %v4106, 64
    %v4109 = vpop.permute.xlu0 %4108
    %v4111 = vmul.f32 %v4095, %v4109
    %4113 = vrot.lane.b32.xlu0 %v4111, 64
    %v4114 = vpop.permute.xlu0 %4113
    %v4116 = vadd.f32 %v4084, %v4114
    %v4117 = vtanh.pop %v4116
    %v4118 = vsub.f32 1.0, %v4095
    %4120 = vrot.lane.b32.xlu0 %v4117, 96
    %v4121 = vpop.permute.xlu0 %4120
    %v4123 = vmul.f32 %v4118, %v4121
    %v4124 = vmul.f32 %v4095, %v3503
    %v4125 = vadd.f32 %v4123, %v4124
    %v4126 = vand.u32 2147483647, %v4125
    %vm4127 = vcmp.le.f32.partialorder %v4126, 0.7853982
    %vm4128 = vcmp.lt.s32.totalorder %v4125, 0
    %v4129 = vand.u32 %v4125, 2139095040
    %v4130 = vshrl.u32 %v4129, 23
    %v4131 = vsub.s32 %v4130, 127
    %v4132 = vand.u32 2147483647, %v4125
    %v4133 = vand.u32 %v4132, 8388607
    %v4134 = vor.u32 %v4133, 8388608
    %v4135 = vsub.s32 0, %v4134
    %v4136 = vadd.s32 %v4131, 1
    %vm4137 = vcmp.gt.s32.totalorder %v4136, 0
    %v4138 = vsel %vm4137, %v4136, 0
    %v4139 = vshrl.u32 %v4138, 5
    %v4140 = vand.u32 %v4138, 31
    %v4141 = vsub.s32 32, %v4140
    %v4142 = vshrl.u32 683565275, %v4141
    %v4143 = vshll.u32 683565275, %v4140
    %v4144 = vshrl.u32 2475754826, %v4141
    %v4145 = vor.u32 %v4143, %v4144
    %v4146 = vshll.u32 2475754826, %v4140
    %v4147 = vshrl.u32 2131351028, %v4141
    %v4148 = vor.u32 %v4146, %v4147
    %v4149 = vshll.u32 2131351028, %v4140
    %v4150 = vshrl.u32 2102212464, %v4141
    %v4151 = vor.u32 %v4149, %v4150
    %v4152 = vshll.u32 2102212464, %v4140
    %v4153 = vshrl.u32 920167782, %v4141
    %v4154 = vor.u32 %v4152, %v4153
    %v4155 = vshll.u32 920167782, %v4140
    %v4156 = vshrl.u32 1326507024, %v4141
    %v4157 = vor.u32 %v4155, %v4156
    %vm4158 = vcmp.lt.s32.totalorder %v4139, 1
    %vm4159 = vcmp.lt.s32.totalorder %v4139, 2
    %vm4160 = vcmp.lt.s32.totalorder %v4139, 3
    %vm4161 = vcmp.lt.s32.totalorder %v4139, 4
    %v4162 = vsel %vm4158, %v4142, %v4145
    %v4163 = vsel %vm4161, %v4151, 2102212464
    %v4164 = vsel %vm4160, %v4148, %v4163
    %v4165 = vsel %vm4159, %v4162, %v4164
    %v4166 = vsel %vm4158, %v4145, %v4148
    %v4167 = vsel %vm4161, %v4154, 920167782
    %v4168 = vsel %vm4160, %v4151, %v4167
    %v4169 = vsel %vm4159, %v4166, %v4168
    %v4170 = vsel %vm4158, %v4148, %v4151
    %v4171 = vsel %vm4161, %v4157, 1326507024
    %v4172 = vsel %vm4160, %v4154, %v4171
    %v4173 = vsel %vm4159, %v4170, %v4172
    %v4174 = vshll.u32 %v4134, 8
    %v4175 = vmul.u32.u64.compose %v4174, %v4173
    %v4176 = vextract.low.u32 %v4175
    %v4177 = vextract.high.u32 %v4175
    %v4178 = vmul.u32.u64.compose %v4174, %v4169
    %v4179 = vextract.low.u32 %v4178
    %v4180 = vextract.high.u32 %v4178
    %v4181 = vmul.u32 %v4174, %v4165
    %v4182 = vadd.s32 %v4177, %v4179
    %vm4183 = vc.u32 %v4177, %v4179
    %v4184 = vadd.s32 %v4180, 1
    %v4185 = vsel %vm4183, %v4184, %v4180
    %v4186 = vadd.s32 %v4181, %v4185
    %v4187 = vadd.s32 %v4186, 536870912
    %v4188 = vshrl.u32 %v4187, 30
    %v4189 = vshll.u32 %v4188, 30
    %v4190 = vsub.s32 %v4186, %v4189
    %vm4191 = vcmp.lt.s32.totalorder %v4190, 0
    %v4192 = vsub.s32 0, %v4190
    %v4193 = vsel %vm4191, %v4192, %v4190
    %v4194 = vclz %v4193
    %v4195 = vsub.s32 %v4194, 2
    %vm4196 = vcmp.gt.s32.totalorder 0, %v4195
    %v4197 = vsel %vm4196, 0, %v4195
    %v4198 = vsub.s32 32, %v4197
    %v4199 = vshll.u32 %v4190, %v4197
    %v4200 = vshrl.u32 %v4182, %v4198
    %v4201 = vor.u32 %v4199, %v4200
    %v4202 = vsub.s32 4294967266, %v4197
    %v4203 = vadd.s32 %v4202, 127
    %v4204 = vshll.u32 %v4203, 23
    %v4205 = vor.u32 4788187, %v4204
    %v4206 = vand.u32 2147483647, %v4205
    %v4208 = vcvt.s32.f32 %v4201
    %v4209 = vmul.f32 %v4208, %v4206
    %v4210 = vxor.u32 %v4209, 2147483648
    %v4211 = vsel %vm4128, %v4210, %v4209
    %v4212 = vsub.s32 4, %v4188
    %v4213 = vsel %vm4128, %v4212, %v4188
    %v4214 = vsel %vm4127, %v4125, %v4211
    %v4215 = vsel %vm4127, 0, %v4213
    %v4216 = vcosq.f32.pop %v4214
    %v4217 = vsinq.f32.pop %v4214
    %vm4218 = vweird.f32 %v4125
    %v4219 = vand.u32 %v4215, 3
    %vm4220 = vcmp.lt.s32.totalorder %v4219, 2
    %vm4221 = vcmp.eq.s32.totalorder %v4219, 0
    %v4222 = vxor.u32 %v4217, 2147483648
    %v4223 = vsel %vm4221, %v4216, %v4222
    %vm4224 = vcmp.eq.s32.totalorder %v4219, 2
    %v4225 = vxor.u32 %v4216, 2147483648
    %v4226 = vsel %vm4224, %v4225, %v4217
    %v4227 = vsel %vm4220, %v4223, %v4226
    %v4228 = vsel %vm4218, nan, %v4227
    %v4229 = vadd.f32 %v4228, 1e-10
    %v4230 = vpack.c.bf16 %v4229, %v4229
    %s4231 = scalar_lea.vmem %s6, 96
    %v4232 = vld [vmem:[%s4231] sm:$0xf]
    %v4233 = vld [vmem:[%s4231 + $0x4] sm:$0xf]
    %v4234 = vld [vmem:[%s4231 + $0x8] sm:$0xf]
    %v4235 = vld [vmem:[%s4231 + $0xc] sm:$0xf]
    %s4236 = scalar_lea.vmem %s7, 6
    %v4237 = vld [vmem:[%s4236] sm:$0x1]
    %v4239 = vlaneseq
    %v4240 = vshrl.u32 %v4239, 7
    %v4241 = vsub.s32 0, %v4240
    %v4242 = vrot.slane %v4237, %v4241
    %4245 = vrot.lane.b32.xlu0 %v4230, 96
    %v4246 = vpop.permute.xlu0 %4245
    %v4251 = vunpack.c.l.b16 %v4232
    %v4252 = vunpack.c.l.b16 %v4233
    %v4253 = vunpack.c.l.b16 %v4234
    %v4254 = vunpack.c.l.b16 %v4235
    %v4255 = vpack.c.b16 %v4252, %v4251
    %v4256 = vpack.c.b16 %v4254, %v4253
    %v4260 = vsel %vm91, %v4246, 0
    %4262 = vmatprep.subr.bf16.mxu0 0
    %4263 = vmatpush1.bf16.msra.mxu0 %v4255
    %4264 = vmatprep.subr.bf16.mxu0 0
    %4265 = vmatpush1.bf16.msra.mxu0 %v4256
    %4266 = vmatprep.subr.bf16.mxu0 0
    %4267 = vmatpush1.bf16.msra.mxu0 0
    %4268 = vmatprep.subr.bf16.mxu0 0
    %4269 = vmatpush1.bf16.msra.mxu0 0
    %4270 = vmatprep.subr.bf16.mxu0 0
    %4271 = vmatpush1.bf16.msra.mxu0 0
    %4272 = vmatprep.subr.bf16.mxu0 0
    %4273 = vmatpush1.bf16.msra.mxu0 0
    %4274 = vmatprep.subr.bf16.mxu0 0
    %4275 = vmatpush1.bf16.msra.mxu0 0
    %4276 = vmatprep.subr.bf16.mxu0 0
    %4277 = vmatpush1.bf16.msra.mxu0 0
    %4278 = vmatprep.subr.bf16.mxu0 0
    %4279 = vmatpush1.bf16.msra.mxu0 0
    %4280 = vmatprep.subr.bf16.mxu0 0
    %4281 = vmatpush1.bf16.msra.mxu0 0
    %4282 = vmatprep.subr.bf16.mxu0 0
    %4283 = vmatpush1.bf16.msra.mxu0 0
    %4284 = vmatprep.subr.bf16.mxu0 0
    %4285 = vmatpush1.bf16.msra.mxu0 0
    %4286 = vmatprep.subr.bf16.mxu0 0
    %4287 = vmatpush1.bf16.msra.mxu0 0
    %4288 = vmatprep.subr.bf16.mxu0 0
    %4289 = vmatpush1.bf16.msra.mxu0 0
    %4290 = vmatprep.subr.bf16.mxu0 0
    %4291 = vmatpush1.bf16.msra.mxu0 0
    %4292 = vmatprep.subr.bf16.mxu0 0
    %4293 = vmatpush1.bf16.msra.mxu0 0
    %4294 = vmatprep.mubr.bf16.mxu0 0
    %4295 = vmatmul.mubr.bf16.gmra.mrb[0].mxu0 %v4260
    %v4296 = vpop.f32.mrb[0].mxu0
    %v4297 = vadd.f32 %v4242, %v4296
    %v4298 = vpop.f32.mrb[0].mxu0
    %v4299 = vpop.f32.mrb[0].mxu0
    %v4300 = vpop.f32.mrb[0].mxu0
    %4301 = vdwg.mxu0
    %v4302 = vmax.f32 %v4297, 0.0
    %v4303 = vpack.c.bf16 %v4302, %v4302
    %s4304 = scalar_lea.vmem %s8, 96
    %v4305 = vld [vmem:[%s4304] sm:$0xf]
    %v4306 = vld [vmem:[%s4304 + $0x4] sm:$0xf]
    %v4307 = vld [vmem:[%s4304 + $0x8] sm:$0xf]
    %v4308 = vld [vmem:[%s4304 + $0xc] sm:$0xf]
    %s4309 = scalar_lea.vmem %s9, 6
    %v4310 = vld [vmem:[%s4309] sm:$0x1]
    %v4312 = vlaneseq
    %v4313 = vshrl.u32 %v4312, 7
    %v4314 = vsub.s32 0, %v4313
    %v4315 = vrot.slane %v4310, %v4314
    %v4321 = vunpack.c.l.b16 %v4305
    %v4322 = vunpack.c.l.b16 %v4306
    %v4323 = vunpack.c.l.b16 %v4307
    %v4324 = vunpack.c.l.b16 %v4308
    %v4325 = vpack.c.b16 %v4322, %v4321
    %v4326 = vpack.c.b16 %v4324, %v4323
    %v4330 = vsel %vm91, %v4303, 0
    %4332 = vmatprep.subr.bf16.mxu0 0
    %4333 = vmatpush1.bf16.msra.mxu0 %v4325
    %4334 = vmatprep.subr.bf16.mxu0 0
    %4335 = vmatpush1.bf16.msra.mxu0 %v4326
    %4336 = vmatprep.subr.bf16.mxu0 0
    %4337 = vmatpush1.bf16.msra.mxu0 0
    %4338 = vmatprep.subr.bf16.mxu0 0
    %4339 = vmatpush1.bf16.msra.mxu0 0
    %4340 = vmatprep.subr.bf16.mxu0 0
    %4341 = vmatpush1.bf16.msra.mxu0 0
    %4342 = vmatprep.subr.bf16.mxu0 0
    %4343 = vmatpush1.bf16.msra.mxu0 0
    %4344 = vmatprep.subr.bf16.mxu0 0
    %4345 = vmatpush1.bf16.msra.mxu0 0
    %4346 = vmatprep.subr.bf16.mxu0 0
    %4347 = vmatpush1.bf16.msra.mxu0 0
    %4348 = vmatprep.subr.bf16.mxu0 0
    %4349 = vmatpush1.bf16.msra.mxu0 0
    %4350 = vmatprep.subr.bf16.mxu0 0
    %4351 = vmatpush1.bf16.msra.mxu0 0
    %4352 = vmatprep.subr.bf16.mxu0 0
    %4353 = vmatpush1.bf16.msra.mxu0 0
    %4354 = vmatprep.subr.bf16.mxu0 0
    %4355 = vmatpush1.bf16.msra.mxu0 0
    %4356 = vmatprep.subr.bf16.mxu0 0
    %4357 = vmatpush1.bf16.msra.mxu0 0
    %4358 = vmatprep.subr.bf16.mxu0 0
    %4359 = vmatpush1.bf16.msra.mxu0 0
    %4360 = vmatprep.subr.bf16.mxu0 0
    %4361 = vmatpush1.bf16.msra.mxu0 0
    %4362 = vmatprep.subr.bf16.mxu0 0
    %4363 = vmatpush1.bf16.msra.mxu0 0
    %4364 = vmatprep.mubr.bf16.mxu0 0
    %4365 = vmatmul.mubr.bf16.gmra.mrb[0].mxu0 %v4330
    %v4366 = vpop.f32.mrb[0].mxu0
    %v4367 = vadd.f32 %v4315, %v4366
    %v4368 = vpop.f32.mrb[0].mxu0
    %v4369 = vpop.f32.mrb[0].mxu0
    %v4370 = vpop.f32.mrb[0].mxu0
    %4371 = vdwg.mxu0
    %v4372 = vsel %vm641, %v4367, -inf
    %4373 = vmax.xlane.f32.xlu0 %v4372
    %v4374 = vpop.xlane.xlu0 %4373
    %v4375 = vsub.f32 %v4367, %v4374
    %v4376 = vmul.f32 %v4375, 1.442695
    %v4377 = vpow.pop %v4376
    %v4378 = vsel %vm641, %v4377, 0.0
    %4379 = vadd.xlane.f32.xlu0 %v4378
    %v4380 = vpop.xlane.xlu0 %4379
    %v4381 = vrcp.pop %v4380
    %v4382 = vmul.f32 %v4377, %v4381
    %v4383 = vadd.f32 %v4382, 1e-10
    %s4384 = scalar_lea.vmem %s10, 48
    %4385 = vst.msk [vmem:[%s4384] sm:$0xff] %vm641, %v4383
    %s4386 = scalar_lea.vmem %s1, 48
    %v4387 = vld [vmem:[%s4386] sm:$0xff]
    %v4388 = vsel %vm641, %v4383, 0.0
    %4389 = vadd.xlane.f32.xlu0 %v4388
    %v4390 = vpop.xlane.xlu0 %4389
    %v4391 = vmul.f32 %v4387, %v4390
    %vm4392 = vcmp.ge.f32.partialorder %v4391, %v4383
    %v4393 = vsel %vm4392, 1, 0
    %vm4394 = vcmp.eq.s32.totalorder %v4393, 0
    %4396 = vrot.lane.b32.xlu0 %v4383, 127
    %v4397 = vpop.permute.xlu0 %4396
    %v4399 = vsel %vm4394, %v4383, %v4397
    %s4400 = scalar_lea.vmem %s11, 48
    %4401 = vst.msk [vmem:[%s4400] sm:$0xff] %vm668, %v4393
    %v4402 = vadd.f32 %v4399, 1e-10
    %v4403 = vlog2.pop %v4402
    %v4404 = vmul.f32 %v4403, 0.6931472
    %v4405 = vadd.f32 %v3783, %v4404
    %4406 = vset.pattern.permute.xlu0 0
    %4407 = vperm.xlu0 %4406, %v4393
    %v4408 = vpop.permute.xlu0 %4407
    %vm4409 = vcmp.eq.s32.totalorder %v68, %v4408
    %v4410 = vsel %vm4409, 1, 0
    %v4411 = vcvt.s32.f32 %v4410
    %v4412 = vpack.c.bf16 %v4411, %v4411
    %s4413 = scalar_lea.vmem [#allocation2], 224
    %v4414 = vld [vmem:[%s4413] sm:$0xf]
    %v4415 = vld [vmem:[%s4413 + $0x4] sm:$0xf]
    %v4416 = vld [vmem:[%s4413 + $0x8] sm:$0xf]
    %v4417 = vld [vmem:[%s4413 + $0xc] sm:$0xf]
    %s4418 = scalar_lea.vmem [#allocation4], 224
    %v4419 = vld [vmem:[%s4418] sm:$0xf]
    %v4420 = vld [vmem:[%s4418 + $0x4] sm:$0xf]
    %v4421 = vld [vmem:[%s4418 + $0x8] sm:$0xf]
    %v4422 = vld [vmem:[%s4418 + $0xc] sm:$0xf]
    %v4427 = vunpack.c.l.b16 %v4419
    %v4428 = vunpack.c.l.b16 %v4420
    %v4429 = vunpack.c.l.b16 %v4421
    %v4430 = vunpack.c.l.b16 %v4422
    %v4431 = vpack.c.b16 %v4428, %v4427
    %v4432 = vpack.c.b16 %v4430, %v4429
    %4435 = vmatprep.subr.bf16.mxu0 0
    %4436 = vmatpush1.bf16.msra.mxu0 %v4431
    %4437 = vmatprep.subr.bf16.mxu0 0
    %4438 = vmatpush1.bf16.msra.mxu0 %v4432
    %4439 = vmatprep.subr.bf16.mxu0 0
    %4440 = vmatpush1.bf16.msra.mxu0 0
    %4441 = vmatprep.subr.bf16.mxu0 0
    %4442 = vmatpush1.bf16.msra.mxu0 0
    %4443 = vmatprep.subr.bf16.mxu0 0
    %4444 = vmatpush1.bf16.msra.mxu0 0
    %4445 = vmatprep.subr.bf16.mxu0 0
    %4446 = vmatpush1.bf16.msra.mxu0 0
    %4447 = vmatprep.subr.bf16.mxu0 0
    %4448 = vmatpush1.bf16.msra.mxu0 0
    %4449 = vmatprep.subr.bf16.mxu0 0
    %4450 = vmatpush1.bf16.msra.mxu0 0
    %4451 = vmatprep.subr.bf16.mxu0 0
    %4452 = vmatpush1.bf16.msra.mxu0 0
    %4453 = vmatprep.subr.bf16.mxu0 0
    %4454 = vmatpush1.bf16.msra.mxu0 0
    %4455 = vmatprep.subr.bf16.mxu0 0
    %4456 = vmatpush1.bf16.msra.mxu0 0
    %4457 = vmatprep.subr.bf16.mxu0 0
    %4458 = vmatpush1.bf16.msra.mxu0 0
    %4459 = vmatprep.subr.bf16.mxu0 0
    %4460 = vmatpush1.bf16.msra.mxu0 0
    %4461 = vmatprep.subr.bf16.mxu0 0
    %4462 = vmatpush1.bf16.msra.mxu0 0
    %4463 = vmatprep.subr.bf16.mxu0 0
    %4464 = vmatpush1.bf16.msra.mxu0 0
    %4465 = vmatprep.subr.bf16.mxu0 0
    %4466 = vmatpush1.bf16.msra.mxu0 0
    %4467 = vmatprep.mubr.bf16.mxu0 0
    %4468 = vmatmul.mubr.bf16.gmra.mrb[0].mxu0 %v4047
    %v4469 = vpop.f32.mrb[0].mxu0
    %v4470 = vadd.f32 0.0, %v4469
    %v4471 = vpop.f32.mrb[0].mxu0
    %v4472 = vpop.f32.mrb[0].mxu0
    %v4473 = vpop.f32.mrb[0].mxu0
    %4474 = vdwg.mxu0
    %s4475 = scalar_lea.vmem %s4, 14
    %v4476 = vld [vmem:[%s4475] sm:$0x1]
    %v4478 = vlaneseq
    %v4479 = vshrl.u32 %v4478, 7
    %v4480 = vsub.s32 0, %v4479
    %v4481 = vrot.slane %v4476, %v4480
    %v4487 = vunpack.c.l.b16 %v4414
    %v4488 = vunpack.c.l.b16 %v4415
    %v4489 = vunpack.c.l.b16 %v4416
    %v4490 = vunpack.c.l.b16 %v4417
    %v4491 = vpack.c.b16 %v4488, %v4487
    %v4492 = vpack.c.b16 %v4490, %v4489
    %v4496 = vsel %vm91, %v4412, 0
    %4498 = vmatprep.subr.bf16.mxu0 0
    %4499 = vmatpush1.bf16.msra.mxu0 %v4491
    %4500 = vmatprep.subr.bf16.mxu0 0
    %4501 = vmatpush1.bf16.msra.mxu0 %v4492
    %4502 = vmatprep.subr.bf16.mxu0 0
    %4503 = vmatpush1.bf16.msra.mxu0 0
    %4504 = vmatprep.subr.bf16.mxu0 0
    %4505 = vmatpush1.bf16.msra.mxu0 0
    %4506 = vmatprep.subr.bf16.mxu0 0
    %4507 = vmatpush1.bf16.msra.mxu0 0
    %4508 = vmatprep.subr.bf16.mxu0 0
    %4509 = vmatpush1.bf16.msra.mxu0 0
    %4510 = vmatprep.subr.bf16.mxu0 0
    %4511 = vmatpush1.bf16.msra.mxu0 0
    %4512 = vmatprep.subr.bf16.mxu0 0
    %4513 = vmatpush1.bf16.msra.mxu0 0
    %4514 = vmatprep.subr.bf16.mxu0 0
    %4515 = vmatpush1.bf16.msra.mxu0 0
    %4516 = vmatprep.subr.bf16.mxu0 0
    %4517 = vmatpush1.bf16.msra.mxu0 0
    %4518 = vmatprep.subr.bf16.mxu0 0
    %4519 = vmatpush1.bf16.msra.mxu0 0
    %4520 = vmatprep.subr.bf16.mxu0 0
    %4521 = vmatpush1.bf16.msra.mxu0 0
    %4522 = vmatprep.subr.bf16.mxu0 0
    %4523 = vmatpush1.bf16.msra.mxu0 0
    %4524 = vmatprep.subr.bf16.mxu0 0
    %4525 = vmatpush1.bf16.msra.mxu0 0
    %4526 = vmatprep.subr.bf16.mxu0 0
    %4527 = vmatpush1.bf16.msra.mxu0 0
    %4528 = vmatprep.subr.bf16.mxu0 0
    %4529 = vmatpush1.bf16.msra.mxu0 0
    %4530 = vmatprep.mubr.bf16.mxu0 0
    %4531 = vmatmul.mubr.bf16.gmra.mrb[0].mxu0 %v4496
    %v4532 = vpop.f32.mrb[0].mxu0
    %v4533 = vadd.f32 %v4481, %v4532
    %v4534 = vpop.f32.mrb[0].mxu0
    %v4535 = vpop.f32.mrb[0].mxu0
    %v4536 = vpop.f32.mrb[0].mxu0
    %4537 = vdwg.mxu0
    %v4538 = vadd.f32 %v4533, %v4470
    %v4539 = vxor.u32 %v4538, 2147483648
    %v4540 = vmul.f32 %v4539, 1.442695
    %v4541 = vpow.pop %v4540
    %v4542 = vadd.f32 %v4541, 1.0
    %v4543 = vrcp.pop %v4542
    %v4544 = vmul.f32 1.0, %v4543
    %s4545 = scalar_lea.vmem %s5, 14
    %v4546 = vld [vmem:[%s4545] sm:$0x1]
    %v4548 = vlaneseq
    %v4549 = vshrl.u32 %v4548, 7
    %v4550 = vsub.s32 0, %v4549
    %v4551 = vrot.slane %v4546, %v4550
    %4552 = vrot.lane.b32.xlu0 %v4551, 64
    %v4553 = vpop.permute.xlu0 %4552
    %v4555 = vadd.f32 %v4470, %v4553
    %4557 = vrot.lane.b32.xlu0 %v4555, 64
    %v4558 = vpop.permute.xlu0 %4557
    %v4560 = vmul.f32 %v4544, %v4558
    %4562 = vrot.lane.b32.xlu0 %v4560, 64
    %v4563 = vpop.permute.xlu0 %4562
    %v4565 = vadd.f32 %v4533, %v4563
    %v4566 = vtanh.pop %v4565
    %v4567 = vsub.f32 1.0, %v4544
    %4569 = vrot.lane.b32.xlu0 %v4566, 96
    %v4570 = vpop.permute.xlu0 %4569
    %v4572 = vmul.f32 %v4567, %v4570
    %v4573 = vmul.f32 %v4544, %v3952
    %v4574 = vadd.f32 %v4572, %v4573
    %v4575 = vpack.c.bf16 %v4574, %v4574
    %s4576 = scalar_lea.vmem [#allocation2], 240
    %v4577 = vld [vmem:[%s4576] sm:$0xf]
    %v4578 = vld [vmem:[%s4576 + $0x4] sm:$0xf]
    %v4579 = vld [vmem:[%s4576 + $0x8] sm:$0xf]
    %v4580 = vld [vmem:[%s4576 + $0xc] sm:$0xf]
    %v4581 = vpack.c.bf16 %v4125, %v4125
    %s4582 = scalar_lea.vmem [#allocation4], 240
    %v4583 = vld [vmem:[%s4582] sm:$0xf]
    %v4584 = vld [vmem:[%s4582 + $0x4] sm:$0xf]
    %v4585 = vld [vmem:[%s4582 + $0x8] sm:$0xf]
    %v4586 = vld [vmem:[%s4582 + $0xc] sm:$0xf]
    %4588 = vrot.lane.b32.xlu0 %v4581, 96
    %v4589 = vpop.permute.xlu0 %4588
    %v4594 = vunpack.c.l.b16 %v4583
    %v4595 = vunpack.c.l.b16 %v4584
    %v4596 = vunpack.c.l.b16 %v4585
    %v4597 = vunpack.c.l.b16 %v4586
    %v4598 = vpack.c.b16 %v4595, %v4594
    %v4599 = vpack.c.b16 %v4597, %v4596
    %v4603 = vsel %vm91, %v4589, 0
    %4605 = vmatprep.subr.bf16.mxu0 0
    %4606 = vmatpush1.bf16.msra.mxu0 %v4598
    %4607 = vmatprep.subr.bf16.mxu0 0
    %4608 = vmatpush1.bf16.msra.mxu0 %v4599
    %4609 = vmatprep.subr.bf16.mxu0 0
    %4610 = vmatpush1.bf16.msra.mxu0 0
    %4611 = vmatprep.subr.bf16.mxu0 0
    %4612 = vmatpush1.bf16.msra.mxu0 0
    %4613 = vmatprep.subr.bf16.mxu0 0
    %4614 = vmatpush1.bf16.msra.mxu0 0
    %4615 = vmatprep.subr.bf16.mxu0 0
    %4616 = vmatpush1.bf16.msra.mxu0 0
    %4617 = vmatprep.subr.bf16.mxu0 0
    %4618 = vmatpush1.bf16.msra.mxu0 0
    %4619 = vmatprep.subr.bf16.mxu0 0
    %4620 = vmatpush1.bf16.msra.mxu0 0
    %4621 = vmatprep.subr.bf16.mxu0 0
    %4622 = vmatpush1.bf16.msra.mxu0 0
    %4623 = vmatprep.subr.bf16.mxu0 0
    %4624 = vmatpush1.bf16.msra.mxu0 0
    %4625 = vmatprep.subr.bf16.mxu0 0
    %4626 = vmatpush1.bf16.msra.mxu0 0
    %4627 = vmatprep.subr.bf16.mxu0 0
    %4628 = vmatpush1.bf16.msra.mxu0 0
    %4629 = vmatprep.subr.bf16.mxu0 0
    %4630 = vmatpush1.bf16.msra.mxu0 0
    %4631 = vmatprep.subr.bf16.mxu0 0
    %4632 = vmatpush1.bf16.msra.mxu0 0
    %4633 = vmatprep.subr.bf16.mxu0 0
    %4634 = vmatpush1.bf16.msra.mxu0 0
    %4635 = vmatprep.subr.bf16.mxu0 0
    %4636 = vmatpush1.bf16.msra.mxu0 0
    %4637 = vmatprep.mubr.bf16.mxu0 0
    %4638 = vmatmul.mubr.bf16.gmra.mrb[0].mxu0 %v4603
    %v4639 = vpop.f32.mrb[0].mxu0
    %v4640 = vadd.f32 0.0, %v4639
    %v4641 = vpop.f32.mrb[0].mxu0
    %v4642 = vpop.f32.mrb[0].mxu0
    %v4643 = vpop.f32.mrb[0].mxu0
    %4644 = vdwg.mxu0
    %s4645 = scalar_lea.vmem %s4, 15
    %v4646 = vld [vmem:[%s4645] sm:$0x1]
    %v4648 = vlaneseq
    %v4649 = vshrl.u32 %v4648, 7
    %v4650 = vsub.s32 0, %v4649
    %v4651 = vrot.slane %v4646, %v4650
    %4654 = vrot.lane.b32.xlu0 %v4575, 96
    %v4655 = vpop.permute.xlu0 %4654
    %v4660 = vunpack.c.l.b16 %v4577
    %v4661 = vunpack.c.l.b16 %v4578
    %v4662 = vunpack.c.l.b16 %v4579
    %v4663 = vunpack.c.l.b16 %v4580
    %v4664 = vpack.c.b16 %v4661, %v4660
    %v4665 = vpack.c.b16 %v4663, %v4662
    %v4669 = vsel %vm91, %v4655, 0
    %4671 = vmatprep.subr.bf16.mxu0 0
    %4672 = vmatpush1.bf16.msra.mxu0 %v4664
    %4673 = vmatprep.subr.bf16.mxu0 0
    %4674 = vmatpush1.bf16.msra.mxu0 %v4665
    %4675 = vmatprep.subr.bf16.mxu0 0
    %4676 = vmatpush1.bf16.msra.mxu0 0
    %4677 = vmatprep.subr.bf16.mxu0 0
    %4678 = vmatpush1.bf16.msra.mxu0 0
    %4679 = vmatprep.subr.bf16.mxu0 0
    %4680 = vmatpush1.bf16.msra.mxu0 0
    %4681 = vmatprep.subr.bf16.mxu0 0
    %4682 = vmatpush1.bf16.msra.mxu0 0
    %4683 = vmatprep.subr.bf16.mxu0 0
    %4684 = vmatpush1.bf16.msra.mxu0 0
    %4685 = vmatprep.subr.bf16.mxu0 0
    %4686 = vmatpush1.bf16.msra.mxu0 0
    %4687 = vmatprep.subr.bf16.mxu0 0
    %4688 = vmatpush1.bf16.msra.mxu0 0
    %4689 = vmatprep.subr.bf16.mxu0 0
    %4690 = vmatpush1.bf16.msra.mxu0 0
    %4691 = vmatprep.subr.bf16.mxu0 0
    %4692 = vmatpush1.bf16.msra.mxu0 0
    %4693 = vmatprep.subr.bf16.mxu0 0
    %4694 = vmatpush1.bf16.msra.mxu0 0
    %4695 = vmatprep.subr.bf16.mxu0 0
    %4696 = vmatpush1.bf16.msra.mxu0 0
    %4697 = vmatprep.subr.bf16.mxu0 0
    %4698 = vmatpush1.bf16.msra.mxu0 0
    %4699 = vmatprep.subr.bf16.mxu0 0
    %4700 = vmatpush1.bf16.msra.mxu0 0
    %4701 = vmatprep.subr.bf16.mxu0 0
    %4702 = vmatpush1.bf16.msra.mxu0 0
    %4703 = vmatprep.mubr.bf16.mxu0 0
    %4704 = vmatmul.mubr.bf16.gmra.mrb[0].mxu0 %v4669
    %v4705 = vpop.f32.mrb[0].mxu0
    %v4706 = vadd.f32 %v4651, %v4705
    %v4707 = vpop.f32.mrb[0].mxu0
    %v4708 = vpop.f32.mrb[0].mxu0
    %v4709 = vpop.f32.mrb[0].mxu0
    %4710 = vdwg.mxu0
    %v4711 = vadd.f32 %v4706, %v4640
    %v4712 = vxor.u32 %v4711, 2147483648
    %v4713 = vmul.f32 %v4712, 1.442695
    %v4714 = vpow.pop %v4713
    %v4715 = vadd.f32 %v4714, 1.0
    %v4716 = vrcp.pop %v4715
    %v4717 = vmul.f32 1.0, %v4716
    %s4718 = scalar_lea.vmem %s5, 15
    %v4719 = vld [vmem:[%s4718] sm:$0x1]
    %v4721 = vlaneseq
    %v4722 = vshrl.u32 %v4721, 7
    %v4723 = vsub.s32 0, %v4722
    %v4724 = vrot.slane %v4719, %v4723
    %4725 = vrot.lane.b32.xlu0 %v4724, 64
    %v4726 = vpop.permute.xlu0 %4725
    %v4728 = vadd.f32 %v4640, %v4726
    %4730 = vrot.lane.b32.xlu0 %v4728, 64
    %v4731 = vpop.permute.xlu0 %4730
    %v4733 = vmul.f32 %v4717, %v4731
    %4735 = vrot.lane.b32.xlu0 %v4733, 64
    %v4736 = vpop.permute.xlu0 %4735
    %v4738 = vadd.f32 %v4706, %v4736
    %v4739 = vtanh.pop %v4738
    %v4740 = vsub.f32 1.0, %v4717
    %4742 = vrot.lane.b32.xlu0 %v4739, 96
    %v4743 = vpop.permute.xlu0 %4742
    %v4745 = vmul.f32 %v4740, %v4743
    %v4746 = vmul.f32 %v4717, %v4125
    %v4747 = vadd.f32 %v4745, %v4746
    %v4748 = vand.u32 2147483647, %v4747
    %vm4749 = vcmp.le.f32.partialorder %v4748, 0.7853982
    %vm4750 = vcmp.lt.s32.totalorder %v4747, 0
    %v4751 = vand.u32 %v4747, 2139095040
    %v4752 = vshrl.u32 %v4751, 23
    %v4753 = vsub.s32 %v4752, 127
    %v4754 = vand.u32 2147483647, %v4747
    %v4755 = vand.u32 %v4754, 8388607
    %v4756 = vor.u32 %v4755, 8388608
    %v4757 = vsub.s32 0, %v4756
    %v4758 = vadd.s32 %v4753, 1
    %vm4759 = vcmp.gt.s32.totalorder %v4758, 0
    %v4760 = vsel %vm4759, %v4758, 0
    %v4761 = vshrl.u32 %v4760, 5
    %v4762 = vand.u32 %v4760, 31
    %v4763 = vsub.s32 32, %v4762
    %v4764 = vshrl.u32 683565275, %v4763
    %v4765 = vshll.u32 683565275, %v4762
    %v4766 = vshrl.u32 2475754826, %v4763
    %v4767 = vor.u32 %v4765, %v4766
    %v4768 = vshll.u32 2475754826, %v4762
    %v4769 = vshrl.u32 2131351028, %v4763
    %v4770 = vor.u32 %v4768, %v4769
    %v4771 = vshll.u32 2131351028, %v4762
    %v4772 = vshrl.u32 2102212464, %v4763
    %v4773 = vor.u32 %v4771, %v4772
    %v4774 = vshll.u32 2102212464, %v4762
    %v4775 = vshrl.u32 920167782, %v4763
    %v4776 = vor.u32 %v4774, %v4775
    %v4777 = vshll.u32 920167782, %v4762
    %v4778 = vshrl.u32 1326507024, %v4763
    %v4779 = vor.u32 %v4777, %v4778
    %vm4780 = vcmp.lt.s32.totalorder %v4761, 1
    %vm4781 = vcmp.lt.s32.totalorder %v4761, 2
    %vm4782 = vcmp.lt.s32.totalorder %v4761, 3
    %vm4783 = vcmp.lt.s32.totalorder %v4761, 4
    %v4784 = vsel %vm4780, %v4764, %v4767
    %v4785 = vsel %vm4783, %v4773, 2102212464
    %v4786 = vsel %vm4782, %v4770, %v4785
    %v4787 = vsel %vm4781, %v4784, %v4786
    %v4788 = vsel %vm4780, %v4767, %v4770
    %v4789 = vsel %vm4783, %v4776, 920167782
    %v4790 = vsel %vm4782, %v4773, %v4789
    %v4791 = vsel %vm4781, %v4788, %v4790
    %v4792 = vsel %vm4780, %v4770, %v4773
    %v4793 = vsel %vm4783, %v4779, 1326507024
    %v4794 = vsel %vm4782, %v4776, %v4793
    %v4795 = vsel %vm4781, %v4792, %v4794
    %v4796 = vshll.u32 %v4756, 8
    %v4797 = vmul.u32.u64.compose %v4796, %v4795
    %v4798 = vextract.low.u32 %v4797
    %v4799 = vextract.high.u32 %v4797
    %v4800 = vmul.u32.u64.compose %v4796, %v4791
    %v4801 = vextract.low.u32 %v4800
    %v4802 = vextract.high.u32 %v4800
    %v4803 = vmul.u32 %v4796, %v4787
    %v4804 = vadd.s32 %v4799, %v4801
    %vm4805 = vc.u32 %v4799, %v4801
    %v4806 = vadd.s32 %v4802, 1
    %v4807 = vsel %vm4805, %v4806, %v4802
    %v4808 = vadd.s32 %v4803, %v4807
    %v4809 = vadd.s32 %v4808, 536870912
    %v4810 = vshrl.u32 %v4809, 30
    %v4811 = vshll.u32 %v4810, 30
    %v4812 = vsub.s32 %v4808, %v4811
    %vm4813 = vcmp.lt.s32.totalorder %v4812, 0
    %v4814 = vsub.s32 0, %v4812
    %v4815 = vsel %vm4813, %v4814, %v4812
    %v4816 = vclz %v4815
    %v4817 = vsub.s32 %v4816, 2
    %vm4818 = vcmp.gt.s32.totalorder 0, %v4817
    %v4819 = vsel %vm4818, 0, %v4817
    %v4820 = vsub.s32 32, %v4819
    %v4821 = vshll.u32 %v4812, %v4819
    %v4822 = vshrl.u32 %v4804, %v4820
    %v4823 = vor.u32 %v4821, %v4822
    %v4824 = vsub.s32 4294967266, %v4819
    %v4825 = vadd.s32 %v4824, 127
    %v4826 = vshll.u32 %v4825, 23
    %v4827 = vor.u32 4788187, %v4826
    %v4828 = vand.u32 2147483647, %v4827
    %v4830 = vcvt.s32.f32 %v4823
    %v4831 = vmul.f32 %v4830, %v4828
    %v4832 = vxor.u32 %v4831, 2147483648
    %v4833 = vsel %vm4750, %v4832, %v4831
    %v4834 = vsub.s32 4, %v4810
    %v4835 = vsel %vm4750, %v4834, %v4810
    %v4836 = vsel %vm4749, %v4747, %v4833
    %v4837 = vsel %vm4749, 0, %v4835
    %v4838 = vcosq.f32.pop %v4836
    %v4839 = vsinq.f32.pop %v4836
    %vm4840 = vweird.f32 %v4747
    %v4841 = vand.u32 %v4837, 3
    %vm4842 = vcmp.lt.s32.totalorder %v4841, 2
    %vm4843 = vcmp.eq.s32.totalorder %v4841, 0
    %v4844 = vxor.u32 %v4839, 2147483648
    %v4845 = vsel %vm4843, %v4838, %v4844
    %vm4846 = vcmp.eq.s32.totalorder %v4841, 2
    %v4847 = vxor.u32 %v4838, 2147483648
    %v4848 = vsel %vm4846, %v4847, %v4839
    %v4849 = vsel %vm4842, %v4845, %v4848
    %v4850 = vsel %vm4840, nan, %v4849
    %v4851 = vadd.f32 %v4850, 1e-10
    %v4852 = vpack.c.bf16 %v4851, %v4851
    %s4853 = scalar_lea.vmem %s6, 112
    %v4854 = vld [vmem:[%s4853] sm:$0xf]
    %v4855 = vld [vmem:[%s4853 + $0x4] sm:$0xf]
    %v4856 = vld [vmem:[%s4853 + $0x8] sm:$0xf]
    %v4857 = vld [vmem:[%s4853 + $0xc] sm:$0xf]
    %s4858 = scalar_lea.vmem %s7, 7
    %v4859 = vld [vmem:[%s4858] sm:$0x1]
    %v4861 = vlaneseq
    %v4862 = vshrl.u32 %v4861, 7
    %v4863 = vsub.s32 0, %v4862
    %v4864 = vrot.slane %v4859, %v4863
    %4867 = vrot.lane.b32.xlu0 %v4852, 96
    %v4868 = vpop.permute.xlu0 %4867
    %v4873 = vunpack.c.l.b16 %v4854
    %v4874 = vunpack.c.l.b16 %v4855
    %v4875 = vunpack.c.l.b16 %v4856
    %v4876 = vunpack.c.l.b16 %v4857
    %v4877 = vpack.c.b16 %v4874, %v4873
    %v4878 = vpack.c.b16 %v4876, %v4875
    %v4882 = vsel %vm91, %v4868, 0
    %4884 = vmatprep.subr.bf16.mxu0 0
    %4885 = vmatpush1.bf16.msra.mxu0 %v4877
    %4886 = vmatprep.subr.bf16.mxu0 0
    %4887 = vmatpush1.bf16.msra.mxu0 %v4878
    %4888 = vmatprep.subr.bf16.mxu0 0
    %4889 = vmatpush1.bf16.msra.mxu0 0
    %4890 = vmatprep.subr.bf16.mxu0 0
    %4891 = vmatpush1.bf16.msra.mxu0 0
    %4892 = vmatprep.subr.bf16.mxu0 0
    %4893 = vmatpush1.bf16.msra.mxu0 0
    %4894 = vmatprep.subr.bf16.mxu0 0
    %4895 = vmatpush1.bf16.msra.mxu0 0
    %4896 = vmatprep.subr.bf16.mxu0 0
    %4897 = vmatpush1.bf16.msra.mxu0 0
    %4898 = vmatprep.subr.bf16.mxu0 0
    %4899 = vmatpush1.bf16.msra.mxu0 0
    %4900 = vmatprep.subr.bf16.mxu0 0
    %4901 = vmatpush1.bf16.msra.mxu0 0
    %4902 = vmatprep.subr.bf16.mxu0 0
    %4903 = vmatpush1.bf16.msra.mxu0 0
    %4904 = vmatprep.subr.bf16.mxu0 0
    %4905 = vmatpush1.bf16.msra.mxu0 0
    %4906 = vmatprep.subr.bf16.mxu0 0
    %4907 = vmatpush1.bf16.msra.mxu0 0
    %4908 = vmatprep.subr.bf16.mxu0 0
    %4909 = vmatpush1.bf16.msra.mxu0 0
    %4910 = vmatprep.subr.bf16.mxu0 0
    %4911 = vmatpush1.bf16.msra.mxu0 0
    %4912 = vmatprep.subr.bf16.mxu0 0
    %4913 = vmatpush1.bf16.msra.mxu0 0
    %4914 = vmatprep.subr.bf16.mxu0 0
    %4915 = vmatpush1.bf16.msra.mxu0 0
    %4916 = vmatprep.mubr.bf16.mxu0 0
    %4917 = vmatmul.mubr.bf16.gmra.mrb[0].mxu0 %v4882
    %v4918 = vpop.f32.mrb[0].mxu0
    %v4919 = vadd.f32 %v4864, %v4918
    %v4920 = vpop.f32.mrb[0].mxu0
    %v4921 = vpop.f32.mrb[0].mxu0
    %v4922 = vpop.f32.mrb[0].mxu0
    %4923 = vdwg.mxu0
    %v4924 = vmax.f32 %v4919, 0.0
    %v4925 = vpack.c.bf16 %v4924, %v4924
    %s4926 = scalar_lea.vmem %s8, 112
    %v4927 = vld [vmem:[%s4926] sm:$0xf]
    %v4928 = vld [vmem:[%s4926 + $0x4] sm:$0xf]
    %v4929 = vld [vmem:[%s4926 + $0x8] sm:$0xf]
    %v4930 = vld [vmem:[%s4926 + $0xc] sm:$0xf]
    %s4931 = scalar_lea.vmem %s9, 7
    %v4932 = vld [vmem:[%s4931] sm:$0x1]
    %v4934 = vlaneseq
    %v4935 = vshrl.u32 %v4934, 7
    %v4936 = vsub.s32 0, %v4935
    %v4937 = vrot.slane %v4932, %v4936
    %v4943 = vunpack.c.l.b16 %v4927
    %v4944 = vunpack.c.l.b16 %v4928
    %v4945 = vunpack.c.l.b16 %v4929
    %v4946 = vunpack.c.l.b16 %v4930
    %v4947 = vpack.c.b16 %v4944, %v4943
    %v4948 = vpack.c.b16 %v4946, %v4945
    %v4952 = vsel %vm91, %v4925, 0
    %4954 = vmatprep.subr.bf16.mxu0 0
    %4955 = vmatpush1.bf16.msra.mxu0 %v4947
    %4956 = vmatprep.subr.bf16.mxu0 0
    %4957 = vmatpush1.bf16.msra.mxu0 %v4948
    %4958 = vmatprep.subr.bf16.mxu0 0
    %4959 = vmatpush1.bf16.msra.mxu0 0
    %4960 = vmatprep.subr.bf16.mxu0 0
    %4961 = vmatpush1.bf16.msra.mxu0 0
    %4962 = vmatprep.subr.bf16.mxu0 0
    %4963 = vmatpush1.bf16.msra.mxu0 0
    %4964 = vmatprep.subr.bf16.mxu0 0
    %4965 = vmatpush1.bf16.msra.mxu0 0
    %4966 = vmatprep.subr.bf16.mxu0 0
    %4967 = vmatpush1.bf16.msra.mxu0 0
    %4968 = vmatprep.subr.bf16.mxu0 0
    %4969 = vmatpush1.bf16.msra.mxu0 0
    %4970 = vmatprep.subr.bf16.mxu0 0
    %4971 = vmatpush1.bf16.msra.mxu0 0
    %4972 = vmatprep.subr.bf16.mxu0 0
    %4973 = vmatpush1.bf16.msra.mxu0 0
    %4974 = vmatprep.subr.bf16.mxu0 0
    %4975 = vmatpush1.bf16.msra.mxu0 0
    %4976 = vmatprep.subr.bf16.mxu0 0
    %4977 = vmatpush1.bf16.msra.mxu0 0
    %4978 = vmatprep.subr.bf16.mxu0 0
    %4979 = vmatpush1.bf16.msra.mxu0 0
    %4980 = vmatprep.subr.bf16.mxu0 0
    %4981 = vmatpush1.bf16.msra.mxu0 0
    %4982 = vmatprep.subr.bf16.mxu0 0
    %4983 = vmatpush1.bf16.msra.mxu0 0
    %4984 = vmatprep.subr.bf16.mxu0 0
    %4985 = vmatpush1.bf16.msra.mxu0 0
    %4986 = vmatprep.mubr.bf16.mxu0 0
    %4987 = vmatmul.mubr.bf16.gmra.mrb[0].mxu0 %v4952
    %v4988 = vpop.f32.mrb[0].mxu0
    %v4989 = vadd.f32 %v4937, %v4988
    %v4990 = vpop.f32.mrb[0].mxu0
    %v4991 = vpop.f32.mrb[0].mxu0
    %v4992 = vpop.f32.mrb[0].mxu0
    %4993 = vdwg.mxu0
    %v4994 = vsel %vm641, %v4989, -inf
    %4995 = vmax.xlane.f32.xlu0 %v4994
    %v4996 = vpop.xlane.xlu0 %4995
    %v4997 = vsub.f32 %v4989, %v4996
    %v4998 = vmul.f32 %v4997, 1.442695
    %v4999 = vpow.pop %v4998
    %v5000 = vsel %vm641, %v4999, 0.0
    %5001 = vadd.xlane.f32.xlu0 %v5000
    %v5002 = vpop.xlane.xlu0 %5001
    %v5003 = vrcp.pop %v5002
    %v5004 = vmul.f32 %v4999, %v5003
    %v5005 = vadd.f32 %v5004, 1e-10
    %s5006 = scalar_lea.vmem %s10, 56
    %5007 = vst.msk [vmem:[%s5006] sm:$0xff] %vm641, %v5005
    %s5008 = scalar_lea.vmem %s1, 56
    %v5009 = vld [vmem:[%s5008] sm:$0xff]
    %v5010 = vsel %vm641, %v5005, 0.0
    %5011 = vadd.xlane.f32.xlu0 %v5010
    %v5012 = vpop.xlane.xlu0 %5011
    %v5013 = vmul.f32 %v5009, %v5012
    %vm5014 = vcmp.ge.f32.partialorder %v5013, %v5005
    %v5015 = vsel %vm5014, 1, 0
    %vm5016 = vcmp.eq.s32.totalorder %v5015, 0
    %5018 = vrot.lane.b32.xlu0 %v5005, 127
    %v5019 = vpop.permute.xlu0 %5018
    %v5021 = vsel %vm5016, %v5005, %v5019
    %s5022 = scalar_lea.vmem %s11, 56
    %5023 = vst.msk [vmem:[%s5022] sm:$0xff] %vm668, %v5015
    %v5024 = vadd.f32 %v5021, 1e-10
    %v5025 = vlog2.pop %v5024
    %v5026 = vmul.f32 %v5025, 0.6931472
    %v5027 = vadd.f32 %v4405, %v5026
    %5028 = vst.msk [vmem:[%s12] sm:$0xff] %vm668, %v5027
    // Predicated region
    $region50: #{tpu_custom_call.1} parent=1 // pred_check
      _
    $region51: #{tpu_custom_call.1} parent=1 // pred_check_branch
      %5030 = sbr.rel (0) target = $region53
    $region52: #{tpu_custom_call.1} parent=1 // pred_region
      _
    $region53: #{tpu_custom_call.1} parent=1 // pred_fallthru
      _
    // Predicated region
    $region54: #{tpu_custom_call.1} parent=1 // pred_check
      _
    $region55: #{tpu_custom_call.1} parent=1 // pred_check_branch
      %5032 = sbr.rel (0) target = $region57
    $region56: #{tpu_custom_call.1} parent=1 // pred_region
      _
    $region57: #{tpu_custom_call.1} parent=1 // pred_fallthru
      _
    // Predicated region
    $region58: #{tpu_custom_call.1} parent=1 // pred_check
      _
    $region59: #{tpu_custom_call.1} parent=1 // pred_check_branch
      %5034 = sbr.rel (0) target = $region61
    $region60: #{tpu_custom_call.1} parent=1 // pred_region
      _
    $region61: #{tpu_custom_call.1} parent=1 // pred_fallthru
      _
    // Predicated region
    $region62: #{tpu_custom_call.1} parent=1 // pred_check
      _
    $region63: #{tpu_custom_call.1} parent=1 // pred_check_branch
      %5036 = sbr.rel (0) target = $region65
    $region64: #{tpu_custom_call.1} parent=1 // pred_region
      _
    $region65: #{tpu_custom_call.1} parent=1 // pred_fallthru
      _
    // Predicated region
    $region66: #{tpu_custom_call.1} parent=1 // pred_check
      _
    $region67: #{tpu_custom_call.1} parent=1 // pred_check_branch
      %5038 = sbr.rel (0) target = $region69
    $region68: #{tpu_custom_call.1} parent=1 // pred_region
      _
    $region69: #{tpu_custom_call.1} parent=1 // pred_fallthru
      _
    // Predicated region
    $region70: #{tpu_custom_call.1} parent=1 // pred_check
      _
    $region71: #{tpu_custom_call.1} parent=1 // pred_check_branch
      %5040 = sbr.rel (0) target = $region73
    $region72: #{tpu_custom_call.1} parent=1 // pred_region
      _
    $region73: #{tpu_custom_call.1} parent=1 // pred_fallthru
      _
    %5041 = vsyncpa [#allocation3], 1
    %5042 = vsyncpa [#allocation5], 1

</llo_original>
